<compile_context>
chip_gen: v7x
topology: tpu7x:2x2x1
jax: 0.10.0
libtpu: 0.0.40
codegen_flags: <defaults>
</compile_context>

<pallas_src>
import jax
import jax.numpy as jnp
from jax.experimental import pallas as pl
from jax.experimental.pallas import tpu as pltpu


_VMEM_SPEC = pl.BlockSpec(memory_space=pltpu.MemorySpace.VMEM)


# ----------------------------------------------------------------------------
# In-kernel helpers
# ----------------------------------------------------------------------------
def _lstm_cell(gates, c_prev, H):
    """One LSTM cell update from pre-activation gates [B, 4H] (i, f, g, o)."""
    sif = jax.nn.sigmoid(gates[:, 0:2 * H])          # merged sigmoid over i|f
    i_g = sif[:, 0:H]
    f_g = sif[:, H:2 * H]
    g_g = jnp.tanh(gates[:, 2 * H:3 * H])
    o_g = jax.nn.sigmoid(gates[:, 3 * H:4 * H])
    c_new = f_g * c_prev + i_g * g_g
    h_new = o_g * jnp.tanh(c_new)
    return h_new, c_new


def _input_projections(x_ref, wih_f_ref, b_f_ref, wih_b_ref, b_b_ref,
                       gxf_scr, gxb_scr):
    """Batched [T*B, 4H] input projection for both directions (one MXU pass each)."""
    x = x_ref[...].astype(jnp.bfloat16)              # [T*B, D]
    gxf_scr[...] = (jnp.dot(x, wih_f_ref[...], preferred_element_type=jnp.float32)
                    + b_f_ref[...])
    gxb_scr[...] = (jnp.dot(x, wih_b_ref[...], preferred_element_type=jnp.float32)
                    + b_b_ref[...])


# ----------------------------------------------------------------------------
# Kernel: one bidirectional LSTM layer, emitting the full hidden sequence
# ----------------------------------------------------------------------------
def _make_bilstm_seq_kernel(T, B, H):
    def kernel(x_ref, wih_f_ref, whh_f_ref, b_f_ref,
               wih_b_ref, whh_b_ref, b_b_ref,
               hout_ref, gxf_scr, gxb_scr):
        # x_ref:   [T*B, D_in]       (row t*B + b == timestep t, batch b)
        # hout_ref:[T*B, 2H] f32     (fwd -> lanes [0:H], bwd -> lanes [H:2H])
        _input_projections(x_ref, wih_f_ref, b_f_ref, wih_b_ref, b_b_ref,
                           gxf_scr, gxb_scr)

        zeros = jnp.zeros((B, H), jnp.float32)
        h_f, c_f = zeros, zeros
        h_b, c_b = zeros, zeros

        for t in range(T):                           # static unroll over time
            rt = T - 1 - t
            # forward direction, timestep t
            gf = gxf_scr[t * B:(t + 1) * B, :] + jnp.dot(
                h_f.astype(jnp.bfloat16), whh_f_ref[...],
                preferred_element_type=jnp.float32)
            h_f, c_f = _lstm_cell(gf, c_f, H)
            hout_ref[t * B:(t + 1) * B, 0:H] = h_f

            # backward direction, timestep T-1-t
            gb = gxb_scr[rt * B:(rt + 1) * B, :] + jnp.dot(
                h_b.astype(jnp.bfloat16), whh_b_ref[...],
                preferred_element_type=jnp.float32)
            h_b, c_b = _lstm_cell(gb, c_b, H)
            hout_ref[rt * B:(rt + 1) * B, H:2 * H] = h_b

    return kernel


# ----------------------------------------------------------------------------
# Kernel: bidirectional LSTM layer fused with time-mean + fc1 + LeakyReLU + final
# ----------------------------------------------------------------------------
def _make_bilstm_mean_head_kernel(T, B, H, slope=0.2):
    def kernel(x_ref, wih_f_ref, whh_f_ref, b_f_ref,
               wih_b_ref, whh_b_ref, b_b_ref,
               w1_ref, b1_ref, wf_ref, bf_ref,
               out_ref, gxf_scr, gxb_scr):
        # out_ref: [B, tag_pad] f32 (lane-dense, padded to a multiple of 128)
        _input_projections(x_ref, wih_f_ref, b_f_ref, wih_b_ref, b_b_ref,
                           gxf_scr, gxb_scr)

        zeros = jnp.zeros((B, H), jnp.float32)
        h_f, c_f = zeros, zeros
        h_b, c_b = zeros, zeros
        sum_f = zeros
        sum_b = zeros

        for t in range(T):                           # static unroll over time
            rt = T - 1 - t
            gf = gxf_scr[t * B:(t + 1) * B, :] + jnp.dot(
                h_f.astype(jnp.bfloat16), whh_f_ref[...],
                preferred_element_type=jnp.float32)
            h_f, c_f = _lstm_cell(gf, c_f, H)
            sum_f = sum_f + h_f                      # running time-sum (fwd)

            gb = gxb_scr[rt * B:(rt + 1) * B, :] + jnp.dot(
                h_b.astype(jnp.bfloat16), whh_b_ref[...],
                preferred_element_type=jnp.float32)
            h_b, c_b = _lstm_cell(gb, c_b, H)
            sum_b = sum_b + h_b                      # running time-sum (bwd)

        # torch.mean(x, 1)
        hmean = jnp.concatenate([sum_f, sum_b], axis=-1) * (1.0 / T)   # [B, 2H]
        # fc1 -> LeakyReLU(0.2) -> final (d1 dropout is an eval-mode identity)
        z = jnp.dot(hmean, w1_ref[...], preferred_element_type=jnp.float32) + b1_ref[...]
        z = jnp.where(z >= 0, z, slope * z)
        out_ref[...] = (jnp.dot(z, wf_ref[...], preferred_element_type=jnp.float32)
                        + bf_ref[...])

    return kernel


# ----------------------------------------------------------------------------
# Wrappers (pallas_call glue)
# ----------------------------------------------------------------------------
def bilstm_seq(x_2d, T, B, fwd_params, bwd_params):
    """One bi-LSTM layer over [T*B, D_in] -> [T*B, 2H] (f32)."""
    TB, _ = x_2d.shape
    H = fwd_params[1].shape[0]
    return pl.pallas_call(
        _make_bilstm_seq_kernel(T, B, H),
        out_shape=jax.ShapeDtypeStruct((TB, 2 * H), jnp.float32),
        in_specs=[_VMEM_SPEC] * 7,
        out_specs=_VMEM_SPEC,
        scratch_shapes=[pltpu.VMEM((TB, 4 * H), jnp.float32),
                        pltpu.VMEM((TB, 4 * H), jnp.float32)],
    )(x_2d, *fwd_params, *bwd_params)


def bilstm_mean_head(x_2d, T, B, fwd_params, bwd_params, w1, b1, wf, bf):
    """Bi-LSTM layer fused with mean-over-time and the FC head -> [B, tag_pad]."""
    TB, _ = x_2d.shape
    H = fwd_params[1].shape[0]
    tag_pad = wf.shape[1]
    return pl.pallas_call(
        _make_bilstm_mean_head_kernel(T, B, H),
        out_shape=jax.ShapeDtypeStruct((B, tag_pad), jnp.float32),
        in_specs=[_VMEM_SPEC] * 11,
        out_specs=_VMEM_SPEC,
        scratch_shapes=[pltpu.VMEM((TB, 4 * H), jnp.float32),
                        pltpu.VMEM((TB, 4 * H), jnp.float32)],
    )(x_2d, *fwd_params, *bwd_params, w1, b1, wf, bf)


def lstm_model_forward(params, x_ids, tag_size):
    """Inference-mode forward of LSTMModel.forward (all dropouts == identity)."""
    B, T = x_ids.shape
    emb = params["embedding"]                                 # [V, D]
    # embedding gather + time-major flatten kept as XLA glue around the kernels
    x = jnp.take(emb, x_ids, axis=0)                          # [B, T, D]
    x = jnp.transpose(x, (1, 0, 2)).reshape(T * B, -1)        # [T*B, D]
    x = x.astype(jnp.bfloat16)

    h = bilstm_seq(x, T, B, params["lstm_l0_fwd"], params["lstm_l0_bwd"])
    # TODO(synk): inter-layer LSTM dropout (p=0.2) and self.d1 are train-only.
    scores_pad = bilstm_mean_head(
        h, T, B, params["lstm_l1_fwd"], params["lstm_l1_bwd"],
        params["fc1_w"], params["fc1_b"], params["final_w"], params["final_b"])
    return scores_pad[:, :tag_size]                           # [B, tag_size]


# ----------------------------------------------------------------------------
# Deterministic parameter init: uniform(-0.08, 0.08) like init_model_parameters
# ----------------------------------------------------------------------------
def init_params(key, vocab_size, emb_size, hid_size, tag_size):
    H = emb_size  # module hardcodes LSTM(300, 300) == (emb, emb); scaled down here

    def u(k, shape):
        return jax.random.uniform(k, shape, jnp.float32, -0.08, 0.08)

    keys = iter(jax.random.split(key, 32))

    def lstm_dir(in_dim):
        # bf16 matmul weights (MXU-native), f32 summed biases
        w_ih = u(next(keys), (in_dim, 4 * H)).astype(jnp.bfloat16)   # torch weight_ih^T
        w_hh = u(next(keys), (H, 4 * H)).astype(jnp.bfloat16)        # torch weight_hh^T
        b = u(next(keys), (1, 4 * H)) + u(next(keys), (1, 4 * H))    # b_ih + b_hh
        return (w_ih, w_hh, b)

    # final linear padded to a lane-dense 128-wide output; sliced back in forward
    tag_pad = ((tag_size + 127) // 128) * 128
    final_w = jnp.zeros((hid_size, tag_pad), jnp.float32)
    final_w = final_w.at[:, :tag_size].set(u(next(keys), (hid_size, tag_size)))
    final_b = jnp.zeros((1, tag_pad), jnp.float32)
    final_b = final_b.at[:, :tag_size].set(u(next(keys), (1, tag_size)))

    return {
        "embedding": u(next(keys), (vocab_size, emb_size)),
        "lstm_l0_fwd": lstm_dir(emb_size),
        "lstm_l0_bwd": lstm_dir(emb_size),
        "lstm_l1_fwd": lstm_dir(2 * H),
        "lstm_l1_bwd": lstm_dir(2 * H),
        "fc1_w": u(next(keys), (2 * emb_size, hid_size)),            # fc1: n_embed*2 -> hid
        "fc1_b": u(next(keys), (1, hid_size)),
        "final_w": final_w,                                          # [hid, tag_pad]
        "final_b": final_b,                                          # [1, tag_pad]
    }


if __name__ == "__main__":
    VOCAB, EMB, HID, TAGS = 100, 128, 128, 8
    B, T = 8, 8   # B >= 8 keeps every tile sublane-full and row offsets aligned

    key = jax.random.PRNGKey(0)
    pkey, xkey = jax.random.split(key)
    params = init_params(pkey, VOCAB, EMB, HID, TAGS)
    x_ids = jax.random.randint(xkey, (B, T), 0, VOCAB, dtype=jnp.int32)

    fwd = jax.jit(lstm_model_forward, static_argnums=2)
    scores = fwd(params, x_ids, TAGS)
    scores = jax.block_until_ready(scores)

    assert scores.shape == (B, TAGS), scores.shape
    assert bool(jnp.all(jnp.isfinite(scores)))
    print("KERNEL_OK")
</pallas_src>

<mosaic_0001>
module attributes {stable_mosaic.version = 11 : i64} {
  func.func @kernel(%arg0: memref<64x256xf32, #tpu.memory_space<vmem>>, %arg1: memref<256x512xbf16, #tpu.memory_space<vmem>>, %arg2: memref<128x512xbf16, #tpu.memory_space<vmem>>, %arg3: memref<1x512xf32, #tpu.memory_space<vmem>>, %arg4: memref<256x512xbf16, #tpu.memory_space<vmem>>, %arg5: memref<128x512xbf16, #tpu.memory_space<vmem>>, %arg6: memref<1x512xf32, #tpu.memory_space<vmem>>, %arg7: memref<256x128xf32, #tpu.memory_space<vmem>>, %arg8: memref<1x128xf32, #tpu.memory_space<vmem>>, %arg9: memref<128x128xf32, #tpu.memory_space<vmem>>, %arg10: memref<1x128xf32, #tpu.memory_space<vmem>>, %arg11: memref<8x128xf32, #tpu.memory_space<vmem>>, %arg12: memref<64x512xf32, #tpu.memory_space<vmem>>, %arg13: memref<64x512xf32, #tpu.memory_space<vmem>>) attributes {dimension_semantics = [], scalar_prefetch = 0 : i64, scratch_operands = 2 : i64, tpu.core_type = #tpu.core_type<tc>} {
    %c0 = arith.constant 0 : index
    %c0_0 = arith.constant 0 : index
    %0 = vector.load %arg0[%c0, %c0_0] : memref<64x256xf32, #tpu.memory_space<vmem>>, vector<64x256xf32>
    %1 = arith.truncf %0 : vector<64x256xf32> to vector<64x256xbf16>
    %c0_1 = arith.constant 0 : index
    %c0_2 = arith.constant 0 : index
    %2 = vector.load %arg1[%c0_1, %c0_2] : memref<256x512xbf16, #tpu.memory_space<vmem>>, vector<256x512xbf16>
    %cst = arith.constant dense<0.000000e+00> : vector<64x512xf32>
    %3 = tpu.matmul %1, %2, %cst {dimension_numbers = #tpu.dot_dimension_numbers<[1], [0], [0], [1], [0, 0, 1, 1], [], []>} : vector<64x256xbf16>, vector<256x512xbf16>, vector<64x512xf32> -> vector<64x512xf32>
    %c0_3 = arith.constant 0 : index
    %c0_4 = arith.constant 0 : index
    %4 = vector.load %arg3[%c0_3, %c0_4] : memref<1x512xf32, #tpu.memory_space<vmem>>, vector<1x512xf32>
    %5 = vector.broadcast %4 : vector<1x512xf32> to vector<64x512xf32>
    %6 = arith.addf %3, %5 : vector<64x512xf32>
    %c0_5 = arith.constant 0 : index
    %c0_6 = arith.constant 0 : index
    %7 = vector.load %arg12[%c0_5, %c0_6] : memref<64x512xf32, #tpu.memory_space<vmem>>, vector<64x512xf32>
    tpu.vector_store %arg12[%c0_5, %c0_6], %6 {strides = array<i32>} : memref<64x512xf32, #tpu.memory_space<vmem>>, vector<64x512xf32>,
    %c0_7 = arith.constant 0 : index
    %c0_8 = arith.constant 0 : index
    %8 = vector.load %arg4[%c0_7, %c0_8] : memref<256x512xbf16, #tpu.memory_space<vmem>>, vector<256x512xbf16>
    %cst_9 = arith.constant dense<0.000000e+00> : vector<64x512xf32>
    %9 = tpu.matmul %1, %8, %cst_9 {dimension_numbers = #tpu.dot_dimension_numbers<[1], [0], [0], [1], [0, 0, 1, 1], [], []>} : vector<64x256xbf16>, vector<256x512xbf16>, vector<64x512xf32> -> vector<64x512xf32>
    %c0_10 = arith.constant 0 : index
    %c0_11 = arith.constant 0 : index
    %10 = vector.load %arg6[%c0_10, %c0_11] : memref<1x512xf32, #tpu.memory_space<vmem>>, vector<1x512xf32>
    %11 = vector.broadcast %10 : vector<1x512xf32> to vector<64x512xf32>
    %12 = arith.addf %9, %11 : vector<64x512xf32>
    %c0_12 = arith.constant 0 : index
    %c0_13 = arith.constant 0 : index
    %13 = vector.load %arg13[%c0_12, %c0_13] : memref<64x512xf32, #tpu.memory_space<vmem>>, vector<64x512xf32>
    tpu.vector_store %arg13[%c0_12, %c0_13], %12 {strides = array<i32>} : memref<64x512xf32, #tpu.memory_space<vmem>>, vector<64x512xf32>,
    %cst_14 = arith.constant 0.000000e+00 : f32
    %14 = vector.broadcast %cst_14 : f32 to vector<8x128xf32>
    %c0_15 = arith.constant 0 : index
    %c0_16 = arith.constant 0 : index
    %15 = vector.load %arg12[%c0_15, %c0_16] : memref<64x512xf32, #tpu.memory_space<vmem>>, vector<8x512xf32>
    %16 = arith.truncf %14 : vector<8x128xf32> to vector<8x128xbf16>
    %c0_17 = arith.constant 0 : index
    %c0_18 = arith.constant 0 : index
    %17 = vector.load %arg2[%c0_17, %c0_18] : memref<128x512xbf16, #tpu.memory_space<vmem>>, vector<128x512xbf16>
    %cst_19 = arith.constant dense<0.000000e+00> : vector<8x512xf32>
    %18 = tpu.matmul %16, %17, %cst_19 {dimension_numbers = #tpu.dot_dimension_numbers<[1], [0], [0], [1], [0, 0, 1, 1], [], []>} : vector<8x128xbf16>, vector<128x512xbf16>, vector<8x512xf32> -> vector<8x512xf32>
    %19 = arith.addf %15, %18 : vector<8x512xf32>
    %20 = vector.extract_strided_slice %19 {offsets = [0, 0], sizes = [8, 256], strides = [1, 1]} : vector<8x512xf32> to vector<8x256xf32>
    %21 = arith.negf %20 : vector<8x256xf32>
    %22 = math.exp %21 : vector<8x256xf32>
    %cst_20 = arith.constant 1.000000e+00 : f32
    %23 = vector.broadcast %cst_20 : f32 to vector<8x256xf32>
    %24 = arith.addf %23, %22 : vector<8x256xf32>
    %25 = arith.divf %23, %24 : vector<8x256xf32>
    %26 = vector.extract_strided_slice %25 {offsets = [0, 0], sizes = [8, 128], strides = [1, 1]} : vector<8x256xf32> to vector<8x128xf32>
    %27 = vector.extract_strided_slice %25 {offsets = [0, 128], sizes = [8, 128], strides = [1, 1]} : vector<8x256xf32> to vector<8x128xf32>
    %28 = vector.extract_strided_slice %19 {offsets = [0, 256], sizes = [8, 128], strides = [1, 1]} : vector<8x512xf32> to vector<8x128xf32>
    %29 = math.tanh %28 : vector<8x128xf32>
    %30 = vector.extract_strided_slice %19 {offsets = [0, 384], sizes = [8, 128], strides = [1, 1]} : vector<8x512xf32> to vector<8x128xf32>
    %31 = arith.negf %30 : vector<8x128xf32>
    %32 = math.exp %31 : vector<8x128xf32>
    %cst_21 = arith.constant 1.000000e+00 : f32
    %33 = vector.broadcast %cst_21 : f32 to vector<8x128xf32>
    %34 = arith.addf %33, %32 : vector<8x128xf32>
    %35 = arith.divf %33, %34 : vector<8x128xf32>
    %36 = arith.mulf %27, %14 : vector<8x128xf32>
    %37 = arith.mulf %26, %29 : vector<8x128xf32>
    %38 = arith.addf %36, %37 : vector<8x128xf32>
    %39 = math.tanh %38 : vector<8x128xf32>
    %40 = arith.mulf %35, %39 : vector<8x128xf32>
    %41 = arith.addf %14, %40 : vector<8x128xf32>
    %c56 = arith.constant 56 : index
    %c0_22 = arith.constant 0 : index
    %42 = vector.load %arg13[%c56, %c0_22] : memref<64x512xf32, #tpu.memory_space<vmem>>, vector<8x512xf32>
    %43 = arith.truncf %14 : vector<8x128xf32> to vector<8x128xbf16>
    %c0_23 = arith.constant 0 : index
    %c0_24 = arith.constant 0 : index
    %44 = vector.load %arg5[%c0_23, %c0_24] : memref<128x512xbf16, #tpu.memory_space<vmem>>, vector<128x512xbf16>
    %cst_25 = arith.constant dense<0.000000e+00> : vector<8x512xf32>
    %45 = tpu.matmul %43, %44, %cst_25 {dimension_numbers = #tpu.dot_dimension_numbers<[1], [0], [0], [1], [0, 0, 1, 1], [], []>} : vector<8x128xbf16>, vector<128x512xbf16>, vector<8x512xf32> -> vector<8x512xf32>
    %46 = arith.addf %42, %45 : vector<8x512xf32>
    %47 = vector.extract_strided_slice %46 {offsets = [0, 0], sizes = [8, 256], strides = [1, 1]} : vector<8x512xf32> to vector<8x256xf32>
    %48 = arith.negf %47 : vector<8x256xf32>
    %49 = math.exp %48 : vector<8x256xf32>
    %cst_26 = arith.constant 1.000000e+00 : f32
    %50 = vector.broadcast %cst_26 : f32 to vector<8x256xf32>
    %51 = arith.addf %50, %49 : vector<8x256xf32>
    %52 = arith.divf %50, %51 : vector<8x256xf32>
    %53 = vector.extract_strided_slice %52 {offsets = [0, 0], sizes = [8, 128], strides = [1, 1]} : vector<8x256xf32> to vector<8x128xf32>
    %54 = vector.extract_strided_slice %52 {offsets = [0, 128], sizes = [8, 128], strides = [1, 1]} : vector<8x256xf32> to vector<8x128xf32>
    %55 = vector.extract_strided_slice %46 {offsets = [0, 256], sizes = [8, 128], strides = [1, 1]} : vector<8x512xf32> to vector<8x128xf32>
    %56 = math.tanh %55 : vector<8x128xf32>
    %57 = vector.extract_strided_slice %46 {offsets = [0, 384], sizes = [8, 128], strides = [1, 1]} : vector<8x512xf32> to vector<8x128xf32>
    %58 = arith.negf %57 : vector<8x128xf32>
    %59 = math.exp %58 : vector<8x128xf32>
    %cst_27 = arith.constant 1.000000e+00 : f32
    %60 = vector.broadcast %cst_27 : f32 to vector<8x128xf32>
    %61 = arith.addf %60, %59 : vector<8x128xf32>
    %62 = arith.divf %60, %61 : vector<8x128xf32>
    %63 = arith.mulf %54, %14 : vector<8x128xf32>
    %64 = arith.mulf %53, %56 : vector<8x128xf32>
    %65 = arith.addf %63, %64 : vector<8x128xf32>
    %66 = math.tanh %65 : vector<8x128xf32>
    %67 = arith.mulf %62, %66 : vector<8x128xf32>
    %68 = arith.addf %14, %67 : vector<8x128xf32>
    %c8 = arith.constant 8 : index
    %c0_28 = arith.constant 0 : index
    %69 = vector.load %arg12[%c8, %c0_28] : memref<64x512xf32, #tpu.memory_space<vmem>>, vector<8x512xf32>
    %70 = arith.truncf %40 : vector<8x128xf32> to vector<8x128xbf16>
    %c0_29 = arith.constant 0 : index
    %c0_30 = arith.constant 0 : index
    %71 = vector.load %arg2[%c0_29, %c0_30] : memref<128x512xbf16, #tpu.memory_space<vmem>>, vector<128x512xbf16>
    %cst_31 = arith.constant dense<0.000000e+00> : vector<8x512xf32>
    %72 = tpu.matmul %70, %71, %cst_31 {dimension_numbers = #tpu.dot_dimension_numbers<[1], [0], [0], [1], [0, 0, 1, 1], [], []>} : vector<8x128xbf16>, vector<128x512xbf16>, vector<8x512xf32> -> vector<8x512xf32>
    %73 = arith.addf %69, %72 : vector<8x512xf32>
    %74 = vector.extract_strided_slice %73 {offsets = [0, 0], sizes = [8, 256], strides = [1, 1]} : vector<8x512xf32> to vector<8x256xf32>
    %75 = arith.negf %74 : vector<8x256xf32>
    %76 = math.exp %75 : vector<8x256xf32>
    %cst_32 = arith.constant 1.000000e+00 : f32
    %77 = vector.broadcast %cst_32 : f32 to vector<8x256xf32>
    %78 = arith.addf %77, %76 : vector<8x256xf32>
    %79 = arith.divf %77, %78 : vector<8x256xf32>
    %80 = vector.extract_strided_slice %79 {offsets = [0, 0], sizes = [8, 128], strides = [1, 1]} : vector<8x256xf32> to vector<8x128xf32>
    %81 = vector.extract_strided_slice %79 {offsets = [0, 128], sizes = [8, 128], strides = [1, 1]} : vector<8x256xf32> to vector<8x128xf32>
    %82 = vector.extract_strided_slice %73 {offsets = [0, 256], sizes = [8, 128], strides = [1, 1]} : vector<8x512xf32> to vector<8x128xf32>
    %83 = math.tanh %82 : vector<8x128xf32>
    %84 = vector.extract_strided_slice %73 {offsets = [0, 384], sizes = [8, 128], strides = [1, 1]} : vector<8x512xf32> to vector<8x128xf32>
    %85 = arith.negf %84 : vector<8x128xf32>
    %86 = math.exp %85 : vector<8x128xf32>
    %cst_33 = arith.constant 1.000000e+00 : f32
    %87 = vector.broadcast %cst_33 : f32 to vector<8x128xf32>
    %88 = arith.addf %87, %86 : vector<8x128xf32>
    %89 = arith.divf %87, %88 : vector<8x128xf32>
    %90 = arith.mulf %81, %38 : vector<8x128xf32>
    %91 = arith.mulf %80, %83 : vector<8x128xf32>
    %92 = arith.addf %90, %91 : vector<8x128xf32>
    %93 = math.tanh %92 : vector<8x128xf32>
    %94 = arith.mulf %89, %93 : vector<8x128xf32>
    %95 = arith.addf %41, %94 : vector<8x128xf32>
    %c48 = arith.constant 48 : index
    %c0_34 = arith.constant 0 : index
    %96 = vector.load %arg13[%c48, %c0_34] : memref<64x512xf32, #tpu.memory_space<vmem>>, vector<8x512xf32>
    %97 = arith.truncf %67 : vector<8x128xf32> to vector<8x128xbf16>
    %c0_35 = arith.constant 0 : index
    %c0_36 = arith.constant 0 : index
    %98 = vector.load %arg5[%c0_35, %c0_36] : memref<128x512xbf16, #tpu.memory_space<vmem>>, vector<128x512xbf16>
    %cst_37 = arith.constant dense<0.000000e+00> : vector<8x512xf32>
    %99 = tpu.matmul %97, %98, %cst_37 {dimension_numbers = #tpu.dot_dimension_numbers<[1], [0], [0], [1], [0, 0, 1, 1], [], []>} : vector<8x128xbf16>, vector<128x512xbf16>, vector<8x512xf32> -> vector<8x512xf32>
    %100 = arith.addf %96, %99 : vector<8x512xf32>
    %101 = vector.extract_strided_slice %100 {offsets = [0, 0], sizes = [8, 256], strides = [1, 1]} : vector<8x512xf32> to vector<8x256xf32>
    %102 = arith.negf %101 : vector<8x256xf32>
    %103 = math.exp %102 : vector<8x256xf32>
    %cst_38 = arith.constant 1.000000e+00 : f32
    %104 = vector.broadcast %cst_38 : f32 to vector<8x256xf32>
    %105 = arith.addf %104, %103 : vector<8x256xf32>
    %106 = arith.divf %104, %105 : vector<8x256xf32>
    %107 = vector.extract_strided_slice %106 {offsets = [0, 0], sizes = [8, 128], strides = [1, 1]} : vector<8x256xf32> to vector<8x128xf32>
    %108 = vector.extract_strided_slice %106 {offsets = [0, 128], sizes = [8, 128], strides = [1, 1]} : vector<8x256xf32> to vector<8x128xf32>
    %109 = vector.extract_strided_slice %100 {offsets = [0, 256], sizes = [8, 128], strides = [1, 1]} : vector<8x512xf32> to vector<8x128xf32>
    %110 = math.tanh %109 : vector<8x128xf32>
    %111 = vector.extract_strided_slice %100 {offsets = [0, 384], sizes = [8, 128], strides = [1, 1]} : vector<8x512xf32> to vector<8x128xf32>
    %112 = arith.negf %111 : vector<8x128xf32>
    %113 = math.exp %112 : vector<8x128xf32>
    %cst_39 = arith.constant 1.000000e+00 : f32
    %114 = vector.broadcast %cst_39 : f32 to vector<8x128xf32>
    %115 = arith.addf %114, %113 : vector<8x128xf32>
    %116 = arith.divf %114, %115 : vector<8x128xf32>
    %117 = arith.mulf %108, %65 : vector<8x128xf32>
    %118 = arith.mulf %107, %110 : vector<8x128xf32>
    %119 = arith.addf %117, %118 : vector<8x128xf32>
    %120 = math.tanh %119 : vector<8x128xf32>
    %121 = arith.mulf %116, %120 : vector<8x128xf32>
    %122 = arith.addf %68, %121 : vector<8x128xf32>
    %c16 = arith.constant 16 : index
    %c0_40 = arith.constant 0 : index
    %123 = vector.load %arg12[%c16, %c0_40] : memref<64x512xf32, #tpu.memory_space<vmem>>, vector<8x512xf32>
    %124 = arith.truncf %94 : vector<8x128xf32> to vector<8x128xbf16>
    %c0_41 = arith.constant 0 : index
    %c0_42 = arith.constant 0 : index
    %125 = vector.load %arg2[%c0_41, %c0_42] : memref<128x512xbf16, #tpu.memory_space<vmem>>, vector<128x512xbf16>
    %cst_43 = arith.constant dense<0.000000e+00> : vector<8x512xf32>
    %126 = tpu.matmul %124, %125, %cst_43 {dimension_numbers = #tpu.dot_dimension_numbers<[1], [0], [0], [1], [0, 0, 1, 1], [], []>} : vector<8x128xbf16>, vector<128x512xbf16>, vector<8x512xf32> -> vector<8x512xf32>
    %127 = arith.addf %123, %126 : vector<8x512xf32>
    %128 = vector.extract_strided_slice %127 {offsets = [0, 0], sizes = [8, 256], strides = [1, 1]} : vector<8x512xf32> to vector<8x256xf32>
    %129 = arith.negf %128 : vector<8x256xf32>
    %130 = math.exp %129 : vector<8x256xf32>
    %cst_44 = arith.constant 1.000000e+00 : f32
    %131 = vector.broadcast %cst_44 : f32 to vector<8x256xf32>
    %132 = arith.addf %131, %130 : vector<8x256xf32>
    %133 = arith.divf %131, %132 : vector<8x256xf32>
    %134 = vector.extract_strided_slice %133 {offsets = [0, 0], sizes = [8, 128], strides = [1, 1]} : vector<8x256xf32> to vector<8x128xf32>
    %135 = vector.extract_strided_slice %133 {offsets = [0, 128], sizes = [8, 128], strides = [1, 1]} : vector<8x256xf32> to vector<8x128xf32>
    %136 = vector.extract_strided_slice %127 {offsets = [0, 256], sizes = [8, 128], strides = [1, 1]} : vector<8x512xf32> to vector<8x128xf32>
    %137 = math.tanh %136 : vector<8x128xf32>
    %138 = vector.extract_strided_slice %127 {offsets = [0, 384], sizes = [8, 128], strides = [1, 1]} : vector<8x512xf32> to vector<8x128xf32>
    %139 = arith.negf %138 : vector<8x128xf32>
    %140 = math.exp %139 : vector<8x128xf32>
    %cst_45 = arith.constant 1.000000e+00 : f32
    %141 = vector.broadcast %cst_45 : f32 to vector<8x128xf32>
    %142 = arith.addf %141, %140 : vector<8x128xf32>
    %143 = arith.divf %141, %142 : vector<8x128xf32>
    %144 = arith.mulf %135, %92 : vector<8x128xf32>
    %145 = arith.mulf %134, %137 : vector<8x128xf32>
    %146 = arith.addf %144, %145 : vector<8x128xf32>
    %147 = math.tanh %146 : vector<8x128xf32>
    %148 = arith.mulf %143, %147 : vector<8x128xf32>
    %149 = arith.addf %95, %148 : vector<8x128xf32>
    %c40 = arith.constant 40 : index
    %c0_46 = arith.constant 0 : index
    %150 = vector.load %arg13[%c40, %c0_46] : memref<64x512xf32, #tpu.memory_space<vmem>>, vector<8x512xf32>
    %151 = arith.truncf %121 : vector<8x128xf32> to vector<8x128xbf16>
    %c0_47 = arith.constant 0 : index
    %c0_48 = arith.constant 0 : index
    %152 = vector.load %arg5[%c0_47, %c0_48] : memref<128x512xbf16, #tpu.memory_space<vmem>>, vector<128x512xbf16>
    %cst_49 = arith.constant dense<0.000000e+00> : vector<8x512xf32>
    %153 = tpu.matmul %151, %152, %cst_49 {dimension_numbers = #tpu.dot_dimension_numbers<[1], [0], [0], [1], [0, 0, 1, 1], [], []>} : vector<8x128xbf16>, vector<128x512xbf16>, vector<8x512xf32> -> vector<8x512xf32>
    %154 = arith.addf %150, %153 : vector<8x512xf32>
    %155 = vector.extract_strided_slice %154 {offsets = [0, 0], sizes = [8, 256], strides = [1, 1]} : vector<8x512xf32> to vector<8x256xf32>
    %156 = arith.negf %155 : vector<8x256xf32>
    %157 = math.exp %156 : vector<8x256xf32>
    %cst_50 = arith.constant 1.000000e+00 : f32
    %158 = vector.broadcast %cst_50 : f32 to vector<8x256xf32>
    %159 = arith.addf %158, %157 : vector<8x256xf32>
    %160 = arith.divf %158, %159 : vector<8x256xf32>
    %161 = vector.extract_strided_slice %160 {offsets = [0, 0], sizes = [8, 128], strides = [1, 1]} : vector<8x256xf32> to vector<8x128xf32>
    %162 = vector.extract_strided_slice %160 {offsets = [0, 128], sizes = [8, 128], strides = [1, 1]} : vector<8x256xf32> to vector<8x128xf32>
    %163 = vector.extract_strided_slice %154 {offsets = [0, 256], sizes = [8, 128], strides = [1, 1]} : vector<8x512xf32> to vector<8x128xf32>
    %164 = math.tanh %163 : vector<8x128xf32>
    %165 = vector.extract_strided_slice %154 {offsets = [0, 384], sizes = [8, 128], strides = [1, 1]} : vector<8x512xf32> to vector<8x128xf32>
    %166 = arith.negf %165 : vector<8x128xf32>
    %167 = math.exp %166 : vector<8x128xf32>
    %cst_51 = arith.constant 1.000000e+00 : f32
    %168 = vector.broadcast %cst_51 : f32 to vector<8x128xf32>
    %169 = arith.addf %168, %167 : vector<8x128xf32>
    %170 = arith.divf %168, %169 : vector<8x128xf32>
    %171 = arith.mulf %162, %119 : vector<8x128xf32>
    %172 = arith.mulf %161, %164 : vector<8x128xf32>
    %173 = arith.addf %171, %172 : vector<8x128xf32>
    %174 = math.tanh %173 : vector<8x128xf32>
    %175 = arith.mulf %170, %174 : vector<8x128xf32>
    %176 = arith.addf %122, %175 : vector<8x128xf32>
    %c24 = arith.constant 24 : index
    %c0_52 = arith.constant 0 : index
    %177 = vector.load %arg12[%c24, %c0_52] : memref<64x512xf32, #tpu.memory_space<vmem>>, vector<8x512xf32>
    %178 = arith.truncf %148 : vector<8x128xf32> to vector<8x128xbf16>
    %c0_53 = arith.constant 0 : index
    %c0_54 = arith.constant 0 : index
    %179 = vector.load %arg2[%c0_53, %c0_54] : memref<128x512xbf16, #tpu.memory_space<vmem>>, vector<128x512xbf16>
    %cst_55 = arith.constant dense<0.000000e+00> : vector<8x512xf32>
    %180 = tpu.matmul %178, %179, %cst_55 {dimension_numbers = #tpu.dot_dimension_numbers<[1], [0], [0], [1], [0, 0, 1, 1], [], []>} : vector<8x128xbf16>, vector<128x512xbf16>, vector<8x512xf32> -> vector<8x512xf32>
    %181 = arith.addf %177, %180 : vector<8x512xf32>
    %182 = vector.extract_strided_slice %181 {offsets = [0, 0], sizes = [8, 256], strides = [1, 1]} : vector<8x512xf32> to vector<8x256xf32>
    %183 = arith.negf %182 : vector<8x256xf32>
    %184 = math.exp %183 : vector<8x256xf32>
    %cst_56 = arith.constant 1.000000e+00 : f32
    %185 = vector.broadcast %cst_56 : f32 to vector<8x256xf32>
    %186 = arith.addf %185, %184 : vector<8x256xf32>
    %187 = arith.divf %185, %186 : vector<8x256xf32>
    %188 = vector.extract_strided_slice %187 {offsets = [0, 0], sizes = [8, 128], strides = [1, 1]} : vector<8x256xf32> to vector<8x128xf32>
    %189 = vector.extract_strided_slice %187 {offsets = [0, 128], sizes = [8, 128], strides = [1, 1]} : vector<8x256xf32> to vector<8x128xf32>
    %190 = vector.extract_strided_slice %181 {offsets = [0, 256], sizes = [8, 128], strides = [1, 1]} : vector<8x512xf32> to vector<8x128xf32>
    %191 = math.tanh %190 : vector<8x128xf32>
    %192 = vector.extract_strided_slice %181 {offsets = [0, 384], sizes = [8, 128], strides = [1, 1]} : vector<8x512xf32> to vector<8x128xf32>
    %193 = arith.negf %192 : vector<8x128xf32>
    %194 = math.exp %193 : vector<8x128xf32>
    %cst_57 = arith.constant 1.000000e+00 : f32
    %195 = vector.broadcast %cst_57 : f32 to vector<8x128xf32>
    %196 = arith.addf %195, %194 : vector<8x128xf32>
    %197 = arith.divf %195, %196 : vector<8x128xf32>
    %198 = arith.mulf %189, %146 : vector<8x128xf32>
    %199 = arith.mulf %188, %191 : vector<8x128xf32>
    %200 = arith.addf %198, %199 : vector<8x128xf32>
    %201 = math.tanh %200 : vector<8x128xf32>
    %202 = arith.mulf %197, %201 : vector<8x128xf32>
    %203 = arith.addf %149, %202 : vector<8x128xf32>
    %c32 = arith.constant 32 : index
    %c0_58 = arith.constant 0 : index
    %204 = vector.load %arg13[%c32, %c0_58] : memref<64x512xf32, #tpu.memory_space<vmem>>, vector<8x512xf32>
    %205 = arith.truncf %175 : vector<8x128xf32> to vector<8x128xbf16>
    %c0_59 = arith.constant 0 : index
    %c0_60 = arith.constant 0 : index
    %206 = vector.load %arg5[%c0_59, %c0_60] : memref<128x512xbf16, #tpu.memory_space<vmem>>, vector<128x512xbf16>
    %cst_61 = arith.constant dense<0.000000e+00> : vector<8x512xf32>
    %207 = tpu.matmul %205, %206, %cst_61 {dimension_numbers = #tpu.dot_dimension_numbers<[1], [0], [0], [1], [0, 0, 1, 1], [], []>} : vector<8x128xbf16>, vector<128x512xbf16>, vector<8x512xf32> -> vector<8x512xf32>
    %208 = arith.addf %204, %207 : vector<8x512xf32>
    %209 = vector.extract_strided_slice %208 {offsets = [0, 0], sizes = [8, 256], strides = [1, 1]} : vector<8x512xf32> to vector<8x256xf32>
    %210 = arith.negf %209 : vector<8x256xf32>
    %211 = math.exp %210 : vector<8x256xf32>
    %cst_62 = arith.constant 1.000000e+00 : f32
    %212 = vector.broadcast %cst_62 : f32 to vector<8x256xf32>
    %213 = arith.addf %212, %211 : vector<8x256xf32>
    %214 = arith.divf %212, %213 : vector<8x256xf32>
    %215 = vector.extract_strided_slice %214 {offsets = [0, 0], sizes = [8, 128], strides = [1, 1]} : vector<8x256xf32> to vector<8x128xf32>
    %216 = vector.extract_strided_slice %214 {offsets = [0, 128], sizes = [8, 128], strides = [1, 1]} : vector<8x256xf32> to vector<8x128xf32>
    %217 = vector.extract_strided_slice %208 {offsets = [0, 256], sizes = [8, 128], strides = [1, 1]} : vector<8x512xf32> to vector<8x128xf32>
    %218 = math.tanh %217 : vector<8x128xf32>
    %219 = vector.extract_strided_slice %208 {offsets = [0, 384], sizes = [8, 128], strides = [1, 1]} : vector<8x512xf32> to vector<8x128xf32>
    %220 = arith.negf %219 : vector<8x128xf32>
    %221 = math.exp %220 : vector<8x128xf32>
    %cst_63 = arith.constant 1.000000e+00 : f32
    %222 = vector.broadcast %cst_63 : f32 to vector<8x128xf32>
    %223 = arith.addf %222, %221 : vector<8x128xf32>
    %224 = arith.divf %222, %223 : vector<8x128xf32>
    %225 = arith.mulf %216, %173 : vector<8x128xf32>
    %226 = arith.mulf %215, %218 : vector<8x128xf32>
    %227 = arith.addf %225, %226 : vector<8x128xf32>
    %228 = math.tanh %227 : vector<8x128xf32>
    %229 = arith.mulf %224, %228 : vector<8x128xf32>
    %230 = arith.addf %176, %229 : vector<8x128xf32>
    %c32_64 = arith.constant 32 : index
    %c0_65 = arith.constant 0 : index
    %231 = vector.load %arg12[%c32_64, %c0_65] : memref<64x512xf32, #tpu.memory_space<vmem>>, vector<8x512xf32>
    %232 = arith.truncf %202 : vector<8x128xf32> to vector<8x128xbf16>
    %c0_66 = arith.constant 0 : index
    %c0_67 = arith.constant 0 : index
    %233 = vector.load %arg2[%c0_66, %c0_67] : memref<128x512xbf16, #tpu.memory_space<vmem>>, vector<128x512xbf16>
    %cst_68 = arith.constant dense<0.000000e+00> : vector<8x512xf32>
    %234 = tpu.matmul %232, %233, %cst_68 {dimension_numbers = #tpu.dot_dimension_numbers<[1], [0], [0], [1], [0, 0, 1, 1], [], []>} : vector<8x128xbf16>, vector<128x512xbf16>, vector<8x512xf32> -> vector<8x512xf32>
    %235 = arith.addf %231, %234 : vector<8x512xf32>
    %236 = vector.extract_strided_slice %235 {offsets = [0, 0], sizes = [8, 256], strides = [1, 1]} : vector<8x512xf32> to vector<8x256xf32>
    %237 = arith.negf %236 : vector<8x256xf32>
    %238 = math.exp %237 : vector<8x256xf32>
    %cst_69 = arith.constant 1.000000e+00 : f32
    %239 = vector.broadcast %cst_69 : f32 to vector<8x256xf32>
    %240 = arith.addf %239, %238 : vector<8x256xf32>
    %241 = arith.divf %239, %240 : vector<8x256xf32>
    %242 = vector.extract_strided_slice %241 {offsets = [0, 0], sizes = [8, 128], strides = [1, 1]} : vector<8x256xf32> to vector<8x128xf32>
    %243 = vector.extract_strided_slice %241 {offsets = [0, 128], sizes = [8, 128], strides = [1, 1]} : vector<8x256xf32> to vector<8x128xf32>
    %244 = vector.extract_strided_slice %235 {offsets = [0, 256], sizes = [8, 128], strides = [1, 1]} : vector<8x512xf32> to vector<8x128xf32>
    %245 = math.tanh %244 : vector<8x128xf32>
    %246 = vector.extract_strided_slice %235 {offsets = [0, 384], sizes = [8, 128], strides = [1, 1]} : vector<8x512xf32> to vector<8x128xf32>
    %247 = arith.negf %246 : vector<8x128xf32>
    %248 = math.exp %247 : vector<8x128xf32>
    %cst_70 = arith.constant 1.000000e+00 : f32
    %249 = vector.broadcast %cst_70 : f32 to vector<8x128xf32>
    %250 = arith.addf %249, %248 : vector<8x128xf32>
    %251 = arith.divf %249, %250 : vector<8x128xf32>
    %252 = arith.mulf %243, %200 : vector<8x128xf32>
    %253 = arith.mulf %242, %245 : vector<8x128xf32>
    %254 = arith.addf %252, %253 : vector<8x128xf32>
    %255 = math.tanh %254 : vector<8x128xf32>
    %256 = arith.mulf %251, %255 : vector<8x128xf32>
    %257 = arith.addf %203, %256 : vector<8x128xf32>
    %c24_71 = arith.constant 24 : index
    %c0_72 = arith.constant 0 : index
    %258 = vector.load %arg13[%c24_71, %c0_72] : memref<64x512xf32, #tpu.memory_space<vmem>>, vector<8x512xf32>
    %259 = arith.truncf %229 : vector<8x128xf32> to vector<8x128xbf16>
    %c0_73 = arith.constant 0 : index
    %c0_74 = arith.constant 0 : index
    %260 = vector.load %arg5[%c0_73, %c0_74] : memref<128x512xbf16, #tpu.memory_space<vmem>>, vector<128x512xbf16>
    %cst_75 = arith.constant dense<0.000000e+00> : vector<8x512xf32>
    %261 = tpu.matmul %259, %260, %cst_75 {dimension_numbers = #tpu.dot_dimension_numbers<[1], [0], [0], [1], [0, 0, 1, 1], [], []>} : vector<8x128xbf16>, vector<128x512xbf16>, vector<8x512xf32> -> vector<8x512xf32>
    %262 = arith.addf %258, %261 : vector<8x512xf32>
    %263 = vector.extract_strided_slice %262 {offsets = [0, 0], sizes = [8, 256], strides = [1, 1]} : vector<8x512xf32> to vector<8x256xf32>
    %264 = arith.negf %263 : vector<8x256xf32>
    %265 = math.exp %264 : vector<8x256xf32>
    %cst_76 = arith.constant 1.000000e+00 : f32
    %266 = vector.broadcast %cst_76 : f32 to vector<8x256xf32>
    %267 = arith.addf %266, %265 : vector<8x256xf32>
    %268 = arith.divf %266, %267 : vector<8x256xf32>
    %269 = vector.extract_strided_slice %268 {offsets = [0, 0], sizes = [8, 128], strides = [1, 1]} : vector<8x256xf32> to vector<8x128xf32>
    %270 = vector.extract_strided_slice %268 {offsets = [0, 128], sizes = [8, 128], strides = [1, 1]} : vector<8x256xf32> to vector<8x128xf32>
    %271 = vector.extract_strided_slice %262 {offsets = [0, 256], sizes = [8, 128], strides = [1, 1]} : vector<8x512xf32> to vector<8x128xf32>
    %272 = math.tanh %271 : vector<8x128xf32>
    %273 = vector.extract_strided_slice %262 {offsets = [0, 384], sizes = [8, 128], strides = [1, 1]} : vector<8x512xf32> to vector<8x128xf32>
    %274 = arith.negf %273 : vector<8x128xf32>
    %275 = math.exp %274 : vector<8x128xf32>
    %cst_77 = arith.constant 1.000000e+00 : f32
    %276 = vector.broadcast %cst_77 : f32 to vector<8x128xf32>
    %277 = arith.addf %276, %275 : vector<8x128xf32>
    %278 = arith.divf %276, %277 : vector<8x128xf32>
    %279 = arith.mulf %270, %227 : vector<8x128xf32>
    %280 = arith.mulf %269, %272 : vector<8x128xf32>
    %281 = arith.addf %279, %280 : vector<8x128xf32>
    %282 = math.tanh %281 : vector<8x128xf32>
    %283 = arith.mulf %278, %282 : vector<8x128xf32>
    %284 = arith.addf %230, %283 : vector<8x128xf32>
    %c40_78 = arith.constant 40 : index
    %c0_79 = arith.constant 0 : index
    %285 = vector.load %arg12[%c40_78, %c0_79] : memref<64x512xf32, #tpu.memory_space<vmem>>, vector<8x512xf32>
    %286 = arith.truncf %256 : vector<8x128xf32> to vector<8x128xbf16>
    %c0_80 = arith.constant 0 : index
    %c0_81 = arith.constant 0 : index
    %287 = vector.load %arg2[%c0_80, %c0_81] : memref<128x512xbf16, #tpu.memory_space<vmem>>, vector<128x512xbf16>
    %cst_82 = arith.constant dense<0.000000e+00> : vector<8x512xf32>
    %288 = tpu.matmul %286, %287, %cst_82 {dimension_numbers = #tpu.dot_dimension_numbers<[1], [0], [0], [1], [0, 0, 1, 1], [], []>} : vector<8x128xbf16>, vector<128x512xbf16>, vector<8x512xf32> -> vector<8x512xf32>
    %289 = arith.addf %285, %288 : vector<8x512xf32>
    %290 = vector.extract_strided_slice %289 {offsets = [0, 0], sizes = [8, 256], strides = [1, 1]} : vector<8x512xf32> to vector<8x256xf32>
    %291 = arith.negf %290 : vector<8x256xf32>
    %292 = math.exp %291 : vector<8x256xf32>
    %cst_83 = arith.constant 1.000000e+00 : f32
    %293 = vector.broadcast %cst_83 : f32 to vector<8x256xf32>
    %294 = arith.addf %293, %292 : vector<8x256xf32>
    %295 = arith.divf %293, %294 : vector<8x256xf32>
    %296 = vector.extract_strided_slice %295 {offsets = [0, 0], sizes = [8, 128], strides = [1, 1]} : vector<8x256xf32> to vector<8x128xf32>
    %297 = vector.extract_strided_slice %295 {offsets = [0, 128], sizes = [8, 128], strides = [1, 1]} : vector<8x256xf32> to vector<8x128xf32>
    %298 = vector.extract_strided_slice %289 {offsets = [0, 256], sizes = [8, 128], strides = [1, 1]} : vector<8x512xf32> to vector<8x128xf32>
    %299 = math.tanh %298 : vector<8x128xf32>
    %300 = vector.extract_strided_slice %289 {offsets = [0, 384], sizes = [8, 128], strides = [1, 1]} : vector<8x512xf32> to vector<8x128xf32>
    %301 = arith.negf %300 : vector<8x128xf32>
    %302 = math.exp %301 : vector<8x128xf32>
    %cst_84 = arith.constant 1.000000e+00 : f32
    %303 = vector.broadcast %cst_84 : f32 to vector<8x128xf32>
    %304 = arith.addf %303, %302 : vector<8x128xf32>
    %305 = arith.divf %303, %304 : vector<8x128xf32>
    %306 = arith.mulf %297, %254 : vector<8x128xf32>
    %307 = arith.mulf %296, %299 : vector<8x128xf32>
    %308 = arith.addf %306, %307 : vector<8x128xf32>
    %309 = math.tanh %308 : vector<8x128xf32>
    %310 = arith.mulf %305, %309 : vector<8x128xf32>
    %311 = arith.addf %257, %310 : vector<8x128xf32>
    %c16_85 = arith.constant 16 : index
    %c0_86 = arith.constant 0 : index
    %312 = vector.load %arg13[%c16_85, %c0_86] : memref<64x512xf32, #tpu.memory_space<vmem>>, vector<8x512xf32>
    %313 = arith.truncf %283 : vector<8x128xf32> to vector<8x128xbf16>
    %c0_87 = arith.constant 0 : index
    %c0_88 = arith.constant 0 : index
    %314 = vector.load %arg5[%c0_87, %c0_88] : memref<128x512xbf16, #tpu.memory_space<vmem>>, vector<128x512xbf16>
    %cst_89 = arith.constant dense<0.000000e+00> : vector<8x512xf32>
    %315 = tpu.matmul %313, %314, %cst_89 {dimension_numbers = #tpu.dot_dimension_numbers<[1], [0], [0], [1], [0, 0, 1, 1], [], []>} : vector<8x128xbf16>, vector<128x512xbf16>, vector<8x512xf32> -> vector<8x512xf32>
    %316 = arith.addf %312, %315 : vector<8x512xf32>
    %317 = vector.extract_strided_slice %316 {offsets = [0, 0], sizes = [8, 256], strides = [1, 1]} : vector<8x512xf32> to vector<8x256xf32>
    %318 = arith.negf %317 : vector<8x256xf32>
    %319 = math.exp %318 : vector<8x256xf32>
    %cst_90 = arith.constant 1.000000e+00 : f32
    %320 = vector.broadcast %cst_90 : f32 to vector<8x256xf32>
    %321 = arith.addf %320, %319 : vector<8x256xf32>
    %322 = arith.divf %320, %321 : vector<8x256xf32>
    %323 = vector.extract_strided_slice %322 {offsets = [0, 0], sizes = [8, 128], strides = [1, 1]} : vector<8x256xf32> to vector<8x128xf32>
    %324 = vector.extract_strided_slice %322 {offsets = [0, 128], sizes = [8, 128], strides = [1, 1]} : vector<8x256xf32> to vector<8x128xf32>
    %325 = vector.extract_strided_slice %316 {offsets = [0, 256], sizes = [8, 128], strides = [1, 1]} : vector<8x512xf32> to vector<8x128xf32>
    %326 = math.tanh %325 : vector<8x128xf32>
    %327 = vector.extract_strided_slice %316 {offsets = [0, 384], sizes = [8, 128], strides = [1, 1]} : vector<8x512xf32> to vector<8x128xf32>
    %328 = arith.negf %327 : vector<8x128xf32>
    %329 = math.exp %328 : vector<8x128xf32>
    %cst_91 = arith.constant 1.000000e+00 : f32
    %330 = vector.broadcast %cst_91 : f32 to vector<8x128xf32>
    %331 = arith.addf %330, %329 : vector<8x128xf32>
    %332 = arith.divf %330, %331 : vector<8x128xf32>
    %333 = arith.mulf %324, %281 : vector<8x128xf32>
    %334 = arith.mulf %323, %326 : vector<8x128xf32>
    %335 = arith.addf %333, %334 : vector<8x128xf32>
    %336 = math.tanh %335 : vector<8x128xf32>
    %337 = arith.mulf %332, %336 : vector<8x128xf32>
    %338 = arith.addf %284, %337 : vector<8x128xf32>
    %c48_92 = arith.constant 48 : index
    %c0_93 = arith.constant 0 : index
    %339 = vector.load %arg12[%c48_92, %c0_93] : memref<64x512xf32, #tpu.memory_space<vmem>>, vector<8x512xf32>
    %340 = arith.truncf %310 : vector<8x128xf32> to vector<8x128xbf16>
    %c0_94 = arith.constant 0 : index
    %c0_95 = arith.constant 0 : index
    %341 = vector.load %arg2[%c0_94, %c0_95] : memref<128x512xbf16, #tpu.memory_space<vmem>>, vector<128x512xbf16>
    %cst_96 = arith.constant dense<0.000000e+00> : vector<8x512xf32>
    %342 = tpu.matmul %340, %341, %cst_96 {dimension_numbers = #tpu.dot_dimension_numbers<[1], [0], [0], [1], [0, 0, 1, 1], [], []>} : vector<8x128xbf16>, vector<128x512xbf16>, vector<8x512xf32> -> vector<8x512xf32>
    %343 = arith.addf %339, %342 : vector<8x512xf32>
    %344 = vector.extract_strided_slice %343 {offsets = [0, 0], sizes = [8, 256], strides = [1, 1]} : vector<8x512xf32> to vector<8x256xf32>
    %345 = arith.negf %344 : vector<8x256xf32>
    %346 = math.exp %345 : vector<8x256xf32>
    %cst_97 = arith.constant 1.000000e+00 : f32
    %347 = vector.broadcast %cst_97 : f32 to vector<8x256xf32>
    %348 = arith.addf %347, %346 : vector<8x256xf32>
    %349 = arith.divf %347, %348 : vector<8x256xf32>
    %350 = vector.extract_strided_slice %349 {offsets = [0, 0], sizes = [8, 128], strides = [1, 1]} : vector<8x256xf32> to vector<8x128xf32>
    %351 = vector.extract_strided_slice %349 {offsets = [0, 128], sizes = [8, 128], strides = [1, 1]} : vector<8x256xf32> to vector<8x128xf32>
    %352 = vector.extract_strided_slice %343 {offsets = [0, 256], sizes = [8, 128], strides = [1, 1]} : vector<8x512xf32> to vector<8x128xf32>
    %353 = math.tanh %352 : vector<8x128xf32>
    %354 = vector.extract_strided_slice %343 {offsets = [0, 384], sizes = [8, 128], strides = [1, 1]} : vector<8x512xf32> to vector<8x128xf32>
    %355 = arith.negf %354 : vector<8x128xf32>
    %356 = math.exp %355 : vector<8x128xf32>
    %cst_98 = arith.constant 1.000000e+00 : f32
    %357 = vector.broadcast %cst_98 : f32 to vector<8x128xf32>
    %358 = arith.addf %357, %356 : vector<8x128xf32>
    %359 = arith.divf %357, %358 : vector<8x128xf32>
    %360 = arith.mulf %351, %308 : vector<8x128xf32>
    %361 = arith.mulf %350, %353 : vector<8x128xf32>
    %362 = arith.addf %360, %361 : vector<8x128xf32>
    %363 = math.tanh %362 : vector<8x128xf32>
    %364 = arith.mulf %359, %363 : vector<8x128xf32>
    %365 = arith.addf %311, %364 : vector<8x128xf32>
    %c8_99 = arith.constant 8 : index
    %c0_100 = arith.constant 0 : index
    %366 = vector.load %arg13[%c8_99, %c0_100] : memref<64x512xf32, #tpu.memory_space<vmem>>, vector<8x512xf32>
    %367 = arith.truncf %337 : vector<8x128xf32> to vector<8x128xbf16>
    %c0_101 = arith.constant 0 : index
    %c0_102 = arith.constant 0 : index
    %368 = vector.load %arg5[%c0_101, %c0_102] : memref<128x512xbf16, #tpu.memory_space<vmem>>, vector<128x512xbf16>
    %cst_103 = arith.constant dense<0.000000e+00> : vector<8x512xf32>
    %369 = tpu.matmul %367, %368, %cst_103 {dimension_numbers = #tpu.dot_dimension_numbers<[1], [0], [0], [1], [0, 0, 1, 1], [], []>} : vector<8x128xbf16>, vector<128x512xbf16>, vector<8x512xf32> -> vector<8x512xf32>
    %370 = arith.addf %366, %369 : vector<8x512xf32>
    %371 = vector.extract_strided_slice %370 {offsets = [0, 0], sizes = [8, 256], strides = [1, 1]} : vector<8x512xf32> to vector<8x256xf32>
    %372 = arith.negf %371 : vector<8x256xf32>
    %373 = math.exp %372 : vector<8x256xf32>
    %cst_104 = arith.constant 1.000000e+00 : f32
    %374 = vector.broadcast %cst_104 : f32 to vector<8x256xf32>
    %375 = arith.addf %374, %373 : vector<8x256xf32>
    %376 = arith.divf %374, %375 : vector<8x256xf32>
    %377 = vector.extract_strided_slice %376 {offsets = [0, 0], sizes = [8, 128], strides = [1, 1]} : vector<8x256xf32> to vector<8x128xf32>
    %378 = vector.extract_strided_slice %376 {offsets = [0, 128], sizes = [8, 128], strides = [1, 1]} : vector<8x256xf32> to vector<8x128xf32>
    %379 = vector.extract_strided_slice %370 {offsets = [0, 256], sizes = [8, 128], strides = [1, 1]} : vector<8x512xf32> to vector<8x128xf32>
    %380 = math.tanh %379 : vector<8x128xf32>
    %381 = vector.extract_strided_slice %370 {offsets = [0, 384], sizes = [8, 128], strides = [1, 1]} : vector<8x512xf32> to vector<8x128xf32>
    %382 = arith.negf %381 : vector<8x128xf32>
    %383 = math.exp %382 : vector<8x128xf32>
    %cst_105 = arith.constant 1.000000e+00 : f32
    %384 = vector.broadcast %cst_105 : f32 to vector<8x128xf32>
    %385 = arith.addf %384, %383 : vector<8x128xf32>
    %386 = arith.divf %384, %385 : vector<8x128xf32>
    %387 = arith.mulf %378, %335 : vector<8x128xf32>
    %388 = arith.mulf %377, %380 : vector<8x128xf32>
    %389 = arith.addf %387, %388 : vector<8x128xf32>
    %390 = math.tanh %389 : vector<8x128xf32>
    %391 = arith.mulf %386, %390 : vector<8x128xf32>
    %392 = arith.addf %338, %391 : vector<8x128xf32>
    %c56_106 = arith.constant 56 : index
    %c0_107 = arith.constant 0 : index
    %393 = vector.load %arg12[%c56_106, %c0_107] : memref<64x512xf32, #tpu.memory_space<vmem>>, vector<8x512xf32>
    %394 = arith.truncf %364 : vector<8x128xf32> to vector<8x128xbf16>
    %c0_108 = arith.constant 0 : index
    %c0_109 = arith.constant 0 : index
    %395 = vector.load %arg2[%c0_108, %c0_109] : memref<128x512xbf16, #tpu.memory_space<vmem>>, vector<128x512xbf16>
    %cst_110 = arith.constant dense<0.000000e+00> : vector<8x512xf32>
    %396 = tpu.matmul %394, %395, %cst_110 {dimension_numbers = #tpu.dot_dimension_numbers<[1], [0], [0], [1], [0, 0, 1, 1], [], []>} : vector<8x128xbf16>, vector<128x512xbf16>, vector<8x512xf32> -> vector<8x512xf32>
    %397 = arith.addf %393, %396 : vector<8x512xf32>
    %398 = vector.extract_strided_slice %397 {offsets = [0, 0], sizes = [8, 256], strides = [1, 1]} : vector<8x512xf32> to vector<8x256xf32>
    %399 = arith.negf %398 : vector<8x256xf32>
    %400 = math.exp %399 : vector<8x256xf32>
    %cst_111 = arith.constant 1.000000e+00 : f32
    %401 = vector.broadcast %cst_111 : f32 to vector<8x256xf32>
    %402 = arith.addf %401, %400 : vector<8x256xf32>
    %403 = arith.divf %401, %402 : vector<8x256xf32>
    %404 = vector.extract_strided_slice %403 {offsets = [0, 0], sizes = [8, 128], strides = [1, 1]} : vector<8x256xf32> to vector<8x128xf32>
    %405 = vector.extract_strided_slice %403 {offsets = [0, 128], sizes = [8, 128], strides = [1, 1]} : vector<8x256xf32> to vector<8x128xf32>
    %406 = vector.extract_strided_slice %397 {offsets = [0, 256], sizes = [8, 128], strides = [1, 1]} : vector<8x512xf32> to vector<8x128xf32>
    %407 = math.tanh %406 : vector<8x128xf32>
    %408 = vector.extract_strided_slice %397 {offsets = [0, 384], sizes = [8, 128], strides = [1, 1]} : vector<8x512xf32> to vector<8x128xf32>
    %409 = arith.negf %408 : vector<8x128xf32>
    %410 = math.exp %409 : vector<8x128xf32>
    %cst_112 = arith.constant 1.000000e+00 : f32
    %411 = vector.broadcast %cst_112 : f32 to vector<8x128xf32>
    %412 = arith.addf %411, %410 : vector<8x128xf32>
    %413 = arith.divf %411, %412 : vector<8x128xf32>
    %414 = arith.mulf %405, %362 : vector<8x128xf32>
    %415 = arith.mulf %404, %407 : vector<8x128xf32>
    %416 = arith.addf %414, %415 : vector<8x128xf32>
    %417 = math.tanh %416 : vector<8x128xf32>
    %418 = arith.mulf %413, %417 : vector<8x128xf32>
    %419 = arith.addf %365, %418 : vector<8x128xf32>
    %c0_113 = arith.constant 0 : index
    %c0_114 = arith.constant 0 : index
    %420 = vector.load %arg13[%c0_113, %c0_114] : memref<64x512xf32, #tpu.memory_space<vmem>>, vector<8x512xf32>
    %421 = arith.truncf %391 : vector<8x128xf32> to vector<8x128xbf16>
    %c0_115 = arith.constant 0 : index
    %c0_116 = arith.constant 0 : index
    %422 = vector.load %arg5[%c0_115, %c0_116] : memref<128x512xbf16, #tpu.memory_space<vmem>>, vector<128x512xbf16>
    %cst_117 = arith.constant dense<0.000000e+00> : vector<8x512xf32>
    %423 = tpu.matmul %421, %422, %cst_117 {dimension_numbers = #tpu.dot_dimension_numbers<[1], [0], [0], [1], [0, 0, 1, 1], [], []>} : vector<8x128xbf16>, vector<128x512xbf16>, vector<8x512xf32> -> vector<8x512xf32>
    %424 = arith.addf %420, %423 : vector<8x512xf32>
    %425 = vector.extract_strided_slice %424 {offsets = [0, 0], sizes = [8, 256], strides = [1, 1]} : vector<8x512xf32> to vector<8x256xf32>
    %426 = arith.negf %425 : vector<8x256xf32>
    %427 = math.exp %426 : vector<8x256xf32>
    %cst_118 = arith.constant 1.000000e+00 : f32
    %428 = vector.broadcast %cst_118 : f32 to vector<8x256xf32>
    %429 = arith.addf %428, %427 : vector<8x256xf32>
    %430 = arith.divf %428, %429 : vector<8x256xf32>
    %431 = vector.extract_strided_slice %430 {offsets = [0, 0], sizes = [8, 128], strides = [1, 1]} : vector<8x256xf32> to vector<8x128xf32>
    %432 = vector.extract_strided_slice %430 {offsets = [0, 128], sizes = [8, 128], strides = [1, 1]} : vector<8x256xf32> to vector<8x128xf32>
    %433 = vector.extract_strided_slice %424 {offsets = [0, 256], sizes = [8, 128], strides = [1, 1]} : vector<8x512xf32> to vector<8x128xf32>
    %434 = math.tanh %433 : vector<8x128xf32>
    %435 = vector.extract_strided_slice %424 {offsets = [0, 384], sizes = [8, 128], strides = [1, 1]} : vector<8x512xf32> to vector<8x128xf32>
    %436 = arith.negf %435 : vector<8x128xf32>
    %437 = math.exp %436 : vector<8x128xf32>
    %cst_119 = arith.constant 1.000000e+00 : f32
    %438 = vector.broadcast %cst_119 : f32 to vector<8x128xf32>
    %439 = arith.addf %438, %437 : vector<8x128xf32>
    %440 = arith.divf %438, %439 : vector<8x128xf32>
    %441 = arith.mulf %432, %389 : vector<8x128xf32>
    %442 = arith.mulf %431, %434 : vector<8x128xf32>
    %443 = arith.addf %441, %442 : vector<8x128xf32>
    %444 = math.tanh %443 : vector<8x128xf32>
    %445 = arith.mulf %440, %444 : vector<8x128xf32>
    %446 = arith.addf %392, %445 : vector<8x128xf32>
    %447 = tpu.concatenate %419, %446 in 1 : vector<8x128xf32>, vector<8x128xf32> -> vector<8x256xf32>
    %cst_120 = arith.constant 1.250000e-01 : f32
    %448 = vector.broadcast %cst_120 : f32 to vector<8x256xf32>
    %449 = arith.mulf %447, %448 : vector<8x256xf32>
    %c0_121 = arith.constant 0 : index
    %c0_122 = arith.constant 0 : index
    %450 = vector.load %arg7[%c0_121, %c0_122] : memref<256x128xf32, #tpu.memory_space<vmem>>, vector<256x128xf32>
    %cst_123 = arith.constant dense<0.000000e+00> : vector<8x128xf32>
    %451 = tpu.matmul %449, %450, %cst_123 {dimension_numbers = #tpu.dot_dimension_numbers<[1], [0], [0], [1], [0, 0, 1, 1], [], []>} : vector<8x256xf32>, vector<256x128xf32>, vector<8x128xf32> -> vector<8x128xf32>
    %c0_124 = arith.constant 0 : index
    %c0_125 = arith.constant 0 : index
    %452 = vector.load %arg8[%c0_124, %c0_125] : memref<1x128xf32, #tpu.memory_space<vmem>>, vector<1x128xf32>
    %453 = vector.broadcast %452 : vector<1x128xf32> to vector<8x128xf32>
    %454 = arith.addf %451, %453 : vector<8x128xf32>
    %cst_126 = arith.constant 0.000000e+00 : f32
    %455 = vector.broadcast %cst_126 : f32 to vector<8x128xf32>
    %456 = arith.cmpf oge, %454, %455 : vector<8x128xf32>
    %cst_127 = arith.constant 2.000000e-01 : f32
    %457 = vector.broadcast %cst_127 : f32 to vector<8x128xf32>
    %458 = arith.mulf %457, %454 : vector<8x128xf32>
    %459 = arith.select %456, %454, %458 : vector<8x128xi1>, vector<8x128xf32>
    %c0_128 = arith.constant 0 : index
    %c0_129 = arith.constant 0 : index
    %460 = vector.load %arg9[%c0_128, %c0_129] : memref<128x128xf32, #tpu.memory_space<vmem>>, vector<128x128xf32>
    %cst_130 = arith.constant dense<0.000000e+00> : vector<8x128xf32>
    %461 = tpu.matmul %459, %460, %cst_130 {dimension_numbers = #tpu.dot_dimension_numbers<[1], [0], [0], [1], [0, 0, 1, 1], [], []>} : vector<8x128xf32>, vector<128x128xf32>, vector<8x128xf32> -> vector<8x128xf32>
    %c0_131 = arith.constant 0 : index
    %c0_132 = arith.constant 0 : index
    %462 = vector.load %arg10[%c0_131, %c0_132] : memref<1x128xf32, #tpu.memory_space<vmem>>, vector<1x128xf32>
    %463 = vector.broadcast %462 : vector<1x128xf32> to vector<8x128xf32>
    %464 = arith.addf %461, %463 : vector<8x128xf32>
    %c0_133 = arith.constant 0 : index
    %c0_134 = arith.constant 0 : index
    %465 = vector.load %arg11[%c0_133, %c0_134] : memref<8x128xf32, #tpu.memory_space<vmem>>, vector<8x128xf32>
    tpu.vector_store %arg11[%c0_133, %c0_134], %464 {strides = array<i32>} : memref<8x128xf32, #tpu.memory_space<vmem>>, vector<8x128xf32>,
    return
  }
}

module attributes {stable_mosaic.version = 11 : i64} {
  func.func @kernel(%arg0: memref<64x128xbf16, #tpu.memory_space<vmem>>, %arg1: memref<128x512xbf16, #tpu.memory_space<vmem>>, %arg2: memref<128x512xbf16, #tpu.memory_space<vmem>>, %arg3: memref<1x512xf32, #tpu.memory_space<vmem>>, %arg4: memref<128x512xbf16, #tpu.memory_space<vmem>>, %arg5: memref<128x512xbf16, #tpu.memory_space<vmem>>, %arg6: memref<1x512xf32, #tpu.memory_space<vmem>>, %arg7: memref<64x256xf32, #tpu.memory_space<vmem>>, %arg8: memref<64x512xf32, #tpu.memory_space<vmem>>, %arg9: memref<64x512xf32, #tpu.memory_space<vmem>>) attributes {dimension_semantics = [], scalar_prefetch = 0 : i64, scratch_operands = 2 : i64, tpu.core_type = #tpu.core_type<tc>} {
    %c0 = arith.constant 0 : index
    %c0_0 = arith.constant 0 : index
    %0 = vector.load %arg0[%c0, %c0_0] : memref<64x128xbf16, #tpu.memory_space<vmem>>, vector<64x128xbf16>
    %c0_1 = arith.constant 0 : index
    %c0_2 = arith.constant 0 : index
    %1 = vector.load %arg1[%c0_1, %c0_2] : memref<128x512xbf16, #tpu.memory_space<vmem>>, vector<128x512xbf16>
    %cst = arith.constant dense<0.000000e+00> : vector<64x512xf32>
    %2 = tpu.matmul %0, %1, %cst {dimension_numbers = #tpu.dot_dimension_numbers<[1], [0], [0], [1], [0, 0, 1, 1], [], []>} : vector<64x128xbf16>, vector<128x512xbf16>, vector<64x512xf32> -> vector<64x512xf32>
    %c0_3 = arith.constant 0 : index
    %c0_4 = arith.constant 0 : index
    %3 = vector.load %arg3[%c0_3, %c0_4] : memref<1x512xf32, #tpu.memory_space<vmem>>, vector<1x512xf32>
    %4 = vector.broadcast %3 : vector<1x512xf32> to vector<64x512xf32>
    %5 = arith.addf %2, %4 : vector<64x512xf32>
    %c0_5 = arith.constant 0 : index
    %c0_6 = arith.constant 0 : index
    %6 = vector.load %arg8[%c0_5, %c0_6] : memref<64x512xf32, #tpu.memory_space<vmem>>, vector<64x512xf32>
    tpu.vector_store %arg8[%c0_5, %c0_6], %5 {strides = array<i32>} : memref<64x512xf32, #tpu.memory_space<vmem>>, vector<64x512xf32>,
    %c0_7 = arith.constant 0 : index
    %c0_8 = arith.constant 0 : index
    %7 = vector.load %arg4[%c0_7, %c0_8] : memref<128x512xbf16, #tpu.memory_space<vmem>>, vector<128x512xbf16>
    %cst_9 = arith.constant dense<0.000000e+00> : vector<64x512xf32>
    %8 = tpu.matmul %0, %7, %cst_9 {dimension_numbers = #tpu.dot_dimension_numbers<[1], [0], [0], [1], [0, 0, 1, 1], [], []>} : vector<64x128xbf16>, vector<128x512xbf16>, vector<64x512xf32> -> vector<64x512xf32>
    %c0_10 = arith.constant 0 : index
    %c0_11 = arith.constant 0 : index
    %9 = vector.load %arg6[%c0_10, %c0_11] : memref<1x512xf32, #tpu.memory_space<vmem>>, vector<1x512xf32>
    %10 = vector.broadcast %9 : vector<1x512xf32> to vector<64x512xf32>
    %11 = arith.addf %8, %10 : vector<64x512xf32>
    %c0_12 = arith.constant 0 : index
    %c0_13 = arith.constant 0 : index
    %12 = vector.load %arg9[%c0_12, %c0_13] : memref<64x512xf32, #tpu.memory_space<vmem>>, vector<64x512xf32>
    tpu.vector_store %arg9[%c0_12, %c0_13], %11 {strides = array<i32>} : memref<64x512xf32, #tpu.memory_space<vmem>>, vector<64x512xf32>,
    %cst_14 = arith.constant 0.000000e+00 : f32
    %13 = vector.broadcast %cst_14 : f32 to vector<8x128xf32>
    %c0_15 = arith.constant 0 : index
    %c0_16 = arith.constant 0 : index
    %14 = vector.load %arg8[%c0_15, %c0_16] : memref<64x512xf32, #tpu.memory_space<vmem>>, vector<8x512xf32>
    %15 = arith.truncf %13 : vector<8x128xf32> to vector<8x128xbf16>
    %c0_17 = arith.constant 0 : index
    %c0_18 = arith.constant 0 : index
    %16 = vector.load %arg2[%c0_17, %c0_18] : memref<128x512xbf16, #tpu.memory_space<vmem>>, vector<128x512xbf16>
    %cst_19 = arith.constant dense<0.000000e+00> : vector<8x512xf32>
    %17 = tpu.matmul %15, %16, %cst_19 {dimension_numbers = #tpu.dot_dimension_numbers<[1], [0], [0], [1], [0, 0, 1, 1], [], []>} : vector<8x128xbf16>, vector<128x512xbf16>, vector<8x512xf32> -> vector<8x512xf32>
    %18 = arith.addf %14, %17 : vector<8x512xf32>
    %19 = vector.extract_strided_slice %18 {offsets = [0, 0], sizes = [8, 256], strides = [1, 1]} : vector<8x512xf32> to vector<8x256xf32>
    %20 = arith.negf %19 : vector<8x256xf32>
    %21 = math.exp %20 : vector<8x256xf32>
    %cst_20 = arith.constant 1.000000e+00 : f32
    %22 = vector.broadcast %cst_20 : f32 to vector<8x256xf32>
    %23 = arith.addf %22, %21 : vector<8x256xf32>
    %24 = arith.divf %22, %23 : vector<8x256xf32>
    %25 = vector.extract_strided_slice %24 {offsets = [0, 0], sizes = [8, 128], strides = [1, 1]} : vector<8x256xf32> to vector<8x128xf32>
    %26 = vector.extract_strided_slice %24 {offsets = [0, 128], sizes = [8, 128], strides = [1, 1]} : vector<8x256xf32> to vector<8x128xf32>
    %27 = vector.extract_strided_slice %18 {offsets = [0, 256], sizes = [8, 128], strides = [1, 1]} : vector<8x512xf32> to vector<8x128xf32>
    %28 = math.tanh %27 : vector<8x128xf32>
    %29 = vector.extract_strided_slice %18 {offsets = [0, 384], sizes = [8, 128], strides = [1, 1]} : vector<8x512xf32> to vector<8x128xf32>
    %30 = arith.negf %29 : vector<8x128xf32>
    %31 = math.exp %30 : vector<8x128xf32>
    %cst_21 = arith.constant 1.000000e+00 : f32
    %32 = vector.broadcast %cst_21 : f32 to vector<8x128xf32>
    %33 = arith.addf %32, %31 : vector<8x128xf32>
    %34 = arith.divf %32, %33 : vector<8x128xf32>
    %35 = arith.mulf %26, %13 : vector<8x128xf32>
    %36 = arith.mulf %25, %28 : vector<8x128xf32>
    %37 = arith.addf %35, %36 : vector<8x128xf32>
    %38 = math.tanh %37 : vector<8x128xf32>
    %39 = arith.mulf %34, %38 : vector<8x128xf32>
    %c0_22 = arith.constant 0 : index
    %c0_23 = arith.constant 0 : index
    %40 = vector.load %arg7[%c0_22, %c0_23] : memref<64x256xf32, #tpu.memory_space<vmem>>, vector<8x128xf32>
    tpu.vector_store %arg7[%c0_22, %c0_23], %39 {strides = array<i32>} : memref<64x256xf32, #tpu.memory_space<vmem>>, vector<8x128xf32>,
    %c56 = arith.constant 56 : index
    %c0_24 = arith.constant 0 : index
    %41 = vector.load %arg9[%c56, %c0_24] : memref<64x512xf32, #tpu.memory_space<vmem>>, vector<8x512xf32>
    %42 = arith.truncf %13 : vector<8x128xf32> to vector<8x128xbf16>
    %c0_25 = arith.constant 0 : index
    %c0_26 = arith.constant 0 : index
    %43 = vector.load %arg5[%c0_25, %c0_26] : memref<128x512xbf16, #tpu.memory_space<vmem>>, vector<128x512xbf16>
    %cst_27 = arith.constant dense<0.000000e+00> : vector<8x512xf32>
    %44 = tpu.matmul %42, %43, %cst_27 {dimension_numbers = #tpu.dot_dimension_numbers<[1], [0], [0], [1], [0, 0, 1, 1], [], []>} : vector<8x128xbf16>, vector<128x512xbf16>, vector<8x512xf32> -> vector<8x512xf32>
    %45 = arith.addf %41, %44 : vector<8x512xf32>
    %46 = vector.extract_strided_slice %45 {offsets = [0, 0], sizes = [8, 256], strides = [1, 1]} : vector<8x512xf32> to vector<8x256xf32>
    %47 = arith.negf %46 : vector<8x256xf32>
    %48 = math.exp %47 : vector<8x256xf32>
    %cst_28 = arith.constant 1.000000e+00 : f32
    %49 = vector.broadcast %cst_28 : f32 to vector<8x256xf32>
    %50 = arith.addf %49, %48 : vector<8x256xf32>
    %51 = arith.divf %49, %50 : vector<8x256xf32>
    %52 = vector.extract_strided_slice %51 {offsets = [0, 0], sizes = [8, 128], strides = [1, 1]} : vector<8x256xf32> to vector<8x128xf32>
    %53 = vector.extract_strided_slice %51 {offsets = [0, 128], sizes = [8, 128], strides = [1, 1]} : vector<8x256xf32> to vector<8x128xf32>
    %54 = vector.extract_strided_slice %45 {offsets = [0, 256], sizes = [8, 128], strides = [1, 1]} : vector<8x512xf32> to vector<8x128xf32>
    %55 = math.tanh %54 : vector<8x128xf32>
    %56 = vector.extract_strided_slice %45 {offsets = [0, 384], sizes = [8, 128], strides = [1, 1]} : vector<8x512xf32> to vector<8x128xf32>
    %57 = arith.negf %56 : vector<8x128xf32>
    %58 = math.exp %57 : vector<8x128xf32>
    %cst_29 = arith.constant 1.000000e+00 : f32
    %59 = vector.broadcast %cst_29 : f32 to vector<8x128xf32>
    %60 = arith.addf %59, %58 : vector<8x128xf32>
    %61 = arith.divf %59, %60 : vector<8x128xf32>
    %62 = arith.mulf %53, %13 : vector<8x128xf32>
    %63 = arith.mulf %52, %55 : vector<8x128xf32>
    %64 = arith.addf %62, %63 : vector<8x128xf32>
    %65 = math.tanh %64 : vector<8x128xf32>
    %66 = arith.mulf %61, %65 : vector<8x128xf32>
    %c56_30 = arith.constant 56 : index
    %c128 = arith.constant 128 : index
    %67 = vector.load %arg7[%c56_30, %c128] : memref<64x256xf32, #tpu.memory_space<vmem>>, vector<8x128xf32>
    tpu.vector_store %arg7[%c56_30, %c128], %66 {strides = array<i32>} : memref<64x256xf32, #tpu.memory_space<vmem>>, vector<8x128xf32>,
    %c8 = arith.constant 8 : index
    %c0_31 = arith.constant 0 : index
    %68 = vector.load %arg8[%c8, %c0_31] : memref<64x512xf32, #tpu.memory_space<vmem>>, vector<8x512xf32>
    %69 = arith.truncf %39 : vector<8x128xf32> to vector<8x128xbf16>
    %c0_32 = arith.constant 0 : index
    %c0_33 = arith.constant 0 : index
    %70 = vector.load %arg2[%c0_32, %c0_33] : memref<128x512xbf16, #tpu.memory_space<vmem>>, vector<128x512xbf16>
    %cst_34 = arith.constant dense<0.000000e+00> : vector<8x512xf32>
    %71 = tpu.matmul %69, %70, %cst_34 {dimension_numbers = #tpu.dot_dimension_numbers<[1], [0], [0], [1], [0, 0, 1, 1], [], []>} : vector<8x128xbf16>, vector<128x512xbf16>, vector<8x512xf32> -> vector<8x512xf32>
    %72 = arith.addf %68, %71 : vector<8x512xf32>
    %73 = vector.extract_strided_slice %72 {offsets = [0, 0], sizes = [8, 256], strides = [1, 1]} : vector<8x512xf32> to vector<8x256xf32>
    %74 = arith.negf %73 : vector<8x256xf32>
    %75 = math.exp %74 : vector<8x256xf32>
    %cst_35 = arith.constant 1.000000e+00 : f32
    %76 = vector.broadcast %cst_35 : f32 to vector<8x256xf32>
    %77 = arith.addf %76, %75 : vector<8x256xf32>
    %78 = arith.divf %76, %77 : vector<8x256xf32>
    %79 = vector.extract_strided_slice %78 {offsets = [0, 0], sizes = [8, 128], strides = [1, 1]} : vector<8x256xf32> to vector<8x128xf32>
    %80 = vector.extract_strided_slice %78 {offsets = [0, 128], sizes = [8, 128], strides = [1, 1]} : vector<8x256xf32> to vector<8x128xf32>
    %81 = vector.extract_strided_slice %72 {offsets = [0, 256], sizes = [8, 128], strides = [1, 1]} : vector<8x512xf32> to vector<8x128xf32>
    %82 = math.tanh %81 : vector<8x128xf32>
    %83 = vector.extract_strided_slice %72 {offsets = [0, 384], sizes = [8, 128], strides = [1, 1]} : vector<8x512xf32> to vector<8x128xf32>
    %84 = arith.negf %83 : vector<8x128xf32>
    %85 = math.exp %84 : vector<8x128xf32>
    %cst_36 = arith.constant 1.000000e+00 : f32
    %86 = vector.broadcast %cst_36 : f32 to vector<8x128xf32>
    %87 = arith.addf %86, %85 : vector<8x128xf32>
    %88 = arith.divf %86, %87 : vector<8x128xf32>
    %89 = arith.mulf %80, %37 : vector<8x128xf32>
    %90 = arith.mulf %79, %82 : vector<8x128xf32>
    %91 = arith.addf %89, %90 : vector<8x128xf32>
    %92 = math.tanh %91 : vector<8x128xf32>
    %93 = arith.mulf %88, %92 : vector<8x128xf32>
    %c8_37 = arith.constant 8 : index
    %c0_38 = arith.constant 0 : index
    %94 = vector.load %arg7[%c8_37, %c0_38] : memref<64x256xf32, #tpu.memory_space<vmem>>, vector<8x128xf32>
    tpu.vector_store %arg7[%c8_37, %c0_38], %93 {strides = array<i32>} : memref<64x256xf32, #tpu.memory_space<vmem>>, vector<8x128xf32>,
    %c48 = arith.constant 48 : index
    %c0_39 = arith.constant 0 : index
    %95 = vector.load %arg9[%c48, %c0_39] : memref<64x512xf32, #tpu.memory_space<vmem>>, vector<8x512xf32>
    %96 = arith.truncf %66 : vector<8x128xf32> to vector<8x128xbf16>
    %c0_40 = arith.constant 0 : index
    %c0_41 = arith.constant 0 : index
    %97 = vector.load %arg5[%c0_40, %c0_41] : memref<128x512xbf16, #tpu.memory_space<vmem>>, vector<128x512xbf16>
    %cst_42 = arith.constant dense<0.000000e+00> : vector<8x512xf32>
    %98 = tpu.matmul %96, %97, %cst_42 {dimension_numbers = #tpu.dot_dimension_numbers<[1], [0], [0], [1], [0, 0, 1, 1], [], []>} : vector<8x128xbf16>, vector<128x512xbf16>, vector<8x512xf32> -> vector<8x512xf32>
    %99 = arith.addf %95, %98 : vector<8x512xf32>
    %100 = vector.extract_strided_slice %99 {offsets = [0, 0], sizes = [8, 256], strides = [1, 1]} : vector<8x512xf32> to vector<8x256xf32>
    %101 = arith.negf %100 : vector<8x256xf32>
    %102 = math.exp %101 : vector<8x256xf32>
    %cst_43 = arith.constant 1.000000e+00 : f32
    %103 = vector.broadcast %cst_43 : f32 to vector<8x256xf32>
    %104 = arith.addf %103, %102 : vector<8x256xf32>
    %105 = arith.divf %103, %104 : vector<8x256xf32>
    %106 = vector.extract_strided_slice %105 {offsets = [0, 0], sizes = [8, 128], strides = [1, 1]} : vector<8x256xf32> to vector<8x128xf32>
    %107 = vector.extract_strided_slice %105 {offsets = [0, 128], sizes = [8, 128], strides = [1, 1]} : vector<8x256xf32> to vector<8x128xf32>
    %108 = vector.extract_strided_slice %99 {offsets = [0, 256], sizes = [8, 128], strides = [1, 1]} : vector<8x512xf32> to vector<8x128xf32>
    %109 = math.tanh %108 : vector<8x128xf32>
    %110 = vector.extract_strided_slice %99 {offsets = [0, 384], sizes = [8, 128], strides = [1, 1]} : vector<8x512xf32> to vector<8x128xf32>
    %111 = arith.negf %110 : vector<8x128xf32>
    %112 = math.exp %111 : vector<8x128xf32>
    %cst_44 = arith.constant 1.000000e+00 : f32
    %113 = vector.broadcast %cst_44 : f32 to vector<8x128xf32>
    %114 = arith.addf %113, %112 : vector<8x128xf32>
    %115 = arith.divf %113, %114 : vector<8x128xf32>
    %116 = arith.mulf %107, %64 : vector<8x128xf32>
    %117 = arith.mulf %106, %109 : vector<8x128xf32>
    %118 = arith.addf %116, %117 : vector<8x128xf32>
    %119 = math.tanh %118 : vector<8x128xf32>
    %120 = arith.mulf %115, %119 : vector<8x128xf32>
    %c48_45 = arith.constant 48 : index
    %c128_46 = arith.constant 128 : index
    %121 = vector.load %arg7[%c48_45, %c128_46] : memref<64x256xf32, #tpu.memory_space<vmem>>, vector<8x128xf32>
    tpu.vector_store %arg7[%c48_45, %c128_46], %120 {strides = array<i32>} : memref<64x256xf32, #tpu.memory_space<vmem>>, vector<8x128xf32>,
    %c16 = arith.constant 16 : index
    %c0_47 = arith.constant 0 : index
    %122 = vector.load %arg8[%c16, %c0_47] : memref<64x512xf32, #tpu.memory_space<vmem>>, vector<8x512xf32>
    %123 = arith.truncf %93 : vector<8x128xf32> to vector<8x128xbf16>
    %c0_48 = arith.constant 0 : index
    %c0_49 = arith.constant 0 : index
    %124 = vector.load %arg2[%c0_48, %c0_49] : memref<128x512xbf16, #tpu.memory_space<vmem>>, vector<128x512xbf16>
    %cst_50 = arith.constant dense<0.000000e+00> : vector<8x512xf32>
    %125 = tpu.matmul %123, %124, %cst_50 {dimension_numbers = #tpu.dot_dimension_numbers<[1], [0], [0], [1], [0, 0, 1, 1], [], []>} : vector<8x128xbf16>, vector<128x512xbf16>, vector<8x512xf32> -> vector<8x512xf32>
    %126 = arith.addf %122, %125 : vector<8x512xf32>
    %127 = vector.extract_strided_slice %126 {offsets = [0, 0], sizes = [8, 256], strides = [1, 1]} : vector<8x512xf32> to vector<8x256xf32>
    %128 = arith.negf %127 : vector<8x256xf32>
    %129 = math.exp %128 : vector<8x256xf32>
    %cst_51 = arith.constant 1.000000e+00 : f32
    %130 = vector.broadcast %cst_51 : f32 to vector<8x256xf32>
    %131 = arith.addf %130, %129 : vector<8x256xf32>
    %132 = arith.divf %130, %131 : vector<8x256xf32>
    %133 = vector.extract_strided_slice %132 {offsets = [0, 0], sizes = [8, 128], strides = [1, 1]} : vector<8x256xf32> to vector<8x128xf32>
    %134 = vector.extract_strided_slice %132 {offsets = [0, 128], sizes = [8, 128], strides = [1, 1]} : vector<8x256xf32> to vector<8x128xf32>
    %135 = vector.extract_strided_slice %126 {offsets = [0, 256], sizes = [8, 128], strides = [1, 1]} : vector<8x512xf32> to vector<8x128xf32>
    %136 = math.tanh %135 : vector<8x128xf32>
    %137 = vector.extract_strided_slice %126 {offsets = [0, 384], sizes = [8, 128], strides = [1, 1]} : vector<8x512xf32> to vector<8x128xf32>
    %138 = arith.negf %137 : vector<8x128xf32>
    %139 = math.exp %138 : vector<8x128xf32>
    %cst_52 = arith.constant 1.000000e+00 : f32
    %140 = vector.broadcast %cst_52 : f32 to vector<8x128xf32>
    %141 = arith.addf %140, %139 : vector<8x128xf32>
    %142 = arith.divf %140, %141 : vector<8x128xf32>
    %143 = arith.mulf %134, %91 : vector<8x128xf32>
    %144 = arith.mulf %133, %136 : vector<8x128xf32>
    %145 = arith.addf %143, %144 : vector<8x128xf32>
    %146 = math.tanh %145 : vector<8x128xf32>
    %147 = arith.mulf %142, %146 : vector<8x128xf32>
    %c16_53 = arith.constant 16 : index
    %c0_54 = arith.constant 0 : index
    %148 = vector.load %arg7[%c16_53, %c0_54] : memref<64x256xf32, #tpu.memory_space<vmem>>, vector<8x128xf32>
    tpu.vector_store %arg7[%c16_53, %c0_54], %147 {strides = array<i32>} : memref<64x256xf32, #tpu.memory_space<vmem>>, vector<8x128xf32>,
    %c40 = arith.constant 40 : index
    %c0_55 = arith.constant 0 : index
    %149 = vector.load %arg9[%c40, %c0_55] : memref<64x512xf32, #tpu.memory_space<vmem>>, vector<8x512xf32>
    %150 = arith.truncf %120 : vector<8x128xf32> to vector<8x128xbf16>
    %c0_56 = arith.constant 0 : index
    %c0_57 = arith.constant 0 : index
    %151 = vector.load %arg5[%c0_56, %c0_57] : memref<128x512xbf16, #tpu.memory_space<vmem>>, vector<128x512xbf16>
    %cst_58 = arith.constant dense<0.000000e+00> : vector<8x512xf32>
    %152 = tpu.matmul %150, %151, %cst_58 {dimension_numbers = #tpu.dot_dimension_numbers<[1], [0], [0], [1], [0, 0, 1, 1], [], []>} : vector<8x128xbf16>, vector<128x512xbf16>, vector<8x512xf32> -> vector<8x512xf32>
    %153 = arith.addf %149, %152 : vector<8x512xf32>
    %154 = vector.extract_strided_slice %153 {offsets = [0, 0], sizes = [8, 256], strides = [1, 1]} : vector<8x512xf32> to vector<8x256xf32>
    %155 = arith.negf %154 : vector<8x256xf32>
    %156 = math.exp %155 : vector<8x256xf32>
    %cst_59 = arith.constant 1.000000e+00 : f32
    %157 = vector.broadcast %cst_59 : f32 to vector<8x256xf32>
    %158 = arith.addf %157, %156 : vector<8x256xf32>
    %159 = arith.divf %157, %158 : vector<8x256xf32>
    %160 = vector.extract_strided_slice %159 {offsets = [0, 0], sizes = [8, 128], strides = [1, 1]} : vector<8x256xf32> to vector<8x128xf32>
    %161 = vector.extract_strided_slice %159 {offsets = [0, 128], sizes = [8, 128], strides = [1, 1]} : vector<8x256xf32> to vector<8x128xf32>
    %162 = vector.extract_strided_slice %153 {offsets = [0, 256], sizes = [8, 128], strides = [1, 1]} : vector<8x512xf32> to vector<8x128xf32>
    %163 = math.tanh %162 : vector<8x128xf32>
    %164 = vector.extract_strided_slice %153 {offsets = [0, 384], sizes = [8, 128], strides = [1, 1]} : vector<8x512xf32> to vector<8x128xf32>
    %165 = arith.negf %164 : vector<8x128xf32>
    %166 = math.exp %165 : vector<8x128xf32>
    %cst_60 = arith.constant 1.000000e+00 : f32
    %167 = vector.broadcast %cst_60 : f32 to vector<8x128xf32>
    %168 = arith.addf %167, %166 : vector<8x128xf32>
    %169 = arith.divf %167, %168 : vector<8x128xf32>
    %170 = arith.mulf %161, %118 : vector<8x128xf32>
    %171 = arith.mulf %160, %163 : vector<8x128xf32>
    %172 = arith.addf %170, %171 : vector<8x128xf32>
    %173 = math.tanh %172 : vector<8x128xf32>
    %174 = arith.mulf %169, %173 : vector<8x128xf32>
    %c40_61 = arith.constant 40 : index
    %c128_62 = arith.constant 128 : index
    %175 = vector.load %arg7[%c40_61, %c128_62] : memref<64x256xf32, #tpu.memory_space<vmem>>, vector<8x128xf32>
    tpu.vector_store %arg7[%c40_61, %c128_62], %174 {strides = array<i32>} : memref<64x256xf32, #tpu.memory_space<vmem>>, vector<8x128xf32>,
    %c24 = arith.constant 24 : index
    %c0_63 = arith.constant 0 : index
    %176 = vector.load %arg8[%c24, %c0_63] : memref<64x512xf32, #tpu.memory_space<vmem>>, vector<8x512xf32>
    %177 = arith.truncf %147 : vector<8x128xf32> to vector<8x128xbf16>
    %c0_64 = arith.constant 0 : index
    %c0_65 = arith.constant 0 : index
    %178 = vector.load %arg2[%c0_64, %c0_65] : memref<128x512xbf16, #tpu.memory_space<vmem>>, vector<128x512xbf16>
    %cst_66 = arith.constant dense<0.000000e+00> : vector<8x512xf32>
    %179 = tpu.matmul %177, %178, %cst_66 {dimension_numbers = #tpu.dot_dimension_numbers<[1], [0], [0], [1], [0, 0, 1, 1], [], []>} : vector<8x128xbf16>, vector<128x512xbf16>, vector<8x512xf32> -> vector<8x512xf32>
    %180 = arith.addf %176, %179 : vector<8x512xf32>
    %181 = vector.extract_strided_slice %180 {offsets = [0, 0], sizes = [8, 256], strides = [1, 1]} : vector<8x512xf32> to vector<8x256xf32>
    %182 = arith.negf %181 : vector<8x256xf32>
    %183 = math.exp %182 : vector<8x256xf32>
    %cst_67 = arith.constant 1.000000e+00 : f32
    %184 = vector.broadcast %cst_67 : f32 to vector<8x256xf32>
    %185 = arith.addf %184, %183 : vector<8x256xf32>
    %186 = arith.divf %184, %185 : vector<8x256xf32>
    %187 = vector.extract_strided_slice %186 {offsets = [0, 0], sizes = [8, 128], strides = [1, 1]} : vector<8x256xf32> to vector<8x128xf32>
    %188 = vector.extract_strided_slice %186 {offsets = [0, 128], sizes = [8, 128], strides = [1, 1]} : vector<8x256xf32> to vector<8x128xf32>
    %189 = vector.extract_strided_slice %180 {offsets = [0, 256], sizes = [8, 128], strides = [1, 1]} : vector<8x512xf32> to vector<8x128xf32>
    %190 = math.tanh %189 : vector<8x128xf32>
    %191 = vector.extract_strided_slice %180 {offsets = [0, 384], sizes = [8, 128], strides = [1, 1]} : vector<8x512xf32> to vector<8x128xf32>
    %192 = arith.negf %191 : vector<8x128xf32>
    %193 = math.exp %192 : vector<8x128xf32>
    %cst_68 = arith.constant 1.000000e+00 : f32
    %194 = vector.broadcast %cst_68 : f32 to vector<8x128xf32>
    %195 = arith.addf %194, %193 : vector<8x128xf32>
    %196 = arith.divf %194, %195 : vector<8x128xf32>
    %197 = arith.mulf %188, %145 : vector<8x128xf32>
    %198 = arith.mulf %187, %190 : vector<8x128xf32>
    %199 = arith.addf %197, %198 : vector<8x128xf32>
    %200 = math.tanh %199 : vector<8x128xf32>
    %201 = arith.mulf %196, %200 : vector<8x128xf32>
    %c24_69 = arith.constant 24 : index
    %c0_70 = arith.constant 0 : index
    %202 = vector.load %arg7[%c24_69, %c0_70] : memref<64x256xf32, #tpu.memory_space<vmem>>, vector<8x128xf32>
    tpu.vector_store %arg7[%c24_69, %c0_70], %201 {strides = array<i32>} : memref<64x256xf32, #tpu.memory_space<vmem>>, vector<8x128xf32>,
    %c32 = arith.constant 32 : index
    %c0_71 = arith.constant 0 : index
    %203 = vector.load %arg9[%c32, %c0_71] : memref<64x512xf32, #tpu.memory_space<vmem>>, vector<8x512xf32>
    %204 = arith.truncf %174 : vector<8x128xf32> to vector<8x128xbf16>
    %c0_72 = arith.constant 0 : index
    %c0_73 = arith.constant 0 : index
    %205 = vector.load %arg5[%c0_72, %c0_73] : memref<128x512xbf16, #tpu.memory_space<vmem>>, vector<128x512xbf16>
    %cst_74 = arith.constant dense<0.000000e+00> : vector<8x512xf32>
    %206 = tpu.matmul %204, %205, %cst_74 {dimension_numbers = #tpu.dot_dimension_numbers<[1], [0], [0], [1], [0, 0, 1, 1], [], []>} : vector<8x128xbf16>, vector<128x512xbf16>, vector<8x512xf32> -> vector<8x512xf32>
    %207 = arith.addf %203, %206 : vector<8x512xf32>
    %208 = vector.extract_strided_slice %207 {offsets = [0, 0], sizes = [8, 256], strides = [1, 1]} : vector<8x512xf32> to vector<8x256xf32>
    %209 = arith.negf %208 : vector<8x256xf32>
    %210 = math.exp %209 : vector<8x256xf32>
    %cst_75 = arith.constant 1.000000e+00 : f32
    %211 = vector.broadcast %cst_75 : f32 to vector<8x256xf32>
    %212 = arith.addf %211, %210 : vector<8x256xf32>
    %213 = arith.divf %211, %212 : vector<8x256xf32>
    %214 = vector.extract_strided_slice %213 {offsets = [0, 0], sizes = [8, 128], strides = [1, 1]} : vector<8x256xf32> to vector<8x128xf32>
    %215 = vector.extract_strided_slice %213 {offsets = [0, 128], sizes = [8, 128], strides = [1, 1]} : vector<8x256xf32> to vector<8x128xf32>
    %216 = vector.extract_strided_slice %207 {offsets = [0, 256], sizes = [8, 128], strides = [1, 1]} : vector<8x512xf32> to vector<8x128xf32>
    %217 = math.tanh %216 : vector<8x128xf32>
    %218 = vector.extract_strided_slice %207 {offsets = [0, 384], sizes = [8, 128], strides = [1, 1]} : vector<8x512xf32> to vector<8x128xf32>
    %219 = arith.negf %218 : vector<8x128xf32>
    %220 = math.exp %219 : vector<8x128xf32>
    %cst_76 = arith.constant 1.000000e+00 : f32
    %221 = vector.broadcast %cst_76 : f32 to vector<8x128xf32>
    %222 = arith.addf %221, %220 : vector<8x128xf32>
    %223 = arith.divf %221, %222 : vector<8x128xf32>
    %224 = arith.mulf %215, %172 : vector<8x128xf32>
    %225 = arith.mulf %214, %217 : vector<8x128xf32>
    %226 = arith.addf %224, %225 : vector<8x128xf32>
    %227 = math.tanh %226 : vector<8x128xf32>
    %228 = arith.mulf %223, %227 : vector<8x128xf32>
    %c32_77 = arith.constant 32 : index
    %c128_78 = arith.constant 128 : index
    %229 = vector.load %arg7[%c32_77, %c128_78] : memref<64x256xf32, #tpu.memory_space<vmem>>, vector<8x128xf32>
    tpu.vector_store %arg7[%c32_77, %c128_78], %228 {strides = array<i32>} : memref<64x256xf32, #tpu.memory_space<vmem>>, vector<8x128xf32>,
    %c32_79 = arith.constant 32 : index
    %c0_80 = arith.constant 0 : index
    %230 = vector.load %arg8[%c32_79, %c0_80] : memref<64x512xf32, #tpu.memory_space<vmem>>, vector<8x512xf32>
    %231 = arith.truncf %201 : vector<8x128xf32> to vector<8x128xbf16>
    %c0_81 = arith.constant 0 : index
    %c0_82 = arith.constant 0 : index
    %232 = vector.load %arg2[%c0_81, %c0_82] : memref<128x512xbf16, #tpu.memory_space<vmem>>, vector<128x512xbf16>
    %cst_83 = arith.constant dense<0.000000e+00> : vector<8x512xf32>
    %233 = tpu.matmul %231, %232, %cst_83 {dimension_numbers = #tpu.dot_dimension_numbers<[1], [0], [0], [1], [0, 0, 1, 1], [], []>} : vector<8x128xbf16>, vector<128x512xbf16>, vector<8x512xf32> -> vector<8x512xf32>
    %234 = arith.addf %230, %233 : vector<8x512xf32>
    %235 = vector.extract_strided_slice %234 {offsets = [0, 0], sizes = [8, 256], strides = [1, 1]} : vector<8x512xf32> to vector<8x256xf32>
    %236 = arith.negf %235 : vector<8x256xf32>
    %237 = math.exp %236 : vector<8x256xf32>
    %cst_84 = arith.constant 1.000000e+00 : f32
    %238 = vector.broadcast %cst_84 : f32 to vector<8x256xf32>
    %239 = arith.addf %238, %237 : vector<8x256xf32>
    %240 = arith.divf %238, %239 : vector<8x256xf32>
    %241 = vector.extract_strided_slice %240 {offsets = [0, 0], sizes = [8, 128], strides = [1, 1]} : vector<8x256xf32> to vector<8x128xf32>
    %242 = vector.extract_strided_slice %240 {offsets = [0, 128], sizes = [8, 128], strides = [1, 1]} : vector<8x256xf32> to vector<8x128xf32>
    %243 = vector.extract_strided_slice %234 {offsets = [0, 256], sizes = [8, 128], strides = [1, 1]} : vector<8x512xf32> to vector<8x128xf32>
    %244 = math.tanh %243 : vector<8x128xf32>
    %245 = vector.extract_strided_slice %234 {offsets = [0, 384], sizes = [8, 128], strides = [1, 1]} : vector<8x512xf32> to vector<8x128xf32>
    %246 = arith.negf %245 : vector<8x128xf32>
    %247 = math.exp %246 : vector<8x128xf32>
    %cst_85 = arith.constant 1.000000e+00 : f32
    %248 = vector.broadcast %cst_85 : f32 to vector<8x128xf32>
    %249 = arith.addf %248, %247 : vector<8x128xf32>
    %250 = arith.divf %248, %249 : vector<8x128xf32>
    %251 = arith.mulf %242, %199 : vector<8x128xf32>
    %252 = arith.mulf %241, %244 : vector<8x128xf32>
    %253 = arith.addf %251, %252 : vector<8x128xf32>
    %254 = math.tanh %253 : vector<8x128xf32>
    %255 = arith.mulf %250, %254 : vector<8x128xf32>
    %c32_86 = arith.constant 32 : index
    %c0_87 = arith.constant 0 : index
    %256 = vector.load %arg7[%c32_86, %c0_87] : memref<64x256xf32, #tpu.memory_space<vmem>>, vector<8x128xf32>
    tpu.vector_store %arg7[%c32_86, %c0_87], %255 {strides = array<i32>} : memref<64x256xf32, #tpu.memory_space<vmem>>, vector<8x128xf32>,
    %c24_88 = arith.constant 24 : index
    %c0_89 = arith.constant 0 : index
    %257 = vector.load %arg9[%c24_88, %c0_89] : memref<64x512xf32, #tpu.memory_space<vmem>>, vector<8x512xf32>
    %258 = arith.truncf %228 : vector<8x128xf32> to vector<8x128xbf16>
    %c0_90 = arith.constant 0 : index
    %c0_91 = arith.constant 0 : index
    %259 = vector.load %arg5[%c0_90, %c0_91] : memref<128x512xbf16, #tpu.memory_space<vmem>>, vector<128x512xbf16>
    %cst_92 = arith.constant dense<0.000000e+00> : vector<8x512xf32>
    %260 = tpu.matmul %258, %259, %cst_92 {dimension_numbers = #tpu.dot_dimension_numbers<[1], [0], [0], [1], [0, 0, 1, 1], [], []>} : vector<8x128xbf16>, vector<128x512xbf16>, vector<8x512xf32> -> vector<8x512xf32>
    %261 = arith.addf %257, %260 : vector<8x512xf32>
    %262 = vector.extract_strided_slice %261 {offsets = [0, 0], sizes = [8, 256], strides = [1, 1]} : vector<8x512xf32> to vector<8x256xf32>
    %263 = arith.negf %262 : vector<8x256xf32>
    %264 = math.exp %263 : vector<8x256xf32>
    %cst_93 = arith.constant 1.000000e+00 : f32
    %265 = vector.broadcast %cst_93 : f32 to vector<8x256xf32>
    %266 = arith.addf %265, %264 : vector<8x256xf32>
    %267 = arith.divf %265, %266 : vector<8x256xf32>
    %268 = vector.extract_strided_slice %267 {offsets = [0, 0], sizes = [8, 128], strides = [1, 1]} : vector<8x256xf32> to vector<8x128xf32>
    %269 = vector.extract_strided_slice %267 {offsets = [0, 128], sizes = [8, 128], strides = [1, 1]} : vector<8x256xf32> to vector<8x128xf32>
    %270 = vector.extract_strided_slice %261 {offsets = [0, 256], sizes = [8, 128], strides = [1, 1]} : vector<8x512xf32> to vector<8x128xf32>
    %271 = math.tanh %270 : vector<8x128xf32>
    %272 = vector.extract_strided_slice %261 {offsets = [0, 384], sizes = [8, 128], strides = [1, 1]} : vector<8x512xf32> to vector<8x128xf32>
    %273 = arith.negf %272 : vector<8x128xf32>
    %274 = math.exp %273 : vector<8x128xf32>
    %cst_94 = arith.constant 1.000000e+00 : f32
    %275 = vector.broadcast %cst_94 : f32 to vector<8x128xf32>
    %276 = arith.addf %275, %274 : vector<8x128xf32>
    %277 = arith.divf %275, %276 : vector<8x128xf32>
    %278 = arith.mulf %269, %226 : vector<8x128xf32>
    %279 = arith.mulf %268, %271 : vector<8x128xf32>
    %280 = arith.addf %278, %279 : vector<8x128xf32>
    %281 = math.tanh %280 : vector<8x128xf32>
    %282 = arith.mulf %277, %281 : vector<8x128xf32>
    %c24_95 = arith.constant 24 : index
    %c128_96 = arith.constant 128 : index
    %283 = vector.load %arg7[%c24_95, %c128_96] : memref<64x256xf32, #tpu.memory_space<vmem>>, vector<8x128xf32>
    tpu.vector_store %arg7[%c24_95, %c128_96], %282 {strides = array<i32>} : memref<64x256xf32, #tpu.memory_space<vmem>>, vector<8x128xf32>,
    %c40_97 = arith.constant 40 : index
    %c0_98 = arith.constant 0 : index
    %284 = vector.load %arg8[%c40_97, %c0_98] : memref<64x512xf32, #tpu.memory_space<vmem>>, vector<8x512xf32>
    %285 = arith.truncf %255 : vector<8x128xf32> to vector<8x128xbf16>
    %c0_99 = arith.constant 0 : index
    %c0_100 = arith.constant 0 : index
    %286 = vector.load %arg2[%c0_99, %c0_100] : memref<128x512xbf16, #tpu.memory_space<vmem>>, vector<128x512xbf16>
    %cst_101 = arith.constant dense<0.000000e+00> : vector<8x512xf32>
    %287 = tpu.matmul %285, %286, %cst_101 {dimension_numbers = #tpu.dot_dimension_numbers<[1], [0], [0], [1], [0, 0, 1, 1], [], []>} : vector<8x128xbf16>, vector<128x512xbf16>, vector<8x512xf32> -> vector<8x512xf32>
    %288 = arith.addf %284, %287 : vector<8x512xf32>
    %289 = vector.extract_strided_slice %288 {offsets = [0, 0], sizes = [8, 256], strides = [1, 1]} : vector<8x512xf32> to vector<8x256xf32>
    %290 = arith.negf %289 : vector<8x256xf32>
    %291 = math.exp %290 : vector<8x256xf32>
    %cst_102 = arith.constant 1.000000e+00 : f32
    %292 = vector.broadcast %cst_102 : f32 to vector<8x256xf32>
    %293 = arith.addf %292, %291 : vector<8x256xf32>
    %294 = arith.divf %292, %293 : vector<8x256xf32>
    %295 = vector.extract_strided_slice %294 {offsets = [0, 0], sizes = [8, 128], strides = [1, 1]} : vector<8x256xf32> to vector<8x128xf32>
    %296 = vector.extract_strided_slice %294 {offsets = [0, 128], sizes = [8, 128], strides = [1, 1]} : vector<8x256xf32> to vector<8x128xf32>
    %297 = vector.extract_strided_slice %288 {offsets = [0, 256], sizes = [8, 128], strides = [1, 1]} : vector<8x512xf32> to vector<8x128xf32>
    %298 = math.tanh %297 : vector<8x128xf32>
    %299 = vector.extract_strided_slice %288 {offsets = [0, 384], sizes = [8, 128], strides = [1, 1]} : vector<8x512xf32> to vector<8x128xf32>
    %300 = arith.negf %299 : vector<8x128xf32>
    %301 = math.exp %300 : vector<8x128xf32>
    %cst_103 = arith.constant 1.000000e+00 : f32
    %302 = vector.broadcast %cst_103 : f32 to vector<8x128xf32>
    %303 = arith.addf %302, %301 : vector<8x128xf32>
    %304 = arith.divf %302, %303 : vector<8x128xf32>
    %305 = arith.mulf %296, %253 : vector<8x128xf32>
    %306 = arith.mulf %295, %298 : vector<8x128xf32>
    %307 = arith.addf %305, %306 : vector<8x128xf32>
    %308 = math.tanh %307 : vector<8x128xf32>
    %309 = arith.mulf %304, %308 : vector<8x128xf32>
    %c40_104 = arith.constant 40 : index
    %c0_105 = arith.constant 0 : index
    %310 = vector.load %arg7[%c40_104, %c0_105] : memref<64x256xf32, #tpu.memory_space<vmem>>, vector<8x128xf32>
    tpu.vector_store %arg7[%c40_104, %c0_105], %309 {strides = array<i32>} : memref<64x256xf32, #tpu.memory_space<vmem>>, vector<8x128xf32>,
    %c16_106 = arith.constant 16 : index
    %c0_107 = arith.constant 0 : index
    %311 = vector.load %arg9[%c16_106, %c0_107] : memref<64x512xf32, #tpu.memory_space<vmem>>, vector<8x512xf32>
    %312 = arith.truncf %282 : vector<8x128xf32> to vector<8x128xbf16>
    %c0_108 = arith.constant 0 : index
    %c0_109 = arith.constant 0 : index
    %313 = vector.load %arg5[%c0_108, %c0_109] : memref<128x512xbf16, #tpu.memory_space<vmem>>, vector<128x512xbf16>
    %cst_110 = arith.constant dense<0.000000e+00> : vector<8x512xf32>
    %314 = tpu.matmul %312, %313, %cst_110 {dimension_numbers = #tpu.dot_dimension_numbers<[1], [0], [0], [1], [0, 0, 1, 1], [], []>} : vector<8x128xbf16>, vector<128x512xbf16>, vector<8x512xf32> -> vector<8x512xf32>
    %315 = arith.addf %311, %314 : vector<8x512xf32>
    %316 = vector.extract_strided_slice %315 {offsets = [0, 0], sizes = [8, 256], strides = [1, 1]} : vector<8x512xf32> to vector<8x256xf32>
    %317 = arith.negf %316 : vector<8x256xf32>
    %318 = math.exp %317 : vector<8x256xf32>
    %cst_111 = arith.constant 1.000000e+00 : f32
    %319 = vector.broadcast %cst_111 : f32 to vector<8x256xf32>
    %320 = arith.addf %319, %318 : vector<8x256xf32>
    %321 = arith.divf %319, %320 : vector<8x256xf32>
    %322 = vector.extract_strided_slice %321 {offsets = [0, 0], sizes = [8, 128], strides = [1, 1]} : vector<8x256xf32> to vector<8x128xf32>
    %323 = vector.extract_strided_slice %321 {offsets = [0, 128], sizes = [8, 128], strides = [1, 1]} : vector<8x256xf32> to vector<8x128xf32>
    %324 = vector.extract_strided_slice %315 {offsets = [0, 256], sizes = [8, 128], strides = [1, 1]} : vector<8x512xf32> to vector<8x128xf32>
    %325 = math.tanh %324 : vector<8x128xf32>
    %326 = vector.extract_strided_slice %315 {offsets = [0, 384], sizes = [8, 128], strides = [1, 1]} : vector<8x512xf32> to vector<8x128xf32>
    %327 = arith.negf %326 : vector<8x128xf32>
    %328 = math.exp %327 : vector<8x128xf32>
    %cst_112 = arith.constant 1.000000e+00 : f32
    %329 = vector.broadcast %cst_112 : f32 to vector<8x128xf32>
    %330 = arith.addf %329, %328 : vector<8x128xf32>
    %331 = arith.divf %329, %330 : vector<8x128xf32>
    %332 = arith.mulf %323, %280 : vector<8x128xf32>
    %333 = arith.mulf %322, %325 : vector<8x128xf32>
    %334 = arith.addf %332, %333 : vector<8x128xf32>
    %335 = math.tanh %334 : vector<8x128xf32>
    %336 = arith.mulf %331, %335 : vector<8x128xf32>
    %c16_113 = arith.constant 16 : index
    %c128_114 = arith.constant 128 : index
    %337 = vector.load %arg7[%c16_113, %c128_114] : memref<64x256xf32, #tpu.memory_space<vmem>>, vector<8x128xf32>
    tpu.vector_store %arg7[%c16_113, %c128_114], %336 {strides = array<i32>} : memref<64x256xf32, #tpu.memory_space<vmem>>, vector<8x128xf32>,
    %c48_115 = arith.constant 48 : index
    %c0_116 = arith.constant 0 : index
    %338 = vector.load %arg8[%c48_115, %c0_116] : memref<64x512xf32, #tpu.memory_space<vmem>>, vector<8x512xf32>
    %339 = arith.truncf %309 : vector<8x128xf32> to vector<8x128xbf16>
    %c0_117 = arith.constant 0 : index
    %c0_118 = arith.constant 0 : index
    %340 = vector.load %arg2[%c0_117, %c0_118] : memref<128x512xbf16, #tpu.memory_space<vmem>>, vector<128x512xbf16>
    %cst_119 = arith.constant dense<0.000000e+00> : vector<8x512xf32>
    %341 = tpu.matmul %339, %340, %cst_119 {dimension_numbers = #tpu.dot_dimension_numbers<[1], [0], [0], [1], [0, 0, 1, 1], [], []>} : vector<8x128xbf16>, vector<128x512xbf16>, vector<8x512xf32> -> vector<8x512xf32>
    %342 = arith.addf %338, %341 : vector<8x512xf32>
    %343 = vector.extract_strided_slice %342 {offsets = [0, 0], sizes = [8, 256], strides = [1, 1]} : vector<8x512xf32> to vector<8x256xf32>
    %344 = arith.negf %343 : vector<8x256xf32>
    %345 = math.exp %344 : vector<8x256xf32>
    %cst_120 = arith.constant 1.000000e+00 : f32
    %346 = vector.broadcast %cst_120 : f32 to vector<8x256xf32>
    %347 = arith.addf %346, %345 : vector<8x256xf32>
    %348 = arith.divf %346, %347 : vector<8x256xf32>
    %349 = vector.extract_strided_slice %348 {offsets = [0, 0], sizes = [8, 128], strides = [1, 1]} : vector<8x256xf32> to vector<8x128xf32>
    %350 = vector.extract_strided_slice %348 {offsets = [0, 128], sizes = [8, 128], strides = [1, 1]} : vector<8x256xf32> to vector<8x128xf32>
    %351 = vector.extract_strided_slice %342 {offsets = [0, 256], sizes = [8, 128], strides = [1, 1]} : vector<8x512xf32> to vector<8x128xf32>
    %352 = math.tanh %351 : vector<8x128xf32>
    %353 = vector.extract_strided_slice %342 {offsets = [0, 384], sizes = [8, 128], strides = [1, 1]} : vector<8x512xf32> to vector<8x128xf32>
    %354 = arith.negf %353 : vector<8x128xf32>
    %355 = math.exp %354 : vector<8x128xf32>
    %cst_121 = arith.constant 1.000000e+00 : f32
    %356 = vector.broadcast %cst_121 : f32 to vector<8x128xf32>
    %357 = arith.addf %356, %355 : vector<8x128xf32>
    %358 = arith.divf %356, %357 : vector<8x128xf32>
    %359 = arith.mulf %350, %307 : vector<8x128xf32>
    %360 = arith.mulf %349, %352 : vector<8x128xf32>
    %361 = arith.addf %359, %360 : vector<8x128xf32>
    %362 = math.tanh %361 : vector<8x128xf32>
    %363 = arith.mulf %358, %362 : vector<8x128xf32>
    %c48_122 = arith.constant 48 : index
    %c0_123 = arith.constant 0 : index
    %364 = vector.load %arg7[%c48_122, %c0_123] : memref<64x256xf32, #tpu.memory_space<vmem>>, vector<8x128xf32>
    tpu.vector_store %arg7[%c48_122, %c0_123], %363 {strides = array<i32>} : memref<64x256xf32, #tpu.memory_space<vmem>>, vector<8x128xf32>,
    %c8_124 = arith.constant 8 : index
    %c0_125 = arith.constant 0 : index
    %365 = vector.load %arg9[%c8_124, %c0_125] : memref<64x512xf32, #tpu.memory_space<vmem>>, vector<8x512xf32>
    %366 = arith.truncf %336 : vector<8x128xf32> to vector<8x128xbf16>
    %c0_126 = arith.constant 0 : index
    %c0_127 = arith.constant 0 : index
    %367 = vector.load %arg5[%c0_126, %c0_127] : memref<128x512xbf16, #tpu.memory_space<vmem>>, vector<128x512xbf16>
    %cst_128 = arith.constant dense<0.000000e+00> : vector<8x512xf32>
    %368 = tpu.matmul %366, %367, %cst_128 {dimension_numbers = #tpu.dot_dimension_numbers<[1], [0], [0], [1], [0, 0, 1, 1], [], []>} : vector<8x128xbf16>, vector<128x512xbf16>, vector<8x512xf32> -> vector<8x512xf32>
    %369 = arith.addf %365, %368 : vector<8x512xf32>
    %370 = vector.extract_strided_slice %369 {offsets = [0, 0], sizes = [8, 256], strides = [1, 1]} : vector<8x512xf32> to vector<8x256xf32>
    %371 = arith.negf %370 : vector<8x256xf32>
    %372 = math.exp %371 : vector<8x256xf32>
    %cst_129 = arith.constant 1.000000e+00 : f32
    %373 = vector.broadcast %cst_129 : f32 to vector<8x256xf32>
    %374 = arith.addf %373, %372 : vector<8x256xf32>
    %375 = arith.divf %373, %374 : vector<8x256xf32>
    %376 = vector.extract_strided_slice %375 {offsets = [0, 0], sizes = [8, 128], strides = [1, 1]} : vector<8x256xf32> to vector<8x128xf32>
    %377 = vector.extract_strided_slice %375 {offsets = [0, 128], sizes = [8, 128], strides = [1, 1]} : vector<8x256xf32> to vector<8x128xf32>
    %378 = vector.extract_strided_slice %369 {offsets = [0, 256], sizes = [8, 128], strides = [1, 1]} : vector<8x512xf32> to vector<8x128xf32>
    %379 = math.tanh %378 : vector<8x128xf32>
    %380 = vector.extract_strided_slice %369 {offsets = [0, 384], sizes = [8, 128], strides = [1, 1]} : vector<8x512xf32> to vector<8x128xf32>
    %381 = arith.negf %380 : vector<8x128xf32>
    %382 = math.exp %381 : vector<8x128xf32>
    %cst_130 = arith.constant 1.000000e+00 : f32
    %383 = vector.broadcast %cst_130 : f32 to vector<8x128xf32>
    %384 = arith.addf %383, %382 : vector<8x128xf32>
    %385 = arith.divf %383, %384 : vector<8x128xf32>
    %386 = arith.mulf %377, %334 : vector<8x128xf32>
    %387 = arith.mulf %376, %379 : vector<8x128xf32>
    %388 = arith.addf %386, %387 : vector<8x128xf32>
    %389 = math.tanh %388 : vector<8x128xf32>
    %390 = arith.mulf %385, %389 : vector<8x128xf32>
    %c8_131 = arith.constant 8 : index
    %c128_132 = arith.constant 128 : index
    %391 = vector.load %arg7[%c8_131, %c128_132] : memref<64x256xf32, #tpu.memory_space<vmem>>, vector<8x128xf32>
    tpu.vector_store %arg7[%c8_131, %c128_132], %390 {strides = array<i32>} : memref<64x256xf32, #tpu.memory_space<vmem>>, vector<8x128xf32>,
    %c56_133 = arith.constant 56 : index
    %c0_134 = arith.constant 0 : index
    %392 = vector.load %arg8[%c56_133, %c0_134] : memref<64x512xf32, #tpu.memory_space<vmem>>, vector<8x512xf32>
    %393 = arith.truncf %363 : vector<8x128xf32> to vector<8x128xbf16>
    %c0_135 = arith.constant 0 : index
    %c0_136 = arith.constant 0 : index
    %394 = vector.load %arg2[%c0_135, %c0_136] : memref<128x512xbf16, #tpu.memory_space<vmem>>, vector<128x512xbf16>
    %cst_137 = arith.constant dense<0.000000e+00> : vector<8x512xf32>
    %395 = tpu.matmul %393, %394, %cst_137 {dimension_numbers = #tpu.dot_dimension_numbers<[1], [0], [0], [1], [0, 0, 1, 1], [], []>} : vector<8x128xbf16>, vector<128x512xbf16>, vector<8x512xf32> -> vector<8x512xf32>
    %396 = arith.addf %392, %395 : vector<8x512xf32>
    %397 = vector.extract_strided_slice %396 {offsets = [0, 0], sizes = [8, 256], strides = [1, 1]} : vector<8x512xf32> to vector<8x256xf32>
    %398 = arith.negf %397 : vector<8x256xf32>
    %399 = math.exp %398 : vector<8x256xf32>
    %cst_138 = arith.constant 1.000000e+00 : f32
    %400 = vector.broadcast %cst_138 : f32 to vector<8x256xf32>
    %401 = arith.addf %400, %399 : vector<8x256xf32>
    %402 = arith.divf %400, %401 : vector<8x256xf32>
    %403 = vector.extract_strided_slice %402 {offsets = [0, 0], sizes = [8, 128], strides = [1, 1]} : vector<8x256xf32> to vector<8x128xf32>
    %404 = vector.extract_strided_slice %402 {offsets = [0, 128], sizes = [8, 128], strides = [1, 1]} : vector<8x256xf32> to vector<8x128xf32>
    %405 = vector.extract_strided_slice %396 {offsets = [0, 256], sizes = [8, 128], strides = [1, 1]} : vector<8x512xf32> to vector<8x128xf32>
    %406 = math.tanh %405 : vector<8x128xf32>
    %407 = vector.extract_strided_slice %396 {offsets = [0, 384], sizes = [8, 128], strides = [1, 1]} : vector<8x512xf32> to vector<8x128xf32>
    %408 = arith.negf %407 : vector<8x128xf32>
    %409 = math.exp %408 : vector<8x128xf32>
    %cst_139 = arith.constant 1.000000e+00 : f32
    %410 = vector.broadcast %cst_139 : f32 to vector<8x128xf32>
    %411 = arith.addf %410, %409 : vector<8x128xf32>
    %412 = arith.divf %410, %411 : vector<8x128xf32>
    %413 = arith.mulf %404, %361 : vector<8x128xf32>
    %414 = arith.mulf %403, %406 : vector<8x128xf32>
    %415 = arith.addf %413, %414 : vector<8x128xf32>
    %416 = math.tanh %415 : vector<8x128xf32>
    %417 = arith.mulf %412, %416 : vector<8x128xf32>
    %c56_140 = arith.constant 56 : index
    %c0_141 = arith.constant 0 : index
    %418 = vector.load %arg7[%c56_140, %c0_141] : memref<64x256xf32, #tpu.memory_space<vmem>>, vector<8x128xf32>
    tpu.vector_store %arg7[%c56_140, %c0_141], %417 {strides = array<i32>} : memref<64x256xf32, #tpu.memory_space<vmem>>, vector<8x128xf32>,
    %c0_142 = arith.constant 0 : index
    %c0_143 = arith.constant 0 : index
    %419 = vector.load %arg9[%c0_142, %c0_143] : memref<64x512xf32, #tpu.memory_space<vmem>>, vector<8x512xf32>
    %420 = arith.truncf %390 : vector<8x128xf32> to vector<8x128xbf16>
    %c0_144 = arith.constant 0 : index
    %c0_145 = arith.constant 0 : index
    %421 = vector.load %arg5[%c0_144, %c0_145] : memref<128x512xbf16, #tpu.memory_space<vmem>>, vector<128x512xbf16>
    %cst_146 = arith.constant dense<0.000000e+00> : vector<8x512xf32>
    %422 = tpu.matmul %420, %421, %cst_146 {dimension_numbers = #tpu.dot_dimension_numbers<[1], [0], [0], [1], [0, 0, 1, 1], [], []>} : vector<8x128xbf16>, vector<128x512xbf16>, vector<8x512xf32> -> vector<8x512xf32>
    %423 = arith.addf %419, %422 : vector<8x512xf32>
    %424 = vector.extract_strided_slice %423 {offsets = [0, 0], sizes = [8, 256], strides = [1, 1]} : vector<8x512xf32> to vector<8x256xf32>
    %425 = arith.negf %424 : vector<8x256xf32>
    %426 = math.exp %425 : vector<8x256xf32>
    %cst_147 = arith.constant 1.000000e+00 : f32
    %427 = vector.broadcast %cst_147 : f32 to vector<8x256xf32>
    %428 = arith.addf %427, %426 : vector<8x256xf32>
    %429 = arith.divf %427, %428 : vector<8x256xf32>
    %430 = vector.extract_strided_slice %429 {offsets = [0, 0], sizes = [8, 128], strides = [1, 1]} : vector<8x256xf32> to vector<8x128xf32>
    %431 = vector.extract_strided_slice %429 {offsets = [0, 128], sizes = [8, 128], strides = [1, 1]} : vector<8x256xf32> to vector<8x128xf32>
    %432 = vector.extract_strided_slice %423 {offsets = [0, 256], sizes = [8, 128], strides = [1, 1]} : vector<8x512xf32> to vector<8x128xf32>
    %433 = math.tanh %432 : vector<8x128xf32>
    %434 = vector.extract_strided_slice %423 {offsets = [0, 384], sizes = [8, 128], strides = [1, 1]} : vector<8x512xf32> to vector<8x128xf32>
    %435 = arith.negf %434 : vector<8x128xf32>
    %436 = math.exp %435 : vector<8x128xf32>
    %cst_148 = arith.constant 1.000000e+00 : f32
    %437 = vector.broadcast %cst_148 : f32 to vector<8x128xf32>
    %438 = arith.addf %437, %436 : vector<8x128xf32>
    %439 = arith.divf %437, %438 : vector<8x128xf32>
    %440 = arith.mulf %431, %388 : vector<8x128xf32>
    %441 = arith.mulf %430, %433 : vector<8x128xf32>
    %442 = arith.addf %440, %441 : vector<8x128xf32>
    %443 = math.tanh %442 : vector<8x128xf32>
    %444 = arith.mulf %439, %443 : vector<8x128xf32>
    %c0_149 = arith.constant 0 : index
    %c128_150 = arith.constant 128 : index
    %445 = vector.load %arg7[%c0_149, %c128_150] : memref<64x256xf32, #tpu.memory_space<vmem>>, vector<8x128xf32>
    tpu.vector_store %arg7[%c0_149, %c128_150], %444 {strides = array<i32>} : memref<64x256xf32, #tpu.memory_space<vmem>>, vector<8x128xf32>,
    return
  }
}

</mosaic_0001>

<llo_original>
// kernel: lstm_model_forward.3
$region0: #{lstm_model_forward.3}
  #allocation0 [shape = 'u32[]', space=smem, size = 0x4, offset = 0x4, fixed_abs, tag = 'smem constant byte address 0x4 - core index']
  #allocation1 [shape = 'u32[144,128]{1,0:T(1,128)}', space=vmem, size = 0x12000, scoped, tag = 'internal scratch']
  #allocation2 [shape = 'f32[64,512]{1,0:T(8,128)}', space=vmem, size = 0x20000, scoped, tag = 'scratch operand']
  #allocation3 [shape = 'f32[64,512]{1,0:T(8,128)}', space=vmem, size = 0x20000, scoped, tag = 'scratch operand']
  %s0 = inlined_call_operand.vmem [shape: f32[64,256], index: 0, kind: input, shape index: {}]
  %s1 = inlined_call_operand.vmem [shape: bf16[256,512], index: 1, kind: input, shape index: {}]
  %s2 = inlined_call_operand.vmem [shape: bf16[128,512], index: 2, kind: input, shape index: {}]
  %s3 = inlined_call_operand.vmem [shape: f32[1,512], index: 3, kind: input, shape index: {}]
  %s4 = inlined_call_operand.vmem [shape: bf16[256,512], index: 4, kind: input, shape index: {}]
  %s5 = inlined_call_operand.hbm [shape: bf16[128,512], index: 5, kind: input, shape index: {}]
  %s6 = inlined_call_operand.vmem [shape: f32[1,512], index: 6, kind: input, shape index: {}]
  %s7 = inlined_call_operand.hbm [shape: f32[256,128], index: 7, kind: input, shape index: {}]
  %s8 = inlined_call_operand.vmem [shape: f32[1,128], index: 8, kind: input, shape index: {}]
  %s9 = inlined_call_operand.hbm [shape: f32[128,128], index: 9, kind: input, shape index: {}]
  %s10 = inlined_call_operand.vmem [shape: f32[1,128], index: 10, kind: input, shape index: {}]
  %s11 = inlined_call_operand.hbm [shape: f32[8,128], index: 11, kind: output, shape index: {}]
  %s12 = sld [smem:[#allocation0]]
  $region66: #{lstm_model_forward.3} parent=0
    _
  %s14 = ssub.s32 1, %s12
  %s15 = scalar_select 0, %s14, %s12
  $region1: #{lstm_model_forward.3} parent=0
    #allocation4 [shape = 'u8[131072]{0}', space=vmem, size = 0x20000, scoped, tag = 'input window, operand 5, single buffered']
    #allocation5 [shape = 's32[1]{0}', space=sflag, size = 0x4, scoped, tag = 'scoped memory for lstm_model_forward.3']
    #allocation6 [shape = 's32[1]{0}', space=sflag, size = 0x4, scoped, tag = 'scoped memory for lstm_model_forward.3']
    #allocation7 [shape = 'u8[131072]{0}', space=vmem, size = 0x20000, scoped, tag = 'input window, operand 7, single buffered']
    #allocation8 [shape = 's32[1]{0}', space=sflag, size = 0x4, scoped, tag = 'scoped memory for lstm_model_forward.3']
    #allocation9 [shape = 'u8[65536]{0}', space=vmem, size = 0x10000, scoped, tag = 'input window, operand 9, single buffered']
    #allocation10 [shape = 'u8[4096]{0}', space=vmem, size = 0x1000, scoped, tag = 'output window, operand 0, single buffered']
    %16 = vsyncpa [#allocation5], 0
    %17 = vsyncpa [#allocation8], 0
    %18 = vsyncpa [#allocation6], 0
    // Predicated region
    $region2: #{lstm_model_forward.3} parent=1 // pred_check
      _
    $region3: #{lstm_model_forward.3} parent=1 // pred_check_branch
      %20 = sbr.rel (0) target = $region5
    $region4: #{lstm_model_forward.3} parent=1 // pred_region
      _
    $region5: #{lstm_model_forward.3} parent=1 // pred_fallthru
      _
    // Predicated region
    $region6: #{lstm_model_forward.3} parent=1 // pred_check
      _
    $region7: #{lstm_model_forward.3} parent=1 // pred_check_branch
      %22 = sbr.rel (0) target = $region9
    $region8: #{lstm_model_forward.3} parent=1 // pred_region
      _
    $region9: #{lstm_model_forward.3} parent=1 // pred_fallthru
      _
    // Predicated region
    $region10: #{lstm_model_forward.3} parent=1 // pred_check
      _
    $region11: #{lstm_model_forward.3} parent=1 // pred_check_branch
      %24 = sbr.rel (0) target = $region13
    $region12: #{lstm_model_forward.3} parent=1 // pred_region
      _
    $region13: #{lstm_model_forward.3} parent=1 // pred_fallthru
      _
    // Predicated region
    $region14: #{lstm_model_forward.3} parent=1 // pred_check
      _
    $region15: #{lstm_model_forward.3} parent=1 // pred_check_branch
      %26 = sbr.rel (0) target = $region17
    $region16: #{lstm_model_forward.3} parent=1 // pred_region
      _
    $region17: #{lstm_model_forward.3} parent=1 // pred_fallthru
      _
    // Predicated region
    $region18: #{lstm_model_forward.3} parent=1 // pred_check
      _
    $region19: #{lstm_model_forward.3} parent=1 // pred_check_branch
      %28 = sbr.rel (0) target = $region21
    $region20: #{lstm_model_forward.3} parent=1 // pred_region
      _
    $region21: #{lstm_model_forward.3} parent=1 // pred_fallthru
      _
    // Predicated region
    $region22: #{lstm_model_forward.3} parent=1 // pred_check
      _
    $region23: #{lstm_model_forward.3} parent=1 // pred_check_branch
      %30 = sbr.rel (0) target = $region25
    $region24: #{lstm_model_forward.3} parent=1 // pred_region
      %s32 = ssub.s32 4096, 4096
      %33 = vsyncadd [#allocation5], %s32
      %s34 = sshll.u32 [#allocation4], 4
      %s35 = int_to_ptr.vmem [resolvable:$true] %s34
      %40 = dma.hbm_to_vmem [thread:$0]  %s5, 4096, %s35, [#allocation5], 256, 256, 16
    $region25: #{lstm_model_forward.3} parent=1 // pred_fallthru
      _
    // Predicated region
    $region26: #{lstm_model_forward.3} parent=1 // pred_check
      _
    $region27: #{lstm_model_forward.3} parent=1 // pred_check_branch
      %42 = sbr.rel (0) target = $region29
    $region28: #{lstm_model_forward.3} parent=1 // pred_region
      _
    $region29: #{lstm_model_forward.3} parent=1 // pred_fallthru
      _
    // Predicated region
    $region30: #{lstm_model_forward.3} parent=1 // pred_check
      _
    $region31: #{lstm_model_forward.3} parent=1 // pred_check_branch
      %44 = sbr.rel (0) target = $region33
    $region32: #{lstm_model_forward.3} parent=1 // pred_region
      %s46 = ssub.s32 4096, 4096
      %47 = vsyncadd [#allocation8], %s46
      %s48 = sshll.u32 [#allocation7], 4
      %s49 = int_to_ptr.vmem [resolvable:$true] %s48
      %54 = dma.hbm_to_vmem [thread:$0]  %s7, 4096, %s49, [#allocation8], 128, 128, 8
    $region33: #{lstm_model_forward.3} parent=1 // pred_fallthru
      _
    // Predicated region
    $region34: #{lstm_model_forward.3} parent=1 // pred_check
      _
    $region35: #{lstm_model_forward.3} parent=1 // pred_check_branch
      %56 = sbr.rel (0) target = $region37
    $region36: #{lstm_model_forward.3} parent=1 // pred_region
      _
    $region37: #{lstm_model_forward.3} parent=1 // pred_fallthru
      _
    // Predicated region
    $region38: #{lstm_model_forward.3} parent=1 // pred_check
      _
    $region39: #{lstm_model_forward.3} parent=1 // pred_check_branch
      %58 = sbr.rel (0) target = $region41
    $region40: #{lstm_model_forward.3} parent=1 // pred_region
      %s60 = ssub.s32 2048, 2048
      %61 = vsyncadd [#allocation8], %s60
      %s62 = sshll.u32 [#allocation9], 4
      %s63 = int_to_ptr.vmem [resolvable:$true] %s62
      %68 = dma.hbm_to_vmem [thread:$0]  %s9, 2048, %s63, [#allocation8], 128, 128, 8
    $region41: #{lstm_model_forward.3} parent=1 // pred_fallthru
      _
    // Predicated region
    $region42: #{lstm_model_forward.3} parent=1 // pred_check
      _
    $region43: #{lstm_model_forward.3} parent=1 // pred_check_branch
      %70 = sbr.rel (0) target = $region45
    $region44: #{lstm_model_forward.3} parent=1 // pred_region
      _
    $region45: #{lstm_model_forward.3} parent=1 // pred_fallthru
      _
    // Predicated region
    $region46: #{lstm_model_forward.3} parent=1 // pred_check
      _
    $region47: #{lstm_model_forward.3} parent=1 // pred_check_branch
      %72 = sbr.rel (0) target = $region49
    $region48: #{lstm_model_forward.3} parent=1 // pred_region
      %73 = dma.done [#allocation5], 4096
    $region49: #{lstm_model_forward.3} parent=1 // pred_fallthru
      _
    // Predicated region
    $region50: #{lstm_model_forward.3} parent=1 // pred_check
      _
    $region51: #{lstm_model_forward.3} parent=1 // pred_check_branch
      %75 = sbr.rel (0) target = $region53
    $region52: #{lstm_model_forward.3} parent=1 // pred_region
      %76 = dma.done [#allocation8], 4096
    $region53: #{lstm_model_forward.3} parent=1 // pred_fallthru
      _
    // Predicated region
    $region54: #{lstm_model_forward.3} parent=1 // pred_check
      _
    $region55: #{lstm_model_forward.3} parent=1 // pred_check_branch
      %78 = sbr.rel (0) target = $region57
    $region56: #{lstm_model_forward.3} parent=1 // pred_region
      %79 = dma.done [#allocation8], 2048
    $region57: #{lstm_model_forward.3} parent=1 // pred_fallthru
      _
    %v81 = vld [vmem:[%s0] sm:$0xff]
    %v82 = vld [vmem:[%s0 + $0x8] sm:$0xff]
    %v83 = vld [vmem:[%s0 + $0x10] sm:$0xff]
    %v84 = vld [vmem:[%s0 + $0x18] sm:$0xff]
    %v85 = vld [vmem:[%s0 + $0x20] sm:$0xff]
    %v86 = vld [vmem:[%s0 + $0x28] sm:$0xff]
    %v87 = vld [vmem:[%s0 + $0x30] sm:$0xff]
    %v88 = vld [vmem:[%s0 + $0x38] sm:$0xff]
    %v89 = vld [vmem:[%s0 + $0x40] sm:$0xff]
    %v90 = vld [vmem:[%s0 + $0x48] sm:$0xff]
    %v91 = vld [vmem:[%s0 + $0x50] sm:$0xff]
    %v92 = vld [vmem:[%s0 + $0x58] sm:$0xff]
    %v93 = vld [vmem:[%s0 + $0x60] sm:$0xff]
    %v94 = vld [vmem:[%s0 + $0x68] sm:$0xff]
    %v95 = vld [vmem:[%s0 + $0x70] sm:$0xff]
    %v96 = vld [vmem:[%s0 + $0x78] sm:$0xff]
    %v97 = vpack.c.bf16 %v83, %v81
    %v98 = vpack.c.bf16 %v84, %v82
    %v99 = vpack.c.bf16 %v87, %v85
    %v100 = vpack.c.bf16 %v88, %v86
    %v101 = vpack.c.bf16 %v91, %v89
    %v102 = vpack.c.bf16 %v92, %v90
    %v103 = vpack.c.bf16 %v95, %v93
    %v104 = vpack.c.bf16 %v96, %v94
    %v105 = vld [vmem:[%s1] sm:$0xff]
    %v106 = vld [vmem:[%s1 + $0x8] sm:$0xff]
    %v107 = vld [vmem:[%s1 + $0x10] sm:$0xff]
    %v108 = vld [vmem:[%s1 + $0x18] sm:$0xff]
    %v109 = vld [vmem:[%s1 + $0x20] sm:$0xff]
    %v110 = vld [vmem:[%s1 + $0x28] sm:$0xff]
    %v111 = vld [vmem:[%s1 + $0x30] sm:$0xff]
    %v112 = vld [vmem:[%s1 + $0x38] sm:$0xff]
    %v113 = vld [vmem:[%s1 + $0x40] sm:$0xff]
    %v114 = vld [vmem:[%s1 + $0x48] sm:$0xff]
    %v115 = vld [vmem:[%s1 + $0x50] sm:$0xff]
    %v116 = vld [vmem:[%s1 + $0x58] sm:$0xff]
    %v117 = vld [vmem:[%s1 + $0x60] sm:$0xff]
    %v118 = vld [vmem:[%s1 + $0x68] sm:$0xff]
    %v119 = vld [vmem:[%s1 + $0x70] sm:$0xff]
    %v120 = vld [vmem:[%s1 + $0x78] sm:$0xff]
    %v121 = vld [vmem:[%s1 + $0x80] sm:$0xff]
    %v122 = vld [vmem:[%s1 + $0x88] sm:$0xff]
    %v123 = vld [vmem:[%s1 + $0x90] sm:$0xff]
    %v124 = vld [vmem:[%s1 + $0x98] sm:$0xff]
    %v125 = vld [vmem:[%s1 + $0xa0] sm:$0xff]
    %v126 = vld [vmem:[%s1 + $0xa8] sm:$0xff]
    %v127 = vld [vmem:[%s1 + $0xb0] sm:$0xff]
    %v128 = vld [vmem:[%s1 + $0xb8] sm:$0xff]
    %v129 = vld [vmem:[%s1 + $0xc0] sm:$0xff]
    %v130 = vld [vmem:[%s1 + $0xc8] sm:$0xff]
    %v131 = vld [vmem:[%s1 + $0xd0] sm:$0xff]
    %v132 = vld [vmem:[%s1 + $0xd8] sm:$0xff]
    %v133 = vld [vmem:[%s1 + $0xe0] sm:$0xff]
    %v134 = vld [vmem:[%s1 + $0xe8] sm:$0xff]
    %v135 = vld [vmem:[%s1 + $0xf0] sm:$0xff]
    %v136 = vld [vmem:[%s1 + $0xf8] sm:$0xff]
    %v137 = vld [vmem:[%s1 + $0x100] sm:$0xff]
    %v138 = vld [vmem:[%s1 + $0x108] sm:$0xff]
    %v139 = vld [vmem:[%s1 + $0x110] sm:$0xff]
    %v140 = vld [vmem:[%s1 + $0x118] sm:$0xff]
    %v141 = vld [vmem:[%s1 + $0x120] sm:$0xff]
    %v142 = vld [vmem:[%s1 + $0x128] sm:$0xff]
    %v143 = vld [vmem:[%s1 + $0x130] sm:$0xff]
    %v144 = vld [vmem:[%s1 + $0x138] sm:$0xff]
    %v145 = vld [vmem:[%s1 + $0x140] sm:$0xff]
    %v146 = vld [vmem:[%s1 + $0x148] sm:$0xff]
    %v147 = vld [vmem:[%s1 + $0x150] sm:$0xff]
    %v148 = vld [vmem:[%s1 + $0x158] sm:$0xff]
    %v149 = vld [vmem:[%s1 + $0x160] sm:$0xff]
    %v150 = vld [vmem:[%s1 + $0x168] sm:$0xff]
    %v151 = vld [vmem:[%s1 + $0x170] sm:$0xff]
    %v152 = vld [vmem:[%s1 + $0x178] sm:$0xff]
    %v153 = vld [vmem:[%s1 + $0x180] sm:$0xff]
    %v154 = vld [vmem:[%s1 + $0x188] sm:$0xff]
    %v155 = vld [vmem:[%s1 + $0x190] sm:$0xff]
    %v156 = vld [vmem:[%s1 + $0x198] sm:$0xff]
    %v157 = vld [vmem:[%s1 + $0x1a0] sm:$0xff]
    %v158 = vld [vmem:[%s1 + $0x1a8] sm:$0xff]
    %v159 = vld [vmem:[%s1 + $0x1b0] sm:$0xff]
    %v160 = vld [vmem:[%s1 + $0x1b8] sm:$0xff]
    %v161 = vld [vmem:[%s1 + $0x1c0] sm:$0xff]
    %v162 = vld [vmem:[%s1 + $0x1c8] sm:$0xff]
    %v163 = vld [vmem:[%s1 + $0x1d0] sm:$0xff]
    %v164 = vld [vmem:[%s1 + $0x1d8] sm:$0xff]
    %v165 = vld [vmem:[%s1 + $0x1e0] sm:$0xff]
    %v166 = vld [vmem:[%s1 + $0x1e8] sm:$0xff]
    %v167 = vld [vmem:[%s1 + $0x1f0] sm:$0xff]
    %v168 = vld [vmem:[%s1 + $0x1f8] sm:$0xff]
    %v169 = vld [vmem:[%s3] sm:$0xf]
    %v171 = vlaneseq
    %v172 = vshrl.u32 %v171, 7
    %v173 = vsub.s32 0, %v172
    %v174 = vrot.slane %v169, %v173
    %v175 = vlaneseq
    %v176 = vshrl.u32 %v175, 7
    %v177 = vsub.s32 1, %v176
    %v178 = vrot.slane %v169, %v177
    %v179 = vlaneseq
    %v180 = vshrl.u32 %v179, 7
    %v181 = vsub.s32 2, %v180
    %v182 = vrot.slane %v169, %v181
    %v183 = vlaneseq
    %v184 = vshrl.u32 %v183, 7
    %v185 = vsub.s32 3, %v184
    %v186 = vrot.slane %v169, %v185
    %v255 = vunpack.c.l.b16 %v105
    %v256 = vunpack.c.h.b16 %v105
    %v257 = vunpack.c.l.b16 %v106
    %v258 = vunpack.c.h.b16 %v106
    %v259 = vunpack.c.l.b16 %v107
    %v260 = vunpack.c.h.b16 %v107
    %v261 = vunpack.c.l.b16 %v108
    %v262 = vunpack.c.h.b16 %v108
    %v263 = vunpack.c.l.b16 %v109
    %v264 = vunpack.c.h.b16 %v109
    %v265 = vunpack.c.l.b16 %v110
    %v266 = vunpack.c.h.b16 %v110
    %v267 = vunpack.c.l.b16 %v111
    %v268 = vunpack.c.h.b16 %v111
    %v269 = vunpack.c.l.b16 %v112
    %v270 = vunpack.c.h.b16 %v112
    %v271 = vunpack.c.l.b16 %v113
    %v272 = vunpack.c.h.b16 %v113
    %v273 = vunpack.c.l.b16 %v114
    %v274 = vunpack.c.h.b16 %v114
    %v275 = vunpack.c.l.b16 %v115
    %v276 = vunpack.c.h.b16 %v115
    %v277 = vunpack.c.l.b16 %v116
    %v278 = vunpack.c.h.b16 %v116
    %v279 = vunpack.c.l.b16 %v117
    %v280 = vunpack.c.h.b16 %v117
    %v281 = vunpack.c.l.b16 %v118
    %v282 = vunpack.c.h.b16 %v118
    %v283 = vunpack.c.l.b16 %v119
    %v284 = vunpack.c.h.b16 %v119
    %v285 = vunpack.c.l.b16 %v120
    %v286 = vunpack.c.h.b16 %v120
    %v287 = vunpack.c.l.b16 %v121
    %v288 = vunpack.c.h.b16 %v121
    %v289 = vunpack.c.l.b16 %v122
    %v290 = vunpack.c.h.b16 %v122
    %v291 = vunpack.c.l.b16 %v123
    %v292 = vunpack.c.h.b16 %v123
    %v293 = vunpack.c.l.b16 %v124
    %v294 = vunpack.c.h.b16 %v124
    %v295 = vunpack.c.l.b16 %v125
    %v296 = vunpack.c.h.b16 %v125
    %v297 = vunpack.c.l.b16 %v126
    %v298 = vunpack.c.h.b16 %v126
    %v299 = vunpack.c.l.b16 %v127
    %v300 = vunpack.c.h.b16 %v127
    %v301 = vunpack.c.l.b16 %v128
    %v302 = vunpack.c.h.b16 %v128
    %v303 = vunpack.c.l.b16 %v129
    %v304 = vunpack.c.h.b16 %v129
    %v305 = vunpack.c.l.b16 %v130
    %v306 = vunpack.c.h.b16 %v130
    %v307 = vunpack.c.l.b16 %v131
    %v308 = vunpack.c.h.b16 %v131
    %v309 = vunpack.c.l.b16 %v132
    %v310 = vunpack.c.h.b16 %v132
    %v311 = vunpack.c.l.b16 %v133
    %v312 = vunpack.c.h.b16 %v133
    %v313 = vunpack.c.l.b16 %v134
    %v314 = vunpack.c.h.b16 %v134
    %v315 = vunpack.c.l.b16 %v135
    %v316 = vunpack.c.h.b16 %v135
    %v317 = vunpack.c.l.b16 %v136
    %v318 = vunpack.c.h.b16 %v136
    %v319 = vunpack.c.l.b16 %v137
    %v320 = vunpack.c.h.b16 %v137
    %v321 = vunpack.c.l.b16 %v138
    %v322 = vunpack.c.h.b16 %v138
    %v323 = vunpack.c.l.b16 %v139
    %v324 = vunpack.c.h.b16 %v139
    %v325 = vunpack.c.l.b16 %v140
    %v326 = vunpack.c.h.b16 %v140
    %v327 = vunpack.c.l.b16 %v141
    %v328 = vunpack.c.h.b16 %v141
    %v329 = vunpack.c.l.b16 %v142
    %v330 = vunpack.c.h.b16 %v142
    %v331 = vunpack.c.l.b16 %v143
    %v332 = vunpack.c.h.b16 %v143
    %v333 = vunpack.c.l.b16 %v144
    %v334 = vunpack.c.h.b16 %v144
    %v335 = vunpack.c.l.b16 %v145
    %v336 = vunpack.c.h.b16 %v145
    %v337 = vunpack.c.l.b16 %v146
    %v338 = vunpack.c.h.b16 %v146
    %v339 = vunpack.c.l.b16 %v147
    %v340 = vunpack.c.h.b16 %v147
    %v341 = vunpack.c.l.b16 %v148
    %v342 = vunpack.c.h.b16 %v148
    %v343 = vunpack.c.l.b16 %v149
    %v344 = vunpack.c.h.b16 %v149
    %v345 = vunpack.c.l.b16 %v150
    %v346 = vunpack.c.h.b16 %v150
    %v347 = vunpack.c.l.b16 %v151
    %v348 = vunpack.c.h.b16 %v151
    %v349 = vunpack.c.l.b16 %v152
    %v350 = vunpack.c.h.b16 %v152
    %v351 = vunpack.c.l.b16 %v153
    %v352 = vunpack.c.h.b16 %v153
    %v353 = vunpack.c.l.b16 %v154
    %v354 = vunpack.c.h.b16 %v154
    %v355 = vunpack.c.l.b16 %v155
    %v356 = vunpack.c.h.b16 %v155
    %v357 = vunpack.c.l.b16 %v156
    %v358 = vunpack.c.h.b16 %v156
    %v359 = vunpack.c.l.b16 %v157
    %v360 = vunpack.c.h.b16 %v157
    %v361 = vunpack.c.l.b16 %v158
    %v362 = vunpack.c.h.b16 %v158
    %v363 = vunpack.c.l.b16 %v159
    %v364 = vunpack.c.h.b16 %v159
    %v365 = vunpack.c.l.b16 %v160
    %v366 = vunpack.c.h.b16 %v160
    %v367 = vunpack.c.l.b16 %v161
    %v368 = vunpack.c.h.b16 %v161
    %v369 = vunpack.c.l.b16 %v162
    %v370 = vunpack.c.h.b16 %v162
    %v371 = vunpack.c.l.b16 %v163
    %v372 = vunpack.c.h.b16 %v163
    %v373 = vunpack.c.l.b16 %v164
    %v374 = vunpack.c.h.b16 %v164
    %v375 = vunpack.c.l.b16 %v165
    %v376 = vunpack.c.h.b16 %v165
    %v377 = vunpack.c.l.b16 %v166
    %v378 = vunpack.c.h.b16 %v166
    %v379 = vunpack.c.l.b16 %v167
    %v380 = vunpack.c.h.b16 %v167
    %v381 = vunpack.c.l.b16 %v168
    %v382 = vunpack.c.h.b16 %v168
    %v383 = vpack.c.b16 %v259, %v255
    %v384 = vpack.c.b16 %v260, %v256
    %v385 = vpack.c.b16 %v261, %v257
    %v386 = vpack.c.b16 %v262, %v258
    %v387 = vpack.c.b16 %v267, %v263
    %v388 = vpack.c.b16 %v268, %v264
    %v389 = vpack.c.b16 %v269, %v265
    %v390 = vpack.c.b16 %v270, %v266
    %v391 = vpack.c.b16 %v275, %v271
    %v392 = vpack.c.b16 %v276, %v272
    %v393 = vpack.c.b16 %v277, %v273
    %v394 = vpack.c.b16 %v278, %v274
    %v395 = vpack.c.b16 %v283, %v279
    %v396 = vpack.c.b16 %v284, %v280
    %v397 = vpack.c.b16 %v285, %v281
    %v398 = vpack.c.b16 %v286, %v282
    %v399 = vpack.c.b16 %v291, %v287
    %v400 = vpack.c.b16 %v292, %v288
    %v401 = vpack.c.b16 %v293, %v289
    %v402 = vpack.c.b16 %v294, %v290
    %v403 = vpack.c.b16 %v299, %v295
    %v404 = vpack.c.b16 %v300, %v296
    %v405 = vpack.c.b16 %v301, %v297
    %v406 = vpack.c.b16 %v302, %v298
    %v407 = vpack.c.b16 %v307, %v303
    %v408 = vpack.c.b16 %v308, %v304
    %v409 = vpack.c.b16 %v309, %v305
    %v410 = vpack.c.b16 %v310, %v306
    %v411 = vpack.c.b16 %v315, %v311
    %v412 = vpack.c.b16 %v316, %v312
    %v413 = vpack.c.b16 %v317, %v313
    %v414 = vpack.c.b16 %v318, %v314
    %v415 = vpack.c.b16 %v323, %v319
    %v416 = vpack.c.b16 %v324, %v320
    %v417 = vpack.c.b16 %v325, %v321
    %v418 = vpack.c.b16 %v326, %v322
    %v419 = vpack.c.b16 %v331, %v327
    %v420 = vpack.c.b16 %v332, %v328
    %v421 = vpack.c.b16 %v333, %v329
    %v422 = vpack.c.b16 %v334, %v330
    %v423 = vpack.c.b16 %v339, %v335
    %v424 = vpack.c.b16 %v340, %v336
    %v425 = vpack.c.b16 %v341, %v337
    %v426 = vpack.c.b16 %v342, %v338
    %v427 = vpack.c.b16 %v347, %v343
    %v428 = vpack.c.b16 %v348, %v344
    %v429 = vpack.c.b16 %v349, %v345
    %v430 = vpack.c.b16 %v350, %v346
    %v431 = vpack.c.b16 %v355, %v351
    %v432 = vpack.c.b16 %v356, %v352
    %v433 = vpack.c.b16 %v357, %v353
    %v434 = vpack.c.b16 %v358, %v354
    %v435 = vpack.c.b16 %v363, %v359
    %v436 = vpack.c.b16 %v364, %v360
    %v437 = vpack.c.b16 %v365, %v361
    %v438 = vpack.c.b16 %v366, %v362
    %v439 = vpack.c.b16 %v371, %v367
    %v440 = vpack.c.b16 %v372, %v368
    %v441 = vpack.c.b16 %v373, %v369
    %v442 = vpack.c.b16 %v374, %v370
    %v443 = vpack.c.b16 %v379, %v375
    %v444 = vpack.c.b16 %v380, %v376
    %v445 = vpack.c.b16 %v381, %v377
    %v446 = vpack.c.b16 %v382, %v378
    %511 = vmatprep.subr.bf16.mxu0 %v384
    %512 = vmatpush1.bf16.msra.mxu0 %v383
    %513 = vmatprep.subr.bf16.mxu0 %v388
    %514 = vmatpush1.bf16.msra.mxu0 %v387
    %515 = vmatprep.subr.bf16.mxu0 %v392
    %516 = vmatpush1.bf16.msra.mxu0 %v391
    %517 = vmatprep.subr.bf16.mxu0 %v396
    %518 = vmatpush1.bf16.msra.mxu0 %v395
    %519 = vmatprep.subr.bf16.mxu0 %v400
    %520 = vmatpush1.bf16.msra.mxu0 %v399
    %521 = vmatprep.subr.bf16.mxu0 %v404
    %522 = vmatpush1.bf16.msra.mxu0 %v403
    %523 = vmatprep.subr.bf16.mxu0 %v408
    %524 = vmatpush1.bf16.msra.mxu0 %v407
    %525 = vmatprep.subr.bf16.mxu0 %v412
    %526 = vmatpush1.bf16.msra.mxu0 %v411
    %527 = vmatprep.subr.bf16.mxu0 %v416
    %528 = vmatpush1.bf16.msra.mxu0 %v415
    %529 = vmatprep.subr.bf16.mxu0 %v420
    %530 = vmatpush1.bf16.msra.mxu0 %v419
    %531 = vmatprep.subr.bf16.mxu0 %v424
    %532 = vmatpush1.bf16.msra.mxu0 %v423
    %533 = vmatprep.subr.bf16.mxu0 %v428
    %534 = vmatpush1.bf16.msra.mxu0 %v427
    %535 = vmatprep.subr.bf16.mxu0 %v432
    %536 = vmatpush1.bf16.msra.mxu0 %v431
    %537 = vmatprep.subr.bf16.mxu0 %v436
    %538 = vmatpush1.bf16.msra.mxu0 %v435
    %539 = vmatprep.subr.bf16.mxu0 %v440
    %540 = vmatpush1.bf16.msra.mxu0 %v439
    %541 = vmatprep.subr.bf16.mxu0 %v444
    %542 = vmatpush1.bf16.msra.mxu0 %v443
    %543 = vmatprep.mubr.bf16.mxu0 %v98
    %544 = vmatmul.mubr.bf16.gmra.mrb[0].mxu0 %v97
    %v545 = vpop.f32.mrb[0].mxu0
    %v546 = vadd.f32 %v174, %v545
    %v547 = vpop.f32.mrb[0].mxu0
    %v548 = vadd.f32 %v178, %v547
    %v549 = vpop.f32.mrb[0].mxu0
    %v550 = vadd.f32 %v174, %v549
    %v551 = vpop.f32.mrb[0].mxu0
    %v552 = vadd.f32 %v178, %v551
    %553 = vmatprep.mubr.bf16.mxu0 %v100
    %554 = vmatmul.mubr.bf16.gmra.mrb[0].mxu0 %v99
    %v555 = vpop.f32.mrb[0].mxu0
    %v556 = vadd.f32 %v174, %v555
    %v557 = vpop.f32.mrb[0].mxu0
    %v558 = vadd.f32 %v178, %v557
    %v559 = vpop.f32.mrb[0].mxu0
    %v560 = vadd.f32 %v174, %v559
    %v561 = vpop.f32.mrb[0].mxu0
    %v562 = vadd.f32 %v178, %v561
    %563 = vmatprep.mubr.bf16.mxu0 %v102
    %564 = vmatmul.mubr.bf16.gmra.mrb[0].mxu0 %v101
    %v565 = vpop.f32.mrb[0].mxu0
    %v566 = vadd.f32 %v174, %v565
    %v567 = vpop.f32.mrb[0].mxu0
    %v568 = vadd.f32 %v178, %v567
    %v569 = vpop.f32.mrb[0].mxu0
    %v570 = vadd.f32 %v174, %v569
    %v571 = vpop.f32.mrb[0].mxu0
    %v572 = vadd.f32 %v178, %v571
    %573 = vmatprep.mubr.bf16.mxu0 %v104
    %574 = vmatmul.mubr.bf16.gmra.mrb[0].mxu0 %v103
    %v575 = vpop.f32.mrb[0].mxu0
    %v576 = vadd.f32 %v174, %v575
    %v577 = vpop.f32.mrb[0].mxu0
    %v578 = vadd.f32 %v178, %v577
    %v579 = vpop.f32.mrb[0].mxu0
    %v580 = vadd.f32 %v174, %v579
    %v581 = vpop.f32.mrb[0].mxu0
    %v582 = vadd.f32 %v178, %v581
    %583 = vdwg.mxu0
    %584 = vmatprep.subr.bf16.mxu0 %v386
    %585 = vmatpush1.bf16.msra.mxu0 %v385
    %586 = vmatprep.subr.bf16.mxu0 %v390
    %587 = vmatpush1.bf16.msra.mxu0 %v389
    %588 = vmatprep.subr.bf16.mxu0 %v394
    %589 = vmatpush1.bf16.msra.mxu0 %v393
    %590 = vmatprep.subr.bf16.mxu0 %v398
    %591 = vmatpush1.bf16.msra.mxu0 %v397
    %592 = vmatprep.subr.bf16.mxu0 %v402
    %593 = vmatpush1.bf16.msra.mxu0 %v401
    %594 = vmatprep.subr.bf16.mxu0 %v406
    %595 = vmatpush1.bf16.msra.mxu0 %v405
    %596 = vmatprep.subr.bf16.mxu0 %v410
    %597 = vmatpush1.bf16.msra.mxu0 %v409
    %598 = vmatprep.subr.bf16.mxu0 %v414
    %599 = vmatpush1.bf16.msra.mxu0 %v413
    %600 = vmatprep.subr.bf16.mxu0 %v418
    %601 = vmatpush1.bf16.msra.mxu0 %v417
    %602 = vmatprep.subr.bf16.mxu0 %v422
    %603 = vmatpush1.bf16.msra.mxu0 %v421
    %604 = vmatprep.subr.bf16.mxu0 %v426
    %605 = vmatpush1.bf16.msra.mxu0 %v425
    %606 = vmatprep.subr.bf16.mxu0 %v430
    %607 = vmatpush1.bf16.msra.mxu0 %v429
    %608 = vmatprep.subr.bf16.mxu0 %v434
    %609 = vmatpush1.bf16.msra.mxu0 %v433
    %610 = vmatprep.subr.bf16.mxu0 %v438
    %611 = vmatpush1.bf16.msra.mxu0 %v437
    %612 = vmatprep.subr.bf16.mxu0 %v442
    %613 = vmatpush1.bf16.msra.mxu0 %v441
    %614 = vmatprep.subr.bf16.mxu0 %v446
    %615 = vmatpush1.bf16.msra.mxu0 %v445
    %616 = vmatprep.mubr.bf16.mxu0 %v98
    %617 = vmatmul.mubr.bf16.gmra.mrb[0].mxu0 %v97
    %v618 = vpop.f32.mrb[0].mxu0
    %v619 = vadd.f32 %v182, %v618
    %v620 = vpop.f32.mrb[0].mxu0
    %v621 = vadd.f32 %v186, %v620
    %v622 = vpop.f32.mrb[0].mxu0
    %v623 = vadd.f32 %v182, %v622
    %v624 = vpop.f32.mrb[0].mxu0
    %v625 = vadd.f32 %v186, %v624
    %626 = vmatprep.mubr.bf16.mxu0 %v100
    %627 = vmatmul.mubr.bf16.gmra.mrb[0].mxu0 %v99
    %v628 = vpop.f32.mrb[0].mxu0
    %v629 = vadd.f32 %v182, %v628
    %v630 = vpop.f32.mrb[0].mxu0
    %v631 = vadd.f32 %v186, %v630
    %v632 = vpop.f32.mrb[0].mxu0
    %v633 = vadd.f32 %v182, %v632
    %v634 = vpop.f32.mrb[0].mxu0
    %v635 = vadd.f32 %v186, %v634
    %636 = vmatprep.mubr.bf16.mxu0 %v102
    %637 = vmatmul.mubr.bf16.gmra.mrb[0].mxu0 %v101
    %v638 = vpop.f32.mrb[0].mxu0
    %v639 = vadd.f32 %v182, %v638
    %v640 = vpop.f32.mrb[0].mxu0
    %v641 = vadd.f32 %v186, %v640
    %v642 = vpop.f32.mrb[0].mxu0
    %v643 = vadd.f32 %v182, %v642
    %v644 = vpop.f32.mrb[0].mxu0
    %v645 = vadd.f32 %v186, %v644
    %646 = vmatprep.mubr.bf16.mxu0 %v104
    %647 = vmatmul.mubr.bf16.gmra.mrb[0].mxu0 %v103
    %v648 = vpop.f32.mrb[0].mxu0
    %v649 = vadd.f32 %v182, %v648
    %v650 = vpop.f32.mrb[0].mxu0
    %v651 = vadd.f32 %v186, %v650
    %v652 = vpop.f32.mrb[0].mxu0
    %v653 = vadd.f32 %v182, %v652
    %v654 = vpop.f32.mrb[0].mxu0
    %v655 = vadd.f32 %v186, %v654
    %656 = vdwg.mxu0
    %657 = vst [vmem:[#allocation2] sm:$0xff] %v546
    %658 = vst [vmem:[#allocation2 + $0x8] sm:$0xff] %v548
    %659 = vst [vmem:[#allocation2 + $0x10] sm:$0xff] %v619
    %660 = vst [vmem:[#allocation2 + $0x18] sm:$0xff] %v621
    %661 = vst [vmem:[#allocation2 + $0x20] sm:$0xff] %v550
    %662 = vst [vmem:[#allocation2 + $0x28] sm:$0xff] %v552
    %663 = vst [vmem:[#allocation2 + $0x30] sm:$0xff] %v623
    %664 = vst [vmem:[#allocation2 + $0x38] sm:$0xff] %v625
    %665 = vst [vmem:[#allocation2 + $0x40] sm:$0xff] %v556
    %666 = vst [vmem:[#allocation2 + $0x48] sm:$0xff] %v558
    %667 = vst [vmem:[#allocation2 + $0x50] sm:$0xff] %v629
    %668 = vst [vmem:[#allocation2 + $0x58] sm:$0xff] %v631
    %669 = vst [vmem:[#allocation2 + $0x60] sm:$0xff] %v560
    %670 = vst [vmem:[#allocation2 + $0x68] sm:$0xff] %v562
    %671 = vst [vmem:[#allocation2 + $0x70] sm:$0xff] %v633
    %672 = vst [vmem:[#allocation2 + $0x78] sm:$0xff] %v635
    %673 = vst [vmem:[#allocation2 + $0x80] sm:$0xff] %v566
    %674 = vst [vmem:[#allocation2 + $0x88] sm:$0xff] %v568
    %675 = vst [vmem:[#allocation2 + $0x90] sm:$0xff] %v639
    %676 = vst [vmem:[#allocation2 + $0x98] sm:$0xff] %v641
    %677 = vst [vmem:[#allocation2 + $0xa0] sm:$0xff] %v570
    %678 = vst [vmem:[#allocation2 + $0xa8] sm:$0xff] %v572
    %679 = vst [vmem:[#allocation2 + $0xb0] sm:$0xff] %v643
    %680 = vst [vmem:[#allocation2 + $0xb8] sm:$0xff] %v645
    %681 = vst [vmem:[#allocation2 + $0xc0] sm:$0xff] %v576
    %682 = vst [vmem:[#allocation2 + $0xc8] sm:$0xff] %v578
    %683 = vst [vmem:[#allocation2 + $0xd0] sm:$0xff] %v649
    %684 = vst [vmem:[#allocation2 + $0xd8] sm:$0xff] %v651
    %685 = vst [vmem:[#allocation2 + $0xe0] sm:$0xff] %v580
    %686 = vst [vmem:[#allocation2 + $0xe8] sm:$0xff] %v582
    %687 = vst [vmem:[#allocation2 + $0xf0] sm:$0xff] %v653
    %688 = vst [vmem:[#allocation2 + $0xf8] sm:$0xff] %v655
    %v689 = vld [vmem:[%s4] sm:$0xff]
    %v690 = vld [vmem:[%s4 + $0x8] sm:$0xff]
    %v691 = vld [vmem:[%s4 + $0x10] sm:$0xff]
    %v692 = vld [vmem:[%s4 + $0x18] sm:$0xff]
    %v693 = vld [vmem:[%s4 + $0x20] sm:$0xff]
    %v694 = vld [vmem:[%s4 + $0x28] sm:$0xff]
    %v695 = vld [vmem:[%s4 + $0x30] sm:$0xff]
    %v696 = vld [vmem:[%s4 + $0x38] sm:$0xff]
    %v697 = vld [vmem:[%s4 + $0x40] sm:$0xff]
    %v698 = vld [vmem:[%s4 + $0x48] sm:$0xff]
    %v699 = vld [vmem:[%s4 + $0x50] sm:$0xff]
    %v700 = vld [vmem:[%s4 + $0x58] sm:$0xff]
    %v701 = vld [vmem:[%s4 + $0x60] sm:$0xff]
    %v702 = vld [vmem:[%s4 + $0x68] sm:$0xff]
    %v703 = vld [vmem:[%s4 + $0x70] sm:$0xff]
    %v704 = vld [vmem:[%s4 + $0x78] sm:$0xff]
    %v705 = vld [vmem:[%s4 + $0x80] sm:$0xff]
    %v706 = vld [vmem:[%s4 + $0x88] sm:$0xff]
    %v707 = vld [vmem:[%s4 + $0x90] sm:$0xff]
    %v708 = vld [vmem:[%s4 + $0x98] sm:$0xff]
    %v709 = vld [vmem:[%s4 + $0xa0] sm:$0xff]
    %v710 = vld [vmem:[%s4 + $0xa8] sm:$0xff]
    %v711 = vld [vmem:[%s4 + $0xb0] sm:$0xff]
    %v712 = vld [vmem:[%s4 + $0xb8] sm:$0xff]
    %v713 = vld [vmem:[%s4 + $0xc0] sm:$0xff]
    %v714 = vld [vmem:[%s4 + $0xc8] sm:$0xff]
    %v715 = vld [vmem:[%s4 + $0xd0] sm:$0xff]
    %v716 = vld [vmem:[%s4 + $0xd8] sm:$0xff]
    %v717 = vld [vmem:[%s4 + $0xe0] sm:$0xff]
    %v718 = vld [vmem:[%s4 + $0xe8] sm:$0xff]
    %v719 = vld [vmem:[%s4 + $0xf0] sm:$0xff]
    %v720 = vld [vmem:[%s4 + $0xf8] sm:$0xff]
    %v721 = vld [vmem:[%s4 + $0x100] sm:$0xff]
    %v722 = vld [vmem:[%s4 + $0x108] sm:$0xff]
    %v723 = vld [vmem:[%s4 + $0x110] sm:$0xff]
    %v724 = vld [vmem:[%s4 + $0x118] sm:$0xff]
    %v725 = vld [vmem:[%s4 + $0x120] sm:$0xff]
    %v726 = vld [vmem:[%s4 + $0x128] sm:$0xff]
    %v727 = vld [vmem:[%s4 + $0x130] sm:$0xff]
    %v728 = vld [vmem:[%s4 + $0x138] sm:$0xff]
    %v729 = vld [vmem:[%s4 + $0x140] sm:$0xff]
    %v730 = vld [vmem:[%s4 + $0x148] sm:$0xff]
    %v731 = vld [vmem:[%s4 + $0x150] sm:$0xff]
    %v732 = vld [vmem:[%s4 + $0x158] sm:$0xff]
    %v733 = vld [vmem:[%s4 + $0x160] sm:$0xff]
    %v734 = vld [vmem:[%s4 + $0x168] sm:$0xff]
    %v735 = vld [vmem:[%s4 + $0x170] sm:$0xff]
    %v736 = vld [vmem:[%s4 + $0x178] sm:$0xff]
    %v737 = vld [vmem:[%s4 + $0x180] sm:$0xff]
    %v738 = vld [vmem:[%s4 + $0x188] sm:$0xff]
    %v739 = vld [vmem:[%s4 + $0x190] sm:$0xff]
    %v740 = vld [vmem:[%s4 + $0x198] sm:$0xff]
    %v741 = vld [vmem:[%s4 + $0x1a0] sm:$0xff]
    %v742 = vld [vmem:[%s4 + $0x1a8] sm:$0xff]
    %v743 = vld [vmem:[%s4 + $0x1b0] sm:$0xff]
    %v744 = vld [vmem:[%s4 + $0x1b8] sm:$0xff]
    %v745 = vld [vmem:[%s4 + $0x1c0] sm:$0xff]
    %v746 = vld [vmem:[%s4 + $0x1c8] sm:$0xff]
    %v747 = vld [vmem:[%s4 + $0x1d0] sm:$0xff]
    %v748 = vld [vmem:[%s4 + $0x1d8] sm:$0xff]
    %v749 = vld [vmem:[%s4 + $0x1e0] sm:$0xff]
    %v750 = vld [vmem:[%s4 + $0x1e8] sm:$0xff]
    %v751 = vld [vmem:[%s4 + $0x1f0] sm:$0xff]
    %v752 = vld [vmem:[%s4 + $0x1f8] sm:$0xff]
    %v753 = vld [vmem:[%s6] sm:$0xf]
    %v755 = vlaneseq
    %v756 = vshrl.u32 %v755, 7
    %v757 = vsub.s32 0, %v756
    %v758 = vrot.slane %v753, %v757
    %v759 = vlaneseq
    %v760 = vshrl.u32 %v759, 7
    %v761 = vsub.s32 1, %v760
    %v762 = vrot.slane %v753, %v761
    %v763 = vlaneseq
    %v764 = vshrl.u32 %v763, 7
    %v765 = vsub.s32 2, %v764
    %v766 = vrot.slane %v753, %v765
    %v767 = vlaneseq
    %v768 = vshrl.u32 %v767, 7
    %v769 = vsub.s32 3, %v768
    %v770 = vrot.slane %v753, %v769
    %v839 = vunpack.c.l.b16 %v689
    %v840 = vunpack.c.h.b16 %v689
    %v841 = vunpack.c.l.b16 %v690
    %v842 = vunpack.c.h.b16 %v690
    %v843 = vunpack.c.l.b16 %v691
    %v844 = vunpack.c.h.b16 %v691
    %v845 = vunpack.c.l.b16 %v692
    %v846 = vunpack.c.h.b16 %v692
    %v847 = vunpack.c.l.b16 %v693
    %v848 = vunpack.c.h.b16 %v693
    %v849 = vunpack.c.l.b16 %v694
    %v850 = vunpack.c.h.b16 %v694
    %v851 = vunpack.c.l.b16 %v695
    %v852 = vunpack.c.h.b16 %v695
    %v853 = vunpack.c.l.b16 %v696
    %v854 = vunpack.c.h.b16 %v696
    %v855 = vunpack.c.l.b16 %v697
    %v856 = vunpack.c.h.b16 %v697
    %v857 = vunpack.c.l.b16 %v698
    %v858 = vunpack.c.h.b16 %v698
    %v859 = vunpack.c.l.b16 %v699
    %v860 = vunpack.c.h.b16 %v699
    %v861 = vunpack.c.l.b16 %v700
    %v862 = vunpack.c.h.b16 %v700
    %v863 = vunpack.c.l.b16 %v701
    %v864 = vunpack.c.h.b16 %v701
    %v865 = vunpack.c.l.b16 %v702
    %v866 = vunpack.c.h.b16 %v702
    %v867 = vunpack.c.l.b16 %v703
    %v868 = vunpack.c.h.b16 %v703
    %v869 = vunpack.c.l.b16 %v704
    %v870 = vunpack.c.h.b16 %v704
    %v871 = vunpack.c.l.b16 %v705
    %v872 = vunpack.c.h.b16 %v705
    %v873 = vunpack.c.l.b16 %v706
    %v874 = vunpack.c.h.b16 %v706
    %v875 = vunpack.c.l.b16 %v707
    %v876 = vunpack.c.h.b16 %v707
    %v877 = vunpack.c.l.b16 %v708
    %v878 = vunpack.c.h.b16 %v708
    %v879 = vunpack.c.l.b16 %v709
    %v880 = vunpack.c.h.b16 %v709
    %v881 = vunpack.c.l.b16 %v710
    %v882 = vunpack.c.h.b16 %v710
    %v883 = vunpack.c.l.b16 %v711
    %v884 = vunpack.c.h.b16 %v711
    %v885 = vunpack.c.l.b16 %v712
    %v886 = vunpack.c.h.b16 %v712
    %v887 = vunpack.c.l.b16 %v713
    %v888 = vunpack.c.h.b16 %v713
    %v889 = vunpack.c.l.b16 %v714
    %v890 = vunpack.c.h.b16 %v714
    %v891 = vunpack.c.l.b16 %v715
    %v892 = vunpack.c.h.b16 %v715
    %v893 = vunpack.c.l.b16 %v716
    %v894 = vunpack.c.h.b16 %v716
    %v895 = vunpack.c.l.b16 %v717
    %v896 = vunpack.c.h.b16 %v717
    %v897 = vunpack.c.l.b16 %v718
    %v898 = vunpack.c.h.b16 %v718
    %v899 = vunpack.c.l.b16 %v719
    %v900 = vunpack.c.h.b16 %v719
    %v901 = vunpack.c.l.b16 %v720
    %v902 = vunpack.c.h.b16 %v720
    %v903 = vunpack.c.l.b16 %v721
    %v904 = vunpack.c.h.b16 %v721
    %v905 = vunpack.c.l.b16 %v722
    %v906 = vunpack.c.h.b16 %v722
    %v907 = vunpack.c.l.b16 %v723
    %v908 = vunpack.c.h.b16 %v723
    %v909 = vunpack.c.l.b16 %v724
    %v910 = vunpack.c.h.b16 %v724
    %v911 = vunpack.c.l.b16 %v725
    %v912 = vunpack.c.h.b16 %v725
    %v913 = vunpack.c.l.b16 %v726
    %v914 = vunpack.c.h.b16 %v726
    %v915 = vunpack.c.l.b16 %v727
    %v916 = vunpack.c.h.b16 %v727
    %v917 = vunpack.c.l.b16 %v728
    %v918 = vunpack.c.h.b16 %v728
    %v919 = vunpack.c.l.b16 %v729
    %v920 = vunpack.c.h.b16 %v729
    %v921 = vunpack.c.l.b16 %v730
    %v922 = vunpack.c.h.b16 %v730
    %v923 = vunpack.c.l.b16 %v731
    %v924 = vunpack.c.h.b16 %v731
    %v925 = vunpack.c.l.b16 %v732
    %v926 = vunpack.c.h.b16 %v732
    %v927 = vunpack.c.l.b16 %v733
    %v928 = vunpack.c.h.b16 %v733
    %v929 = vunpack.c.l.b16 %v734
    %v930 = vunpack.c.h.b16 %v734
    %v931 = vunpack.c.l.b16 %v735
    %v932 = vunpack.c.h.b16 %v735
    %v933 = vunpack.c.l.b16 %v736
    %v934 = vunpack.c.h.b16 %v736
    %v935 = vunpack.c.l.b16 %v737
    %v936 = vunpack.c.h.b16 %v737
    %v937 = vunpack.c.l.b16 %v738
    %v938 = vunpack.c.h.b16 %v738
    %v939 = vunpack.c.l.b16 %v739
    %v940 = vunpack.c.h.b16 %v739
    %v941 = vunpack.c.l.b16 %v740
    %v942 = vunpack.c.h.b16 %v740
    %v943 = vunpack.c.l.b16 %v741
    %v944 = vunpack.c.h.b16 %v741
    %v945 = vunpack.c.l.b16 %v742
    %v946 = vunpack.c.h.b16 %v742
    %v947 = vunpack.c.l.b16 %v743
    %v948 = vunpack.c.h.b16 %v743
    %v949 = vunpack.c.l.b16 %v744
    %v950 = vunpack.c.h.b16 %v744
    %v951 = vunpack.c.l.b16 %v745
    %v952 = vunpack.c.h.b16 %v745
    %v953 = vunpack.c.l.b16 %v746
    %v954 = vunpack.c.h.b16 %v746
    %v955 = vunpack.c.l.b16 %v747
    %v956 = vunpack.c.h.b16 %v747
    %v957 = vunpack.c.l.b16 %v748
    %v958 = vunpack.c.h.b16 %v748
    %v959 = vunpack.c.l.b16 %v749
    %v960 = vunpack.c.h.b16 %v749
    %v961 = vunpack.c.l.b16 %v750
    %v962 = vunpack.c.h.b16 %v750
    %v963 = vunpack.c.l.b16 %v751
    %v964 = vunpack.c.h.b16 %v751
    %v965 = vunpack.c.l.b16 %v752
    %v966 = vunpack.c.h.b16 %v752
    %v967 = vpack.c.b16 %v843, %v839
    %v968 = vpack.c.b16 %v844, %v840
    %v969 = vpack.c.b16 %v845, %v841
    %v970 = vpack.c.b16 %v846, %v842
    %v971 = vpack.c.b16 %v851, %v847
    %v972 = vpack.c.b16 %v852, %v848
    %v973 = vpack.c.b16 %v853, %v849
    %v974 = vpack.c.b16 %v854, %v850
    %v975 = vpack.c.b16 %v859, %v855
    %v976 = vpack.c.b16 %v860, %v856
    %v977 = vpack.c.b16 %v861, %v857
    %v978 = vpack.c.b16 %v862, %v858
    %v979 = vpack.c.b16 %v867, %v863
    %v980 = vpack.c.b16 %v868, %v864
    %v981 = vpack.c.b16 %v869, %v865
    %v982 = vpack.c.b16 %v870, %v866
    %v983 = vpack.c.b16 %v875, %v871
    %v984 = vpack.c.b16 %v876, %v872
    %v985 = vpack.c.b16 %v877, %v873
    %v986 = vpack.c.b16 %v878, %v874
    %v987 = vpack.c.b16 %v883, %v879
    %v988 = vpack.c.b16 %v884, %v880
    %v989 = vpack.c.b16 %v885, %v881
    %v990 = vpack.c.b16 %v886, %v882
    %v991 = vpack.c.b16 %v891, %v887
    %v992 = vpack.c.b16 %v892, %v888
    %v993 = vpack.c.b16 %v893, %v889
    %v994 = vpack.c.b16 %v894, %v890
    %v995 = vpack.c.b16 %v899, %v895
    %v996 = vpack.c.b16 %v900, %v896
    %v997 = vpack.c.b16 %v901, %v897
    %v998 = vpack.c.b16 %v902, %v898
    %v999 = vpack.c.b16 %v907, %v903
    %v1000 = vpack.c.b16 %v908, %v904
    %v1001 = vpack.c.b16 %v909, %v905
    %v1002 = vpack.c.b16 %v910, %v906
    %v1003 = vpack.c.b16 %v915, %v911
    %v1004 = vpack.c.b16 %v916, %v912
    %v1005 = vpack.c.b16 %v917, %v913
    %v1006 = vpack.c.b16 %v918, %v914
    %v1007 = vpack.c.b16 %v923, %v919
    %v1008 = vpack.c.b16 %v924, %v920
    %v1009 = vpack.c.b16 %v925, %v921
    %v1010 = vpack.c.b16 %v926, %v922
    %v1011 = vpack.c.b16 %v931, %v927
    %v1012 = vpack.c.b16 %v932, %v928
    %v1013 = vpack.c.b16 %v933, %v929
    %v1014 = vpack.c.b16 %v934, %v930
    %v1015 = vpack.c.b16 %v939, %v935
    %v1016 = vpack.c.b16 %v940, %v936
    %v1017 = vpack.c.b16 %v941, %v937
    %v1018 = vpack.c.b16 %v942, %v938
    %v1019 = vpack.c.b16 %v947, %v943
    %v1020 = vpack.c.b16 %v948, %v944
    %v1021 = vpack.c.b16 %v949, %v945
    %v1022 = vpack.c.b16 %v950, %v946
    %v1023 = vpack.c.b16 %v955, %v951
    %v1024 = vpack.c.b16 %v956, %v952
    %v1025 = vpack.c.b16 %v957, %v953
    %v1026 = vpack.c.b16 %v958, %v954
    %v1027 = vpack.c.b16 %v963, %v959
    %v1028 = vpack.c.b16 %v964, %v960
    %v1029 = vpack.c.b16 %v965, %v961
    %v1030 = vpack.c.b16 %v966, %v962
    %1095 = vmatprep.subr.bf16.mxu0 %v968
    %1096 = vmatpush1.bf16.msra.mxu0 %v967
    %1097 = vmatprep.subr.bf16.mxu0 %v972
    %1098 = vmatpush1.bf16.msra.mxu0 %v971
    %1099 = vmatprep.subr.bf16.mxu0 %v976
    %1100 = vmatpush1.bf16.msra.mxu0 %v975
    %1101 = vmatprep.subr.bf16.mxu0 %v980
    %1102 = vmatpush1.bf16.msra.mxu0 %v979
    %1103 = vmatprep.subr.bf16.mxu0 %v984
    %1104 = vmatpush1.bf16.msra.mxu0 %v983
    %1105 = vmatprep.subr.bf16.mxu0 %v988
    %1106 = vmatpush1.bf16.msra.mxu0 %v987
    %1107 = vmatprep.subr.bf16.mxu0 %v992
    %1108 = vmatpush1.bf16.msra.mxu0 %v991
    %1109 = vmatprep.subr.bf16.mxu0 %v996
    %1110 = vmatpush1.bf16.msra.mxu0 %v995
    %1111 = vmatprep.subr.bf16.mxu0 %v1000
    %1112 = vmatpush1.bf16.msra.mxu0 %v999
    %1113 = vmatprep.subr.bf16.mxu0 %v1004
    %1114 = vmatpush1.bf16.msra.mxu0 %v1003
    %1115 = vmatprep.subr.bf16.mxu0 %v1008
    %1116 = vmatpush1.bf16.msra.mxu0 %v1007
    %1117 = vmatprep.subr.bf16.mxu0 %v1012
    %1118 = vmatpush1.bf16.msra.mxu0 %v1011
    %1119 = vmatprep.subr.bf16.mxu0 %v1016
    %1120 = vmatpush1.bf16.msra.mxu0 %v1015
    %1121 = vmatprep.subr.bf16.mxu0 %v1020
    %1122 = vmatpush1.bf16.msra.mxu0 %v1019
    %1123 = vmatprep.subr.bf16.mxu0 %v1024
    %1124 = vmatpush1.bf16.msra.mxu0 %v1023
    %1125 = vmatprep.subr.bf16.mxu0 %v1028
    %1126 = vmatpush1.bf16.msra.mxu0 %v1027
    %1127 = vmatprep.mubr.bf16.mxu0 %v98
    %1128 = vmatmul.mubr.bf16.gmra.mrb[0].mxu0 %v97
    %v1129 = vpop.f32.mrb[0].mxu0
    %v1130 = vadd.f32 %v758, %v1129
    %v1131 = vpop.f32.mrb[0].mxu0
    %v1132 = vadd.f32 %v762, %v1131
    %v1133 = vpop.f32.mrb[0].mxu0
    %v1134 = vadd.f32 %v758, %v1133
    %v1135 = vpop.f32.mrb[0].mxu0
    %v1136 = vadd.f32 %v762, %v1135
    %1137 = vmatprep.mubr.bf16.mxu0 %v100
    %1138 = vmatmul.mubr.bf16.gmra.mrb[0].mxu0 %v99
    %v1139 = vpop.f32.mrb[0].mxu0
    %v1140 = vadd.f32 %v758, %v1139
    %v1141 = vpop.f32.mrb[0].mxu0
    %v1142 = vadd.f32 %v762, %v1141
    %v1143 = vpop.f32.mrb[0].mxu0
    %v1144 = vadd.f32 %v758, %v1143
    %v1145 = vpop.f32.mrb[0].mxu0
    %v1146 = vadd.f32 %v762, %v1145
    %1147 = vmatprep.mubr.bf16.mxu0 %v102
    %1148 = vmatmul.mubr.bf16.gmra.mrb[0].mxu0 %v101
    %v1149 = vpop.f32.mrb[0].mxu0
    %v1150 = vadd.f32 %v758, %v1149
    %v1151 = vpop.f32.mrb[0].mxu0
    %v1152 = vadd.f32 %v762, %v1151
    %v1153 = vpop.f32.mrb[0].mxu0
    %v1154 = vadd.f32 %v758, %v1153
    %v1155 = vpop.f32.mrb[0].mxu0
    %v1156 = vadd.f32 %v762, %v1155
    %1157 = vmatprep.mubr.bf16.mxu0 %v104
    %1158 = vmatmul.mubr.bf16.gmra.mrb[0].mxu0 %v103
    %v1159 = vpop.f32.mrb[0].mxu0
    %v1160 = vadd.f32 %v758, %v1159
    %v1161 = vpop.f32.mrb[0].mxu0
    %v1162 = vadd.f32 %v762, %v1161
    %v1163 = vpop.f32.mrb[0].mxu0
    %v1164 = vadd.f32 %v758, %v1163
    %v1165 = vpop.f32.mrb[0].mxu0
    %v1166 = vadd.f32 %v762, %v1165
    %1167 = vdwg.mxu0
    %1168 = vmatprep.subr.bf16.mxu0 %v970
    %1169 = vmatpush1.bf16.msra.mxu0 %v969
    %1170 = vmatprep.subr.bf16.mxu0 %v974
    %1171 = vmatpush1.bf16.msra.mxu0 %v973
    %1172 = vmatprep.subr.bf16.mxu0 %v978
    %1173 = vmatpush1.bf16.msra.mxu0 %v977
    %1174 = vmatprep.subr.bf16.mxu0 %v982
    %1175 = vmatpush1.bf16.msra.mxu0 %v981
    %1176 = vmatprep.subr.bf16.mxu0 %v986
    %1177 = vmatpush1.bf16.msra.mxu0 %v985
    %1178 = vmatprep.subr.bf16.mxu0 %v990
    %1179 = vmatpush1.bf16.msra.mxu0 %v989
    %1180 = vmatprep.subr.bf16.mxu0 %v994
    %1181 = vmatpush1.bf16.msra.mxu0 %v993
    %1182 = vmatprep.subr.bf16.mxu0 %v998
    %1183 = vmatpush1.bf16.msra.mxu0 %v997
    %1184 = vmatprep.subr.bf16.mxu0 %v1002
    %1185 = vmatpush1.bf16.msra.mxu0 %v1001
    %1186 = vmatprep.subr.bf16.mxu0 %v1006
    %1187 = vmatpush1.bf16.msra.mxu0 %v1005
    %1188 = vmatprep.subr.bf16.mxu0 %v1010
    %1189 = vmatpush1.bf16.msra.mxu0 %v1009
    %1190 = vmatprep.subr.bf16.mxu0 %v1014
    %1191 = vmatpush1.bf16.msra.mxu0 %v1013
    %1192 = vmatprep.subr.bf16.mxu0 %v1018
    %1193 = vmatpush1.bf16.msra.mxu0 %v1017
    %1194 = vmatprep.subr.bf16.mxu0 %v1022
    %1195 = vmatpush1.bf16.msra.mxu0 %v1021
    %1196 = vmatprep.subr.bf16.mxu0 %v1026
    %1197 = vmatpush1.bf16.msra.mxu0 %v1025
    %1198 = vmatprep.subr.bf16.mxu0 %v1030
    %1199 = vmatpush1.bf16.msra.mxu0 %v1029
    %1200 = vmatprep.mubr.bf16.mxu0 %v98
    %1201 = vmatmul.mubr.bf16.gmra.mrb[0].mxu0 %v97
    %v1202 = vpop.f32.mrb[0].mxu0
    %v1203 = vadd.f32 %v766, %v1202
    %v1204 = vpop.f32.mrb[0].mxu0
    %v1205 = vadd.f32 %v770, %v1204
    %v1206 = vpop.f32.mrb[0].mxu0
    %v1207 = vadd.f32 %v766, %v1206
    %v1208 = vpop.f32.mrb[0].mxu0
    %v1209 = vadd.f32 %v770, %v1208
    %1210 = vmatprep.mubr.bf16.mxu0 %v100
    %1211 = vmatmul.mubr.bf16.gmra.mrb[0].mxu0 %v99
    %v1212 = vpop.f32.mrb[0].mxu0
    %v1213 = vadd.f32 %v766, %v1212
    %v1214 = vpop.f32.mrb[0].mxu0
    %v1215 = vadd.f32 %v770, %v1214
    %v1216 = vpop.f32.mrb[0].mxu0
    %v1217 = vadd.f32 %v766, %v1216
    %v1218 = vpop.f32.mrb[0].mxu0
    %v1219 = vadd.f32 %v770, %v1218
    %1220 = vmatprep.mubr.bf16.mxu0 %v102
    %1221 = vmatmul.mubr.bf16.gmra.mrb[0].mxu0 %v101
    %v1222 = vpop.f32.mrb[0].mxu0
    %v1223 = vadd.f32 %v766, %v1222
    %v1224 = vpop.f32.mrb[0].mxu0
    %v1225 = vadd.f32 %v770, %v1224
    %v1226 = vpop.f32.mrb[0].mxu0
    %v1227 = vadd.f32 %v766, %v1226
    %v1228 = vpop.f32.mrb[0].mxu0
    %v1229 = vadd.f32 %v770, %v1228
    %1230 = vmatprep.mubr.bf16.mxu0 %v104
    %1231 = vmatmul.mubr.bf16.gmra.mrb[0].mxu0 %v103
    %v1232 = vpop.f32.mrb[0].mxu0
    %v1233 = vadd.f32 %v766, %v1232
    %v1234 = vpop.f32.mrb[0].mxu0
    %v1235 = vadd.f32 %v770, %v1234
    %v1236 = vpop.f32.mrb[0].mxu0
    %v1237 = vadd.f32 %v766, %v1236
    %v1238 = vpop.f32.mrb[0].mxu0
    %v1239 = vadd.f32 %v770, %v1238
    %1240 = vdwg.mxu0
    %1241 = vst [vmem:[#allocation3] sm:$0xff] %v1130
    %1242 = vst [vmem:[#allocation3 + $0x8] sm:$0xff] %v1132
    %1243 = vst [vmem:[#allocation3 + $0x10] sm:$0xff] %v1203
    %1244 = vst [vmem:[#allocation3 + $0x18] sm:$0xff] %v1205
    %1245 = vst [vmem:[#allocation3 + $0x20] sm:$0xff] %v1134
    %1246 = vst [vmem:[#allocation3 + $0x28] sm:$0xff] %v1136
    %1247 = vst [vmem:[#allocation3 + $0x30] sm:$0xff] %v1207
    %1248 = vst [vmem:[#allocation3 + $0x38] sm:$0xff] %v1209
    %1249 = vst [vmem:[#allocation3 + $0x40] sm:$0xff] %v1140
    %1250 = vst [vmem:[#allocation3 + $0x48] sm:$0xff] %v1142
    %1251 = vst [vmem:[#allocation3 + $0x50] sm:$0xff] %v1213
    %1252 = vst [vmem:[#allocation3 + $0x58] sm:$0xff] %v1215
    %1253 = vst [vmem:[#allocation3 + $0x60] sm:$0xff] %v1144
    %1254 = vst [vmem:[#allocation3 + $0x68] sm:$0xff] %v1146
    %1255 = vst [vmem:[#allocation3 + $0x70] sm:$0xff] %v1217
    %1256 = vst [vmem:[#allocation3 + $0x78] sm:$0xff] %v1219
    %1257 = vst [vmem:[#allocation3 + $0x80] sm:$0xff] %v1150
    %1258 = vst [vmem:[#allocation3 + $0x88] sm:$0xff] %v1152
    %1259 = vst [vmem:[#allocation3 + $0x90] sm:$0xff] %v1223
    %1260 = vst [vmem:[#allocation3 + $0x98] sm:$0xff] %v1225
    %1261 = vst [vmem:[#allocation3 + $0xa0] sm:$0xff] %v1154
    %1262 = vst [vmem:[#allocation3 + $0xa8] sm:$0xff] %v1156
    %1263 = vst [vmem:[#allocation3 + $0xb0] sm:$0xff] %v1227
    %1264 = vst [vmem:[#allocation3 + $0xb8] sm:$0xff] %v1229
    %1265 = vst [vmem:[#allocation3 + $0xc0] sm:$0xff] %v1160
    %1266 = vst [vmem:[#allocation3 + $0xc8] sm:$0xff] %v1162
    %1267 = vst [vmem:[#allocation3 + $0xd0] sm:$0xff] %v1233
    %1268 = vst [vmem:[#allocation3 + $0xd8] sm:$0xff] %v1235
    %1269 = vst [vmem:[#allocation3 + $0xe0] sm:$0xff] %v1164
    %1270 = vst [vmem:[#allocation3 + $0xe8] sm:$0xff] %v1166
    %1271 = vst [vmem:[#allocation3 + $0xf0] sm:$0xff] %v1237
    %1272 = vst [vmem:[#allocation3 + $0xf8] sm:$0xff] %v1239
    %v1273 = vld [vmem:[#allocation2] sm:$0xff]
    %v1274 = vld [vmem:[#allocation2 + $0x8] sm:$0xff]
    %v1275 = vld [vmem:[#allocation2 + $0x10] sm:$0xff]
    %v1276 = vld [vmem:[#allocation2 + $0x18] sm:$0xff]
    %v1277 = vld [vmem:[%s2] sm:$0xff]
    %v1278 = vld [vmem:[%s2 + $0x8] sm:$0xff]
    %v1279 = vld [vmem:[%s2 + $0x10] sm:$0xff]
    %v1280 = vld [vmem:[%s2 + $0x18] sm:$0xff]
    %v1281 = vld [vmem:[%s2 + $0x20] sm:$0xff]
    %v1282 = vld [vmem:[%s2 + $0x28] sm:$0xff]
    %v1283 = vld [vmem:[%s2 + $0x30] sm:$0xff]
    %v1284 = vld [vmem:[%s2 + $0x38] sm:$0xff]
    %v1285 = vld [vmem:[%s2 + $0x40] sm:$0xff]
    %v1286 = vld [vmem:[%s2 + $0x48] sm:$0xff]
    %v1287 = vld [vmem:[%s2 + $0x50] sm:$0xff]
    %v1288 = vld [vmem:[%s2 + $0x58] sm:$0xff]
    %v1289 = vld [vmem:[%s2 + $0x60] sm:$0xff]
    %v1290 = vld [vmem:[%s2 + $0x68] sm:$0xff]
    %v1291 = vld [vmem:[%s2 + $0x70] sm:$0xff]
    %v1292 = vld [vmem:[%s2 + $0x78] sm:$0xff]
    %v1293 = vld [vmem:[%s2 + $0x80] sm:$0xff]
    %v1294 = vld [vmem:[%s2 + $0x88] sm:$0xff]
    %v1295 = vld [vmem:[%s2 + $0x90] sm:$0xff]
    %v1296 = vld [vmem:[%s2 + $0x98] sm:$0xff]
    %v1297 = vld [vmem:[%s2 + $0xa0] sm:$0xff]
    %v1298 = vld [vmem:[%s2 + $0xa8] sm:$0xff]
    %v1299 = vld [vmem:[%s2 + $0xb0] sm:$0xff]
    %v1300 = vld [vmem:[%s2 + $0xb8] sm:$0xff]
    %v1301 = vld [vmem:[%s2 + $0xc0] sm:$0xff]
    %v1302 = vld [vmem:[%s2 + $0xc8] sm:$0xff]
    %v1303 = vld [vmem:[%s2 + $0xd0] sm:$0xff]
    %v1304 = vld [vmem:[%s2 + $0xd8] sm:$0xff]
    %v1305 = vld [vmem:[%s2 + $0xe0] sm:$0xff]
    %v1306 = vld [vmem:[%s2 + $0xe8] sm:$0xff]
    %v1307 = vld [vmem:[%s2 + $0xf0] sm:$0xff]
    %v1308 = vld [vmem:[%s2 + $0xf8] sm:$0xff]
    %v1341 = vunpack.c.l.b16 %v1277
    %v1342 = vunpack.c.h.b16 %v1277
    %v1343 = vunpack.c.l.b16 %v1278
    %v1344 = vunpack.c.h.b16 %v1278
    %v1345 = vunpack.c.l.b16 %v1279
    %v1346 = vunpack.c.h.b16 %v1279
    %v1347 = vunpack.c.l.b16 %v1280
    %v1348 = vunpack.c.h.b16 %v1280
    %v1349 = vunpack.c.l.b16 %v1281
    %v1350 = vunpack.c.h.b16 %v1281
    %v1351 = vunpack.c.l.b16 %v1282
    %v1352 = vunpack.c.h.b16 %v1282
    %v1353 = vunpack.c.l.b16 %v1283
    %v1354 = vunpack.c.h.b16 %v1283
    %v1355 = vunpack.c.l.b16 %v1284
    %v1356 = vunpack.c.h.b16 %v1284
    %v1357 = vunpack.c.l.b16 %v1285
    %v1358 = vunpack.c.h.b16 %v1285
    %v1359 = vunpack.c.l.b16 %v1286
    %v1360 = vunpack.c.h.b16 %v1286
    %v1361 = vunpack.c.l.b16 %v1287
    %v1362 = vunpack.c.h.b16 %v1287
    %v1363 = vunpack.c.l.b16 %v1288
    %v1364 = vunpack.c.h.b16 %v1288
    %v1365 = vunpack.c.l.b16 %v1289
    %v1366 = vunpack.c.h.b16 %v1289
    %v1367 = vunpack.c.l.b16 %v1290
    %v1368 = vunpack.c.h.b16 %v1290
    %v1369 = vunpack.c.l.b16 %v1291
    %v1370 = vunpack.c.h.b16 %v1291
    %v1371 = vunpack.c.l.b16 %v1292
    %v1372 = vunpack.c.h.b16 %v1292
    %v1373 = vunpack.c.l.b16 %v1293
    %v1374 = vunpack.c.h.b16 %v1293
    %v1375 = vunpack.c.l.b16 %v1294
    %v1376 = vunpack.c.h.b16 %v1294
    %v1377 = vunpack.c.l.b16 %v1295
    %v1378 = vunpack.c.h.b16 %v1295
    %v1379 = vunpack.c.l.b16 %v1296
    %v1380 = vunpack.c.h.b16 %v1296
    %v1381 = vunpack.c.l.b16 %v1297
    %v1382 = vunpack.c.h.b16 %v1297
    %v1383 = vunpack.c.l.b16 %v1298
    %v1384 = vunpack.c.h.b16 %v1298
    %v1385 = vunpack.c.l.b16 %v1299
    %v1386 = vunpack.c.h.b16 %v1299
    %v1387 = vunpack.c.l.b16 %v1300
    %v1388 = vunpack.c.h.b16 %v1300
    %v1389 = vunpack.c.l.b16 %v1301
    %v1390 = vunpack.c.h.b16 %v1301
    %v1391 = vunpack.c.l.b16 %v1302
    %v1392 = vunpack.c.h.b16 %v1302
    %v1393 = vunpack.c.l.b16 %v1303
    %v1394 = vunpack.c.h.b16 %v1303
    %v1395 = vunpack.c.l.b16 %v1304
    %v1396 = vunpack.c.h.b16 %v1304
    %v1397 = vunpack.c.l.b16 %v1305
    %v1398 = vunpack.c.h.b16 %v1305
    %v1399 = vunpack.c.l.b16 %v1306
    %v1400 = vunpack.c.h.b16 %v1306
    %v1401 = vunpack.c.l.b16 %v1307
    %v1402 = vunpack.c.h.b16 %v1307
    %v1403 = vunpack.c.l.b16 %v1308
    %v1404 = vunpack.c.h.b16 %v1308
    %v1405 = vpack.c.b16 %v1345, %v1341
    %v1406 = vpack.c.b16 %v1346, %v1342
    %v1407 = vpack.c.b16 %v1347, %v1343
    %v1408 = vpack.c.b16 %v1348, %v1344
    %v1409 = vpack.c.b16 %v1353, %v1349
    %v1410 = vpack.c.b16 %v1354, %v1350
    %v1411 = vpack.c.b16 %v1355, %v1351
    %v1412 = vpack.c.b16 %v1356, %v1352
    %v1413 = vpack.c.b16 %v1361, %v1357
    %v1414 = vpack.c.b16 %v1362, %v1358
    %v1415 = vpack.c.b16 %v1363, %v1359
    %v1416 = vpack.c.b16 %v1364, %v1360
    %v1417 = vpack.c.b16 %v1369, %v1365
    %v1418 = vpack.c.b16 %v1370, %v1366
    %v1419 = vpack.c.b16 %v1371, %v1367
    %v1420 = vpack.c.b16 %v1372, %v1368
    %v1421 = vpack.c.b16 %v1377, %v1373
    %v1422 = vpack.c.b16 %v1378, %v1374
    %v1423 = vpack.c.b16 %v1379, %v1375
    %v1424 = vpack.c.b16 %v1380, %v1376
    %v1425 = vpack.c.b16 %v1385, %v1381
    %v1426 = vpack.c.b16 %v1386, %v1382
    %v1427 = vpack.c.b16 %v1387, %v1383
    %v1428 = vpack.c.b16 %v1388, %v1384
    %v1429 = vpack.c.b16 %v1393, %v1389
    %v1430 = vpack.c.b16 %v1394, %v1390
    %v1431 = vpack.c.b16 %v1395, %v1391
    %v1432 = vpack.c.b16 %v1396, %v1392
    %v1433 = vpack.c.b16 %v1401, %v1397
    %v1434 = vpack.c.b16 %v1402, %v1398
    %v1435 = vpack.c.b16 %v1403, %v1399
    %v1436 = vpack.c.b16 %v1404, %v1400
    %1469 = vmatprep.subr.bf16.mxu0 %v1406
    %1470 = vmatpush1.bf16.msra.mxu0 %v1405
    %1471 = vmatprep.subr.bf16.mxu0 %v1410
    %1472 = vmatpush1.bf16.msra.mxu0 %v1409
    %1473 = vmatprep.subr.bf16.mxu0 %v1414
    %1474 = vmatpush1.bf16.msra.mxu0 %v1413
    %1475 = vmatprep.subr.bf16.mxu0 %v1418
    %1476 = vmatpush1.bf16.msra.mxu0 %v1417
    %1477 = vmatprep.subr.bf16.mxu0 %v1422
    %1478 = vmatpush1.bf16.msra.mxu0 %v1421
    %1479 = vmatprep.subr.bf16.mxu0 %v1426
    %1480 = vmatpush1.bf16.msra.mxu0 %v1425
    %1481 = vmatprep.subr.bf16.mxu0 %v1430
    %1482 = vmatpush1.bf16.msra.mxu0 %v1429
    %1483 = vmatprep.subr.bf16.mxu0 %v1434
    %1484 = vmatpush1.bf16.msra.mxu0 %v1433
    %1485 = vmatprep.subr.bf16.mxu0 0
    %1486 = vmatpush1.bf16.msra.mxu0 0
    %1487 = vmatprep.subr.bf16.mxu0 0
    %1488 = vmatpush1.bf16.msra.mxu0 0
    %1489 = vmatprep.subr.bf16.mxu0 0
    %1490 = vmatpush1.bf16.msra.mxu0 0
    %1491 = vmatprep.subr.bf16.mxu0 0
    %1492 = vmatpush1.bf16.msra.mxu0 0
    %1493 = vmatprep.subr.bf16.mxu0 0
    %1494 = vmatpush1.bf16.msra.mxu0 0
    %1495 = vmatprep.subr.bf16.mxu0 0
    %1496 = vmatpush1.bf16.msra.mxu0 0
    %1497 = vmatprep.subr.bf16.mxu0 0
    %1498 = vmatpush1.bf16.msra.mxu0 0
    %1499 = vmatprep.subr.bf16.mxu0 0
    %1500 = vmatpush1.bf16.msra.mxu0 0
    %1501 = vmatprep.mubr.bf16.mxu0 0
    %1502 = vmatmul.mubr.bf16.gmra.mrb[0].mxu0 0
    %v1503 = vpop.f32.mrb[0].mxu0
    %v1504 = vadd.f32 0.0, %v1503
    %v1505 = vpop.f32.mrb[0].mxu0
    %v1506 = vadd.f32 0.0, %v1505
    %v1507 = vpop.f32.mrb[0].mxu0
    %v1508 = vpop.f32.mrb[0].mxu0
    %1509 = vdwg.mxu0
    %1510 = vmatprep.subr.bf16.mxu0 %v1408
    %1511 = vmatpush1.bf16.msra.mxu0 %v1407
    %1512 = vmatprep.subr.bf16.mxu0 %v1412
    %1513 = vmatpush1.bf16.msra.mxu0 %v1411
    %1514 = vmatprep.subr.bf16.mxu0 %v1416
    %1515 = vmatpush1.bf16.msra.mxu0 %v1415
    %1516 = vmatprep.subr.bf16.mxu0 %v1420
    %1517 = vmatpush1.bf16.msra.mxu0 %v1419
    %1518 = vmatprep.subr.bf16.mxu0 %v1424
    %1519 = vmatpush1.bf16.msra.mxu0 %v1423
    %1520 = vmatprep.subr.bf16.mxu0 %v1428
    %1521 = vmatpush1.bf16.msra.mxu0 %v1427
    %1522 = vmatprep.subr.bf16.mxu0 %v1432
    %1523 = vmatpush1.bf16.msra.mxu0 %v1431
    %1524 = vmatprep.subr.bf16.mxu0 %v1436
    %1525 = vmatpush1.bf16.msra.mxu0 %v1435
    %1526 = vmatprep.subr.bf16.mxu0 0
    %1527 = vmatpush1.bf16.msra.mxu0 0
    %1528 = vmatprep.subr.bf16.mxu0 0
    %1529 = vmatpush1.bf16.msra.mxu0 0
    %1530 = vmatprep.subr.bf16.mxu0 0
    %1531 = vmatpush1.bf16.msra.mxu0 0
    %1532 = vmatprep.subr.bf16.mxu0 0
    %1533 = vmatpush1.bf16.msra.mxu0 0
    %1534 = vmatprep.subr.bf16.mxu0 0
    %1535 = vmatpush1.bf16.msra.mxu0 0
    %1536 = vmatprep.subr.bf16.mxu0 0
    %1537 = vmatpush1.bf16.msra.mxu0 0
    %1538 = vmatprep.subr.bf16.mxu0 0
    %1539 = vmatpush1.bf16.msra.mxu0 0
    %1540 = vmatprep.subr.bf16.mxu0 0
    %1541 = vmatpush1.bf16.msra.mxu0 0
    %1542 = vmatprep.mubr.bf16.mxu0 0
    %1543 = vmatmul.mubr.bf16.gmra.mrb[0].mxu0 0
    %v1544 = vpop.f32.mrb[0].mxu0
    %v1545 = vadd.f32 0.0, %v1544
    %v1546 = vpop.f32.mrb[0].mxu0
    %v1547 = vadd.f32 0.0, %v1546
    %v1548 = vpop.f32.mrb[0].mxu0
    %v1549 = vpop.f32.mrb[0].mxu0
    %1550 = vdwg.mxu0
    %v1551 = vadd.f32 %v1273, %v1504
    %v1552 = vadd.f32 %v1274, %v1506
    %v1553 = vadd.f32 %v1275, %v1545
    %v1554 = vadd.f32 %v1276, %v1547
    %v1555 = vxor.u32 %v1551, 2147483648
    %v1556 = vxor.u32 %v1552, 2147483648
    %v1557 = vmul.f32 %v1555, 1.442695
    %v1558 = vpow.pop %v1557
    %v1559 = vmul.f32 %v1556, 1.442695
    %v1560 = vpow.pop %v1559
    %v1561 = vadd.f32 %v1558, 1.0
    %v1562 = vadd.f32 %v1560, 1.0
    %v1563 = vrcp.pop %v1561
    %v1564 = vmul.f32 1.0, %v1563
    %v1565 = vrcp.pop %v1562
    %v1566 = vmul.f32 1.0, %v1565
    %v1567 = vtanh.pop %v1553
    %v1568 = vxor.u32 %v1554, 2147483648
    %v1569 = vmul.f32 %v1568, 1.442695
    %v1570 = vpow.pop %v1569
    %v1571 = vadd.f32 %v1570, 1.0
    %v1572 = vrcp.pop %v1571
    %v1573 = vmul.f32 1.0, %v1572
    %v1574 = vmul.f32 %v1566, 0.0
    %v1575 = vmul.f32 %v1564, %v1567
    %v1576 = vadd.f32 %v1574, %v1575
    %v1577 = vtanh.pop %v1576
    %v1578 = vmul.f32 %v1573, %v1577
    %v1579 = vadd.f32 %v1578, 0.0
    %v1580 = vld [vmem:[#allocation3 + $0xe0] sm:$0xff]
    %v1581 = vld [vmem:[#allocation3 + $0xe8] sm:$0xff]
    %v1582 = vld [vmem:[#allocation3 + $0xf0] sm:$0xff]
    %v1583 = vld [vmem:[#allocation3 + $0xf8] sm:$0xff]
    %v1584 = vld [vmem:[#allocation4] sm:$0xff]
    %v1585 = vld [vmem:[#allocation4 + $0x8] sm:$0xff]
    %v1586 = vld [vmem:[#allocation4 + $0x10] sm:$0xff]
    %v1587 = vld [vmem:[#allocation4 + $0x18] sm:$0xff]
    %v1588 = vld [vmem:[#allocation4 + $0x20] sm:$0xff]
    %v1589 = vld [vmem:[#allocation4 + $0x28] sm:$0xff]
    %v1590 = vld [vmem:[#allocation4 + $0x30] sm:$0xff]
    %v1591 = vld [vmem:[#allocation4 + $0x38] sm:$0xff]
    %v1592 = vld [vmem:[#allocation4 + $0x40] sm:$0xff]
    %v1593 = vld [vmem:[#allocation4 + $0x48] sm:$0xff]
    %v1594 = vld [vmem:[#allocation4 + $0x50] sm:$0xff]
    %v1595 = vld [vmem:[#allocation4 + $0x58] sm:$0xff]
    %v1596 = vld [vmem:[#allocation4 + $0x60] sm:$0xff]
    %v1597 = vld [vmem:[#allocation4 + $0x68] sm:$0xff]
    %v1598 = vld [vmem:[#allocation4 + $0x70] sm:$0xff]
    %v1599 = vld [vmem:[#allocation4 + $0x78] sm:$0xff]
    %v1600 = vld [vmem:[#allocation4 + $0x80] sm:$0xff]
    %v1601 = vld [vmem:[#allocation4 + $0x88] sm:$0xff]
    %v1602 = vld [vmem:[#allocation4 + $0x90] sm:$0xff]
    %v1603 = vld [vmem:[#allocation4 + $0x98] sm:$0xff]
    %v1604 = vld [vmem:[#allocation4 + $0xa0] sm:$0xff]
    %v1605 = vld [vmem:[#allocation4 + $0xa8] sm:$0xff]
    %v1606 = vld [vmem:[#allocation4 + $0xb0] sm:$0xff]
    %v1607 = vld [vmem:[#allocation4 + $0xb8] sm:$0xff]
    %v1608 = vld [vmem:[#allocation4 + $0xc0] sm:$0xff]
    %v1609 = vld [vmem:[#allocation4 + $0xc8] sm:$0xff]
    %v1610 = vld [vmem:[#allocation4 + $0xd0] sm:$0xff]
    %v1611 = vld [vmem:[#allocation4 + $0xd8] sm:$0xff]
    %v1612 = vld [vmem:[#allocation4 + $0xe0] sm:$0xff]
    %v1613 = vld [vmem:[#allocation4 + $0xe8] sm:$0xff]
    %v1614 = vld [vmem:[#allocation4 + $0xf0] sm:$0xff]
    %v1615 = vld [vmem:[#allocation4 + $0xf8] sm:$0xff]
    %v1648 = vunpack.c.l.b16 %v1584
    %v1649 = vunpack.c.h.b16 %v1584
    %v1650 = vunpack.c.l.b16 %v1585
    %v1651 = vunpack.c.h.b16 %v1585
    %v1652 = vunpack.c.l.b16 %v1586
    %v1653 = vunpack.c.h.b16 %v1586
    %v1654 = vunpack.c.l.b16 %v1587
    %v1655 = vunpack.c.h.b16 %v1587
    %v1656 = vunpack.c.l.b16 %v1588
    %v1657 = vunpack.c.h.b16 %v1588
    %v1658 = vunpack.c.l.b16 %v1589
    %v1659 = vunpack.c.h.b16 %v1589
    %v1660 = vunpack.c.l.b16 %v1590
    %v1661 = vunpack.c.h.b16 %v1590
    %v1662 = vunpack.c.l.b16 %v1591
    %v1663 = vunpack.c.h.b16 %v1591
    %v1664 = vunpack.c.l.b16 %v1592
    %v1665 = vunpack.c.h.b16 %v1592
    %v1666 = vunpack.c.l.b16 %v1593
    %v1667 = vunpack.c.h.b16 %v1593
    %v1668 = vunpack.c.l.b16 %v1594
    %v1669 = vunpack.c.h.b16 %v1594
    %v1670 = vunpack.c.l.b16 %v1595
    %v1671 = vunpack.c.h.b16 %v1595
    %v1672 = vunpack.c.l.b16 %v1596
    %v1673 = vunpack.c.h.b16 %v1596
    %v1674 = vunpack.c.l.b16 %v1597
    %v1675 = vunpack.c.h.b16 %v1597
    %v1676 = vunpack.c.l.b16 %v1598
    %v1677 = vunpack.c.h.b16 %v1598
    %v1678 = vunpack.c.l.b16 %v1599
    %v1679 = vunpack.c.h.b16 %v1599
    %v1680 = vunpack.c.l.b16 %v1600
    %v1681 = vunpack.c.h.b16 %v1600
    %v1682 = vunpack.c.l.b16 %v1601
    %v1683 = vunpack.c.h.b16 %v1601
    %v1684 = vunpack.c.l.b16 %v1602
    %v1685 = vunpack.c.h.b16 %v1602
    %v1686 = vunpack.c.l.b16 %v1603
    %v1687 = vunpack.c.h.b16 %v1603
    %v1688 = vunpack.c.l.b16 %v1604
    %v1689 = vunpack.c.h.b16 %v1604
    %v1690 = vunpack.c.l.b16 %v1605
    %v1691 = vunpack.c.h.b16 %v1605
    %v1692 = vunpack.c.l.b16 %v1606
    %v1693 = vunpack.c.h.b16 %v1606
    %v1694 = vunpack.c.l.b16 %v1607
    %v1695 = vunpack.c.h.b16 %v1607
    %v1696 = vunpack.c.l.b16 %v1608
    %v1697 = vunpack.c.h.b16 %v1608
    %v1698 = vunpack.c.l.b16 %v1609
    %v1699 = vunpack.c.h.b16 %v1609
    %v1700 = vunpack.c.l.b16 %v1610
    %v1701 = vunpack.c.h.b16 %v1610
    %v1702 = vunpack.c.l.b16 %v1611
    %v1703 = vunpack.c.h.b16 %v1611
    %v1704 = vunpack.c.l.b16 %v1612
    %v1705 = vunpack.c.h.b16 %v1612
    %v1706 = vunpack.c.l.b16 %v1613
    %v1707 = vunpack.c.h.b16 %v1613
    %v1708 = vunpack.c.l.b16 %v1614
    %v1709 = vunpack.c.h.b16 %v1614
    %v1710 = vunpack.c.l.b16 %v1615
    %v1711 = vunpack.c.h.b16 %v1615
    %v1712 = vpack.c.b16 %v1652, %v1648
    %v1713 = vpack.c.b16 %v1653, %v1649
    %v1714 = vpack.c.b16 %v1654, %v1650
    %v1715 = vpack.c.b16 %v1655, %v1651
    %v1716 = vpack.c.b16 %v1660, %v1656
    %v1717 = vpack.c.b16 %v1661, %v1657
    %v1718 = vpack.c.b16 %v1662, %v1658
    %v1719 = vpack.c.b16 %v1663, %v1659
    %v1720 = vpack.c.b16 %v1668, %v1664
    %v1721 = vpack.c.b16 %v1669, %v1665
    %v1722 = vpack.c.b16 %v1670, %v1666
    %v1723 = vpack.c.b16 %v1671, %v1667
    %v1724 = vpack.c.b16 %v1676, %v1672
    %v1725 = vpack.c.b16 %v1677, %v1673
    %v1726 = vpack.c.b16 %v1678, %v1674
    %v1727 = vpack.c.b16 %v1679, %v1675
    %v1728 = vpack.c.b16 %v1684, %v1680
    %v1729 = vpack.c.b16 %v1685, %v1681
    %v1730 = vpack.c.b16 %v1686, %v1682
    %v1731 = vpack.c.b16 %v1687, %v1683
    %v1732 = vpack.c.b16 %v1692, %v1688
    %v1733 = vpack.c.b16 %v1693, %v1689
    %v1734 = vpack.c.b16 %v1694, %v1690
    %v1735 = vpack.c.b16 %v1695, %v1691
    %v1736 = vpack.c.b16 %v1700, %v1696
    %v1737 = vpack.c.b16 %v1701, %v1697
    %v1738 = vpack.c.b16 %v1702, %v1698
    %v1739 = vpack.c.b16 %v1703, %v1699
    %v1740 = vpack.c.b16 %v1708, %v1704
    %v1741 = vpack.c.b16 %v1709, %v1705
    %v1742 = vpack.c.b16 %v1710, %v1706
    %v1743 = vpack.c.b16 %v1711, %v1707
    %1776 = vmatprep.subr.bf16.mxu0 %v1713
    %1777 = vmatpush1.bf16.msra.mxu0 %v1712
    %1778 = vmatprep.subr.bf16.mxu0 %v1717
    %1779 = vmatpush1.bf16.msra.mxu0 %v1716
    %1780 = vmatprep.subr.bf16.mxu0 %v1721
    %1781 = vmatpush1.bf16.msra.mxu0 %v1720
    %1782 = vmatprep.subr.bf16.mxu0 %v1725
    %1783 = vmatpush1.bf16.msra.mxu0 %v1724
    %1784 = vmatprep.subr.bf16.mxu0 %v1729
    %1785 = vmatpush1.bf16.msra.mxu0 %v1728
    %1786 = vmatprep.subr.bf16.mxu0 %v1733
    %1787 = vmatpush1.bf16.msra.mxu0 %v1732
    %1788 = vmatprep.subr.bf16.mxu0 %v1737
    %1789 = vmatpush1.bf16.msra.mxu0 %v1736
    %1790 = vmatprep.subr.bf16.mxu0 %v1741
    %1791 = vmatpush1.bf16.msra.mxu0 %v1740
    %1792 = vmatprep.subr.bf16.mxu0 0
    %1793 = vmatpush1.bf16.msra.mxu0 0
    %1794 = vmatprep.subr.bf16.mxu0 0
    %1795 = vmatpush1.bf16.msra.mxu0 0
    %1796 = vmatprep.subr.bf16.mxu0 0
    %1797 = vmatpush1.bf16.msra.mxu0 0
    %1798 = vmatprep.subr.bf16.mxu0 0
    %1799 = vmatpush1.bf16.msra.mxu0 0
    %1800 = vmatprep.subr.bf16.mxu0 0
    %1801 = vmatpush1.bf16.msra.mxu0 0
    %1802 = vmatprep.subr.bf16.mxu0 0
    %1803 = vmatpush1.bf16.msra.mxu0 0
    %1804 = vmatprep.subr.bf16.mxu0 0
    %1805 = vmatpush1.bf16.msra.mxu0 0
    %1806 = vmatprep.subr.bf16.mxu0 0
    %1807 = vmatpush1.bf16.msra.mxu0 0
    %1808 = vmatprep.mubr.bf16.mxu0 0
    %1809 = vmatmul.mubr.bf16.gmra.mrb[0].mxu0 0
    %v1810 = vpop.f32.mrb[0].mxu0
    %v1811 = vadd.f32 0.0, %v1810
    %v1812 = vpop.f32.mrb[0].mxu0
    %v1813 = vadd.f32 0.0, %v1812
    %v1814 = vpop.f32.mrb[0].mxu0
    %v1815 = vpop.f32.mrb[0].mxu0
    %1816 = vdwg.mxu0
    %1817 = vmatprep.subr.bf16.mxu0 %v1715
    %1818 = vmatpush1.bf16.msra.mxu0 %v1714
    %1819 = vmatprep.subr.bf16.mxu0 %v1719
    %1820 = vmatpush1.bf16.msra.mxu0 %v1718
    %1821 = vmatprep.subr.bf16.mxu0 %v1723
    %1822 = vmatpush1.bf16.msra.mxu0 %v1722
    %1823 = vmatprep.subr.bf16.mxu0 %v1727
    %1824 = vmatpush1.bf16.msra.mxu0 %v1726
    %1825 = vmatprep.subr.bf16.mxu0 %v1731
    %1826 = vmatpush1.bf16.msra.mxu0 %v1730
    %1827 = vmatprep.subr.bf16.mxu0 %v1735
    %1828 = vmatpush1.bf16.msra.mxu0 %v1734
    %1829 = vmatprep.subr.bf16.mxu0 %v1739
    %1830 = vmatpush1.bf16.msra.mxu0 %v1738
    %1831 = vmatprep.subr.bf16.mxu0 %v1743
    %1832 = vmatpush1.bf16.msra.mxu0 %v1742
    %1833 = vmatprep.subr.bf16.mxu0 0
    %1834 = vmatpush1.bf16.msra.mxu0 0
    %1835 = vmatprep.subr.bf16.mxu0 0
    %1836 = vmatpush1.bf16.msra.mxu0 0
    %1837 = vmatprep.subr.bf16.mxu0 0
    %1838 = vmatpush1.bf16.msra.mxu0 0
    %1839 = vmatprep.subr.bf16.mxu0 0
    %1840 = vmatpush1.bf16.msra.mxu0 0
    %1841 = vmatprep.subr.bf16.mxu0 0
    %1842 = vmatpush1.bf16.msra.mxu0 0
    %1843 = vmatprep.subr.bf16.mxu0 0
    %1844 = vmatpush1.bf16.msra.mxu0 0
    %1845 = vmatprep.subr.bf16.mxu0 0
    %1846 = vmatpush1.bf16.msra.mxu0 0
    %1847 = vmatprep.subr.bf16.mxu0 0
    %1848 = vmatpush1.bf16.msra.mxu0 0
    %1849 = vmatprep.mubr.bf16.mxu0 0
    %1850 = vmatmul.mubr.bf16.gmra.mrb[0].mxu0 0
    %v1851 = vpop.f32.mrb[0].mxu0
    %v1852 = vadd.f32 0.0, %v1851
    %v1853 = vpop.f32.mrb[0].mxu0
    %v1854 = vadd.f32 0.0, %v1853
    %v1855 = vpop.f32.mrb[0].mxu0
    %v1856 = vpop.f32.mrb[0].mxu0
    %1857 = vdwg.mxu0
    %v1858 = vadd.f32 %v1580, %v1811
    %v1859 = vadd.f32 %v1581, %v1813
    %v1860 = vadd.f32 %v1582, %v1852
    %v1861 = vadd.f32 %v1583, %v1854
    %v1862 = vxor.u32 %v1858, 2147483648
    %v1863 = vxor.u32 %v1859, 2147483648
    %v1864 = vmul.f32 %v1862, 1.442695
    %v1865 = vpow.pop %v1864
    %v1866 = vmul.f32 %v1863, 1.442695
    %v1867 = vpow.pop %v1866
    %v1868 = vadd.f32 %v1865, 1.0
    %v1869 = vadd.f32 %v1867, 1.0
    %v1870 = vrcp.pop %v1868
    %v1871 = vmul.f32 1.0, %v1870
    %v1872 = vrcp.pop %v1869
    %v1873 = vmul.f32 1.0, %v1872
    %v1874 = vtanh.pop %v1860
    %v1875 = vxor.u32 %v1861, 2147483648
    %v1876 = vmul.f32 %v1875, 1.442695
    %v1877 = vpow.pop %v1876
    %v1878 = vadd.f32 %v1877, 1.0
    %v1879 = vrcp.pop %v1878
    %v1880 = vmul.f32 1.0, %v1879
    %v1881 = vmul.f32 %v1873, 0.0
    %v1882 = vmul.f32 %v1871, %v1874
    %v1883 = vadd.f32 %v1881, %v1882
    %v1884 = vtanh.pop %v1883
    %v1885 = vmul.f32 %v1880, %v1884
    %v1886 = vadd.f32 %v1885, 0.0
    %v1887 = vld [vmem:[#allocation2 + $0x20] sm:$0xff]
    %v1888 = vld [vmem:[#allocation2 + $0x28] sm:$0xff]
    %v1889 = vld [vmem:[#allocation2 + $0x30] sm:$0xff]
    %v1890 = vld [vmem:[#allocation2 + $0x38] sm:$0xff]
    %v1891 = vpack.c.bf16 %v1578, %v1578
    %1892 = vmatprep.subr.bf16.mxu0 %v1406
    %1893 = vmatpush1.bf16.msra.mxu0 %v1405
    %1894 = vmatprep.subr.bf16.mxu0 %v1410
    %1895 = vmatpush1.bf16.msra.mxu0 %v1409
    %1896 = vmatprep.subr.bf16.mxu0 %v1414
    %1897 = vmatpush1.bf16.msra.mxu0 %v1413
    %1898 = vmatprep.subr.bf16.mxu0 %v1418
    %1899 = vmatpush1.bf16.msra.mxu0 %v1417
    %1900 = vmatprep.subr.bf16.mxu0 %v1422
    %1901 = vmatpush1.bf16.msra.mxu0 %v1421
    %1902 = vmatprep.subr.bf16.mxu0 %v1426
    %1903 = vmatpush1.bf16.msra.mxu0 %v1425
    %1904 = vmatprep.subr.bf16.mxu0 %v1430
    %1905 = vmatpush1.bf16.msra.mxu0 %v1429
    %1906 = vmatprep.subr.bf16.mxu0 %v1434
    %1907 = vmatpush1.bf16.msra.mxu0 %v1433
    %1908 = vmatprep.subr.bf16.mxu0 0
    %1909 = vmatpush1.bf16.msra.mxu0 0
    %1910 = vmatprep.subr.bf16.mxu0 0
    %1911 = vmatpush1.bf16.msra.mxu0 0
    %1912 = vmatprep.subr.bf16.mxu0 0
    %1913 = vmatpush1.bf16.msra.mxu0 0
    %1914 = vmatprep.subr.bf16.mxu0 0
    %1915 = vmatpush1.bf16.msra.mxu0 0
    %1916 = vmatprep.subr.bf16.mxu0 0
    %1917 = vmatpush1.bf16.msra.mxu0 0
    %1918 = vmatprep.subr.bf16.mxu0 0
    %1919 = vmatpush1.bf16.msra.mxu0 0
    %1920 = vmatprep.subr.bf16.mxu0 0
    %1921 = vmatpush1.bf16.msra.mxu0 0
    %1922 = vmatprep.subr.bf16.mxu0 0
    %1923 = vmatpush1.bf16.msra.mxu0 0
    %1924 = vmatprep.mubr.bf16.mxu0 0
    %1925 = vmatmul.mubr.bf16.gmra.mrb[0].mxu0 %v1891
    %v1926 = vpop.f32.mrb[0].mxu0
    %v1927 = vadd.f32 0.0, %v1926
    %v1928 = vpop.f32.mrb[0].mxu0
    %v1929 = vadd.f32 0.0, %v1928
    %v1930 = vpop.f32.mrb[0].mxu0
    %v1931 = vpop.f32.mrb[0].mxu0
    %1932 = vdwg.mxu0
    %1933 = vmatprep.subr.bf16.mxu0 %v1408
    %1934 = vmatpush1.bf16.msra.mxu0 %v1407
    %1935 = vmatprep.subr.bf16.mxu0 %v1412
    %1936 = vmatpush1.bf16.msra.mxu0 %v1411
    %1937 = vmatprep.subr.bf16.mxu0 %v1416
    %1938 = vmatpush1.bf16.msra.mxu0 %v1415
    %1939 = vmatprep.subr.bf16.mxu0 %v1420
    %1940 = vmatpush1.bf16.msra.mxu0 %v1419
    %1941 = vmatprep.subr.bf16.mxu0 %v1424
    %1942 = vmatpush1.bf16.msra.mxu0 %v1423
    %1943 = vmatprep.subr.bf16.mxu0 %v1428
    %1944 = vmatpush1.bf16.msra.mxu0 %v1427
    %1945 = vmatprep.subr.bf16.mxu0 %v1432
    %1946 = vmatpush1.bf16.msra.mxu0 %v1431
    %1947 = vmatprep.subr.bf16.mxu0 %v1436
    %1948 = vmatpush1.bf16.msra.mxu0 %v1435
    %1949 = vmatprep.subr.bf16.mxu0 0
    %1950 = vmatpush1.bf16.msra.mxu0 0
    %1951 = vmatprep.subr.bf16.mxu0 0
    %1952 = vmatpush1.bf16.msra.mxu0 0
    %1953 = vmatprep.subr.bf16.mxu0 0
    %1954 = vmatpush1.bf16.msra.mxu0 0
    %1955 = vmatprep.subr.bf16.mxu0 0
    %1956 = vmatpush1.bf16.msra.mxu0 0
    %1957 = vmatprep.subr.bf16.mxu0 0
    %1958 = vmatpush1.bf16.msra.mxu0 0
    %1959 = vmatprep.subr.bf16.mxu0 0
    %1960 = vmatpush1.bf16.msra.mxu0 0
    %1961 = vmatprep.subr.bf16.mxu0 0
    %1962 = vmatpush1.bf16.msra.mxu0 0
    %1963 = vmatprep.subr.bf16.mxu0 0
    %1964 = vmatpush1.bf16.msra.mxu0 0
    %1965 = vmatprep.mubr.bf16.mxu0 0
    %1966 = vmatmul.mubr.bf16.gmra.mrb[0].mxu0 %v1891
    %v1967 = vpop.f32.mrb[0].mxu0
    %v1968 = vadd.f32 0.0, %v1967
    %v1969 = vpop.f32.mrb[0].mxu0
    %v1970 = vadd.f32 0.0, %v1969
    %v1971 = vpop.f32.mrb[0].mxu0
    %v1972 = vpop.f32.mrb[0].mxu0
    %1973 = vdwg.mxu0
    %v1974 = vadd.f32 %v1887, %v1927
    %v1975 = vadd.f32 %v1888, %v1929
    %v1976 = vadd.f32 %v1889, %v1968
    %v1977 = vadd.f32 %v1890, %v1970
    %v1978 = vxor.u32 %v1974, 2147483648
    %v1979 = vxor.u32 %v1975, 2147483648
    %v1980 = vmul.f32 %v1978, 1.442695
    %v1981 = vpow.pop %v1980
    %v1982 = vmul.f32 %v1979, 1.442695
    %v1983 = vpow.pop %v1982
    %v1984 = vadd.f32 %v1981, 1.0
    %v1985 = vadd.f32 %v1983, 1.0
    %v1986 = vrcp.pop %v1984
    %v1987 = vmul.f32 1.0, %v1986
    %v1988 = vrcp.pop %v1985
    %v1989 = vmul.f32 1.0, %v1988
    %v1990 = vtanh.pop %v1976
    %v1991 = vxor.u32 %v1977, 2147483648
    %v1992 = vmul.f32 %v1991, 1.442695
    %v1993 = vpow.pop %v1992
    %v1994 = vadd.f32 %v1993, 1.0
    %v1995 = vrcp.pop %v1994
    %v1996 = vmul.f32 1.0, %v1995
    %v1997 = vmul.f32 %v1989, %v1576
    %v1998 = vmul.f32 %v1987, %v1990
    %v1999 = vadd.f32 %v1997, %v1998
    %v2000 = vtanh.pop %v1999
    %v2001 = vmul.f32 %v1996, %v2000
    %v2002 = vadd.f32 %v1579, %v2001
    %v2003 = vld [vmem:[#allocation3 + $0xc0] sm:$0xff]
    %v2004 = vld [vmem:[#allocation3 + $0xc8] sm:$0xff]
    %v2005 = vld [vmem:[#allocation3 + $0xd0] sm:$0xff]
    %v2006 = vld [vmem:[#allocation3 + $0xd8] sm:$0xff]
    %v2007 = vpack.c.bf16 %v1885, %v1885
    %2008 = vmatprep.subr.bf16.mxu0 %v1713
    %2009 = vmatpush1.bf16.msra.mxu0 %v1712
    %2010 = vmatprep.subr.bf16.mxu0 %v1717
    %2011 = vmatpush1.bf16.msra.mxu0 %v1716
    %2012 = vmatprep.subr.bf16.mxu0 %v1721
    %2013 = vmatpush1.bf16.msra.mxu0 %v1720
    %2014 = vmatprep.subr.bf16.mxu0 %v1725
    %2015 = vmatpush1.bf16.msra.mxu0 %v1724
    %2016 = vmatprep.subr.bf16.mxu0 %v1729
    %2017 = vmatpush1.bf16.msra.mxu0 %v1728
    %2018 = vmatprep.subr.bf16.mxu0 %v1733
    %2019 = vmatpush1.bf16.msra.mxu0 %v1732
    %2020 = vmatprep.subr.bf16.mxu0 %v1737
    %2021 = vmatpush1.bf16.msra.mxu0 %v1736
    %2022 = vmatprep.subr.bf16.mxu0 %v1741
    %2023 = vmatpush1.bf16.msra.mxu0 %v1740
    %2024 = vmatprep.subr.bf16.mxu0 0
    %2025 = vmatpush1.bf16.msra.mxu0 0
    %2026 = vmatprep.subr.bf16.mxu0 0
    %2027 = vmatpush1.bf16.msra.mxu0 0
    %2028 = vmatprep.subr.bf16.mxu0 0
    %2029 = vmatpush1.bf16.msra.mxu0 0
    %2030 = vmatprep.subr.bf16.mxu0 0
    %2031 = vmatpush1.bf16.msra.mxu0 0
    %2032 = vmatprep.subr.bf16.mxu0 0
    %2033 = vmatpush1.bf16.msra.mxu0 0
    %2034 = vmatprep.subr.bf16.mxu0 0
    %2035 = vmatpush1.bf16.msra.mxu0 0
    %2036 = vmatprep.subr.bf16.mxu0 0
    %2037 = vmatpush1.bf16.msra.mxu0 0
    %2038 = vmatprep.subr.bf16.mxu0 0
    %2039 = vmatpush1.bf16.msra.mxu0 0
    %2040 = vmatprep.mubr.bf16.mxu0 0
    %2041 = vmatmul.mubr.bf16.gmra.mrb[0].mxu0 %v2007
    %v2042 = vpop.f32.mrb[0].mxu0
    %v2043 = vadd.f32 0.0, %v2042
    %v2044 = vpop.f32.mrb[0].mxu0
    %v2045 = vadd.f32 0.0, %v2044
    %v2046 = vpop.f32.mrb[0].mxu0
    %v2047 = vpop.f32.mrb[0].mxu0
    %2048 = vdwg.mxu0
    %2049 = vmatprep.subr.bf16.mxu0 %v1715
    %2050 = vmatpush1.bf16.msra.mxu0 %v1714
    %2051 = vmatprep.subr.bf16.mxu0 %v1719
    %2052 = vmatpush1.bf16.msra.mxu0 %v1718
    %2053 = vmatprep.subr.bf16.mxu0 %v1723
    %2054 = vmatpush1.bf16.msra.mxu0 %v1722
    %2055 = vmatprep.subr.bf16.mxu0 %v1727
    %2056 = vmatpush1.bf16.msra.mxu0 %v1726
    %2057 = vmatprep.subr.bf16.mxu0 %v1731
    %2058 = vmatpush1.bf16.msra.mxu0 %v1730
    %2059 = vmatprep.subr.bf16.mxu0 %v1735
    %2060 = vmatpush1.bf16.msra.mxu0 %v1734
    %2061 = vmatprep.subr.bf16.mxu0 %v1739
    %2062 = vmatpush1.bf16.msra.mxu0 %v1738
    %2063 = vmatprep.subr.bf16.mxu0 %v1743
    %2064 = vmatpush1.bf16.msra.mxu0 %v1742
    %2065 = vmatprep.subr.bf16.mxu0 0
    %2066 = vmatpush1.bf16.msra.mxu0 0
    %2067 = vmatprep.subr.bf16.mxu0 0
    %2068 = vmatpush1.bf16.msra.mxu0 0
    %2069 = vmatprep.subr.bf16.mxu0 0
    %2070 = vmatpush1.bf16.msra.mxu0 0
    %2071 = vmatprep.subr.bf16.mxu0 0
    %2072 = vmatpush1.bf16.msra.mxu0 0
    %2073 = vmatprep.subr.bf16.mxu0 0
    %2074 = vmatpush1.bf16.msra.mxu0 0
    %2075 = vmatprep.subr.bf16.mxu0 0
    %2076 = vmatpush1.bf16.msra.mxu0 0
    %2077 = vmatprep.subr.bf16.mxu0 0
    %2078 = vmatpush1.bf16.msra.mxu0 0
    %2079 = vmatprep.subr.bf16.mxu0 0
    %2080 = vmatpush1.bf16.msra.mxu0 0
    %2081 = vmatprep.mubr.bf16.mxu0 0
    %2082 = vmatmul.mubr.bf16.gmra.mrb[0].mxu0 %v2007
    %v2083 = vpop.f32.mrb[0].mxu0
    %v2084 = vadd.f32 0.0, %v2083
    %v2085 = vpop.f32.mrb[0].mxu0
    %v2086 = vadd.f32 0.0, %v2085
    %v2087 = vpop.f32.mrb[0].mxu0
    %v2088 = vpop.f32.mrb[0].mxu0
    %2089 = vdwg.mxu0
    %v2090 = vadd.f32 %v2003, %v2043
    %v2091 = vadd.f32 %v2004, %v2045
    %v2092 = vadd.f32 %v2005, %v2084
    %v2093 = vadd.f32 %v2006, %v2086
    %v2094 = vxor.u32 %v2090, 2147483648
    %v2095 = vxor.u32 %v2091, 2147483648
    %v2096 = vmul.f32 %v2094, 1.442695
    %v2097 = vpow.pop %v2096
    %v2098 = vmul.f32 %v2095, 1.442695
    %v2099 = vpow.pop %v2098
    %v2100 = vadd.f32 %v2097, 1.0
    %v2101 = vadd.f32 %v2099, 1.0
    %v2102 = vrcp.pop %v2100
    %v2103 = vmul.f32 1.0, %v2102
    %v2104 = vrcp.pop %v2101
    %v2105 = vmul.f32 1.0, %v2104
    %v2106 = vtanh.pop %v2092
    %v2107 = vxor.u32 %v2093, 2147483648
    %v2108 = vmul.f32 %v2107, 1.442695
    %v2109 = vpow.pop %v2108
    %v2110 = vadd.f32 %v2109, 1.0
    %v2111 = vrcp.pop %v2110
    %v2112 = vmul.f32 1.0, %v2111
    %v2113 = vmul.f32 %v2105, %v1883
    %v2114 = vmul.f32 %v2103, %v2106
    %v2115 = vadd.f32 %v2113, %v2114
    %v2116 = vtanh.pop %v2115
    %v2117 = vmul.f32 %v2112, %v2116
    %v2118 = vadd.f32 %v1886, %v2117
    %v2119 = vld [vmem:[#allocation2 + $0x40] sm:$0xff]
    %v2120 = vld [vmem:[#allocation2 + $0x48] sm:$0xff]
    %v2121 = vld [vmem:[#allocation2 + $0x50] sm:$0xff]
    %v2122 = vld [vmem:[#allocation2 + $0x58] sm:$0xff]
    %v2123 = vpack.c.bf16 %v2001, %v2001
    %2124 = vmatprep.subr.bf16.mxu0 %v1406
    %2125 = vmatpush1.bf16.msra.mxu0 %v1405
    %2126 = vmatprep.subr.bf16.mxu0 %v1410
    %2127 = vmatpush1.bf16.msra.mxu0 %v1409
    %2128 = vmatprep.subr.bf16.mxu0 %v1414
    %2129 = vmatpush1.bf16.msra.mxu0 %v1413
    %2130 = vmatprep.subr.bf16.mxu0 %v1418
    %2131 = vmatpush1.bf16.msra.mxu0 %v1417
    %2132 = vmatprep.subr.bf16.mxu0 %v1422
    %2133 = vmatpush1.bf16.msra.mxu0 %v1421
    %2134 = vmatprep.subr.bf16.mxu0 %v1426
    %2135 = vmatpush1.bf16.msra.mxu0 %v1425
    %2136 = vmatprep.subr.bf16.mxu0 %v1430
    %2137 = vmatpush1.bf16.msra.mxu0 %v1429
    %2138 = vmatprep.subr.bf16.mxu0 %v1434
    %2139 = vmatpush1.bf16.msra.mxu0 %v1433
    %2140 = vmatprep.subr.bf16.mxu0 0
    %2141 = vmatpush1.bf16.msra.mxu0 0
    %2142 = vmatprep.subr.bf16.mxu0 0
    %2143 = vmatpush1.bf16.msra.mxu0 0
    %2144 = vmatprep.subr.bf16.mxu0 0
    %2145 = vmatpush1.bf16.msra.mxu0 0
    %2146 = vmatprep.subr.bf16.mxu0 0
    %2147 = vmatpush1.bf16.msra.mxu0 0
    %2148 = vmatprep.subr.bf16.mxu0 0
    %2149 = vmatpush1.bf16.msra.mxu0 0
    %2150 = vmatprep.subr.bf16.mxu0 0
    %2151 = vmatpush1.bf16.msra.mxu0 0
    %2152 = vmatprep.subr.bf16.mxu0 0
    %2153 = vmatpush1.bf16.msra.mxu0 0
    %2154 = vmatprep.subr.bf16.mxu0 0
    %2155 = vmatpush1.bf16.msra.mxu0 0
    %2156 = vmatprep.mubr.bf16.mxu0 0
    %2157 = vmatmul.mubr.bf16.gmra.mrb[0].mxu0 %v2123
    %v2158 = vpop.f32.mrb[0].mxu0
    %v2159 = vadd.f32 0.0, %v2158
    %v2160 = vpop.f32.mrb[0].mxu0
    %v2161 = vadd.f32 0.0, %v2160
    %v2162 = vpop.f32.mrb[0].mxu0
    %v2163 = vpop.f32.mrb[0].mxu0
    %2164 = vdwg.mxu0
    %2165 = vmatprep.subr.bf16.mxu0 %v1408
    %2166 = vmatpush1.bf16.msra.mxu0 %v1407
    %2167 = vmatprep.subr.bf16.mxu0 %v1412
    %2168 = vmatpush1.bf16.msra.mxu0 %v1411
    %2169 = vmatprep.subr.bf16.mxu0 %v1416
    %2170 = vmatpush1.bf16.msra.mxu0 %v1415
    %2171 = vmatprep.subr.bf16.mxu0 %v1420
    %2172 = vmatpush1.bf16.msra.mxu0 %v1419
    %2173 = vmatprep.subr.bf16.mxu0 %v1424
    %2174 = vmatpush1.bf16.msra.mxu0 %v1423
    %2175 = vmatprep.subr.bf16.mxu0 %v1428
    %2176 = vmatpush1.bf16.msra.mxu0 %v1427
    %2177 = vmatprep.subr.bf16.mxu0 %v1432
    %2178 = vmatpush1.bf16.msra.mxu0 %v1431
    %2179 = vmatprep.subr.bf16.mxu0 %v1436
    %2180 = vmatpush1.bf16.msra.mxu0 %v1435
    %2181 = vmatprep.subr.bf16.mxu0 0
    %2182 = vmatpush1.bf16.msra.mxu0 0
    %2183 = vmatprep.subr.bf16.mxu0 0
    %2184 = vmatpush1.bf16.msra.mxu0 0
    %2185 = vmatprep.subr.bf16.mxu0 0
    %2186 = vmatpush1.bf16.msra.mxu0 0
    %2187 = vmatprep.subr.bf16.mxu0 0
    %2188 = vmatpush1.bf16.msra.mxu0 0
    %2189 = vmatprep.subr.bf16.mxu0 0
    %2190 = vmatpush1.bf16.msra.mxu0 0
    %2191 = vmatprep.subr.bf16.mxu0 0
    %2192 = vmatpush1.bf16.msra.mxu0 0
    %2193 = vmatprep.subr.bf16.mxu0 0
    %2194 = vmatpush1.bf16.msra.mxu0 0
    %2195 = vmatprep.subr.bf16.mxu0 0
    %2196 = vmatpush1.bf16.msra.mxu0 0
    %2197 = vmatprep.mubr.bf16.mxu0 0
    %2198 = vmatmul.mubr.bf16.gmra.mrb[0].mxu0 %v2123
    %v2199 = vpop.f32.mrb[0].mxu0
    %v2200 = vadd.f32 0.0, %v2199
    %v2201 = vpop.f32.mrb[0].mxu0
    %v2202 = vadd.f32 0.0, %v2201
    %v2203 = vpop.f32.mrb[0].mxu0
    %v2204 = vpop.f32.mrb[0].mxu0
    %2205 = vdwg.mxu0
    %v2206 = vadd.f32 %v2119, %v2159
    %v2207 = vadd.f32 %v2120, %v2161
    %v2208 = vadd.f32 %v2121, %v2200
    %v2209 = vadd.f32 %v2122, %v2202
    %v2210 = vxor.u32 %v2206, 2147483648
    %v2211 = vxor.u32 %v2207, 2147483648
    %v2212 = vmul.f32 %v2210, 1.442695
    %v2213 = vpow.pop %v2212
    %v2214 = vmul.f32 %v2211, 1.442695
    %v2215 = vpow.pop %v2214
    %v2216 = vadd.f32 %v2213, 1.0
    %v2217 = vadd.f32 %v2215, 1.0
    %v2218 = vrcp.pop %v2216
    %v2219 = vmul.f32 1.0, %v2218
    %v2220 = vrcp.pop %v2217
    %v2221 = vmul.f32 1.0, %v2220
    %v2222 = vtanh.pop %v2208
    %v2223 = vxor.u32 %v2209, 2147483648
    %v2224 = vmul.f32 %v2223, 1.442695
    %v2225 = vpow.pop %v2224
    %v2226 = vadd.f32 %v2225, 1.0
    %v2227 = vrcp.pop %v2226
    %v2228 = vmul.f32 1.0, %v2227
    %v2229 = vmul.f32 %v2221, %v1999
    %v2230 = vmul.f32 %v2219, %v2222
    %v2231 = vadd.f32 %v2229, %v2230
    %v2232 = vtanh.pop %v2231
    %v2233 = vmul.f32 %v2228, %v2232
    %v2234 = vadd.f32 %v2002, %v2233
    %v2235 = vld [vmem:[#allocation3 + $0xa0] sm:$0xff]
    %v2236 = vld [vmem:[#allocation3 + $0xa8] sm:$0xff]
    %v2237 = vld [vmem:[#allocation3 + $0xb0] sm:$0xff]
    %v2238 = vld [vmem:[#allocation3 + $0xb8] sm:$0xff]
    %v2239 = vpack.c.bf16 %v2117, %v2117
    %2240 = vmatprep.subr.bf16.mxu0 %v1713
    %2241 = vmatpush1.bf16.msra.mxu0 %v1712
    %2242 = vmatprep.subr.bf16.mxu0 %v1717
    %2243 = vmatpush1.bf16.msra.mxu0 %v1716
    %2244 = vmatprep.subr.bf16.mxu0 %v1721
    %2245 = vmatpush1.bf16.msra.mxu0 %v1720
    %2246 = vmatprep.subr.bf16.mxu0 %v1725
    %2247 = vmatpush1.bf16.msra.mxu0 %v1724
    %2248 = vmatprep.subr.bf16.mxu0 %v1729
    %2249 = vmatpush1.bf16.msra.mxu0 %v1728
    %2250 = vmatprep.subr.bf16.mxu0 %v1733
    %2251 = vmatpush1.bf16.msra.mxu0 %v1732
    %2252 = vmatprep.subr.bf16.mxu0 %v1737
    %2253 = vmatpush1.bf16.msra.mxu0 %v1736
    %2254 = vmatprep.subr.bf16.mxu0 %v1741
    %2255 = vmatpush1.bf16.msra.mxu0 %v1740
    %2256 = vmatprep.subr.bf16.mxu0 0
    %2257 = vmatpush1.bf16.msra.mxu0 0
    %2258 = vmatprep.subr.bf16.mxu0 0
    %2259 = vmatpush1.bf16.msra.mxu0 0
    %2260 = vmatprep.subr.bf16.mxu0 0
    %2261 = vmatpush1.bf16.msra.mxu0 0
    %2262 = vmatprep.subr.bf16.mxu0 0
    %2263 = vmatpush1.bf16.msra.mxu0 0
    %2264 = vmatprep.subr.bf16.mxu0 0
    %2265 = vmatpush1.bf16.msra.mxu0 0
    %2266 = vmatprep.subr.bf16.mxu0 0
    %2267 = vmatpush1.bf16.msra.mxu0 0
    %2268 = vmatprep.subr.bf16.mxu0 0
    %2269 = vmatpush1.bf16.msra.mxu0 0
    %2270 = vmatprep.subr.bf16.mxu0 0
    %2271 = vmatpush1.bf16.msra.mxu0 0
    %2272 = vmatprep.mubr.bf16.mxu0 0
    %2273 = vmatmul.mubr.bf16.gmra.mrb[0].mxu0 %v2239
    %v2274 = vpop.f32.mrb[0].mxu0
    %v2275 = vadd.f32 0.0, %v2274
    %v2276 = vpop.f32.mrb[0].mxu0
    %v2277 = vadd.f32 0.0, %v2276
    %v2278 = vpop.f32.mrb[0].mxu0
    %v2279 = vpop.f32.mrb[0].mxu0
    %2280 = vdwg.mxu0
    %2281 = vmatprep.subr.bf16.mxu0 %v1715
    %2282 = vmatpush1.bf16.msra.mxu0 %v1714
    %2283 = vmatprep.subr.bf16.mxu0 %v1719
    %2284 = vmatpush1.bf16.msra.mxu0 %v1718
    %2285 = vmatprep.subr.bf16.mxu0 %v1723
    %2286 = vmatpush1.bf16.msra.mxu0 %v1722
    %2287 = vmatprep.subr.bf16.mxu0 %v1727
    %2288 = vmatpush1.bf16.msra.mxu0 %v1726
    %2289 = vmatprep.subr.bf16.mxu0 %v1731
    %2290 = vmatpush1.bf16.msra.mxu0 %v1730
    %2291 = vmatprep.subr.bf16.mxu0 %v1735
    %2292 = vmatpush1.bf16.msra.mxu0 %v1734
    %2293 = vmatprep.subr.bf16.mxu0 %v1739
    %2294 = vmatpush1.bf16.msra.mxu0 %v1738
    %2295 = vmatprep.subr.bf16.mxu0 %v1743
    %2296 = vmatpush1.bf16.msra.mxu0 %v1742
    %2297 = vmatprep.subr.bf16.mxu0 0
    %2298 = vmatpush1.bf16.msra.mxu0 0
    %2299 = vmatprep.subr.bf16.mxu0 0
    %2300 = vmatpush1.bf16.msra.mxu0 0
    %2301 = vmatprep.subr.bf16.mxu0 0
    %2302 = vmatpush1.bf16.msra.mxu0 0
    %2303 = vmatprep.subr.bf16.mxu0 0
    %2304 = vmatpush1.bf16.msra.mxu0 0
    %2305 = vmatprep.subr.bf16.mxu0 0
    %2306 = vmatpush1.bf16.msra.mxu0 0
    %2307 = vmatprep.subr.bf16.mxu0 0
    %2308 = vmatpush1.bf16.msra.mxu0 0
    %2309 = vmatprep.subr.bf16.mxu0 0
    %2310 = vmatpush1.bf16.msra.mxu0 0
    %2311 = vmatprep.subr.bf16.mxu0 0
    %2312 = vmatpush1.bf16.msra.mxu0 0
    %2313 = vmatprep.mubr.bf16.mxu0 0
    %2314 = vmatmul.mubr.bf16.gmra.mrb[0].mxu0 %v2239
    %v2315 = vpop.f32.mrb[0].mxu0
    %v2316 = vadd.f32 0.0, %v2315
    %v2317 = vpop.f32.mrb[0].mxu0
    %v2318 = vadd.f32 0.0, %v2317
    %v2319 = vpop.f32.mrb[0].mxu0
    %v2320 = vpop.f32.mrb[0].mxu0
    %2321 = vdwg.mxu0
    %v2322 = vadd.f32 %v2235, %v2275
    %v2323 = vadd.f32 %v2236, %v2277
    %v2324 = vadd.f32 %v2237, %v2316
    %v2325 = vadd.f32 %v2238, %v2318
    %v2326 = vxor.u32 %v2322, 2147483648
    %v2327 = vxor.u32 %v2323, 2147483648
    %v2328 = vmul.f32 %v2326, 1.442695
    %v2329 = vpow.pop %v2328
    %v2330 = vmul.f32 %v2327, 1.442695
    %v2331 = vpow.pop %v2330
    %v2332 = vadd.f32 %v2329, 1.0
    %v2333 = vadd.f32 %v2331, 1.0
    %v2334 = vrcp.pop %v2332
    %v2335 = vmul.f32 1.0, %v2334
    %v2336 = vrcp.pop %v2333
    %v2337 = vmul.f32 1.0, %v2336
    %v2338 = vtanh.pop %v2324
    %v2339 = vxor.u32 %v2325, 2147483648
    %v2340 = vmul.f32 %v2339, 1.442695
    %v2341 = vpow.pop %v2340
    %v2342 = vadd.f32 %v2341, 1.0
    %v2343 = vrcp.pop %v2342
    %v2344 = vmul.f32 1.0, %v2343
    %v2345 = vmul.f32 %v2337, %v2115
    %v2346 = vmul.f32 %v2335, %v2338
    %v2347 = vadd.f32 %v2345, %v2346
    %v2348 = vtanh.pop %v2347
    %v2349 = vmul.f32 %v2344, %v2348
    %v2350 = vadd.f32 %v2118, %v2349
    %v2351 = vld [vmem:[#allocation2 + $0x60] sm:$0xff]
    %v2352 = vld [vmem:[#allocation2 + $0x68] sm:$0xff]
    %v2353 = vld [vmem:[#allocation2 + $0x70] sm:$0xff]
    %v2354 = vld [vmem:[#allocation2 + $0x78] sm:$0xff]
    %v2355 = vpack.c.bf16 %v2233, %v2233
    %2356 = vmatprep.subr.bf16.mxu0 %v1406
    %2357 = vmatpush1.bf16.msra.mxu0 %v1405
    %2358 = vmatprep.subr.bf16.mxu0 %v1410
    %2359 = vmatpush1.bf16.msra.mxu0 %v1409
    %2360 = vmatprep.subr.bf16.mxu0 %v1414
    %2361 = vmatpush1.bf16.msra.mxu0 %v1413
    %2362 = vmatprep.subr.bf16.mxu0 %v1418
    %2363 = vmatpush1.bf16.msra.mxu0 %v1417
    %2364 = vmatprep.subr.bf16.mxu0 %v1422
    %2365 = vmatpush1.bf16.msra.mxu0 %v1421
    %2366 = vmatprep.subr.bf16.mxu0 %v1426
    %2367 = vmatpush1.bf16.msra.mxu0 %v1425
    %2368 = vmatprep.subr.bf16.mxu0 %v1430
    %2369 = vmatpush1.bf16.msra.mxu0 %v1429
    %2370 = vmatprep.subr.bf16.mxu0 %v1434
    %2371 = vmatpush1.bf16.msra.mxu0 %v1433
    %2372 = vmatprep.subr.bf16.mxu0 0
    %2373 = vmatpush1.bf16.msra.mxu0 0
    %2374 = vmatprep.subr.bf16.mxu0 0
    %2375 = vmatpush1.bf16.msra.mxu0 0
    %2376 = vmatprep.subr.bf16.mxu0 0
    %2377 = vmatpush1.bf16.msra.mxu0 0
    %2378 = vmatprep.subr.bf16.mxu0 0
    %2379 = vmatpush1.bf16.msra.mxu0 0
    %2380 = vmatprep.subr.bf16.mxu0 0
    %2381 = vmatpush1.bf16.msra.mxu0 0
    %2382 = vmatprep.subr.bf16.mxu0 0
    %2383 = vmatpush1.bf16.msra.mxu0 0
    %2384 = vmatprep.subr.bf16.mxu0 0
    %2385 = vmatpush1.bf16.msra.mxu0 0
    %2386 = vmatprep.subr.bf16.mxu0 0
    %2387 = vmatpush1.bf16.msra.mxu0 0
    %2388 = vmatprep.mubr.bf16.mxu0 0
    %2389 = vmatmul.mubr.bf16.gmra.mrb[0].mxu0 %v2355
    %v2390 = vpop.f32.mrb[0].mxu0
    %v2391 = vadd.f32 0.0, %v2390
    %v2392 = vpop.f32.mrb[0].mxu0
    %v2393 = vadd.f32 0.0, %v2392
    %v2394 = vpop.f32.mrb[0].mxu0
    %v2395 = vpop.f32.mrb[0].mxu0
    %2396 = vdwg.mxu0
    %2397 = vmatprep.subr.bf16.mxu0 %v1408
    %2398 = vmatpush1.bf16.msra.mxu0 %v1407
    %2399 = vmatprep.subr.bf16.mxu0 %v1412
    %2400 = vmatpush1.bf16.msra.mxu0 %v1411
    %2401 = vmatprep.subr.bf16.mxu0 %v1416
    %2402 = vmatpush1.bf16.msra.mxu0 %v1415
    %2403 = vmatprep.subr.bf16.mxu0 %v1420
    %2404 = vmatpush1.bf16.msra.mxu0 %v1419
    %2405 = vmatprep.subr.bf16.mxu0 %v1424
    %2406 = vmatpush1.bf16.msra.mxu0 %v1423
    %2407 = vmatprep.subr.bf16.mxu0 %v1428
    %2408 = vmatpush1.bf16.msra.mxu0 %v1427
    %2409 = vmatprep.subr.bf16.mxu0 %v1432
    %2410 = vmatpush1.bf16.msra.mxu0 %v1431
    %2411 = vmatprep.subr.bf16.mxu0 %v1436
    %2412 = vmatpush1.bf16.msra.mxu0 %v1435
    %2413 = vmatprep.subr.bf16.mxu0 0
    %2414 = vmatpush1.bf16.msra.mxu0 0
    %2415 = vmatprep.subr.bf16.mxu0 0
    %2416 = vmatpush1.bf16.msra.mxu0 0
    %2417 = vmatprep.subr.bf16.mxu0 0
    %2418 = vmatpush1.bf16.msra.mxu0 0
    %2419 = vmatprep.subr.bf16.mxu0 0
    %2420 = vmatpush1.bf16.msra.mxu0 0
    %2421 = vmatprep.subr.bf16.mxu0 0
    %2422 = vmatpush1.bf16.msra.mxu0 0
    %2423 = vmatprep.subr.bf16.mxu0 0
    %2424 = vmatpush1.bf16.msra.mxu0 0
    %2425 = vmatprep.subr.bf16.mxu0 0
    %2426 = vmatpush1.bf16.msra.mxu0 0
    %2427 = vmatprep.subr.bf16.mxu0 0
    %2428 = vmatpush1.bf16.msra.mxu0 0
    %2429 = vmatprep.mubr.bf16.mxu0 0
    %2430 = vmatmul.mubr.bf16.gmra.mrb[0].mxu0 %v2355
    %v2431 = vpop.f32.mrb[0].mxu0
    %v2432 = vadd.f32 0.0, %v2431
    %v2433 = vpop.f32.mrb[0].mxu0
    %v2434 = vadd.f32 0.0, %v2433
    %v2435 = vpop.f32.mrb[0].mxu0
    %v2436 = vpop.f32.mrb[0].mxu0
    %2437 = vdwg.mxu0
    %v2438 = vadd.f32 %v2351, %v2391
    %v2439 = vadd.f32 %v2352, %v2393
    %v2440 = vadd.f32 %v2353, %v2432
    %v2441 = vadd.f32 %v2354, %v2434
    %v2442 = vxor.u32 %v2438, 2147483648
    %v2443 = vxor.u32 %v2439, 2147483648
    %v2444 = vmul.f32 %v2442, 1.442695
    %v2445 = vpow.pop %v2444
    %v2446 = vmul.f32 %v2443, 1.442695
    %v2447 = vpow.pop %v2446
    %v2448 = vadd.f32 %v2445, 1.0
    %v2449 = vadd.f32 %v2447, 1.0
    %v2450 = vrcp.pop %v2448
    %v2451 = vmul.f32 1.0, %v2450
    %v2452 = vrcp.pop %v2449
    %v2453 = vmul.f32 1.0, %v2452
    %v2454 = vtanh.pop %v2440
    %v2455 = vxor.u32 %v2441, 2147483648
    %v2456 = vmul.f32 %v2455, 1.442695
    %v2457 = vpow.pop %v2456
    %v2458 = vadd.f32 %v2457, 1.0
    %v2459 = vrcp.pop %v2458
    %v2460 = vmul.f32 1.0, %v2459
    %v2461 = vmul.f32 %v2453, %v2231
    %v2462 = vmul.f32 %v2451, %v2454
    %v2463 = vadd.f32 %v2461, %v2462
    %v2464 = vtanh.pop %v2463
    %v2465 = vmul.f32 %v2460, %v2464
    %v2466 = vadd.f32 %v2234, %v2465
    %v2467 = vld [vmem:[#allocation3 + $0x80] sm:$0xff]
    %v2468 = vld [vmem:[#allocation3 + $0x88] sm:$0xff]
    %v2469 = vld [vmem:[#allocation3 + $0x90] sm:$0xff]
    %v2470 = vld [vmem:[#allocation3 + $0x98] sm:$0xff]
    %v2471 = vpack.c.bf16 %v2349, %v2349
    %2472 = vmatprep.subr.bf16.mxu0 %v1713
    %2473 = vmatpush1.bf16.msra.mxu0 %v1712
    %2474 = vmatprep.subr.bf16.mxu0 %v1717
    %2475 = vmatpush1.bf16.msra.mxu0 %v1716
    %2476 = vmatprep.subr.bf16.mxu0 %v1721
    %2477 = vmatpush1.bf16.msra.mxu0 %v1720
    %2478 = vmatprep.subr.bf16.mxu0 %v1725
    %2479 = vmatpush1.bf16.msra.mxu0 %v1724
    %2480 = vmatprep.subr.bf16.mxu0 %v1729
    %2481 = vmatpush1.bf16.msra.mxu0 %v1728
    %2482 = vmatprep.subr.bf16.mxu0 %v1733
    %2483 = vmatpush1.bf16.msra.mxu0 %v1732
    %2484 = vmatprep.subr.bf16.mxu0 %v1737
    %2485 = vmatpush1.bf16.msra.mxu0 %v1736
    %2486 = vmatprep.subr.bf16.mxu0 %v1741
    %2487 = vmatpush1.bf16.msra.mxu0 %v1740
    %2488 = vmatprep.subr.bf16.mxu0 0
    %2489 = vmatpush1.bf16.msra.mxu0 0
    %2490 = vmatprep.subr.bf16.mxu0 0
    %2491 = vmatpush1.bf16.msra.mxu0 0
    %2492 = vmatprep.subr.bf16.mxu0 0
    %2493 = vmatpush1.bf16.msra.mxu0 0
    %2494 = vmatprep.subr.bf16.mxu0 0
    %2495 = vmatpush1.bf16.msra.mxu0 0
    %2496 = vmatprep.subr.bf16.mxu0 0
    %2497 = vmatpush1.bf16.msra.mxu0 0
    %2498 = vmatprep.subr.bf16.mxu0 0
    %2499 = vmatpush1.bf16.msra.mxu0 0
    %2500 = vmatprep.subr.bf16.mxu0 0
    %2501 = vmatpush1.bf16.msra.mxu0 0
    %2502 = vmatprep.subr.bf16.mxu0 0
    %2503 = vmatpush1.bf16.msra.mxu0 0
    %2504 = vmatprep.mubr.bf16.mxu0 0
    %2505 = vmatmul.mubr.bf16.gmra.mrb[0].mxu0 %v2471
    %v2506 = vpop.f32.mrb[0].mxu0
    %v2507 = vadd.f32 0.0, %v2506
    %v2508 = vpop.f32.mrb[0].mxu0
    %v2509 = vadd.f32 0.0, %v2508
    %v2510 = vpop.f32.mrb[0].mxu0
    %v2511 = vpop.f32.mrb[0].mxu0
    %2512 = vdwg.mxu0
    %2513 = vmatprep.subr.bf16.mxu0 %v1715
    %2514 = vmatpush1.bf16.msra.mxu0 %v1714
    %2515 = vmatprep.subr.bf16.mxu0 %v1719
    %2516 = vmatpush1.bf16.msra.mxu0 %v1718
    %2517 = vmatprep.subr.bf16.mxu0 %v1723
    %2518 = vmatpush1.bf16.msra.mxu0 %v1722
    %2519 = vmatprep.subr.bf16.mxu0 %v1727
    %2520 = vmatpush1.bf16.msra.mxu0 %v1726
    %2521 = vmatprep.subr.bf16.mxu0 %v1731
    %2522 = vmatpush1.bf16.msra.mxu0 %v1730
    %2523 = vmatprep.subr.bf16.mxu0 %v1735
    %2524 = vmatpush1.bf16.msra.mxu0 %v1734
    %2525 = vmatprep.subr.bf16.mxu0 %v1739
    %2526 = vmatpush1.bf16.msra.mxu0 %v1738
    %2527 = vmatprep.subr.bf16.mxu0 %v1743
    %2528 = vmatpush1.bf16.msra.mxu0 %v1742
    %2529 = vmatprep.subr.bf16.mxu0 0
    %2530 = vmatpush1.bf16.msra.mxu0 0
    %2531 = vmatprep.subr.bf16.mxu0 0
    %2532 = vmatpush1.bf16.msra.mxu0 0
    %2533 = vmatprep.subr.bf16.mxu0 0
    %2534 = vmatpush1.bf16.msra.mxu0 0
    %2535 = vmatprep.subr.bf16.mxu0 0
    %2536 = vmatpush1.bf16.msra.mxu0 0
    %2537 = vmatprep.subr.bf16.mxu0 0
    %2538 = vmatpush1.bf16.msra.mxu0 0
    %2539 = vmatprep.subr.bf16.mxu0 0
    %2540 = vmatpush1.bf16.msra.mxu0 0
    %2541 = vmatprep.subr.bf16.mxu0 0
    %2542 = vmatpush1.bf16.msra.mxu0 0
    %2543 = vmatprep.subr.bf16.mxu0 0
    %2544 = vmatpush1.bf16.msra.mxu0 0
    %2545 = vmatprep.mubr.bf16.mxu0 0
    %2546 = vmatmul.mubr.bf16.gmra.mrb[0].mxu0 %v2471
    %v2547 = vpop.f32.mrb[0].mxu0
    %v2548 = vadd.f32 0.0, %v2547
    %v2549 = vpop.f32.mrb[0].mxu0
    %v2550 = vadd.f32 0.0, %v2549
    %v2551 = vpop.f32.mrb[0].mxu0
    %v2552 = vpop.f32.mrb[0].mxu0
    %2553 = vdwg.mxu0
    %v2554 = vadd.f32 %v2467, %v2507
    %v2555 = vadd.f32 %v2468, %v2509
    %v2556 = vadd.f32 %v2469, %v2548
    %v2557 = vadd.f32 %v2470, %v2550
    %v2558 = vxor.u32 %v2554, 2147483648
    %v2559 = vxor.u32 %v2555, 2147483648
    %v2560 = vmul.f32 %v2558, 1.442695
    %v2561 = vpow.pop %v2560
    %v2562 = vmul.f32 %v2559, 1.442695
    %v2563 = vpow.pop %v2562
    %v2564 = vadd.f32 %v2561, 1.0
    %v2565 = vadd.f32 %v2563, 1.0
    %v2566 = vrcp.pop %v2564
    %v2567 = vmul.f32 1.0, %v2566
    %v2568 = vrcp.pop %v2565
    %v2569 = vmul.f32 1.0, %v2568
    %v2570 = vtanh.pop %v2556
    %v2571 = vxor.u32 %v2557, 2147483648
    %v2572 = vmul.f32 %v2571, 1.442695
    %v2573 = vpow.pop %v2572
    %v2574 = vadd.f32 %v2573, 1.0
    %v2575 = vrcp.pop %v2574
    %v2576 = vmul.f32 1.0, %v2575
    %v2577 = vmul.f32 %v2569, %v2347
    %v2578 = vmul.f32 %v2567, %v2570
    %v2579 = vadd.f32 %v2577, %v2578
    %v2580 = vtanh.pop %v2579
    %v2581 = vmul.f32 %v2576, %v2580
    %v2582 = vadd.f32 %v2350, %v2581
    %v2583 = vld [vmem:[#allocation2 + $0x80] sm:$0xff]
    %v2584 = vld [vmem:[#allocation2 + $0x88] sm:$0xff]
    %v2585 = vld [vmem:[#allocation2 + $0x90] sm:$0xff]
    %v2586 = vld [vmem:[#allocation2 + $0x98] sm:$0xff]
    %v2587 = vpack.c.bf16 %v2465, %v2465
    %2588 = vmatprep.subr.bf16.mxu0 %v1406
    %2589 = vmatpush1.bf16.msra.mxu0 %v1405
    %2590 = vmatprep.subr.bf16.mxu0 %v1410
    %2591 = vmatpush1.bf16.msra.mxu0 %v1409
    %2592 = vmatprep.subr.bf16.mxu0 %v1414
    %2593 = vmatpush1.bf16.msra.mxu0 %v1413
    %2594 = vmatprep.subr.bf16.mxu0 %v1418
    %2595 = vmatpush1.bf16.msra.mxu0 %v1417
    %2596 = vmatprep.subr.bf16.mxu0 %v1422
    %2597 = vmatpush1.bf16.msra.mxu0 %v1421
    %2598 = vmatprep.subr.bf16.mxu0 %v1426
    %2599 = vmatpush1.bf16.msra.mxu0 %v1425
    %2600 = vmatprep.subr.bf16.mxu0 %v1430
    %2601 = vmatpush1.bf16.msra.mxu0 %v1429
    %2602 = vmatprep.subr.bf16.mxu0 %v1434
    %2603 = vmatpush1.bf16.msra.mxu0 %v1433
    %2604 = vmatprep.subr.bf16.mxu0 0
    %2605 = vmatpush1.bf16.msra.mxu0 0
    %2606 = vmatprep.subr.bf16.mxu0 0
    %2607 = vmatpush1.bf16.msra.mxu0 0
    %2608 = vmatprep.subr.bf16.mxu0 0
    %2609 = vmatpush1.bf16.msra.mxu0 0
    %2610 = vmatprep.subr.bf16.mxu0 0
    %2611 = vmatpush1.bf16.msra.mxu0 0
    %2612 = vmatprep.subr.bf16.mxu0 0
    %2613 = vmatpush1.bf16.msra.mxu0 0
    %2614 = vmatprep.subr.bf16.mxu0 0
    %2615 = vmatpush1.bf16.msra.mxu0 0
    %2616 = vmatprep.subr.bf16.mxu0 0
    %2617 = vmatpush1.bf16.msra.mxu0 0
    %2618 = vmatprep.subr.bf16.mxu0 0
    %2619 = vmatpush1.bf16.msra.mxu0 0
    %2620 = vmatprep.mubr.bf16.mxu0 0
    %2621 = vmatmul.mubr.bf16.gmra.mrb[0].mxu0 %v2587
    %v2622 = vpop.f32.mrb[0].mxu0
    %v2623 = vadd.f32 0.0, %v2622
    %v2624 = vpop.f32.mrb[0].mxu0
    %v2625 = vadd.f32 0.0, %v2624
    %v2626 = vpop.f32.mrb[0].mxu0
    %v2627 = vpop.f32.mrb[0].mxu0
    %2628 = vdwg.mxu0
    %2629 = vmatprep.subr.bf16.mxu0 %v1408
    %2630 = vmatpush1.bf16.msra.mxu0 %v1407
    %2631 = vmatprep.subr.bf16.mxu0 %v1412
    %2632 = vmatpush1.bf16.msra.mxu0 %v1411
    %2633 = vmatprep.subr.bf16.mxu0 %v1416
    %2634 = vmatpush1.bf16.msra.mxu0 %v1415
    %2635 = vmatprep.subr.bf16.mxu0 %v1420
    %2636 = vmatpush1.bf16.msra.mxu0 %v1419
    %2637 = vmatprep.subr.bf16.mxu0 %v1424
    %2638 = vmatpush1.bf16.msra.mxu0 %v1423
    %2639 = vmatprep.subr.bf16.mxu0 %v1428
    %2640 = vmatpush1.bf16.msra.mxu0 %v1427
    %2641 = vmatprep.subr.bf16.mxu0 %v1432
    %2642 = vmatpush1.bf16.msra.mxu0 %v1431
    %2643 = vmatprep.subr.bf16.mxu0 %v1436
    %2644 = vmatpush1.bf16.msra.mxu0 %v1435
    %2645 = vmatprep.subr.bf16.mxu0 0
    %2646 = vmatpush1.bf16.msra.mxu0 0
    %2647 = vmatprep.subr.bf16.mxu0 0
    %2648 = vmatpush1.bf16.msra.mxu0 0
    %2649 = vmatprep.subr.bf16.mxu0 0
    %2650 = vmatpush1.bf16.msra.mxu0 0
    %2651 = vmatprep.subr.bf16.mxu0 0
    %2652 = vmatpush1.bf16.msra.mxu0 0
    %2653 = vmatprep.subr.bf16.mxu0 0
    %2654 = vmatpush1.bf16.msra.mxu0 0
    %2655 = vmatprep.subr.bf16.mxu0 0
    %2656 = vmatpush1.bf16.msra.mxu0 0
    %2657 = vmatprep.subr.bf16.mxu0 0
    %2658 = vmatpush1.bf16.msra.mxu0 0
    %2659 = vmatprep.subr.bf16.mxu0 0
    %2660 = vmatpush1.bf16.msra.mxu0 0
    %2661 = vmatprep.mubr.bf16.mxu0 0
    %2662 = vmatmul.mubr.bf16.gmra.mrb[0].mxu0 %v2587
    %v2663 = vpop.f32.mrb[0].mxu0
    %v2664 = vadd.f32 0.0, %v2663
    %v2665 = vpop.f32.mrb[0].mxu0
    %v2666 = vadd.f32 0.0, %v2665
    %v2667 = vpop.f32.mrb[0].mxu0
    %v2668 = vpop.f32.mrb[0].mxu0
    %2669 = vdwg.mxu0
    %v2670 = vadd.f32 %v2583, %v2623
    %v2671 = vadd.f32 %v2584, %v2625
    %v2672 = vadd.f32 %v2585, %v2664
    %v2673 = vadd.f32 %v2586, %v2666
    %v2674 = vxor.u32 %v2670, 2147483648
    %v2675 = vxor.u32 %v2671, 2147483648
    %v2676 = vmul.f32 %v2674, 1.442695
    %v2677 = vpow.pop %v2676
    %v2678 = vmul.f32 %v2675, 1.442695
    %v2679 = vpow.pop %v2678
    %v2680 = vadd.f32 %v2677, 1.0
    %v2681 = vadd.f32 %v2679, 1.0
    %v2682 = vrcp.pop %v2680
    %v2683 = vmul.f32 1.0, %v2682
    %v2684 = vrcp.pop %v2681
    %v2685 = vmul.f32 1.0, %v2684
    %v2686 = vtanh.pop %v2672
    %v2687 = vxor.u32 %v2673, 2147483648
    %v2688 = vmul.f32 %v2687, 1.442695
    %v2689 = vpow.pop %v2688
    %v2690 = vadd.f32 %v2689, 1.0
    %v2691 = vrcp.pop %v2690
    %v2692 = vmul.f32 1.0, %v2691
    %v2693 = vmul.f32 %v2685, %v2463
    %v2694 = vmul.f32 %v2683, %v2686
    %v2695 = vadd.f32 %v2693, %v2694
    %v2696 = vtanh.pop %v2695
    %v2697 = vmul.f32 %v2692, %v2696
    %v2698 = vadd.f32 %v2466, %v2697
    %v2699 = vld [vmem:[#allocation3 + $0x60] sm:$0xff]
    %v2700 = vld [vmem:[#allocation3 + $0x68] sm:$0xff]
    %v2701 = vld [vmem:[#allocation3 + $0x70] sm:$0xff]
    %v2702 = vld [vmem:[#allocation3 + $0x78] sm:$0xff]
    %v2703 = vpack.c.bf16 %v2581, %v2581
    %2704 = vmatprep.subr.bf16.mxu0 %v1713
    %2705 = vmatpush1.bf16.msra.mxu0 %v1712
    %2706 = vmatprep.subr.bf16.mxu0 %v1717
    %2707 = vmatpush1.bf16.msra.mxu0 %v1716
    %2708 = vmatprep.subr.bf16.mxu0 %v1721
    %2709 = vmatpush1.bf16.msra.mxu0 %v1720
    %2710 = vmatprep.subr.bf16.mxu0 %v1725
    %2711 = vmatpush1.bf16.msra.mxu0 %v1724
    %2712 = vmatprep.subr.bf16.mxu0 %v1729
    %2713 = vmatpush1.bf16.msra.mxu0 %v1728
    %2714 = vmatprep.subr.bf16.mxu0 %v1733
    %2715 = vmatpush1.bf16.msra.mxu0 %v1732
    %2716 = vmatprep.subr.bf16.mxu0 %v1737
    %2717 = vmatpush1.bf16.msra.mxu0 %v1736
    %2718 = vmatprep.subr.bf16.mxu0 %v1741
    %2719 = vmatpush1.bf16.msra.mxu0 %v1740
    %2720 = vmatprep.subr.bf16.mxu0 0
    %2721 = vmatpush1.bf16.msra.mxu0 0
    %2722 = vmatprep.subr.bf16.mxu0 0
    %2723 = vmatpush1.bf16.msra.mxu0 0
    %2724 = vmatprep.subr.bf16.mxu0 0
    %2725 = vmatpush1.bf16.msra.mxu0 0
    %2726 = vmatprep.subr.bf16.mxu0 0
    %2727 = vmatpush1.bf16.msra.mxu0 0
    %2728 = vmatprep.subr.bf16.mxu0 0
    %2729 = vmatpush1.bf16.msra.mxu0 0
    %2730 = vmatprep.subr.bf16.mxu0 0
    %2731 = vmatpush1.bf16.msra.mxu0 0
    %2732 = vmatprep.subr.bf16.mxu0 0
    %2733 = vmatpush1.bf16.msra.mxu0 0
    %2734 = vmatprep.subr.bf16.mxu0 0
    %2735 = vmatpush1.bf16.msra.mxu0 0
    %2736 = vmatprep.mubr.bf16.mxu0 0
    %2737 = vmatmul.mubr.bf16.gmra.mrb[0].mxu0 %v2703
    %v2738 = vpop.f32.mrb[0].mxu0
    %v2739 = vadd.f32 0.0, %v2738
    %v2740 = vpop.f32.mrb[0].mxu0
    %v2741 = vadd.f32 0.0, %v2740
    %v2742 = vpop.f32.mrb[0].mxu0
    %v2743 = vpop.f32.mrb[0].mxu0
    %2744 = vdwg.mxu0
    %2745 = vmatprep.subr.bf16.mxu0 %v1715
    %2746 = vmatpush1.bf16.msra.mxu0 %v1714
    %2747 = vmatprep.subr.bf16.mxu0 %v1719
    %2748 = vmatpush1.bf16.msra.mxu0 %v1718
    %2749 = vmatprep.subr.bf16.mxu0 %v1723
    %2750 = vmatpush1.bf16.msra.mxu0 %v1722
    %2751 = vmatprep.subr.bf16.mxu0 %v1727
    %2752 = vmatpush1.bf16.msra.mxu0 %v1726
    %2753 = vmatprep.subr.bf16.mxu0 %v1731
    %2754 = vmatpush1.bf16.msra.mxu0 %v1730
    %2755 = vmatprep.subr.bf16.mxu0 %v1735
    %2756 = vmatpush1.bf16.msra.mxu0 %v1734
    %2757 = vmatprep.subr.bf16.mxu0 %v1739
    %2758 = vmatpush1.bf16.msra.mxu0 %v1738
    %2759 = vmatprep.subr.bf16.mxu0 %v1743
    %2760 = vmatpush1.bf16.msra.mxu0 %v1742
    %2761 = vmatprep.subr.bf16.mxu0 0
    %2762 = vmatpush1.bf16.msra.mxu0 0
    %2763 = vmatprep.subr.bf16.mxu0 0
    %2764 = vmatpush1.bf16.msra.mxu0 0
    %2765 = vmatprep.subr.bf16.mxu0 0
    %2766 = vmatpush1.bf16.msra.mxu0 0
    %2767 = vmatprep.subr.bf16.mxu0 0
    %2768 = vmatpush1.bf16.msra.mxu0 0
    %2769 = vmatprep.subr.bf16.mxu0 0
    %2770 = vmatpush1.bf16.msra.mxu0 0
    %2771 = vmatprep.subr.bf16.mxu0 0
    %2772 = vmatpush1.bf16.msra.mxu0 0
    %2773 = vmatprep.subr.bf16.mxu0 0
    %2774 = vmatpush1.bf16.msra.mxu0 0
    %2775 = vmatprep.subr.bf16.mxu0 0
    %2776 = vmatpush1.bf16.msra.mxu0 0
    %2777 = vmatprep.mubr.bf16.mxu0 0
    %2778 = vmatmul.mubr.bf16.gmra.mrb[0].mxu0 %v2703
    %v2779 = vpop.f32.mrb[0].mxu0
    %v2780 = vadd.f32 0.0, %v2779
    %v2781 = vpop.f32.mrb[0].mxu0
    %v2782 = vadd.f32 0.0, %v2781
    %v2783 = vpop.f32.mrb[0].mxu0
    %v2784 = vpop.f32.mrb[0].mxu0
    %2785 = vdwg.mxu0
    %v2786 = vadd.f32 %v2699, %v2739
    %v2787 = vadd.f32 %v2700, %v2741
    %v2788 = vadd.f32 %v2701, %v2780
    %v2789 = vadd.f32 %v2702, %v2782
    %v2790 = vxor.u32 %v2786, 2147483648
    %v2791 = vxor.u32 %v2787, 2147483648
    %v2792 = vmul.f32 %v2790, 1.442695
    %v2793 = vpow.pop %v2792
    %v2794 = vmul.f32 %v2791, 1.442695
    %v2795 = vpow.pop %v2794
    %v2796 = vadd.f32 %v2793, 1.0
    %v2797 = vadd.f32 %v2795, 1.0
    %v2798 = vrcp.pop %v2796
    %v2799 = vmul.f32 1.0, %v2798
    %v2800 = vrcp.pop %v2797
    %v2801 = vmul.f32 1.0, %v2800
    %v2802 = vtanh.pop %v2788
    %v2803 = vxor.u32 %v2789, 2147483648
    %v2804 = vmul.f32 %v2803, 1.442695
    %v2805 = vpow.pop %v2804
    %v2806 = vadd.f32 %v2805, 1.0
    %v2807 = vrcp.pop %v2806
    %v2808 = vmul.f32 1.0, %v2807
    %v2809 = vmul.f32 %v2801, %v2579
    %v2810 = vmul.f32 %v2799, %v2802
    %v2811 = vadd.f32 %v2809, %v2810
    %v2812 = vtanh.pop %v2811
    %v2813 = vmul.f32 %v2808, %v2812
    %v2814 = vadd.f32 %v2582, %v2813
    %v2815 = vld [vmem:[#allocation2 + $0xa0] sm:$0xff]
    %v2816 = vld [vmem:[#allocation2 + $0xa8] sm:$0xff]
    %v2817 = vld [vmem:[#allocation2 + $0xb0] sm:$0xff]
    %v2818 = vld [vmem:[#allocation2 + $0xb8] sm:$0xff]
    %v2819 = vpack.c.bf16 %v2697, %v2697
    %2820 = vmatprep.subr.bf16.mxu0 %v1406
    %2821 = vmatpush1.bf16.msra.mxu0 %v1405
    %2822 = vmatprep.subr.bf16.mxu0 %v1410
    %2823 = vmatpush1.bf16.msra.mxu0 %v1409
    %2824 = vmatprep.subr.bf16.mxu0 %v1414
    %2825 = vmatpush1.bf16.msra.mxu0 %v1413
    %2826 = vmatprep.subr.bf16.mxu0 %v1418
    %2827 = vmatpush1.bf16.msra.mxu0 %v1417
    %2828 = vmatprep.subr.bf16.mxu0 %v1422
    %2829 = vmatpush1.bf16.msra.mxu0 %v1421
    %2830 = vmatprep.subr.bf16.mxu0 %v1426
    %2831 = vmatpush1.bf16.msra.mxu0 %v1425
    %2832 = vmatprep.subr.bf16.mxu0 %v1430
    %2833 = vmatpush1.bf16.msra.mxu0 %v1429
    %2834 = vmatprep.subr.bf16.mxu0 %v1434
    %2835 = vmatpush1.bf16.msra.mxu0 %v1433
    %2836 = vmatprep.subr.bf16.mxu0 0
    %2837 = vmatpush1.bf16.msra.mxu0 0
    %2838 = vmatprep.subr.bf16.mxu0 0
    %2839 = vmatpush1.bf16.msra.mxu0 0
    %2840 = vmatprep.subr.bf16.mxu0 0
    %2841 = vmatpush1.bf16.msra.mxu0 0
    %2842 = vmatprep.subr.bf16.mxu0 0
    %2843 = vmatpush1.bf16.msra.mxu0 0
    %2844 = vmatprep.subr.bf16.mxu0 0
    %2845 = vmatpush1.bf16.msra.mxu0 0
    %2846 = vmatprep.subr.bf16.mxu0 0
    %2847 = vmatpush1.bf16.msra.mxu0 0
    %2848 = vmatprep.subr.bf16.mxu0 0
    %2849 = vmatpush1.bf16.msra.mxu0 0
    %2850 = vmatprep.subr.bf16.mxu0 0
    %2851 = vmatpush1.bf16.msra.mxu0 0
    %2852 = vmatprep.mubr.bf16.mxu0 0
    %2853 = vmatmul.mubr.bf16.gmra.mrb[0].mxu0 %v2819
    %v2854 = vpop.f32.mrb[0].mxu0
    %v2855 = vadd.f32 0.0, %v2854
    %v2856 = vpop.f32.mrb[0].mxu0
    %v2857 = vadd.f32 0.0, %v2856
    %v2858 = vpop.f32.mrb[0].mxu0
    %v2859 = vpop.f32.mrb[0].mxu0
    %2860 = vdwg.mxu0
    %2861 = vmatprep.subr.bf16.mxu0 %v1408
    %2862 = vmatpush1.bf16.msra.mxu0 %v1407
    %2863 = vmatprep.subr.bf16.mxu0 %v1412
    %2864 = vmatpush1.bf16.msra.mxu0 %v1411
    %2865 = vmatprep.subr.bf16.mxu0 %v1416
    %2866 = vmatpush1.bf16.msra.mxu0 %v1415
    %2867 = vmatprep.subr.bf16.mxu0 %v1420
    %2868 = vmatpush1.bf16.msra.mxu0 %v1419
    %2869 = vmatprep.subr.bf16.mxu0 %v1424
    %2870 = vmatpush1.bf16.msra.mxu0 %v1423
    %2871 = vmatprep.subr.bf16.mxu0 %v1428
    %2872 = vmatpush1.bf16.msra.mxu0 %v1427
    %2873 = vmatprep.subr.bf16.mxu0 %v1432
    %2874 = vmatpush1.bf16.msra.mxu0 %v1431
    %2875 = vmatprep.subr.bf16.mxu0 %v1436
    %2876 = vmatpush1.bf16.msra.mxu0 %v1435
    %2877 = vmatprep.subr.bf16.mxu0 0
    %2878 = vmatpush1.bf16.msra.mxu0 0
    %2879 = vmatprep.subr.bf16.mxu0 0
    %2880 = vmatpush1.bf16.msra.mxu0 0
    %2881 = vmatprep.subr.bf16.mxu0 0
    %2882 = vmatpush1.bf16.msra.mxu0 0
    %2883 = vmatprep.subr.bf16.mxu0 0
    %2884 = vmatpush1.bf16.msra.mxu0 0
    %2885 = vmatprep.subr.bf16.mxu0 0
    %2886 = vmatpush1.bf16.msra.mxu0 0
    %2887 = vmatprep.subr.bf16.mxu0 0
    %2888 = vmatpush1.bf16.msra.mxu0 0
    %2889 = vmatprep.subr.bf16.mxu0 0
    %2890 = vmatpush1.bf16.msra.mxu0 0
    %2891 = vmatprep.subr.bf16.mxu0 0
    %2892 = vmatpush1.bf16.msra.mxu0 0
    %2893 = vmatprep.mubr.bf16.mxu0 0
    %2894 = vmatmul.mubr.bf16.gmra.mrb[0].mxu0 %v2819
    %v2895 = vpop.f32.mrb[0].mxu0
    %v2896 = vadd.f32 0.0, %v2895
    %v2897 = vpop.f32.mrb[0].mxu0
    %v2898 = vadd.f32 0.0, %v2897
    %v2899 = vpop.f32.mrb[0].mxu0
    %v2900 = vpop.f32.mrb[0].mxu0
    %2901 = vdwg.mxu0
    %v2902 = vadd.f32 %v2815, %v2855
    %v2903 = vadd.f32 %v2816, %v2857
    %v2904 = vadd.f32 %v2817, %v2896
    %v2905 = vadd.f32 %v2818, %v2898
    %v2906 = vxor.u32 %v2902, 2147483648
    %v2907 = vxor.u32 %v2903, 2147483648
    %v2908 = vmul.f32 %v2906, 1.442695
    %v2909 = vpow.pop %v2908
    %v2910 = vmul.f32 %v2907, 1.442695
    %v2911 = vpow.pop %v2910
    %v2912 = vadd.f32 %v2909, 1.0
    %v2913 = vadd.f32 %v2911, 1.0
    %v2914 = vrcp.pop %v2912
    %v2915 = vmul.f32 1.0, %v2914
    %v2916 = vrcp.pop %v2913
    %v2917 = vmul.f32 1.0, %v2916
    %v2918 = vtanh.pop %v2904
    %v2919 = vxor.u32 %v2905, 2147483648
    %v2920 = vmul.f32 %v2919, 1.442695
    %v2921 = vpow.pop %v2920
    %v2922 = vadd.f32 %v2921, 1.0
    %v2923 = vrcp.pop %v2922
    %v2924 = vmul.f32 1.0, %v2923
    %v2925 = vmul.f32 %v2917, %v2695
    %v2926 = vmul.f32 %v2915, %v2918
    %v2927 = vadd.f32 %v2925, %v2926
    %v2928 = vtanh.pop %v2927
    %v2929 = vmul.f32 %v2924, %v2928
    %v2930 = vadd.f32 %v2698, %v2929
    %v2931 = vld [vmem:[#allocation3 + $0x40] sm:$0xff]
    %v2932 = vld [vmem:[#allocation3 + $0x48] sm:$0xff]
    %v2933 = vld [vmem:[#allocation3 + $0x50] sm:$0xff]
    %v2934 = vld [vmem:[#allocation3 + $0x58] sm:$0xff]
    %v2935 = vpack.c.bf16 %v2813, %v2813
    %2936 = vmatprep.subr.bf16.mxu0 %v1713
    %2937 = vmatpush1.bf16.msra.mxu0 %v1712
    %2938 = vmatprep.subr.bf16.mxu0 %v1717
    %2939 = vmatpush1.bf16.msra.mxu0 %v1716
    %2940 = vmatprep.subr.bf16.mxu0 %v1721
    %2941 = vmatpush1.bf16.msra.mxu0 %v1720
    %2942 = vmatprep.subr.bf16.mxu0 %v1725
    %2943 = vmatpush1.bf16.msra.mxu0 %v1724
    %2944 = vmatprep.subr.bf16.mxu0 %v1729
    %2945 = vmatpush1.bf16.msra.mxu0 %v1728
    %2946 = vmatprep.subr.bf16.mxu0 %v1733
    %2947 = vmatpush1.bf16.msra.mxu0 %v1732
    %2948 = vmatprep.subr.bf16.mxu0 %v1737
    %2949 = vmatpush1.bf16.msra.mxu0 %v1736
    %2950 = vmatprep.subr.bf16.mxu0 %v1741
    %2951 = vmatpush1.bf16.msra.mxu0 %v1740
    %2952 = vmatprep.subr.bf16.mxu0 0
    %2953 = vmatpush1.bf16.msra.mxu0 0
    %2954 = vmatprep.subr.bf16.mxu0 0
    %2955 = vmatpush1.bf16.msra.mxu0 0
    %2956 = vmatprep.subr.bf16.mxu0 0
    %2957 = vmatpush1.bf16.msra.mxu0 0
    %2958 = vmatprep.subr.bf16.mxu0 0
    %2959 = vmatpush1.bf16.msra.mxu0 0
    %2960 = vmatprep.subr.bf16.mxu0 0
    %2961 = vmatpush1.bf16.msra.mxu0 0
    %2962 = vmatprep.subr.bf16.mxu0 0
    %2963 = vmatpush1.bf16.msra.mxu0 0
    %2964 = vmatprep.subr.bf16.mxu0 0
    %2965 = vmatpush1.bf16.msra.mxu0 0
    %2966 = vmatprep.subr.bf16.mxu0 0
    %2967 = vmatpush1.bf16.msra.mxu0 0
    %2968 = vmatprep.mubr.bf16.mxu0 0
    %2969 = vmatmul.mubr.bf16.gmra.mrb[0].mxu0 %v2935
    %v2970 = vpop.f32.mrb[0].mxu0
    %v2971 = vadd.f32 0.0, %v2970
    %v2972 = vpop.f32.mrb[0].mxu0
    %v2973 = vadd.f32 0.0, %v2972
    %v2974 = vpop.f32.mrb[0].mxu0
    %v2975 = vpop.f32.mrb[0].mxu0
    %2976 = vdwg.mxu0
    %2977 = vmatprep.subr.bf16.mxu0 %v1715
    %2978 = vmatpush1.bf16.msra.mxu0 %v1714
    %2979 = vmatprep.subr.bf16.mxu0 %v1719
    %2980 = vmatpush1.bf16.msra.mxu0 %v1718
    %2981 = vmatprep.subr.bf16.mxu0 %v1723
    %2982 = vmatpush1.bf16.msra.mxu0 %v1722
    %2983 = vmatprep.subr.bf16.mxu0 %v1727
    %2984 = vmatpush1.bf16.msra.mxu0 %v1726
    %2985 = vmatprep.subr.bf16.mxu0 %v1731
    %2986 = vmatpush1.bf16.msra.mxu0 %v1730
    %2987 = vmatprep.subr.bf16.mxu0 %v1735
    %2988 = vmatpush1.bf16.msra.mxu0 %v1734
    %2989 = vmatprep.subr.bf16.mxu0 %v1739
    %2990 = vmatpush1.bf16.msra.mxu0 %v1738
    %2991 = vmatprep.subr.bf16.mxu0 %v1743
    %2992 = vmatpush1.bf16.msra.mxu0 %v1742
    %2993 = vmatprep.subr.bf16.mxu0 0
    %2994 = vmatpush1.bf16.msra.mxu0 0
    %2995 = vmatprep.subr.bf16.mxu0 0
    %2996 = vmatpush1.bf16.msra.mxu0 0
    %2997 = vmatprep.subr.bf16.mxu0 0
    %2998 = vmatpush1.bf16.msra.mxu0 0
    %2999 = vmatprep.subr.bf16.mxu0 0
    %3000 = vmatpush1.bf16.msra.mxu0 0
    %3001 = vmatprep.subr.bf16.mxu0 0
    %3002 = vmatpush1.bf16.msra.mxu0 0
    %3003 = vmatprep.subr.bf16.mxu0 0
    %3004 = vmatpush1.bf16.msra.mxu0 0
    %3005 = vmatprep.subr.bf16.mxu0 0
    %3006 = vmatpush1.bf16.msra.mxu0 0
    %3007 = vmatprep.subr.bf16.mxu0 0
    %3008 = vmatpush1.bf16.msra.mxu0 0
    %3009 = vmatprep.mubr.bf16.mxu0 0
    %3010 = vmatmul.mubr.bf16.gmra.mrb[0].mxu0 %v2935
    %v3011 = vpop.f32.mrb[0].mxu0
    %v3012 = vadd.f32 0.0, %v3011
    %v3013 = vpop.f32.mrb[0].mxu0
    %v3014 = vadd.f32 0.0, %v3013
    %v3015 = vpop.f32.mrb[0].mxu0
    %v3016 = vpop.f32.mrb[0].mxu0
    %3017 = vdwg.mxu0
    %v3018 = vadd.f32 %v2931, %v2971
    %v3019 = vadd.f32 %v2932, %v2973
    %v3020 = vadd.f32 %v2933, %v3012
    %v3021 = vadd.f32 %v2934, %v3014
    %v3022 = vxor.u32 %v3018, 2147483648
    %v3023 = vxor.u32 %v3019, 2147483648
    %v3024 = vmul.f32 %v3022, 1.442695
    %v3025 = vpow.pop %v3024
    %v3026 = vmul.f32 %v3023, 1.442695
    %v3027 = vpow.pop %v3026
    %v3028 = vadd.f32 %v3025, 1.0
    %v3029 = vadd.f32 %v3027, 1.0
    %v3030 = vrcp.pop %v3028
    %v3031 = vmul.f32 1.0, %v3030
    %v3032 = vrcp.pop %v3029
    %v3033 = vmul.f32 1.0, %v3032
    %v3034 = vtanh.pop %v3020
    %v3035 = vxor.u32 %v3021, 2147483648
    %v3036 = vmul.f32 %v3035, 1.442695
    %v3037 = vpow.pop %v3036
    %v3038 = vadd.f32 %v3037, 1.0
    %v3039 = vrcp.pop %v3038
    %v3040 = vmul.f32 1.0, %v3039
    %v3041 = vmul.f32 %v3033, %v2811
    %v3042 = vmul.f32 %v3031, %v3034
    %v3043 = vadd.f32 %v3041, %v3042
    %v3044 = vtanh.pop %v3043
    %v3045 = vmul.f32 %v3040, %v3044
    %v3046 = vadd.f32 %v2814, %v3045
    %v3047 = vld [vmem:[#allocation2 + $0xc0] sm:$0xff]
    %v3048 = vld [vmem:[#allocation2 + $0xc8] sm:$0xff]
    %v3049 = vld [vmem:[#allocation2 + $0xd0] sm:$0xff]
    %v3050 = vld [vmem:[#allocation2 + $0xd8] sm:$0xff]
    %v3051 = vpack.c.bf16 %v2929, %v2929
    %3052 = vmatprep.subr.bf16.mxu0 %v1406
    %3053 = vmatpush1.bf16.msra.mxu0 %v1405
    %3054 = vmatprep.subr.bf16.mxu0 %v1410
    %3055 = vmatpush1.bf16.msra.mxu0 %v1409
    %3056 = vmatprep.subr.bf16.mxu0 %v1414
    %3057 = vmatpush1.bf16.msra.mxu0 %v1413
    %3058 = vmatprep.subr.bf16.mxu0 %v1418
    %3059 = vmatpush1.bf16.msra.mxu0 %v1417
    %3060 = vmatprep.subr.bf16.mxu0 %v1422
    %3061 = vmatpush1.bf16.msra.mxu0 %v1421
    %3062 = vmatprep.subr.bf16.mxu0 %v1426
    %3063 = vmatpush1.bf16.msra.mxu0 %v1425
    %3064 = vmatprep.subr.bf16.mxu0 %v1430
    %3065 = vmatpush1.bf16.msra.mxu0 %v1429
    %3066 = vmatprep.subr.bf16.mxu0 %v1434
    %3067 = vmatpush1.bf16.msra.mxu0 %v1433
    %3068 = vmatprep.subr.bf16.mxu0 0
    %3069 = vmatpush1.bf16.msra.mxu0 0
    %3070 = vmatprep.subr.bf16.mxu0 0
    %3071 = vmatpush1.bf16.msra.mxu0 0
    %3072 = vmatprep.subr.bf16.mxu0 0
    %3073 = vmatpush1.bf16.msra.mxu0 0
    %3074 = vmatprep.subr.bf16.mxu0 0
    %3075 = vmatpush1.bf16.msra.mxu0 0
    %3076 = vmatprep.subr.bf16.mxu0 0
    %3077 = vmatpush1.bf16.msra.mxu0 0
    %3078 = vmatprep.subr.bf16.mxu0 0
    %3079 = vmatpush1.bf16.msra.mxu0 0
    %3080 = vmatprep.subr.bf16.mxu0 0
    %3081 = vmatpush1.bf16.msra.mxu0 0
    %3082 = vmatprep.subr.bf16.mxu0 0
    %3083 = vmatpush1.bf16.msra.mxu0 0
    %3084 = vmatprep.mubr.bf16.mxu0 0
    %3085 = vmatmul.mubr.bf16.gmra.mrb[0].mxu0 %v3051
    %v3086 = vpop.f32.mrb[0].mxu0
    %v3087 = vadd.f32 0.0, %v3086
    %v3088 = vpop.f32.mrb[0].mxu0
    %v3089 = vadd.f32 0.0, %v3088
    %v3090 = vpop.f32.mrb[0].mxu0
    %v3091 = vpop.f32.mrb[0].mxu0
    %3092 = vdwg.mxu0
    %3093 = vmatprep.subr.bf16.mxu0 %v1408
    %3094 = vmatpush1.bf16.msra.mxu0 %v1407
    %3095 = vmatprep.subr.bf16.mxu0 %v1412
    %3096 = vmatpush1.bf16.msra.mxu0 %v1411
    %3097 = vmatprep.subr.bf16.mxu0 %v1416
    %3098 = vmatpush1.bf16.msra.mxu0 %v1415
    %3099 = vmatprep.subr.bf16.mxu0 %v1420
    %3100 = vmatpush1.bf16.msra.mxu0 %v1419
    %3101 = vmatprep.subr.bf16.mxu0 %v1424
    %3102 = vmatpush1.bf16.msra.mxu0 %v1423
    %3103 = vmatprep.subr.bf16.mxu0 %v1428
    %3104 = vmatpush1.bf16.msra.mxu0 %v1427
    %3105 = vmatprep.subr.bf16.mxu0 %v1432
    %3106 = vmatpush1.bf16.msra.mxu0 %v1431
    %3107 = vmatprep.subr.bf16.mxu0 %v1436
    %3108 = vmatpush1.bf16.msra.mxu0 %v1435
    %3109 = vmatprep.subr.bf16.mxu0 0
    %3110 = vmatpush1.bf16.msra.mxu0 0
    %3111 = vmatprep.subr.bf16.mxu0 0
    %3112 = vmatpush1.bf16.msra.mxu0 0
    %3113 = vmatprep.subr.bf16.mxu0 0
    %3114 = vmatpush1.bf16.msra.mxu0 0
    %3115 = vmatprep.subr.bf16.mxu0 0
    %3116 = vmatpush1.bf16.msra.mxu0 0
    %3117 = vmatprep.subr.bf16.mxu0 0
    %3118 = vmatpush1.bf16.msra.mxu0 0
    %3119 = vmatprep.subr.bf16.mxu0 0
    %3120 = vmatpush1.bf16.msra.mxu0 0
    %3121 = vmatprep.subr.bf16.mxu0 0
    %3122 = vmatpush1.bf16.msra.mxu0 0
    %3123 = vmatprep.subr.bf16.mxu0 0
    %3124 = vmatpush1.bf16.msra.mxu0 0
    %3125 = vmatprep.mubr.bf16.mxu0 0
    %3126 = vmatmul.mubr.bf16.gmra.mrb[0].mxu0 %v3051
    %v3127 = vpop.f32.mrb[0].mxu0
    %v3128 = vadd.f32 0.0, %v3127
    %v3129 = vpop.f32.mrb[0].mxu0
    %v3130 = vadd.f32 0.0, %v3129
    %v3131 = vpop.f32.mrb[0].mxu0
    %v3132 = vpop.f32.mrb[0].mxu0
    %3133 = vdwg.mxu0
    %v3134 = vadd.f32 %v3047, %v3087
    %v3135 = vadd.f32 %v3048, %v3089
    %v3136 = vadd.f32 %v3049, %v3128
    %v3137 = vadd.f32 %v3050, %v3130
    %v3138 = vxor.u32 %v3134, 2147483648
    %v3139 = vxor.u32 %v3135, 2147483648
    %v3140 = vmul.f32 %v3138, 1.442695
    %v3141 = vpow.pop %v3140
    %v3142 = vmul.f32 %v3139, 1.442695
    %v3143 = vpow.pop %v3142
    %v3144 = vadd.f32 %v3141, 1.0
    %v3145 = vadd.f32 %v3143, 1.0
    %v3146 = vrcp.pop %v3144
    %v3147 = vmul.f32 1.0, %v3146
    %v3148 = vrcp.pop %v3145
    %v3149 = vmul.f32 1.0, %v3148
    %v3150 = vtanh.pop %v3136
    %v3151 = vxor.u32 %v3137, 2147483648
    %v3152 = vmul.f32 %v3151, 1.442695
    %v3153 = vpow.pop %v3152
    %v3154 = vadd.f32 %v3153, 1.0
    %v3155 = vrcp.pop %v3154
    %v3156 = vmul.f32 1.0, %v3155
    %v3157 = vmul.f32 %v3149, %v2927
    %v3158 = vmul.f32 %v3147, %v3150
    %v3159 = vadd.f32 %v3157, %v3158
    %v3160 = vtanh.pop %v3159
    %v3161 = vmul.f32 %v3156, %v3160
    %v3162 = vadd.f32 %v2930, %v3161
    %v3163 = vld [vmem:[#allocation3 + $0x20] sm:$0xff]
    %v3164 = vld [vmem:[#allocation3 + $0x28] sm:$0xff]
    %v3165 = vld [vmem:[#allocation3 + $0x30] sm:$0xff]
    %v3166 = vld [vmem:[#allocation3 + $0x38] sm:$0xff]
    %v3167 = vpack.c.bf16 %v3045, %v3045
    %3168 = vmatprep.subr.bf16.mxu0 %v1713
    %3169 = vmatpush1.bf16.msra.mxu0 %v1712
    %3170 = vmatprep.subr.bf16.mxu0 %v1717
    %3171 = vmatpush1.bf16.msra.mxu0 %v1716
    %3172 = vmatprep.subr.bf16.mxu0 %v1721
    %3173 = vmatpush1.bf16.msra.mxu0 %v1720
    %3174 = vmatprep.subr.bf16.mxu0 %v1725
    %3175 = vmatpush1.bf16.msra.mxu0 %v1724
    %3176 = vmatprep.subr.bf16.mxu0 %v1729
    %3177 = vmatpush1.bf16.msra.mxu0 %v1728
    %3178 = vmatprep.subr.bf16.mxu0 %v1733
    %3179 = vmatpush1.bf16.msra.mxu0 %v1732
    %3180 = vmatprep.subr.bf16.mxu0 %v1737
    %3181 = vmatpush1.bf16.msra.mxu0 %v1736
    %3182 = vmatprep.subr.bf16.mxu0 %v1741
    %3183 = vmatpush1.bf16.msra.mxu0 %v1740
    %3184 = vmatprep.subr.bf16.mxu0 0
    %3185 = vmatpush1.bf16.msra.mxu0 0
    %3186 = vmatprep.subr.bf16.mxu0 0
    %3187 = vmatpush1.bf16.msra.mxu0 0
    %3188 = vmatprep.subr.bf16.mxu0 0
    %3189 = vmatpush1.bf16.msra.mxu0 0
    %3190 = vmatprep.subr.bf16.mxu0 0
    %3191 = vmatpush1.bf16.msra.mxu0 0
    %3192 = vmatprep.subr.bf16.mxu0 0
    %3193 = vmatpush1.bf16.msra.mxu0 0
    %3194 = vmatprep.subr.bf16.mxu0 0
    %3195 = vmatpush1.bf16.msra.mxu0 0
    %3196 = vmatprep.subr.bf16.mxu0 0
    %3197 = vmatpush1.bf16.msra.mxu0 0
    %3198 = vmatprep.subr.bf16.mxu0 0
    %3199 = vmatpush1.bf16.msra.mxu0 0
    %3200 = vmatprep.mubr.bf16.mxu0 0
    %3201 = vmatmul.mubr.bf16.gmra.mrb[0].mxu0 %v3167
    %v3202 = vpop.f32.mrb[0].mxu0
    %v3203 = vadd.f32 0.0, %v3202
    %v3204 = vpop.f32.mrb[0].mxu0
    %v3205 = vadd.f32 0.0, %v3204
    %v3206 = vpop.f32.mrb[0].mxu0
    %v3207 = vpop.f32.mrb[0].mxu0
    %3208 = vdwg.mxu0
    %3209 = vmatprep.subr.bf16.mxu0 %v1715
    %3210 = vmatpush1.bf16.msra.mxu0 %v1714
    %3211 = vmatprep.subr.bf16.mxu0 %v1719
    %3212 = vmatpush1.bf16.msra.mxu0 %v1718
    %3213 = vmatprep.subr.bf16.mxu0 %v1723
    %3214 = vmatpush1.bf16.msra.mxu0 %v1722
    %3215 = vmatprep.subr.bf16.mxu0 %v1727
    %3216 = vmatpush1.bf16.msra.mxu0 %v1726
    %3217 = vmatprep.subr.bf16.mxu0 %v1731
    %3218 = vmatpush1.bf16.msra.mxu0 %v1730
    %3219 = vmatprep.subr.bf16.mxu0 %v1735
    %3220 = vmatpush1.bf16.msra.mxu0 %v1734
    %3221 = vmatprep.subr.bf16.mxu0 %v1739
    %3222 = vmatpush1.bf16.msra.mxu0 %v1738
    %3223 = vmatprep.subr.bf16.mxu0 %v1743
    %3224 = vmatpush1.bf16.msra.mxu0 %v1742
    %3225 = vmatprep.subr.bf16.mxu0 0
    %3226 = vmatpush1.bf16.msra.mxu0 0
    %3227 = vmatprep.subr.bf16.mxu0 0
    %3228 = vmatpush1.bf16.msra.mxu0 0
    %3229 = vmatprep.subr.bf16.mxu0 0
    %3230 = vmatpush1.bf16.msra.mxu0 0
    %3231 = vmatprep.subr.bf16.mxu0 0
    %3232 = vmatpush1.bf16.msra.mxu0 0
    %3233 = vmatprep.subr.bf16.mxu0 0
    %3234 = vmatpush1.bf16.msra.mxu0 0
    %3235 = vmatprep.subr.bf16.mxu0 0
    %3236 = vmatpush1.bf16.msra.mxu0 0
    %3237 = vmatprep.subr.bf16.mxu0 0
    %3238 = vmatpush1.bf16.msra.mxu0 0
    %3239 = vmatprep.subr.bf16.mxu0 0
    %3240 = vmatpush1.bf16.msra.mxu0 0
    %3241 = vmatprep.mubr.bf16.mxu0 0
    %3242 = vmatmul.mubr.bf16.gmra.mrb[0].mxu0 %v3167
    %v3243 = vpop.f32.mrb[0].mxu0
    %v3244 = vadd.f32 0.0, %v3243
    %v3245 = vpop.f32.mrb[0].mxu0
    %v3246 = vadd.f32 0.0, %v3245
    %v3247 = vpop.f32.mrb[0].mxu0
    %v3248 = vpop.f32.mrb[0].mxu0
    %3249 = vdwg.mxu0
    %v3250 = vadd.f32 %v3163, %v3203
    %v3251 = vadd.f32 %v3164, %v3205
    %v3252 = vadd.f32 %v3165, %v3244
    %v3253 = vadd.f32 %v3166, %v3246
    %v3254 = vxor.u32 %v3250, 2147483648
    %v3255 = vxor.u32 %v3251, 2147483648
    %v3256 = vmul.f32 %v3254, 1.442695
    %v3257 = vpow.pop %v3256
    %v3258 = vmul.f32 %v3255, 1.442695
    %v3259 = vpow.pop %v3258
    %v3260 = vadd.f32 %v3257, 1.0
    %v3261 = vadd.f32 %v3259, 1.0
    %v3262 = vrcp.pop %v3260
    %v3263 = vmul.f32 1.0, %v3262
    %v3264 = vrcp.pop %v3261
    %v3265 = vmul.f32 1.0, %v3264
    %v3266 = vtanh.pop %v3252
    %v3267 = vxor.u32 %v3253, 2147483648
    %v3268 = vmul.f32 %v3267, 1.442695
    %v3269 = vpow.pop %v3268
    %v3270 = vadd.f32 %v3269, 1.0
    %v3271 = vrcp.pop %v3270
    %v3272 = vmul.f32 1.0, %v3271
    %v3273 = vmul.f32 %v3265, %v3043
    %v3274 = vmul.f32 %v3263, %v3266
    %v3275 = vadd.f32 %v3273, %v3274
    %v3276 = vtanh.pop %v3275
    %v3277 = vmul.f32 %v3272, %v3276
    %v3278 = vadd.f32 %v3046, %v3277
    %v3279 = vld [vmem:[#allocation2 + $0xe0] sm:$0xff]
    %v3280 = vld [vmem:[#allocation2 + $0xe8] sm:$0xff]
    %v3281 = vld [vmem:[#allocation2 + $0xf0] sm:$0xff]
    %v3282 = vld [vmem:[#allocation2 + $0xf8] sm:$0xff]
    %v3283 = vpack.c.bf16 %v3161, %v3161
    %3284 = vmatprep.subr.bf16.mxu0 %v1406
    %3285 = vmatpush1.bf16.msra.mxu0 %v1405
    %3286 = vmatprep.subr.bf16.mxu0 %v1410
    %3287 = vmatpush1.bf16.msra.mxu0 %v1409
    %3288 = vmatprep.subr.bf16.mxu0 %v1414
    %3289 = vmatpush1.bf16.msra.mxu0 %v1413
    %3290 = vmatprep.subr.bf16.mxu0 %v1418
    %3291 = vmatpush1.bf16.msra.mxu0 %v1417
    %3292 = vmatprep.subr.bf16.mxu0 %v1422
    %3293 = vmatpush1.bf16.msra.mxu0 %v1421
    %3294 = vmatprep.subr.bf16.mxu0 %v1426
    %3295 = vmatpush1.bf16.msra.mxu0 %v1425
    %3296 = vmatprep.subr.bf16.mxu0 %v1430
    %3297 = vmatpush1.bf16.msra.mxu0 %v1429
    %3298 = vmatprep.subr.bf16.mxu0 %v1434
    %3299 = vmatpush1.bf16.msra.mxu0 %v1433
    %3300 = vmatprep.subr.bf16.mxu0 0
    %3301 = vmatpush1.bf16.msra.mxu0 0
    %3302 = vmatprep.subr.bf16.mxu0 0
    %3303 = vmatpush1.bf16.msra.mxu0 0
    %3304 = vmatprep.subr.bf16.mxu0 0
    %3305 = vmatpush1.bf16.msra.mxu0 0
    %3306 = vmatprep.subr.bf16.mxu0 0
    %3307 = vmatpush1.bf16.msra.mxu0 0
    %3308 = vmatprep.subr.bf16.mxu0 0
    %3309 = vmatpush1.bf16.msra.mxu0 0
    %3310 = vmatprep.subr.bf16.mxu0 0
    %3311 = vmatpush1.bf16.msra.mxu0 0
    %3312 = vmatprep.subr.bf16.mxu0 0
    %3313 = vmatpush1.bf16.msra.mxu0 0
    %3314 = vmatprep.subr.bf16.mxu0 0
    %3315 = vmatpush1.bf16.msra.mxu0 0
    %3316 = vmatprep.mubr.bf16.mxu0 0
    %3317 = vmatmul.mubr.bf16.gmra.mrb[0].mxu0 %v3283
    %v3318 = vpop.f32.mrb[0].mxu0
    %v3319 = vadd.f32 0.0, %v3318
    %v3320 = vpop.f32.mrb[0].mxu0
    %v3321 = vadd.f32 0.0, %v3320
    %v3322 = vpop.f32.mrb[0].mxu0
    %v3323 = vpop.f32.mrb[0].mxu0
    %3324 = vdwg.mxu0
    %3325 = vmatprep.subr.bf16.mxu0 %v1408
    %3326 = vmatpush1.bf16.msra.mxu0 %v1407
    %3327 = vmatprep.subr.bf16.mxu0 %v1412
    %3328 = vmatpush1.bf16.msra.mxu0 %v1411
    %3329 = vmatprep.subr.bf16.mxu0 %v1416
    %3330 = vmatpush1.bf16.msra.mxu0 %v1415
    %3331 = vmatprep.subr.bf16.mxu0 %v1420
    %3332 = vmatpush1.bf16.msra.mxu0 %v1419
    %3333 = vmatprep.subr.bf16.mxu0 %v1424
    %3334 = vmatpush1.bf16.msra.mxu0 %v1423
    %3335 = vmatprep.subr.bf16.mxu0 %v1428
    %3336 = vmatpush1.bf16.msra.mxu0 %v1427
    %3337 = vmatprep.subr.bf16.mxu0 %v1432
    %3338 = vmatpush1.bf16.msra.mxu0 %v1431
    %3339 = vmatprep.subr.bf16.mxu0 %v1436
    %3340 = vmatpush1.bf16.msra.mxu0 %v1435
    %3341 = vmatprep.subr.bf16.mxu0 0
    %3342 = vmatpush1.bf16.msra.mxu0 0
    %3343 = vmatprep.subr.bf16.mxu0 0
    %3344 = vmatpush1.bf16.msra.mxu0 0
    %3345 = vmatprep.subr.bf16.mxu0 0
    %3346 = vmatpush1.bf16.msra.mxu0 0
    %3347 = vmatprep.subr.bf16.mxu0 0
    %3348 = vmatpush1.bf16.msra.mxu0 0
    %3349 = vmatprep.subr.bf16.mxu0 0
    %3350 = vmatpush1.bf16.msra.mxu0 0
    %3351 = vmatprep.subr.bf16.mxu0 0
    %3352 = vmatpush1.bf16.msra.mxu0 0
    %3353 = vmatprep.subr.bf16.mxu0 0
    %3354 = vmatpush1.bf16.msra.mxu0 0
    %3355 = vmatprep.subr.bf16.mxu0 0
    %3356 = vmatpush1.bf16.msra.mxu0 0
    %3357 = vmatprep.mubr.bf16.mxu0 0
    %3358 = vmatmul.mubr.bf16.gmra.mrb[0].mxu0 %v3283
    %v3359 = vpop.f32.mrb[0].mxu0
    %v3360 = vadd.f32 0.0, %v3359
    %v3361 = vpop.f32.mrb[0].mxu0
    %v3362 = vadd.f32 0.0, %v3361
    %v3363 = vpop.f32.mrb[0].mxu0
    %v3364 = vpop.f32.mrb[0].mxu0
    %3365 = vdwg.mxu0
    %v3366 = vadd.f32 %v3279, %v3319
    %v3367 = vadd.f32 %v3280, %v3321
    %v3368 = vadd.f32 %v3281, %v3360
    %v3369 = vadd.f32 %v3282, %v3362
    %v3370 = vxor.u32 %v3366, 2147483648
    %v3371 = vxor.u32 %v3367, 2147483648
    %v3372 = vmul.f32 %v3370, 1.442695
    %v3373 = vpow.pop %v3372
    %v3374 = vmul.f32 %v3371, 1.442695
    %v3375 = vpow.pop %v3374
    %v3376 = vadd.f32 %v3373, 1.0
    %v3377 = vadd.f32 %v3375, 1.0
    %v3378 = vrcp.pop %v3376
    %v3379 = vmul.f32 1.0, %v3378
    %v3380 = vrcp.pop %v3377
    %v3381 = vmul.f32 1.0, %v3380
    %v3382 = vtanh.pop %v3368
    %v3383 = vxor.u32 %v3369, 2147483648
    %v3384 = vmul.f32 %v3383, 1.442695
    %v3385 = vpow.pop %v3384
    %v3386 = vadd.f32 %v3385, 1.0
    %v3387 = vrcp.pop %v3386
    %v3388 = vmul.f32 1.0, %v3387
    %v3389 = vmul.f32 %v3381, %v3159
    %v3390 = vmul.f32 %v3379, %v3382
    %v3391 = vadd.f32 %v3389, %v3390
    %v3392 = vtanh.pop %v3391
    %v3393 = vmul.f32 %v3388, %v3392
    %v3394 = vadd.f32 %v3162, %v3393
    %v3395 = vld [vmem:[#allocation3] sm:$0xff]
    %v3396 = vld [vmem:[#allocation3 + $0x8] sm:$0xff]
    %v3397 = vld [vmem:[#allocation3 + $0x10] sm:$0xff]
    %v3398 = vld [vmem:[#allocation3 + $0x18] sm:$0xff]
    %v3399 = vpack.c.bf16 %v3277, %v3277
    %3400 = vmatprep.subr.bf16.mxu0 %v1713
    %3401 = vmatpush1.bf16.msra.mxu0 %v1712
    %3402 = vmatprep.subr.bf16.mxu0 %v1717
    %3403 = vmatpush1.bf16.msra.mxu0 %v1716
    %3404 = vmatprep.subr.bf16.mxu0 %v1721
    %3405 = vmatpush1.bf16.msra.mxu0 %v1720
    %3406 = vmatprep.subr.bf16.mxu0 %v1725
    %3407 = vmatpush1.bf16.msra.mxu0 %v1724
    %3408 = vmatprep.subr.bf16.mxu0 %v1729
    %3409 = vmatpush1.bf16.msra.mxu0 %v1728
    %3410 = vmatprep.subr.bf16.mxu0 %v1733
    %3411 = vmatpush1.bf16.msra.mxu0 %v1732
    %3412 = vmatprep.subr.bf16.mxu0 %v1737
    %3413 = vmatpush1.bf16.msra.mxu0 %v1736
    %3414 = vmatprep.subr.bf16.mxu0 %v1741
    %3415 = vmatpush1.bf16.msra.mxu0 %v1740
    %3416 = vmatprep.subr.bf16.mxu0 0
    %3417 = vmatpush1.bf16.msra.mxu0 0
    %3418 = vmatprep.subr.bf16.mxu0 0
    %3419 = vmatpush1.bf16.msra.mxu0 0
    %3420 = vmatprep.subr.bf16.mxu0 0
    %3421 = vmatpush1.bf16.msra.mxu0 0
    %3422 = vmatprep.subr.bf16.mxu0 0
    %3423 = vmatpush1.bf16.msra.mxu0 0
    %3424 = vmatprep.subr.bf16.mxu0 0
    %3425 = vmatpush1.bf16.msra.mxu0 0
    %3426 = vmatprep.subr.bf16.mxu0 0
    %3427 = vmatpush1.bf16.msra.mxu0 0
    %3428 = vmatprep.subr.bf16.mxu0 0
    %3429 = vmatpush1.bf16.msra.mxu0 0
    %3430 = vmatprep.subr.bf16.mxu0 0
    %3431 = vmatpush1.bf16.msra.mxu0 0
    %3432 = vmatprep.mubr.bf16.mxu0 0
    %3433 = vmatmul.mubr.bf16.gmra.mrb[0].mxu0 %v3399
    %v3434 = vpop.f32.mrb[0].mxu0
    %v3435 = vadd.f32 0.0, %v3434
    %v3436 = vpop.f32.mrb[0].mxu0
    %v3437 = vadd.f32 0.0, %v3436
    %v3438 = vpop.f32.mrb[0].mxu0
    %v3439 = vpop.f32.mrb[0].mxu0
    %3440 = vdwg.mxu0
    %3441 = vmatprep.subr.bf16.mxu0 %v1715
    %3442 = vmatpush1.bf16.msra.mxu0 %v1714
    %3443 = vmatprep.subr.bf16.mxu0 %v1719
    %3444 = vmatpush1.bf16.msra.mxu0 %v1718
    %3445 = vmatprep.subr.bf16.mxu0 %v1723
    %3446 = vmatpush1.bf16.msra.mxu0 %v1722
    %3447 = vmatprep.subr.bf16.mxu0 %v1727
    %3448 = vmatpush1.bf16.msra.mxu0 %v1726
    %3449 = vmatprep.subr.bf16.mxu0 %v1731
    %3450 = vmatpush1.bf16.msra.mxu0 %v1730
    %3451 = vmatprep.subr.bf16.mxu0 %v1735
    %3452 = vmatpush1.bf16.msra.mxu0 %v1734
    %3453 = vmatprep.subr.bf16.mxu0 %v1739
    %3454 = vmatpush1.bf16.msra.mxu0 %v1738
    %3455 = vmatprep.subr.bf16.mxu0 %v1743
    %3456 = vmatpush1.bf16.msra.mxu0 %v1742
    %3457 = vmatprep.subr.bf16.mxu0 0
    %3458 = vmatpush1.bf16.msra.mxu0 0
    %3459 = vmatprep.subr.bf16.mxu0 0
    %3460 = vmatpush1.bf16.msra.mxu0 0
    %3461 = vmatprep.subr.bf16.mxu0 0
    %3462 = vmatpush1.bf16.msra.mxu0 0
    %3463 = vmatprep.subr.bf16.mxu0 0
    %3464 = vmatpush1.bf16.msra.mxu0 0
    %3465 = vmatprep.subr.bf16.mxu0 0
    %3466 = vmatpush1.bf16.msra.mxu0 0
    %3467 = vmatprep.subr.bf16.mxu0 0
    %3468 = vmatpush1.bf16.msra.mxu0 0
    %3469 = vmatprep.subr.bf16.mxu0 0
    %3470 = vmatpush1.bf16.msra.mxu0 0
    %3471 = vmatprep.subr.bf16.mxu0 0
    %3472 = vmatpush1.bf16.msra.mxu0 0
    %3473 = vmatprep.mubr.bf16.mxu0 0
    %3474 = vmatmul.mubr.bf16.gmra.mrb[0].mxu0 %v3399
    %v3475 = vpop.f32.mrb[0].mxu0
    %v3476 = vadd.f32 0.0, %v3475
    %v3477 = vpop.f32.mrb[0].mxu0
    %v3478 = vadd.f32 0.0, %v3477
    %v3479 = vpop.f32.mrb[0].mxu0
    %v3480 = vpop.f32.mrb[0].mxu0
    %3481 = vdwg.mxu0
    %v3482 = vadd.f32 %v3395, %v3435
    %v3483 = vadd.f32 %v3396, %v3437
    %v3484 = vadd.f32 %v3397, %v3476
    %v3485 = vadd.f32 %v3398, %v3478
    %v3486 = vxor.u32 %v3482, 2147483648
    %v3487 = vxor.u32 %v3483, 2147483648
    %v3488 = vmul.f32 %v3486, 1.442695
    %v3489 = vpow.pop %v3488
    %v3490 = vmul.f32 %v3487, 1.442695
    %v3491 = vpow.pop %v3490
    %v3492 = vadd.f32 %v3489, 1.0
    %v3493 = vadd.f32 %v3491, 1.0
    %v3494 = vrcp.pop %v3492
    %v3495 = vmul.f32 1.0, %v3494
    %v3496 = vrcp.pop %v3493
    %v3497 = vmul.f32 1.0, %v3496
    %v3498 = vtanh.pop %v3484
    %v3499 = vxor.u32 %v3485, 2147483648
    %v3500 = vmul.f32 %v3499, 1.442695
    %v3501 = vpow.pop %v3500
    %v3502 = vadd.f32 %v3501, 1.0
    %v3503 = vrcp.pop %v3502
    %v3504 = vmul.f32 1.0, %v3503
    %v3505 = vmul.f32 %v3497, %v3275
    %v3506 = vmul.f32 %v3495, %v3498
    %v3507 = vadd.f32 %v3505, %v3506
    %v3508 = vtanh.pop %v3507
    %v3509 = vmul.f32 %v3504, %v3508
    %v3510 = vadd.f32 %v3278, %v3509
    %v3511 = vmul.f32 %v3394, 0.125
    %v3512 = vmul.f32 %v3510, 0.125
    %v3513 = vld [vmem:[#allocation7] sm:$0xff]
    %v3514 = vld [vmem:[#allocation7 + $0x8] sm:$0xff]
    %v3515 = vld [vmem:[#allocation7 + $0x10] sm:$0xff]
    %v3516 = vld [vmem:[#allocation7 + $0x18] sm:$0xff]
    %v3517 = vld [vmem:[#allocation7 + $0x20] sm:$0xff]
    %v3518 = vld [vmem:[#allocation7 + $0x28] sm:$0xff]
    %v3519 = vld [vmem:[#allocation7 + $0x30] sm:$0xff]
    %v3520 = vld [vmem:[#allocation7 + $0x38] sm:$0xff]
    %v3521 = vld [vmem:[#allocation7 + $0x40] sm:$0xff]
    %v3522 = vld [vmem:[#allocation7 + $0x48] sm:$0xff]
    %v3523 = vld [vmem:[#allocation7 + $0x50] sm:$0xff]
    %v3524 = vld [vmem:[#allocation7 + $0x58] sm:$0xff]
    %v3525 = vld [vmem:[#allocation7 + $0x60] sm:$0xff]
    %v3526 = vld [vmem:[#allocation7 + $0x68] sm:$0xff]
    %v3527 = vld [vmem:[#allocation7 + $0x70] sm:$0xff]
    %v3528 = vld [vmem:[#allocation7 + $0x78] sm:$0xff]
    %v3529 = vld [vmem:[#allocation7 + $0x80] sm:$0xff]
    %v3530 = vld [vmem:[#allocation7 + $0x88] sm:$0xff]
    %v3531 = vld [vmem:[#allocation7 + $0x90] sm:$0xff]
    %v3532 = vld [vmem:[#allocation7 + $0x98] sm:$0xff]
    %v3533 = vld [vmem:[#allocation7 + $0xa0] sm:$0xff]
    %v3534 = vld [vmem:[#allocation7 + $0xa8] sm:$0xff]
    %v3535 = vld [vmem:[#allocation7 + $0xb0] sm:$0xff]
    %v3536 = vld [vmem:[#allocation7 + $0xb8] sm:$0xff]
    %v3537 = vld [vmem:[#allocation7 + $0xc0] sm:$0xff]
    %v3538 = vld [vmem:[#allocation7 + $0xc8] sm:$0xff]
    %v3539 = vld [vmem:[#allocation7 + $0xd0] sm:$0xff]
    %v3540 = vld [vmem:[#allocation7 + $0xd8] sm:$0xff]
    %v3541 = vld [vmem:[#allocation7 + $0xe0] sm:$0xff]
    %v3542 = vld [vmem:[#allocation7 + $0xe8] sm:$0xff]
    %v3543 = vld [vmem:[#allocation7 + $0xf0] sm:$0xff]
    %v3544 = vld [vmem:[#allocation7 + $0xf8] sm:$0xff]
    %v3545 = vld [vmem:[%s8] sm:$0x1]
    %v3547 = vlaneseq
    %v3548 = vshrl.u32 %v3547, 7
    %v3549 = vsub.s32 0, %v3548
    %v3550 = vrot.slane %v3545, %v3549
    %3552 = vmatprep.subr.mxu0 0.0
    %3553 = vmatpush1.msra.mxu0 %v3513
    %3554 = vmatprep.subr.mxu0 0.0
    %3555 = vmatpush1.msra.mxu0 %v3514
    %3556 = vmatprep.subr.mxu0 0.0
    %3557 = vmatpush1.msra.mxu0 %v3515
    %3558 = vmatprep.subr.mxu0 0.0
    %3559 = vmatpush1.msra.mxu0 %v3516
    %3560 = vmatprep.subr.mxu0 0.0
    %3561 = vmatpush1.msra.mxu0 %v3517
    %3562 = vmatprep.subr.mxu0 0.0
    %3563 = vmatpush1.msra.mxu0 %v3518
    %3564 = vmatprep.subr.mxu0 0.0
    %3565 = vmatpush1.msra.mxu0 %v3519
    %3566 = vmatprep.subr.mxu0 0.0
    %3567 = vmatpush1.msra.mxu0 %v3520
    %3568 = vmatprep.subr.mxu0 0.0
    %3569 = vmatpush1.msra.mxu0 %v3521
    %3570 = vmatprep.subr.mxu0 0.0
    %3571 = vmatpush1.msra.mxu0 %v3522
    %3572 = vmatprep.subr.mxu0 0.0
    %3573 = vmatpush1.msra.mxu0 %v3523
    %3574 = vmatprep.subr.mxu0 0.0
    %3575 = vmatpush1.msra.mxu0 %v3524
    %3576 = vmatprep.subr.mxu0 0.0
    %3577 = vmatpush1.msra.mxu0 %v3525
    %3578 = vmatprep.subr.mxu0 0.0
    %3579 = vmatpush1.msra.mxu0 %v3526
    %3580 = vmatprep.subr.mxu0 0.0
    %3581 = vmatpush1.msra.mxu0 %v3527
    %3582 = vmatprep.subr.mxu0 0.0
    %3583 = vmatpush1.msra.mxu0 %v3528
    %3584 = vmatprep.subr.mxu0 0.0
    %3585 = vmatpush1.msra.mxu0 %v3529
    %3586 = vmatprep.subr.mxu0 0.0
    %3587 = vmatpush1.msra.mxu0 %v3530
    %3588 = vmatprep.subr.mxu0 0.0
    %3589 = vmatpush1.msra.mxu0 %v3531
    %3590 = vmatprep.subr.mxu0 0.0
    %3591 = vmatpush1.msra.mxu0 %v3532
    %3592 = vmatprep.subr.mxu0 0.0
    %3593 = vmatpush1.msra.mxu0 %v3533
    %3594 = vmatprep.subr.mxu0 0.0
    %3595 = vmatpush1.msra.mxu0 %v3534
    %3596 = vmatprep.subr.mxu0 0.0
    %3597 = vmatpush1.msra.mxu0 %v3535
    %3598 = vmatprep.subr.mxu0 0.0
    %3599 = vmatpush1.msra.mxu0 %v3536
    %3600 = vmatprep.subr.mxu0 0.0
    %3601 = vmatpush1.msra.mxu0 %v3537
    %3602 = vmatprep.subr.mxu0 0.0
    %3603 = vmatpush1.msra.mxu0 %v3538
    %3604 = vmatprep.subr.mxu0 0.0
    %3605 = vmatpush1.msra.mxu0 %v3539
    %3606 = vmatprep.subr.mxu0 0.0
    %3607 = vmatpush1.msra.mxu0 %v3540
    %3608 = vmatprep.subr.mxu0 0.0
    %3609 = vmatpush1.msra.mxu0 %v3541
    %3610 = vmatprep.subr.mxu0 0.0
    %3611 = vmatpush1.msra.mxu0 %v3542
    %3612 = vmatprep.subr.mxu0 0.0
    %3613 = vmatpush1.msra.mxu0 %v3543
    %3614 = vmatprep.subr.mxu0 0.0
    %3615 = vmatpush1.msra.mxu0 %v3544
    %3616 = vmatprep.mubr.f32.mxu0 %v3512
    %3617 = vmatmul.mubr.f32.gmra.mrb[0].mxu0 %v3511
    %v3618 = vpop.f32.mrb[0].mxu0
    %v3619 = vadd.f32 %v3550, %v3618
    %v3620 = vpop.f32.mrb[0].mxu0
    %3621 = vdwg.mxu0
    %vm3622 = vcmp.ge.f32.partialorder %v3619, 0.0
    %v3623 = vmul.f32 %v3619, 0.2
    %v3624 = vsel %vm3622, %v3619, %v3623
    %v3625 = vld [vmem:[#allocation9] sm:$0xff]
    %v3626 = vld [vmem:[#allocation9 + $0x8] sm:$0xff]
    %v3627 = vld [vmem:[#allocation9 + $0x10] sm:$0xff]
    %v3628 = vld [vmem:[#allocation9 + $0x18] sm:$0xff]
    %v3629 = vld [vmem:[#allocation9 + $0x20] sm:$0xff]
    %v3630 = vld [vmem:[#allocation9 + $0x28] sm:$0xff]
    %v3631 = vld [vmem:[#allocation9 + $0x30] sm:$0xff]
    %v3632 = vld [vmem:[#allocation9 + $0x38] sm:$0xff]
    %v3633 = vld [vmem:[#allocation9 + $0x40] sm:$0xff]
    %v3634 = vld [vmem:[#allocation9 + $0x48] sm:$0xff]
    %v3635 = vld [vmem:[#allocation9 + $0x50] sm:$0xff]
    %v3636 = vld [vmem:[#allocation9 + $0x58] sm:$0xff]
    %v3637 = vld [vmem:[#allocation9 + $0x60] sm:$0xff]
    %v3638 = vld [vmem:[#allocation9 + $0x68] sm:$0xff]
    %v3639 = vld [vmem:[#allocation9 + $0x70] sm:$0xff]
    %v3640 = vld [vmem:[#allocation9 + $0x78] sm:$0xff]
    %v3641 = vld [vmem:[%s10] sm:$0x1]
    %v3643 = vlaneseq
    %v3644 = vshrl.u32 %v3643, 7
    %v3645 = vsub.s32 0, %v3644
    %v3646 = vrot.slane %v3641, %v3645
    %3648 = vmatprep.subr.mxu0 0.0
    %3649 = vmatpush1.msra.mxu0 %v3625
    %3650 = vmatprep.subr.mxu0 0.0
    %3651 = vmatpush1.msra.mxu0 %v3626
    %3652 = vmatprep.subr.mxu0 0.0
    %3653 = vmatpush1.msra.mxu0 %v3627
    %3654 = vmatprep.subr.mxu0 0.0
    %3655 = vmatpush1.msra.mxu0 %v3628
    %3656 = vmatprep.subr.mxu0 0.0
    %3657 = vmatpush1.msra.mxu0 %v3629
    %3658 = vmatprep.subr.mxu0 0.0
    %3659 = vmatpush1.msra.mxu0 %v3630
    %3660 = vmatprep.subr.mxu0 0.0
    %3661 = vmatpush1.msra.mxu0 %v3631
    %3662 = vmatprep.subr.mxu0 0.0
    %3663 = vmatpush1.msra.mxu0 %v3632
    %3664 = vmatprep.subr.mxu0 0.0
    %3665 = vmatpush1.msra.mxu0 %v3633
    %3666 = vmatprep.subr.mxu0 0.0
    %3667 = vmatpush1.msra.mxu0 %v3634
    %3668 = vmatprep.subr.mxu0 0.0
    %3669 = vmatpush1.msra.mxu0 %v3635
    %3670 = vmatprep.subr.mxu0 0.0
    %3671 = vmatpush1.msra.mxu0 %v3636
    %3672 = vmatprep.subr.mxu0 0.0
    %3673 = vmatpush1.msra.mxu0 %v3637
    %3674 = vmatprep.subr.mxu0 0.0
    %3675 = vmatpush1.msra.mxu0 %v3638
    %3676 = vmatprep.subr.mxu0 0.0
    %3677 = vmatpush1.msra.mxu0 %v3639
    %3678 = vmatprep.subr.mxu0 0.0
    %3679 = vmatpush1.msra.mxu0 %v3640
    %3680 = vmatprep.subr.mxu0 0.0
    %3681 = vmatpush1.msra.mxu0 0.0
    %3682 = vmatprep.subr.mxu0 0.0
    %3683 = vmatpush1.msra.mxu0 0.0
    %3684 = vmatprep.subr.mxu0 0.0
    %3685 = vmatpush1.msra.mxu0 0.0
    %3686 = vmatprep.subr.mxu0 0.0
    %3687 = vmatpush1.msra.mxu0 0.0
    %3688 = vmatprep.subr.mxu0 0.0
    %3689 = vmatpush1.msra.mxu0 0.0
    %3690 = vmatprep.subr.mxu0 0.0
    %3691 = vmatpush1.msra.mxu0 0.0
    %3692 = vmatprep.subr.mxu0 0.0
    %3693 = vmatpush1.msra.mxu0 0.0
    %3694 = vmatprep.subr.mxu0 0.0
    %3695 = vmatpush1.msra.mxu0 0.0
    %3696 = vmatprep.subr.mxu0 0.0
    %3697 = vmatpush1.msra.mxu0 0.0
    %3698 = vmatprep.subr.mxu0 0.0
    %3699 = vmatpush1.msra.mxu0 0.0
    %3700 = vmatprep.subr.mxu0 0.0
    %3701 = vmatpush1.msra.mxu0 0.0
    %3702 = vmatprep.subr.mxu0 0.0
    %3703 = vmatpush1.msra.mxu0 0.0
    %3704 = vmatprep.subr.mxu0 0.0
    %3705 = vmatpush1.msra.mxu0 0.0
    %3706 = vmatprep.subr.mxu0 0.0
    %3707 = vmatpush1.msra.mxu0 0.0
    %3708 = vmatprep.subr.mxu0 0.0
    %3709 = vmatpush1.msra.mxu0 0.0
    %3710 = vmatprep.subr.mxu0 0.0
    %3711 = vmatpush1.msra.mxu0 0.0
    %3712 = vmatprep.mubr.f32.mxu0 0.0
    %3713 = vmatmul.mubr.f32.gmra.mrb[0].mxu0 %v3624
    %v3714 = vpop.f32.mrb[0].mxu0
    %v3715 = vadd.f32 %v3646, %v3714
    %v3716 = vpop.f32.mrb[0].mxu0
    %3717 = vdwg.mxu0
    %3718 = vst [vmem:[#allocation10] sm:$0xff] %v3715
    // Predicated region
    $region58: #{lstm_model_forward.3} parent=1 // pred_check
      _
    $region59: #{lstm_model_forward.3} parent=1 // pred_check_branch
      %3720 = sbr.rel (0) target = $region61
    $region60: #{lstm_model_forward.3} parent=1 // pred_region
      %s3722 = ssub.s32 128, 128
      %3723 = vsyncadd [#allocation6], %s3722
      %s3725 = sshll.u32 [#allocation10], 4
      %s3726 = int_to_ptr.vmem [resolvable:$true] %s3725
      %3728 = dma.vmem_to_hbm [thread:$0]  %s3726, 128, %s11, [#allocation6]
    $region61: #{lstm_model_forward.3} parent=1 // pred_fallthru
      _
    // Predicated region
    $region62: #{lstm_model_forward.3} parent=1 // pred_check
      _
    $region63: #{lstm_model_forward.3} parent=1 // pred_check_branch
      %3730 = sbr.rel (0) target = $region65
    $region64: #{lstm_model_forward.3} parent=1 // pred_region
      %3731 = dma.done [#allocation6], 128
    $region65: #{lstm_model_forward.3} parent=1 // pred_fallthru
      _
    %3732 = vsyncpa [#allocation5], 1
    %3733 = vsyncpa [#allocation8], 1
    %3734 = vsyncpa [#allocation6], 1

// kernel: lstm_model_forward.2
$region0: #{lstm_model_forward.2}
  #allocation0 [shape = 'u32[]', space=smem, size = 0x4, offset = 0x4, fixed_abs, tag = 'smem constant byte address 0x4 - core index']
  #allocation1 [shape = 'u32[144,128]{1,0:T(1,128)}', space=vmem, size = 0x12000, scoped, tag = 'internal scratch']
  #allocation2 [shape = 'f32[64,512]{1,0:T(8,128)}', space=vmem, size = 0x20000, scoped, tag = 'scratch operand']
  #allocation3 [shape = 'f32[64,512]{1,0:T(8,128)}', space=vmem, size = 0x20000, scoped, tag = 'scratch operand']
  %s0 = inlined_call_operand.vmem [shape: bf16[64,128], index: 0, kind: input, shape index: {}]
  %s1 = inlined_call_operand.vmem [shape: bf16[128,512], index: 1, kind: input, shape index: {}]
  %s2 = inlined_call_operand.hbm [shape: bf16[128,512], index: 2, kind: input, shape index: {}]
  %s3 = inlined_call_operand.vmem [shape: f32[1,512], index: 3, kind: input, shape index: {}]
  %s4 = inlined_call_operand.hbm [shape: bf16[128,512], index: 4, kind: input, shape index: {}]
  %s5 = inlined_call_operand.hbm [shape: bf16[128,512], index: 5, kind: input, shape index: {}]
  %s6 = inlined_call_operand.vmem [shape: f32[1,512], index: 6, kind: input, shape index: {}]
  %s7 = inlined_call_operand.vmem [shape: f32[64,256], index: 7, kind: output, shape index: {}]
  %s8 = sld [smem:[#allocation0]]
  $region50: #{lstm_model_forward.2} parent=0
    _
  %s10 = ssub.s32 1, %s8
  %s11 = scalar_select 0, %s10, %s8
  $region1: #{lstm_model_forward.2} parent=0
    #allocation4 [shape = 'u8[131072]{0}', space=vmem, size = 0x20000, scoped, tag = 'input window, operand 2, single buffered']
    #allocation5 [shape = 's32[1]{0}', space=sflag, size = 0x4, scoped, tag = 'scoped memory for lstm_model_forward.2']
    #allocation6 [shape = 'u8[131072]{0}', space=vmem, size = 0x20000, scoped, tag = 'input window, operand 4, single buffered']
    #allocation7 [shape = 's32[1]{0}', space=sflag, size = 0x4, scoped, tag = 'scoped memory for lstm_model_forward.2']
    #allocation8 [shape = 'u8[131072]{0}', space=vmem, size = 0x20000, scoped, tag = 'input window, operand 5, single buffered']
    %12 = vsyncpa [#allocation5], 0
    %13 = vsyncpa [#allocation7], 0
    // Predicated region
    $region2: #{lstm_model_forward.2} parent=1 // pred_check
      _
    $region3: #{lstm_model_forward.2} parent=1 // pred_check_branch
      %15 = sbr.rel (0) target = $region5
    $region4: #{lstm_model_forward.2} parent=1 // pred_region
      _
    $region5: #{lstm_model_forward.2} parent=1 // pred_fallthru
      _
    // Predicated region
    $region6: #{lstm_model_forward.2} parent=1 // pred_check
      _
    $region7: #{lstm_model_forward.2} parent=1 // pred_check_branch
      %17 = sbr.rel (0) target = $region9
    $region8: #{lstm_model_forward.2} parent=1 // pred_region
      _
    $region9: #{lstm_model_forward.2} parent=1 // pred_fallthru
      _
    // Predicated region
    $region10: #{lstm_model_forward.2} parent=1 // pred_check
      _
    $region11: #{lstm_model_forward.2} parent=1 // pred_check_branch
      %19 = sbr.rel (0) target = $region13
    $region12: #{lstm_model_forward.2} parent=1 // pred_region
      %s21 = ssub.s32 4096, 4096
      %22 = vsyncadd [#allocation5], %s21
      %s23 = sshll.u32 [#allocation4], 4
      %s24 = int_to_ptr.vmem [resolvable:$true] %s23
      %29 = dma.hbm_to_vmem [thread:$0]  %s2, 4096, %s24, [#allocation5], 256, 256, 16
    $region13: #{lstm_model_forward.2} parent=1 // pred_fallthru
      _
    // Predicated region
    $region14: #{lstm_model_forward.2} parent=1 // pred_check
      _
    $region15: #{lstm_model_forward.2} parent=1 // pred_check_branch
      %31 = sbr.rel (0) target = $region17
    $region16: #{lstm_model_forward.2} parent=1 // pred_region
      _
    $region17: #{lstm_model_forward.2} parent=1 // pred_fallthru
      _
    // Predicated region
    $region18: #{lstm_model_forward.2} parent=1 // pred_check
      _
    $region19: #{lstm_model_forward.2} parent=1 // pred_check_branch
      %33 = sbr.rel (0) target = $region21
    $region20: #{lstm_model_forward.2} parent=1 // pred_region
      %s35 = ssub.s32 4096, 4096
      %36 = vsyncadd [#allocation7], %s35
      %s37 = sshll.u32 [#allocation6], 4
      %s38 = int_to_ptr.vmem [resolvable:$true] %s37
      %43 = dma.hbm_to_vmem [thread:$0]  %s4, 4096, %s38, [#allocation7], 256, 256, 16
    $region21: #{lstm_model_forward.2} parent=1 // pred_fallthru
      _
    // Predicated region
    $region22: #{lstm_model_forward.2} parent=1 // pred_check
      _
    $region23: #{lstm_model_forward.2} parent=1 // pred_check_branch
      %45 = sbr.rel (0) target = $region25
    $region24: #{lstm_model_forward.2} parent=1 // pred_region
      %s47 = ssub.s32 4096, 4096
      %48 = vsyncadd [#allocation7], %s47
      %s49 = sshll.u32 [#allocation8], 4
      %s50 = int_to_ptr.vmem [resolvable:$true] %s49
      %55 = dma.hbm_to_vmem [thread:$0]  %s5, 4096, %s50, [#allocation7], 256, 256, 16
    $region25: #{lstm_model_forward.2} parent=1 // pred_fallthru
      _
    // Predicated region
    $region26: #{lstm_model_forward.2} parent=1 // pred_check
      _
    $region27: #{lstm_model_forward.2} parent=1 // pred_check_branch
      %57 = sbr.rel (0) target = $region29
    $region28: #{lstm_model_forward.2} parent=1 // pred_region
      _
    $region29: #{lstm_model_forward.2} parent=1 // pred_fallthru
      _
    // Predicated region
    $region30: #{lstm_model_forward.2} parent=1 // pred_check
      _
    $region31: #{lstm_model_forward.2} parent=1 // pred_check_branch
      %59 = sbr.rel (0) target = $region33
    $region32: #{lstm_model_forward.2} parent=1 // pred_region
      %60 = dma.done [#allocation5], 4096
    $region33: #{lstm_model_forward.2} parent=1 // pred_fallthru
      _
    // Predicated region
    $region34: #{lstm_model_forward.2} parent=1 // pred_check
      _
    $region35: #{lstm_model_forward.2} parent=1 // pred_check_branch
      %62 = sbr.rel (0) target = $region37
    $region36: #{lstm_model_forward.2} parent=1 // pred_region
      %63 = dma.done [#allocation7], 4096
    $region37: #{lstm_model_forward.2} parent=1 // pred_fallthru
      _
    // Predicated region
    $region38: #{lstm_model_forward.2} parent=1 // pred_check
      _
    $region39: #{lstm_model_forward.2} parent=1 // pred_check_branch
      %65 = sbr.rel (0) target = $region41
    $region40: #{lstm_model_forward.2} parent=1 // pred_region
      %66 = dma.done [#allocation7], 4096
    $region41: #{lstm_model_forward.2} parent=1 // pred_fallthru
      _
    %v68 = vld [vmem:[%s0] sm:$0xf]
    %v69 = vld [vmem:[%s0 + $0x4] sm:$0xf]
    %v70 = vld [vmem:[%s0 + $0x8] sm:$0xf]
    %v71 = vld [vmem:[%s0 + $0xc] sm:$0xf]
    %v72 = vld [vmem:[%s0 + $0x10] sm:$0xf]
    %v73 = vld [vmem:[%s0 + $0x14] sm:$0xf]
    %v74 = vld [vmem:[%s0 + $0x18] sm:$0xf]
    %v75 = vld [vmem:[%s0 + $0x1c] sm:$0xf]
    %v76 = vld [vmem:[%s1] sm:$0xff]
    %v77 = vld [vmem:[%s1 + $0x8] sm:$0xff]
    %v78 = vld [vmem:[%s1 + $0x10] sm:$0xff]
    %v79 = vld [vmem:[%s1 + $0x18] sm:$0xff]
    %v80 = vld [vmem:[%s1 + $0x20] sm:$0xff]
    %v81 = vld [vmem:[%s1 + $0x28] sm:$0xff]
    %v82 = vld [vmem:[%s1 + $0x30] sm:$0xff]
    %v83 = vld [vmem:[%s1 + $0x38] sm:$0xff]
    %v84 = vld [vmem:[%s1 + $0x40] sm:$0xff]
    %v85 = vld [vmem:[%s1 + $0x48] sm:$0xff]
    %v86 = vld [vmem:[%s1 + $0x50] sm:$0xff]
    %v87 = vld [vmem:[%s1 + $0x58] sm:$0xff]
    %v88 = vld [vmem:[%s1 + $0x60] sm:$0xff]
    %v89 = vld [vmem:[%s1 + $0x68] sm:$0xff]
    %v90 = vld [vmem:[%s1 + $0x70] sm:$0xff]
    %v91 = vld [vmem:[%s1 + $0x78] sm:$0xff]
    %v92 = vld [vmem:[%s1 + $0x80] sm:$0xff]
    %v93 = vld [vmem:[%s1 + $0x88] sm:$0xff]
    %v94 = vld [vmem:[%s1 + $0x90] sm:$0xff]
    %v95 = vld [vmem:[%s1 + $0x98] sm:$0xff]
    %v96 = vld [vmem:[%s1 + $0xa0] sm:$0xff]
    %v97 = vld [vmem:[%s1 + $0xa8] sm:$0xff]
    %v98 = vld [vmem:[%s1 + $0xb0] sm:$0xff]
    %v99 = vld [vmem:[%s1 + $0xb8] sm:$0xff]
    %v100 = vld [vmem:[%s1 + $0xc0] sm:$0xff]
    %v101 = vld [vmem:[%s1 + $0xc8] sm:$0xff]
    %v102 = vld [vmem:[%s1 + $0xd0] sm:$0xff]
    %v103 = vld [vmem:[%s1 + $0xd8] sm:$0xff]
    %v104 = vld [vmem:[%s1 + $0xe0] sm:$0xff]
    %v105 = vld [vmem:[%s1 + $0xe8] sm:$0xff]
    %v106 = vld [vmem:[%s1 + $0xf0] sm:$0xff]
    %v107 = vld [vmem:[%s1 + $0xf8] sm:$0xff]
    %v108 = vld [vmem:[%s3] sm:$0xf]
    %v110 = vlaneseq
    %v111 = vshrl.u32 %v110, 7
    %v112 = vsub.s32 0, %v111
    %v113 = vrot.slane %v108, %v112
    %v114 = vlaneseq
    %v115 = vshrl.u32 %v114, 7
    %v116 = vsub.s32 1, %v115
    %v117 = vrot.slane %v108, %v116
    %v118 = vlaneseq
    %v119 = vshrl.u32 %v118, 7
    %v120 = vsub.s32 2, %v119
    %v121 = vrot.slane %v108, %v120
    %v122 = vlaneseq
    %v123 = vshrl.u32 %v122, 7
    %v124 = vsub.s32 3, %v123
    %v125 = vrot.slane %v108, %v124
    %v138 = vunpack.c.l.b16 %v68
    %v139 = vunpack.c.l.b16 %v69
    %v140 = vunpack.c.l.b16 %v70
    %v141 = vunpack.c.l.b16 %v71
    %v142 = vunpack.c.l.b16 %v72
    %v143 = vunpack.c.l.b16 %v73
    %v144 = vunpack.c.l.b16 %v74
    %v145 = vunpack.c.l.b16 %v75
    %v146 = vpack.c.b16 %v139, %v138
    %v147 = vpack.c.b16 %v141, %v140
    %v148 = vpack.c.b16 %v143, %v142
    %v149 = vpack.c.b16 %v145, %v144
    %v186 = vunpack.c.l.b16 %v76
    %v187 = vunpack.c.h.b16 %v76
    %v188 = vunpack.c.l.b16 %v77
    %v189 = vunpack.c.h.b16 %v77
    %v190 = vunpack.c.l.b16 %v78
    %v191 = vunpack.c.h.b16 %v78
    %v192 = vunpack.c.l.b16 %v79
    %v193 = vunpack.c.h.b16 %v79
    %v194 = vunpack.c.l.b16 %v80
    %v195 = vunpack.c.h.b16 %v80
    %v196 = vunpack.c.l.b16 %v81
    %v197 = vunpack.c.h.b16 %v81
    %v198 = vunpack.c.l.b16 %v82
    %v199 = vunpack.c.h.b16 %v82
    %v200 = vunpack.c.l.b16 %v83
    %v201 = vunpack.c.h.b16 %v83
    %v202 = vunpack.c.l.b16 %v84
    %v203 = vunpack.c.h.b16 %v84
    %v204 = vunpack.c.l.b16 %v85
    %v205 = vunpack.c.h.b16 %v85
    %v206 = vunpack.c.l.b16 %v86
    %v207 = vunpack.c.h.b16 %v86
    %v208 = vunpack.c.l.b16 %v87
    %v209 = vunpack.c.h.b16 %v87
    %v210 = vunpack.c.l.b16 %v88
    %v211 = vunpack.c.h.b16 %v88
    %v212 = vunpack.c.l.b16 %v89
    %v213 = vunpack.c.h.b16 %v89
    %v214 = vunpack.c.l.b16 %v90
    %v215 = vunpack.c.h.b16 %v90
    %v216 = vunpack.c.l.b16 %v91
    %v217 = vunpack.c.h.b16 %v91
    %v218 = vunpack.c.l.b16 %v92
    %v219 = vunpack.c.h.b16 %v92
    %v220 = vunpack.c.l.b16 %v93
    %v221 = vunpack.c.h.b16 %v93
    %v222 = vunpack.c.l.b16 %v94
    %v223 = vunpack.c.h.b16 %v94
    %v224 = vunpack.c.l.b16 %v95
    %v225 = vunpack.c.h.b16 %v95
    %v226 = vunpack.c.l.b16 %v96
    %v227 = vunpack.c.h.b16 %v96
    %v228 = vunpack.c.l.b16 %v97
    %v229 = vunpack.c.h.b16 %v97
    %v230 = vunpack.c.l.b16 %v98
    %v231 = vunpack.c.h.b16 %v98
    %v232 = vunpack.c.l.b16 %v99
    %v233 = vunpack.c.h.b16 %v99
    %v234 = vunpack.c.l.b16 %v100
    %v235 = vunpack.c.h.b16 %v100
    %v236 = vunpack.c.l.b16 %v101
    %v237 = vunpack.c.h.b16 %v101
    %v238 = vunpack.c.l.b16 %v102
    %v239 = vunpack.c.h.b16 %v102
    %v240 = vunpack.c.l.b16 %v103
    %v241 = vunpack.c.h.b16 %v103
    %v242 = vunpack.c.l.b16 %v104
    %v243 = vunpack.c.h.b16 %v104
    %v244 = vunpack.c.l.b16 %v105
    %v245 = vunpack.c.h.b16 %v105
    %v246 = vunpack.c.l.b16 %v106
    %v247 = vunpack.c.h.b16 %v106
    %v248 = vunpack.c.l.b16 %v107
    %v249 = vunpack.c.h.b16 %v107
    %v250 = vpack.c.b16 %v190, %v186
    %v251 = vpack.c.b16 %v191, %v187
    %v252 = vpack.c.b16 %v192, %v188
    %v253 = vpack.c.b16 %v193, %v189
    %v254 = vpack.c.b16 %v198, %v194
    %v255 = vpack.c.b16 %v199, %v195
    %v256 = vpack.c.b16 %v200, %v196
    %v257 = vpack.c.b16 %v201, %v197
    %v258 = vpack.c.b16 %v206, %v202
    %v259 = vpack.c.b16 %v207, %v203
    %v260 = vpack.c.b16 %v208, %v204
    %v261 = vpack.c.b16 %v209, %v205
    %v262 = vpack.c.b16 %v214, %v210
    %v263 = vpack.c.b16 %v215, %v211
    %v264 = vpack.c.b16 %v216, %v212
    %v265 = vpack.c.b16 %v217, %v213
    %v266 = vpack.c.b16 %v222, %v218
    %v267 = vpack.c.b16 %v223, %v219
    %v268 = vpack.c.b16 %v224, %v220
    %v269 = vpack.c.b16 %v225, %v221
    %v270 = vpack.c.b16 %v230, %v226
    %v271 = vpack.c.b16 %v231, %v227
    %v272 = vpack.c.b16 %v232, %v228
    %v273 = vpack.c.b16 %v233, %v229
    %v274 = vpack.c.b16 %v238, %v234
    %v275 = vpack.c.b16 %v239, %v235
    %v276 = vpack.c.b16 %v240, %v236
    %v277 = vpack.c.b16 %v241, %v237
    %v278 = vpack.c.b16 %v246, %v242
    %v279 = vpack.c.b16 %v247, %v243
    %v280 = vpack.c.b16 %v248, %v244
    %v281 = vpack.c.b16 %v249, %v245
    %314 = vmatprep.subr.bf16.mxu0 %v251
    %315 = vmatpush1.bf16.msra.mxu0 %v250
    %316 = vmatprep.subr.bf16.mxu0 %v255
    %317 = vmatpush1.bf16.msra.mxu0 %v254
    %318 = vmatprep.subr.bf16.mxu0 %v259
    %319 = vmatpush1.bf16.msra.mxu0 %v258
    %320 = vmatprep.subr.bf16.mxu0 %v263
    %321 = vmatpush1.bf16.msra.mxu0 %v262
    %322 = vmatprep.subr.bf16.mxu0 %v267
    %323 = vmatpush1.bf16.msra.mxu0 %v266
    %324 = vmatprep.subr.bf16.mxu0 %v271
    %325 = vmatpush1.bf16.msra.mxu0 %v270
    %326 = vmatprep.subr.bf16.mxu0 %v275
    %327 = vmatpush1.bf16.msra.mxu0 %v274
    %328 = vmatprep.subr.bf16.mxu0 %v279
    %329 = vmatpush1.bf16.msra.mxu0 %v278
    %330 = vmatprep.subr.bf16.mxu0 0
    %331 = vmatpush1.bf16.msra.mxu0 0
    %332 = vmatprep.subr.bf16.mxu0 0
    %333 = vmatpush1.bf16.msra.mxu0 0
    %334 = vmatprep.subr.bf16.mxu0 0
    %335 = vmatpush1.bf16.msra.mxu0 0
    %336 = vmatprep.subr.bf16.mxu0 0
    %337 = vmatpush1.bf16.msra.mxu0 0
    %338 = vmatprep.subr.bf16.mxu0 0
    %339 = vmatpush1.bf16.msra.mxu0 0
    %340 = vmatprep.subr.bf16.mxu0 0
    %341 = vmatpush1.bf16.msra.mxu0 0
    %342 = vmatprep.subr.bf16.mxu0 0
    %343 = vmatpush1.bf16.msra.mxu0 0
    %344 = vmatprep.subr.bf16.mxu0 0
    %345 = vmatpush1.bf16.msra.mxu0 0
    %346 = vmatprep.mubr.bf16.mxu0 0
    %347 = vmatmul.mubr.bf16.gmra.mrb[0].mxu0 %v146
    %v348 = vpop.f32.mrb[0].mxu0
    %v349 = vadd.f32 %v113, %v348
    %v350 = vpop.f32.mrb[0].mxu0
    %v351 = vadd.f32 %v117, %v350
    %v352 = vpop.f32.mrb[0].mxu0
    %v353 = vadd.f32 %v113, %v352
    %v354 = vpop.f32.mrb[0].mxu0
    %v355 = vadd.f32 %v117, %v354
    %356 = vmatprep.mubr.bf16.mxu0 0
    %357 = vmatmul.mubr.bf16.gmra.mrb[0].mxu0 %v147
    %v358 = vpop.f32.mrb[0].mxu0
    %v359 = vadd.f32 %v113, %v358
    %v360 = vpop.f32.mrb[0].mxu0
    %v361 = vadd.f32 %v117, %v360
    %v362 = vpop.f32.mrb[0].mxu0
    %v363 = vadd.f32 %v113, %v362
    %v364 = vpop.f32.mrb[0].mxu0
    %v365 = vadd.f32 %v117, %v364
    %366 = vmatprep.mubr.bf16.mxu0 0
    %367 = vmatmul.mubr.bf16.gmra.mrb[0].mxu0 %v148
    %v368 = vpop.f32.mrb[0].mxu0
    %v369 = vadd.f32 %v113, %v368
    %v370 = vpop.f32.mrb[0].mxu0
    %v371 = vadd.f32 %v117, %v370
    %v372 = vpop.f32.mrb[0].mxu0
    %v373 = vadd.f32 %v113, %v372
    %v374 = vpop.f32.mrb[0].mxu0
    %v375 = vadd.f32 %v117, %v374
    %376 = vmatprep.mubr.bf16.mxu0 0
    %377 = vmatmul.mubr.bf16.gmra.mrb[0].mxu0 %v149
    %v378 = vpop.f32.mrb[0].mxu0
    %v379 = vadd.f32 %v113, %v378
    %v380 = vpop.f32.mrb[0].mxu0
    %v381 = vadd.f32 %v117, %v380
    %v382 = vpop.f32.mrb[0].mxu0
    %v383 = vadd.f32 %v113, %v382
    %v384 = vpop.f32.mrb[0].mxu0
    %v385 = vadd.f32 %v117, %v384
    %386 = vdwg.mxu0
    %387 = vmatprep.subr.bf16.mxu0 %v253
    %388 = vmatpush1.bf16.msra.mxu0 %v252
    %389 = vmatprep.subr.bf16.mxu0 %v257
    %390 = vmatpush1.bf16.msra.mxu0 %v256
    %391 = vmatprep.subr.bf16.mxu0 %v261
    %392 = vmatpush1.bf16.msra.mxu0 %v260
    %393 = vmatprep.subr.bf16.mxu0 %v265
    %394 = vmatpush1.bf16.msra.mxu0 %v264
    %395 = vmatprep.subr.bf16.mxu0 %v269
    %396 = vmatpush1.bf16.msra.mxu0 %v268
    %397 = vmatprep.subr.bf16.mxu0 %v273
    %398 = vmatpush1.bf16.msra.mxu0 %v272
    %399 = vmatprep.subr.bf16.mxu0 %v277
    %400 = vmatpush1.bf16.msra.mxu0 %v276
    %401 = vmatprep.subr.bf16.mxu0 %v281
    %402 = vmatpush1.bf16.msra.mxu0 %v280
    %403 = vmatprep.subr.bf16.mxu0 0
    %404 = vmatpush1.bf16.msra.mxu0 0
    %405 = vmatprep.subr.bf16.mxu0 0
    %406 = vmatpush1.bf16.msra.mxu0 0
    %407 = vmatprep.subr.bf16.mxu0 0
    %408 = vmatpush1.bf16.msra.mxu0 0
    %409 = vmatprep.subr.bf16.mxu0 0
    %410 = vmatpush1.bf16.msra.mxu0 0
    %411 = vmatprep.subr.bf16.mxu0 0
    %412 = vmatpush1.bf16.msra.mxu0 0
    %413 = vmatprep.subr.bf16.mxu0 0
    %414 = vmatpush1.bf16.msra.mxu0 0
    %415 = vmatprep.subr.bf16.mxu0 0
    %416 = vmatpush1.bf16.msra.mxu0 0
    %417 = vmatprep.subr.bf16.mxu0 0
    %418 = vmatpush1.bf16.msra.mxu0 0
    %419 = vmatprep.mubr.bf16.mxu0 0
    %420 = vmatmul.mubr.bf16.gmra.mrb[0].mxu0 %v146
    %v421 = vpop.f32.mrb[0].mxu0
    %v422 = vadd.f32 %v121, %v421
    %v423 = vpop.f32.mrb[0].mxu0
    %v424 = vadd.f32 %v125, %v423
    %v425 = vpop.f32.mrb[0].mxu0
    %v426 = vadd.f32 %v121, %v425
    %v427 = vpop.f32.mrb[0].mxu0
    %v428 = vadd.f32 %v125, %v427
    %429 = vmatprep.mubr.bf16.mxu0 0
    %430 = vmatmul.mubr.bf16.gmra.mrb[0].mxu0 %v147
    %v431 = vpop.f32.mrb[0].mxu0
    %v432 = vadd.f32 %v121, %v431
    %v433 = vpop.f32.mrb[0].mxu0
    %v434 = vadd.f32 %v125, %v433
    %v435 = vpop.f32.mrb[0].mxu0
    %v436 = vadd.f32 %v121, %v435
    %v437 = vpop.f32.mrb[0].mxu0
    %v438 = vadd.f32 %v125, %v437
    %439 = vmatprep.mubr.bf16.mxu0 0
    %440 = vmatmul.mubr.bf16.gmra.mrb[0].mxu0 %v148
    %v441 = vpop.f32.mrb[0].mxu0
    %v442 = vadd.f32 %v121, %v441
    %v443 = vpop.f32.mrb[0].mxu0
    %v444 = vadd.f32 %v125, %v443
    %v445 = vpop.f32.mrb[0].mxu0
    %v446 = vadd.f32 %v121, %v445
    %v447 = vpop.f32.mrb[0].mxu0
    %v448 = vadd.f32 %v125, %v447
    %449 = vmatprep.mubr.bf16.mxu0 0
    %450 = vmatmul.mubr.bf16.gmra.mrb[0].mxu0 %v149
    %v451 = vpop.f32.mrb[0].mxu0
    %v452 = vadd.f32 %v121, %v451
    %v453 = vpop.f32.mrb[0].mxu0
    %v454 = vadd.f32 %v125, %v453
    %v455 = vpop.f32.mrb[0].mxu0
    %v456 = vadd.f32 %v121, %v455
    %v457 = vpop.f32.mrb[0].mxu0
    %v458 = vadd.f32 %v125, %v457
    %459 = vdwg.mxu0
    %460 = vst [vmem:[#allocation2] sm:$0xff] %v349
    %461 = vst [vmem:[#allocation2 + $0x8] sm:$0xff] %v351
    %462 = vst [vmem:[#allocation2 + $0x10] sm:$0xff] %v422
    %463 = vst [vmem:[#allocation2 + $0x18] sm:$0xff] %v424
    %464 = vst [vmem:[#allocation2 + $0x20] sm:$0xff] %v353
    %465 = vst [vmem:[#allocation2 + $0x28] sm:$0xff] %v355
    %466 = vst [vmem:[#allocation2 + $0x30] sm:$0xff] %v426
    %467 = vst [vmem:[#allocation2 + $0x38] sm:$0xff] %v428
    %468 = vst [vmem:[#allocation2 + $0x40] sm:$0xff] %v359
    %469 = vst [vmem:[#allocation2 + $0x48] sm:$0xff] %v361
    %470 = vst [vmem:[#allocation2 + $0x50] sm:$0xff] %v432
    %471 = vst [vmem:[#allocation2 + $0x58] sm:$0xff] %v434
    %472 = vst [vmem:[#allocation2 + $0x60] sm:$0xff] %v363
    %473 = vst [vmem:[#allocation2 + $0x68] sm:$0xff] %v365
    %474 = vst [vmem:[#allocation2 + $0x70] sm:$0xff] %v436
    %475 = vst [vmem:[#allocation2 + $0x78] sm:$0xff] %v438
    %476 = vst [vmem:[#allocation2 + $0x80] sm:$0xff] %v369
    %477 = vst [vmem:[#allocation2 + $0x88] sm:$0xff] %v371
    %478 = vst [vmem:[#allocation2 + $0x90] sm:$0xff] %v442
    %479 = vst [vmem:[#allocation2 + $0x98] sm:$0xff] %v444
    %480 = vst [vmem:[#allocation2 + $0xa0] sm:$0xff] %v373
    %481 = vst [vmem:[#allocation2 + $0xa8] sm:$0xff] %v375
    %482 = vst [vmem:[#allocation2 + $0xb0] sm:$0xff] %v446
    %483 = vst [vmem:[#allocation2 + $0xb8] sm:$0xff] %v448
    %484 = vst [vmem:[#allocation2 + $0xc0] sm:$0xff] %v379
    %485 = vst [vmem:[#allocation2 + $0xc8] sm:$0xff] %v381
    %486 = vst [vmem:[#allocation2 + $0xd0] sm:$0xff] %v452
    %487 = vst [vmem:[#allocation2 + $0xd8] sm:$0xff] %v454
    %488 = vst [vmem:[#allocation2 + $0xe0] sm:$0xff] %v383
    %489 = vst [vmem:[#allocation2 + $0xe8] sm:$0xff] %v385
    %490 = vst [vmem:[#allocation2 + $0xf0] sm:$0xff] %v456
    %491 = vst [vmem:[#allocation2 + $0xf8] sm:$0xff] %v458
    %v492 = vld [vmem:[#allocation6] sm:$0xff]
    %v493 = vld [vmem:[#allocation6 + $0x8] sm:$0xff]
    %v494 = vld [vmem:[#allocation6 + $0x10] sm:$0xff]
    %v495 = vld [vmem:[#allocation6 + $0x18] sm:$0xff]
    %v496 = vld [vmem:[#allocation6 + $0x20] sm:$0xff]
    %v497 = vld [vmem:[#allocation6 + $0x28] sm:$0xff]
    %v498 = vld [vmem:[#allocation6 + $0x30] sm:$0xff]
    %v499 = vld [vmem:[#allocation6 + $0x38] sm:$0xff]
    %v500 = vld [vmem:[#allocation6 + $0x40] sm:$0xff]
    %v501 = vld [vmem:[#allocation6 + $0x48] sm:$0xff]
    %v502 = vld [vmem:[#allocation6 + $0x50] sm:$0xff]
    %v503 = vld [vmem:[#allocation6 + $0x58] sm:$0xff]
    %v504 = vld [vmem:[#allocation6 + $0x60] sm:$0xff]
    %v505 = vld [vmem:[#allocation6 + $0x68] sm:$0xff]
    %v506 = vld [vmem:[#allocation6 + $0x70] sm:$0xff]
    %v507 = vld [vmem:[#allocation6 + $0x78] sm:$0xff]
    %v508 = vld [vmem:[#allocation6 + $0x80] sm:$0xff]
    %v509 = vld [vmem:[#allocation6 + $0x88] sm:$0xff]
    %v510 = vld [vmem:[#allocation6 + $0x90] sm:$0xff]
    %v511 = vld [vmem:[#allocation6 + $0x98] sm:$0xff]
    %v512 = vld [vmem:[#allocation6 + $0xa0] sm:$0xff]
    %v513 = vld [vmem:[#allocation6 + $0xa8] sm:$0xff]
    %v514 = vld [vmem:[#allocation6 + $0xb0] sm:$0xff]
    %v515 = vld [vmem:[#allocation6 + $0xb8] sm:$0xff]
    %v516 = vld [vmem:[#allocation6 + $0xc0] sm:$0xff]
    %v517 = vld [vmem:[#allocation6 + $0xc8] sm:$0xff]
    %v518 = vld [vmem:[#allocation6 + $0xd0] sm:$0xff]
    %v519 = vld [vmem:[#allocation6 + $0xd8] sm:$0xff]
    %v520 = vld [vmem:[#allocation6 + $0xe0] sm:$0xff]
    %v521 = vld [vmem:[#allocation6 + $0xe8] sm:$0xff]
    %v522 = vld [vmem:[#allocation6 + $0xf0] sm:$0xff]
    %v523 = vld [vmem:[#allocation6 + $0xf8] sm:$0xff]
    %v524 = vld [vmem:[%s6] sm:$0xf]
    %v526 = vlaneseq
    %v527 = vshrl.u32 %v526, 7
    %v528 = vsub.s32 0, %v527
    %v529 = vrot.slane %v524, %v528
    %v530 = vlaneseq
    %v531 = vshrl.u32 %v530, 7
    %v532 = vsub.s32 1, %v531
    %v533 = vrot.slane %v524, %v532
    %v534 = vlaneseq
    %v535 = vshrl.u32 %v534, 7
    %v536 = vsub.s32 2, %v535
    %v537 = vrot.slane %v524, %v536
    %v538 = vlaneseq
    %v539 = vshrl.u32 %v538, 7
    %v540 = vsub.s32 3, %v539
    %v541 = vrot.slane %v524, %v540
    %v578 = vunpack.c.l.b16 %v492
    %v579 = vunpack.c.h.b16 %v492
    %v580 = vunpack.c.l.b16 %v493
    %v581 = vunpack.c.h.b16 %v493
    %v582 = vunpack.c.l.b16 %v494
    %v583 = vunpack.c.h.b16 %v494
    %v584 = vunpack.c.l.b16 %v495
    %v585 = vunpack.c.h.b16 %v495
    %v586 = vunpack.c.l.b16 %v496
    %v587 = vunpack.c.h.b16 %v496
    %v588 = vunpack.c.l.b16 %v497
    %v589 = vunpack.c.h.b16 %v497
    %v590 = vunpack.c.l.b16 %v498
    %v591 = vunpack.c.h.b16 %v498
    %v592 = vunpack.c.l.b16 %v499
    %v593 = vunpack.c.h.b16 %v499
    %v594 = vunpack.c.l.b16 %v500
    %v595 = vunpack.c.h.b16 %v500
    %v596 = vunpack.c.l.b16 %v501
    %v597 = vunpack.c.h.b16 %v501
    %v598 = vunpack.c.l.b16 %v502
    %v599 = vunpack.c.h.b16 %v502
    %v600 = vunpack.c.l.b16 %v503
    %v601 = vunpack.c.h.b16 %v503
    %v602 = vunpack.c.l.b16 %v504
    %v603 = vunpack.c.h.b16 %v504
    %v604 = vunpack.c.l.b16 %v505
    %v605 = vunpack.c.h.b16 %v505
    %v606 = vunpack.c.l.b16 %v506
    %v607 = vunpack.c.h.b16 %v506
    %v608 = vunpack.c.l.b16 %v507
    %v609 = vunpack.c.h.b16 %v507
    %v610 = vunpack.c.l.b16 %v508
    %v611 = vunpack.c.h.b16 %v508
    %v612 = vunpack.c.l.b16 %v509
    %v613 = vunpack.c.h.b16 %v509
    %v614 = vunpack.c.l.b16 %v510
    %v615 = vunpack.c.h.b16 %v510
    %v616 = vunpack.c.l.b16 %v511
    %v617 = vunpack.c.h.b16 %v511
    %v618 = vunpack.c.l.b16 %v512
    %v619 = vunpack.c.h.b16 %v512
    %v620 = vunpack.c.l.b16 %v513
    %v621 = vunpack.c.h.b16 %v513
    %v622 = vunpack.c.l.b16 %v514
    %v623 = vunpack.c.h.b16 %v514
    %v624 = vunpack.c.l.b16 %v515
    %v625 = vunpack.c.h.b16 %v515
    %v626 = vunpack.c.l.b16 %v516
    %v627 = vunpack.c.h.b16 %v516
    %v628 = vunpack.c.l.b16 %v517
    %v629 = vunpack.c.h.b16 %v517
    %v630 = vunpack.c.l.b16 %v518
    %v631 = vunpack.c.h.b16 %v518
    %v632 = vunpack.c.l.b16 %v519
    %v633 = vunpack.c.h.b16 %v519
    %v634 = vunpack.c.l.b16 %v520
    %v635 = vunpack.c.h.b16 %v520
    %v636 = vunpack.c.l.b16 %v521
    %v637 = vunpack.c.h.b16 %v521
    %v638 = vunpack.c.l.b16 %v522
    %v639 = vunpack.c.h.b16 %v522
    %v640 = vunpack.c.l.b16 %v523
    %v641 = vunpack.c.h.b16 %v523
    %v642 = vpack.c.b16 %v582, %v578
    %v643 = vpack.c.b16 %v583, %v579
    %v644 = vpack.c.b16 %v584, %v580
    %v645 = vpack.c.b16 %v585, %v581
    %v646 = vpack.c.b16 %v590, %v586
    %v647 = vpack.c.b16 %v591, %v587
    %v648 = vpack.c.b16 %v592, %v588
    %v649 = vpack.c.b16 %v593, %v589
    %v650 = vpack.c.b16 %v598, %v594
    %v651 = vpack.c.b16 %v599, %v595
    %v652 = vpack.c.b16 %v600, %v596
    %v653 = vpack.c.b16 %v601, %v597
    %v654 = vpack.c.b16 %v606, %v602
    %v655 = vpack.c.b16 %v607, %v603
    %v656 = vpack.c.b16 %v608, %v604
    %v657 = vpack.c.b16 %v609, %v605
    %v658 = vpack.c.b16 %v614, %v610
    %v659 = vpack.c.b16 %v615, %v611
    %v660 = vpack.c.b16 %v616, %v612
    %v661 = vpack.c.b16 %v617, %v613
    %v662 = vpack.c.b16 %v622, %v618
    %v663 = vpack.c.b16 %v623, %v619
    %v664 = vpack.c.b16 %v624, %v620
    %v665 = vpack.c.b16 %v625, %v621
    %v666 = vpack.c.b16 %v630, %v626
    %v667 = vpack.c.b16 %v631, %v627
    %v668 = vpack.c.b16 %v632, %v628
    %v669 = vpack.c.b16 %v633, %v629
    %v670 = vpack.c.b16 %v638, %v634
    %v671 = vpack.c.b16 %v639, %v635
    %v672 = vpack.c.b16 %v640, %v636
    %v673 = vpack.c.b16 %v641, %v637
    %706 = vmatprep.subr.bf16.mxu0 %v643
    %707 = vmatpush1.bf16.msra.mxu0 %v642
    %708 = vmatprep.subr.bf16.mxu0 %v647
    %709 = vmatpush1.bf16.msra.mxu0 %v646
    %710 = vmatprep.subr.bf16.mxu0 %v651
    %711 = vmatpush1.bf16.msra.mxu0 %v650
    %712 = vmatprep.subr.bf16.mxu0 %v655
    %713 = vmatpush1.bf16.msra.mxu0 %v654
    %714 = vmatprep.subr.bf16.mxu0 %v659
    %715 = vmatpush1.bf16.msra.mxu0 %v658
    %716 = vmatprep.subr.bf16.mxu0 %v663
    %717 = vmatpush1.bf16.msra.mxu0 %v662
    %718 = vmatprep.subr.bf16.mxu0 %v667
    %719 = vmatpush1.bf16.msra.mxu0 %v666
    %720 = vmatprep.subr.bf16.mxu0 %v671
    %721 = vmatpush1.bf16.msra.mxu0 %v670
    %722 = vmatprep.subr.bf16.mxu0 0
    %723 = vmatpush1.bf16.msra.mxu0 0
    %724 = vmatprep.subr.bf16.mxu0 0
    %725 = vmatpush1.bf16.msra.mxu0 0
    %726 = vmatprep.subr.bf16.mxu0 0
    %727 = vmatpush1.bf16.msra.mxu0 0
    %728 = vmatprep.subr.bf16.mxu0 0
    %729 = vmatpush1.bf16.msra.mxu0 0
    %730 = vmatprep.subr.bf16.mxu0 0
    %731 = vmatpush1.bf16.msra.mxu0 0
    %732 = vmatprep.subr.bf16.mxu0 0
    %733 = vmatpush1.bf16.msra.mxu0 0
    %734 = vmatprep.subr.bf16.mxu0 0
    %735 = vmatpush1.bf16.msra.mxu0 0
    %736 = vmatprep.subr.bf16.mxu0 0
    %737 = vmatpush1.bf16.msra.mxu0 0
    %738 = vmatprep.mubr.bf16.mxu0 0
    %739 = vmatmul.mubr.bf16.gmra.mrb[0].mxu0 %v146
    %v740 = vpop.f32.mrb[0].mxu0
    %v741 = vadd.f32 %v529, %v740
    %v742 = vpop.f32.mrb[0].mxu0
    %v743 = vadd.f32 %v533, %v742
    %v744 = vpop.f32.mrb[0].mxu0
    %v745 = vadd.f32 %v529, %v744
    %v746 = vpop.f32.mrb[0].mxu0
    %v747 = vadd.f32 %v533, %v746
    %748 = vmatprep.mubr.bf16.mxu0 0
    %749 = vmatmul.mubr.bf16.gmra.mrb[0].mxu0 %v147
    %v750 = vpop.f32.mrb[0].mxu0
    %v751 = vadd.f32 %v529, %v750
    %v752 = vpop.f32.mrb[0].mxu0
    %v753 = vadd.f32 %v533, %v752
    %v754 = vpop.f32.mrb[0].mxu0
    %v755 = vadd.f32 %v529, %v754
    %v756 = vpop.f32.mrb[0].mxu0
    %v757 = vadd.f32 %v533, %v756
    %758 = vmatprep.mubr.bf16.mxu0 0
    %759 = vmatmul.mubr.bf16.gmra.mrb[0].mxu0 %v148
    %v760 = vpop.f32.mrb[0].mxu0
    %v761 = vadd.f32 %v529, %v760
    %v762 = vpop.f32.mrb[0].mxu0
    %v763 = vadd.f32 %v533, %v762
    %v764 = vpop.f32.mrb[0].mxu0
    %v765 = vadd.f32 %v529, %v764
    %v766 = vpop.f32.mrb[0].mxu0
    %v767 = vadd.f32 %v533, %v766
    %768 = vmatprep.mubr.bf16.mxu0 0
    %769 = vmatmul.mubr.bf16.gmra.mrb[0].mxu0 %v149
    %v770 = vpop.f32.mrb[0].mxu0
    %v771 = vadd.f32 %v529, %v770
    %v772 = vpop.f32.mrb[0].mxu0
    %v773 = vadd.f32 %v533, %v772
    %v774 = vpop.f32.mrb[0].mxu0
    %v775 = vadd.f32 %v529, %v774
    %v776 = vpop.f32.mrb[0].mxu0
    %v777 = vadd.f32 %v533, %v776
    %778 = vdwg.mxu0
    %779 = vmatprep.subr.bf16.mxu0 %v645
    %780 = vmatpush1.bf16.msra.mxu0 %v644
    %781 = vmatprep.subr.bf16.mxu0 %v649
    %782 = vmatpush1.bf16.msra.mxu0 %v648
    %783 = vmatprep.subr.bf16.mxu0 %v653
    %784 = vmatpush1.bf16.msra.mxu0 %v652
    %785 = vmatprep.subr.bf16.mxu0 %v657
    %786 = vmatpush1.bf16.msra.mxu0 %v656
    %787 = vmatprep.subr.bf16.mxu0 %v661
    %788 = vmatpush1.bf16.msra.mxu0 %v660
    %789 = vmatprep.subr.bf16.mxu0 %v665
    %790 = vmatpush1.bf16.msra.mxu0 %v664
    %791 = vmatprep.subr.bf16.mxu0 %v669
    %792 = vmatpush1.bf16.msra.mxu0 %v668
    %793 = vmatprep.subr.bf16.mxu0 %v673
    %794 = vmatpush1.bf16.msra.mxu0 %v672
    %795 = vmatprep.subr.bf16.mxu0 0
    %796 = vmatpush1.bf16.msra.mxu0 0
    %797 = vmatprep.subr.bf16.mxu0 0
    %798 = vmatpush1.bf16.msra.mxu0 0
    %799 = vmatprep.subr.bf16.mxu0 0
    %800 = vmatpush1.bf16.msra.mxu0 0
    %801 = vmatprep.subr.bf16.mxu0 0
    %802 = vmatpush1.bf16.msra.mxu0 0
    %803 = vmatprep.subr.bf16.mxu0 0
    %804 = vmatpush1.bf16.msra.mxu0 0
    %805 = vmatprep.subr.bf16.mxu0 0
    %806 = vmatpush1.bf16.msra.mxu0 0
    %807 = vmatprep.subr.bf16.mxu0 0
    %808 = vmatpush1.bf16.msra.mxu0 0
    %809 = vmatprep.subr.bf16.mxu0 0
    %810 = vmatpush1.bf16.msra.mxu0 0
    %811 = vmatprep.mubr.bf16.mxu0 0
    %812 = vmatmul.mubr.bf16.gmra.mrb[0].mxu0 %v146
    %v813 = vpop.f32.mrb[0].mxu0
    %v814 = vadd.f32 %v537, %v813
    %v815 = vpop.f32.mrb[0].mxu0
    %v816 = vadd.f32 %v541, %v815
    %v817 = vpop.f32.mrb[0].mxu0
    %v818 = vadd.f32 %v537, %v817
    %v819 = vpop.f32.mrb[0].mxu0
    %v820 = vadd.f32 %v541, %v819
    %821 = vmatprep.mubr.bf16.mxu0 0
    %822 = vmatmul.mubr.bf16.gmra.mrb[0].mxu0 %v147
    %v823 = vpop.f32.mrb[0].mxu0
    %v824 = vadd.f32 %v537, %v823
    %v825 = vpop.f32.mrb[0].mxu0
    %v826 = vadd.f32 %v541, %v825
    %v827 = vpop.f32.mrb[0].mxu0
    %v828 = vadd.f32 %v537, %v827
    %v829 = vpop.f32.mrb[0].mxu0
    %v830 = vadd.f32 %v541, %v829
    %831 = vmatprep.mubr.bf16.mxu0 0
    %832 = vmatmul.mubr.bf16.gmra.mrb[0].mxu0 %v148
    %v833 = vpop.f32.mrb[0].mxu0
    %v834 = vadd.f32 %v537, %v833
    %v835 = vpop.f32.mrb[0].mxu0
    %v836 = vadd.f32 %v541, %v835
    %v837 = vpop.f32.mrb[0].mxu0
    %v838 = vadd.f32 %v537, %v837
    %v839 = vpop.f32.mrb[0].mxu0
    %v840 = vadd.f32 %v541, %v839
    %841 = vmatprep.mubr.bf16.mxu0 0
    %842 = vmatmul.mubr.bf16.gmra.mrb[0].mxu0 %v149
    %v843 = vpop.f32.mrb[0].mxu0
    %v844 = vadd.f32 %v537, %v843
    %v845 = vpop.f32.mrb[0].mxu0
    %v846 = vadd.f32 %v541, %v845
    %v847 = vpop.f32.mrb[0].mxu0
    %v848 = vadd.f32 %v537, %v847
    %v849 = vpop.f32.mrb[0].mxu0
    %v850 = vadd.f32 %v541, %v849
    %851 = vdwg.mxu0
    %852 = vst [vmem:[#allocation3] sm:$0xff] %v741
    %853 = vst [vmem:[#allocation3 + $0x8] sm:$0xff] %v743
    %854 = vst [vmem:[#allocation3 + $0x10] sm:$0xff] %v814
    %855 = vst [vmem:[#allocation3 + $0x18] sm:$0xff] %v816
    %856 = vst [vmem:[#allocation3 + $0x20] sm:$0xff] %v745
    %857 = vst [vmem:[#allocation3 + $0x28] sm:$0xff] %v747
    %858 = vst [vmem:[#allocation3 + $0x30] sm:$0xff] %v818
    %859 = vst [vmem:[#allocation3 + $0x38] sm:$0xff] %v820
    %860 = vst [vmem:[#allocation3 + $0x40] sm:$0xff] %v751
    %861 = vst [vmem:[#allocation3 + $0x48] sm:$0xff] %v753
    %862 = vst [vmem:[#allocation3 + $0x50] sm:$0xff] %v824
    %863 = vst [vmem:[#allocation3 + $0x58] sm:$0xff] %v826
    %864 = vst [vmem:[#allocation3 + $0x60] sm:$0xff] %v755
    %865 = vst [vmem:[#allocation3 + $0x68] sm:$0xff] %v757
    %866 = vst [vmem:[#allocation3 + $0x70] sm:$0xff] %v828
    %867 = vst [vmem:[#allocation3 + $0x78] sm:$0xff] %v830
    %868 = vst [vmem:[#allocation3 + $0x80] sm:$0xff] %v761
    %869 = vst [vmem:[#allocation3 + $0x88] sm:$0xff] %v763
    %870 = vst [vmem:[#allocation3 + $0x90] sm:$0xff] %v834
    %871 = vst [vmem:[#allocation3 + $0x98] sm:$0xff] %v836
    %872 = vst [vmem:[#allocation3 + $0xa0] sm:$0xff] %v765
    %873 = vst [vmem:[#allocation3 + $0xa8] sm:$0xff] %v767
    %874 = vst [vmem:[#allocation3 + $0xb0] sm:$0xff] %v838
    %875 = vst [vmem:[#allocation3 + $0xb8] sm:$0xff] %v840
    %876 = vst [vmem:[#allocation3 + $0xc0] sm:$0xff] %v771
    %877 = vst [vmem:[#allocation3 + $0xc8] sm:$0xff] %v773
    %878 = vst [vmem:[#allocation3 + $0xd0] sm:$0xff] %v844
    %879 = vst [vmem:[#allocation3 + $0xd8] sm:$0xff] %v846
    %880 = vst [vmem:[#allocation3 + $0xe0] sm:$0xff] %v775
    %881 = vst [vmem:[#allocation3 + $0xe8] sm:$0xff] %v777
    %882 = vst [vmem:[#allocation3 + $0xf0] sm:$0xff] %v848
    %883 = vst [vmem:[#allocation3 + $0xf8] sm:$0xff] %v850
    %v884 = vld [vmem:[#allocation2] sm:$0xff]
    %v885 = vld [vmem:[#allocation2 + $0x8] sm:$0xff]
    %v886 = vld [vmem:[#allocation2 + $0x10] sm:$0xff]
    %v887 = vld [vmem:[#allocation2 + $0x18] sm:$0xff]
    %v888 = vld [vmem:[#allocation4] sm:$0xff]
    %v889 = vld [vmem:[#allocation4 + $0x8] sm:$0xff]
    %v890 = vld [vmem:[#allocation4 + $0x10] sm:$0xff]
    %v891 = vld [vmem:[#allocation4 + $0x18] sm:$0xff]
    %v892 = vld [vmem:[#allocation4 + $0x20] sm:$0xff]
    %v893 = vld [vmem:[#allocation4 + $0x28] sm:$0xff]
    %v894 = vld [vmem:[#allocation4 + $0x30] sm:$0xff]
    %v895 = vld [vmem:[#allocation4 + $0x38] sm:$0xff]
    %v896 = vld [vmem:[#allocation4 + $0x40] sm:$0xff]
    %v897 = vld [vmem:[#allocation4 + $0x48] sm:$0xff]
    %v898 = vld [vmem:[#allocation4 + $0x50] sm:$0xff]
    %v899 = vld [vmem:[#allocation4 + $0x58] sm:$0xff]
    %v900 = vld [vmem:[#allocation4 + $0x60] sm:$0xff]
    %v901 = vld [vmem:[#allocation4 + $0x68] sm:$0xff]
    %v902 = vld [vmem:[#allocation4 + $0x70] sm:$0xff]
    %v903 = vld [vmem:[#allocation4 + $0x78] sm:$0xff]
    %v904 = vld [vmem:[#allocation4 + $0x80] sm:$0xff]
    %v905 = vld [vmem:[#allocation4 + $0x88] sm:$0xff]
    %v906 = vld [vmem:[#allocation4 + $0x90] sm:$0xff]
    %v907 = vld [vmem:[#allocation4 + $0x98] sm:$0xff]
    %v908 = vld [vmem:[#allocation4 + $0xa0] sm:$0xff]
    %v909 = vld [vmem:[#allocation4 + $0xa8] sm:$0xff]
    %v910 = vld [vmem:[#allocation4 + $0xb0] sm:$0xff]
    %v911 = vld [vmem:[#allocation4 + $0xb8] sm:$0xff]
    %v912 = vld [vmem:[#allocation4 + $0xc0] sm:$0xff]
    %v913 = vld [vmem:[#allocation4 + $0xc8] sm:$0xff]
    %v914 = vld [vmem:[#allocation4 + $0xd0] sm:$0xff]
    %v915 = vld [vmem:[#allocation4 + $0xd8] sm:$0xff]
    %v916 = vld [vmem:[#allocation4 + $0xe0] sm:$0xff]
    %v917 = vld [vmem:[#allocation4 + $0xe8] sm:$0xff]
    %v918 = vld [vmem:[#allocation4 + $0xf0] sm:$0xff]
    %v919 = vld [vmem:[#allocation4 + $0xf8] sm:$0xff]
    %v952 = vunpack.c.l.b16 %v888
    %v953 = vunpack.c.h.b16 %v888
    %v954 = vunpack.c.l.b16 %v889
    %v955 = vunpack.c.h.b16 %v889
    %v956 = vunpack.c.l.b16 %v890
    %v957 = vunpack.c.h.b16 %v890
    %v958 = vunpack.c.l.b16 %v891
    %v959 = vunpack.c.h.b16 %v891
    %v960 = vunpack.c.l.b16 %v892
    %v961 = vunpack.c.h.b16 %v892
    %v962 = vunpack.c.l.b16 %v893
    %v963 = vunpack.c.h.b16 %v893
    %v964 = vunpack.c.l.b16 %v894
    %v965 = vunpack.c.h.b16 %v894
    %v966 = vunpack.c.l.b16 %v895
    %v967 = vunpack.c.h.b16 %v895
    %v968 = vunpack.c.l.b16 %v896
    %v969 = vunpack.c.h.b16 %v896
    %v970 = vunpack.c.l.b16 %v897
    %v971 = vunpack.c.h.b16 %v897
    %v972 = vunpack.c.l.b16 %v898
    %v973 = vunpack.c.h.b16 %v898
    %v974 = vunpack.c.l.b16 %v899
    %v975 = vunpack.c.h.b16 %v899
    %v976 = vunpack.c.l.b16 %v900
    %v977 = vunpack.c.h.b16 %v900
    %v978 = vunpack.c.l.b16 %v901
    %v979 = vunpack.c.h.b16 %v901
    %v980 = vunpack.c.l.b16 %v902
    %v981 = vunpack.c.h.b16 %v902
    %v982 = vunpack.c.l.b16 %v903
    %v983 = vunpack.c.h.b16 %v903
    %v984 = vunpack.c.l.b16 %v904
    %v985 = vunpack.c.h.b16 %v904
    %v986 = vunpack.c.l.b16 %v905
    %v987 = vunpack.c.h.b16 %v905
    %v988 = vunpack.c.l.b16 %v906
    %v989 = vunpack.c.h.b16 %v906
    %v990 = vunpack.c.l.b16 %v907
    %v991 = vunpack.c.h.b16 %v907
    %v992 = vunpack.c.l.b16 %v908
    %v993 = vunpack.c.h.b16 %v908
    %v994 = vunpack.c.l.b16 %v909
    %v995 = vunpack.c.h.b16 %v909
    %v996 = vunpack.c.l.b16 %v910
    %v997 = vunpack.c.h.b16 %v910
    %v998 = vunpack.c.l.b16 %v911
    %v999 = vunpack.c.h.b16 %v911
    %v1000 = vunpack.c.l.b16 %v912
    %v1001 = vunpack.c.h.b16 %v912
    %v1002 = vunpack.c.l.b16 %v913
    %v1003 = vunpack.c.h.b16 %v913
    %v1004 = vunpack.c.l.b16 %v914
    %v1005 = vunpack.c.h.b16 %v914
    %v1006 = vunpack.c.l.b16 %v915
    %v1007 = vunpack.c.h.b16 %v915
    %v1008 = vunpack.c.l.b16 %v916
    %v1009 = vunpack.c.h.b16 %v916
    %v1010 = vunpack.c.l.b16 %v917
    %v1011 = vunpack.c.h.b16 %v917
    %v1012 = vunpack.c.l.b16 %v918
    %v1013 = vunpack.c.h.b16 %v918
    %v1014 = vunpack.c.l.b16 %v919
    %v1015 = vunpack.c.h.b16 %v919
    %v1016 = vpack.c.b16 %v956, %v952
    %v1017 = vpack.c.b16 %v957, %v953
    %v1018 = vpack.c.b16 %v958, %v954
    %v1019 = vpack.c.b16 %v959, %v955
    %v1020 = vpack.c.b16 %v964, %v960
    %v1021 = vpack.c.b16 %v965, %v961
    %v1022 = vpack.c.b16 %v966, %v962
    %v1023 = vpack.c.b16 %v967, %v963
    %v1024 = vpack.c.b16 %v972, %v968
    %v1025 = vpack.c.b16 %v973, %v969
    %v1026 = vpack.c.b16 %v974, %v970
    %v1027 = vpack.c.b16 %v975, %v971
    %v1028 = vpack.c.b16 %v980, %v976
    %v1029 = vpack.c.b16 %v981, %v977
    %v1030 = vpack.c.b16 %v982, %v978
    %v1031 = vpack.c.b16 %v983, %v979
    %v1032 = vpack.c.b16 %v988, %v984
    %v1033 = vpack.c.b16 %v989, %v985
    %v1034 = vpack.c.b16 %v990, %v986
    %v1035 = vpack.c.b16 %v991, %v987
    %v1036 = vpack.c.b16 %v996, %v992
    %v1037 = vpack.c.b16 %v997, %v993
    %v1038 = vpack.c.b16 %v998, %v994
    %v1039 = vpack.c.b16 %v999, %v995
    %v1040 = vpack.c.b16 %v1004, %v1000
    %v1041 = vpack.c.b16 %v1005, %v1001
    %v1042 = vpack.c.b16 %v1006, %v1002
    %v1043 = vpack.c.b16 %v1007, %v1003
    %v1044 = vpack.c.b16 %v1012, %v1008
    %v1045 = vpack.c.b16 %v1013, %v1009
    %v1046 = vpack.c.b16 %v1014, %v1010
    %v1047 = vpack.c.b16 %v1015, %v1011
    %1080 = vmatprep.subr.bf16.mxu0 %v1017
    %1081 = vmatpush1.bf16.msra.mxu0 %v1016
    %1082 = vmatprep.subr.bf16.mxu0 %v1021
    %1083 = vmatpush1.bf16.msra.mxu0 %v1020
    %1084 = vmatprep.subr.bf16.mxu0 %v1025
    %1085 = vmatpush1.bf16.msra.mxu0 %v1024
    %1086 = vmatprep.subr.bf16.mxu0 %v1029
    %1087 = vmatpush1.bf16.msra.mxu0 %v1028
    %1088 = vmatprep.subr.bf16.mxu0 %v1033
    %1089 = vmatpush1.bf16.msra.mxu0 %v1032
    %1090 = vmatprep.subr.bf16.mxu0 %v1037
    %1091 = vmatpush1.bf16.msra.mxu0 %v1036
    %1092 = vmatprep.subr.bf16.mxu0 %v1041
    %1093 = vmatpush1.bf16.msra.mxu0 %v1040
    %1094 = vmatprep.subr.bf16.mxu0 %v1045
    %1095 = vmatpush1.bf16.msra.mxu0 %v1044
    %1096 = vmatprep.subr.bf16.mxu0 0
    %1097 = vmatpush1.bf16.msra.mxu0 0
    %1098 = vmatprep.subr.bf16.mxu0 0
    %1099 = vmatpush1.bf16.msra.mxu0 0
    %1100 = vmatprep.subr.bf16.mxu0 0
    %1101 = vmatpush1.bf16.msra.mxu0 0
    %1102 = vmatprep.subr.bf16.mxu0 0
    %1103 = vmatpush1.bf16.msra.mxu0 0
    %1104 = vmatprep.subr.bf16.mxu0 0
    %1105 = vmatpush1.bf16.msra.mxu0 0
    %1106 = vmatprep.subr.bf16.mxu0 0
    %1107 = vmatpush1.bf16.msra.mxu0 0
    %1108 = vmatprep.subr.bf16.mxu0 0
    %1109 = vmatpush1.bf16.msra.mxu0 0
    %1110 = vmatprep.subr.bf16.mxu0 0
    %1111 = vmatpush1.bf16.msra.mxu0 0
    %1112 = vmatprep.mubr.bf16.mxu0 0
    %1113 = vmatmul.mubr.bf16.gmra.mrb[0].mxu0 0
    %v1114 = vpop.f32.mrb[0].mxu0
    %v1115 = vadd.f32 0.0, %v1114
    %v1116 = vpop.f32.mrb[0].mxu0
    %v1117 = vadd.f32 0.0, %v1116
    %v1118 = vpop.f32.mrb[0].mxu0
    %v1119 = vpop.f32.mrb[0].mxu0
    %1120 = vdwg.mxu0
    %1121 = vmatprep.subr.bf16.mxu0 %v1019
    %1122 = vmatpush1.bf16.msra.mxu0 %v1018
    %1123 = vmatprep.subr.bf16.mxu0 %v1023
    %1124 = vmatpush1.bf16.msra.mxu0 %v1022
    %1125 = vmatprep.subr.bf16.mxu0 %v1027
    %1126 = vmatpush1.bf16.msra.mxu0 %v1026
    %1127 = vmatprep.subr.bf16.mxu0 %v1031
    %1128 = vmatpush1.bf16.msra.mxu0 %v1030
    %1129 = vmatprep.subr.bf16.mxu0 %v1035
    %1130 = vmatpush1.bf16.msra.mxu0 %v1034
    %1131 = vmatprep.subr.bf16.mxu0 %v1039
    %1132 = vmatpush1.bf16.msra.mxu0 %v1038
    %1133 = vmatprep.subr.bf16.mxu0 %v1043
    %1134 = vmatpush1.bf16.msra.mxu0 %v1042
    %1135 = vmatprep.subr.bf16.mxu0 %v1047
    %1136 = vmatpush1.bf16.msra.mxu0 %v1046
    %1137 = vmatprep.subr.bf16.mxu0 0
    %1138 = vmatpush1.bf16.msra.mxu0 0
    %1139 = vmatprep.subr.bf16.mxu0 0
    %1140 = vmatpush1.bf16.msra.mxu0 0
    %1141 = vmatprep.subr.bf16.mxu0 0
    %1142 = vmatpush1.bf16.msra.mxu0 0
    %1143 = vmatprep.subr.bf16.mxu0 0
    %1144 = vmatpush1.bf16.msra.mxu0 0
    %1145 = vmatprep.subr.bf16.mxu0 0
    %1146 = vmatpush1.bf16.msra.mxu0 0
    %1147 = vmatprep.subr.bf16.mxu0 0
    %1148 = vmatpush1.bf16.msra.mxu0 0
    %1149 = vmatprep.subr.bf16.mxu0 0
    %1150 = vmatpush1.bf16.msra.mxu0 0
    %1151 = vmatprep.subr.bf16.mxu0 0
    %1152 = vmatpush1.bf16.msra.mxu0 0
    %1153 = vmatprep.mubr.bf16.mxu0 0
    %1154 = vmatmul.mubr.bf16.gmra.mrb[0].mxu0 0
    %v1155 = vpop.f32.mrb[0].mxu0
    %v1156 = vadd.f32 0.0, %v1155
    %v1157 = vpop.f32.mrb[0].mxu0
    %v1158 = vadd.f32 0.0, %v1157
    %v1159 = vpop.f32.mrb[0].mxu0
    %v1160 = vpop.f32.mrb[0].mxu0
    %1161 = vdwg.mxu0
    %v1162 = vadd.f32 %v884, %v1115
    %v1163 = vadd.f32 %v885, %v1117
    %v1164 = vadd.f32 %v886, %v1156
    %v1165 = vadd.f32 %v887, %v1158
    %v1166 = vxor.u32 %v1162, 2147483648
    %v1167 = vxor.u32 %v1163, 2147483648
    %v1168 = vmul.f32 %v1166, 1.442695
    %v1169 = vpow.pop %v1168
    %v1170 = vmul.f32 %v1167, 1.442695
    %v1171 = vpow.pop %v1170
    %v1172 = vadd.f32 %v1169, 1.0
    %v1173 = vadd.f32 %v1171, 1.0
    %v1174 = vrcp.pop %v1172
    %v1175 = vmul.f32 1.0, %v1174
    %v1176 = vrcp.pop %v1173
    %v1177 = vmul.f32 1.0, %v1176
    %v1178 = vtanh.pop %v1164
    %v1179 = vxor.u32 %v1165, 2147483648
    %v1180 = vmul.f32 %v1179, 1.442695
    %v1181 = vpow.pop %v1180
    %v1182 = vadd.f32 %v1181, 1.0
    %v1183 = vrcp.pop %v1182
    %v1184 = vmul.f32 1.0, %v1183
    %v1185 = vmul.f32 %v1177, 0.0
    %v1186 = vmul.f32 %v1175, %v1178
    %v1187 = vadd.f32 %v1185, %v1186
    %v1188 = vtanh.pop %v1187
    %v1189 = vmul.f32 %v1184, %v1188
    %1190 = vst [vmem:[%s7] sm:$0xff] %v1189
    %v1191 = vld [vmem:[#allocation3 + $0xe0] sm:$0xff]
    %v1192 = vld [vmem:[#allocation3 + $0xe8] sm:$0xff]
    %v1193 = vld [vmem:[#allocation3 + $0xf0] sm:$0xff]
    %v1194 = vld [vmem:[#allocation3 + $0xf8] sm:$0xff]
    %v1195 = vld [vmem:[#allocation8] sm:$0xff]
    %v1196 = vld [vmem:[#allocation8 + $0x8] sm:$0xff]
    %v1197 = vld [vmem:[#allocation8 + $0x10] sm:$0xff]
    %v1198 = vld [vmem:[#allocation8 + $0x18] sm:$0xff]
    %v1199 = vld [vmem:[#allocation8 + $0x20] sm:$0xff]
    %v1200 = vld [vmem:[#allocation8 + $0x28] sm:$0xff]
    %v1201 = vld [vmem:[#allocation8 + $0x30] sm:$0xff]
    %v1202 = vld [vmem:[#allocation8 + $0x38] sm:$0xff]
    %v1203 = vld [vmem:[#allocation8 + $0x40] sm:$0xff]
    %v1204 = vld [vmem:[#allocation8 + $0x48] sm:$0xff]
    %v1205 = vld [vmem:[#allocation8 + $0x50] sm:$0xff]
    %v1206 = vld [vmem:[#allocation8 + $0x58] sm:$0xff]
    %v1207 = vld [vmem:[#allocation8 + $0x60] sm:$0xff]
    %v1208 = vld [vmem:[#allocation8 + $0x68] sm:$0xff]
    %v1209 = vld [vmem:[#allocation8 + $0x70] sm:$0xff]
    %v1210 = vld [vmem:[#allocation8 + $0x78] sm:$0xff]
    %v1211 = vld [vmem:[#allocation8 + $0x80] sm:$0xff]
    %v1212 = vld [vmem:[#allocation8 + $0x88] sm:$0xff]
    %v1213 = vld [vmem:[#allocation8 + $0x90] sm:$0xff]
    %v1214 = vld [vmem:[#allocation8 + $0x98] sm:$0xff]
    %v1215 = vld [vmem:[#allocation8 + $0xa0] sm:$0xff]
    %v1216 = vld [vmem:[#allocation8 + $0xa8] sm:$0xff]
    %v1217 = vld [vmem:[#allocation8 + $0xb0] sm:$0xff]
    %v1218 = vld [vmem:[#allocation8 + $0xb8] sm:$0xff]
    %v1219 = vld [vmem:[#allocation8 + $0xc0] sm:$0xff]
    %v1220 = vld [vmem:[#allocation8 + $0xc8] sm:$0xff]
    %v1221 = vld [vmem:[#allocation8 + $0xd0] sm:$0xff]
    %v1222 = vld [vmem:[#allocation8 + $0xd8] sm:$0xff]
    %v1223 = vld [vmem:[#allocation8 + $0xe0] sm:$0xff]
    %v1224 = vld [vmem:[#allocation8 + $0xe8] sm:$0xff]
    %v1225 = vld [vmem:[#allocation8 + $0xf0] sm:$0xff]
    %v1226 = vld [vmem:[#allocation8 + $0xf8] sm:$0xff]
    %v1259 = vunpack.c.l.b16 %v1195
    %v1260 = vunpack.c.h.b16 %v1195
    %v1261 = vunpack.c.l.b16 %v1196
    %v1262 = vunpack.c.h.b16 %v1196
    %v1263 = vunpack.c.l.b16 %v1197
    %v1264 = vunpack.c.h.b16 %v1197
    %v1265 = vunpack.c.l.b16 %v1198
    %v1266 = vunpack.c.h.b16 %v1198
    %v1267 = vunpack.c.l.b16 %v1199
    %v1268 = vunpack.c.h.b16 %v1199
    %v1269 = vunpack.c.l.b16 %v1200
    %v1270 = vunpack.c.h.b16 %v1200
    %v1271 = vunpack.c.l.b16 %v1201
    %v1272 = vunpack.c.h.b16 %v1201
    %v1273 = vunpack.c.l.b16 %v1202
    %v1274 = vunpack.c.h.b16 %v1202
    %v1275 = vunpack.c.l.b16 %v1203
    %v1276 = vunpack.c.h.b16 %v1203
    %v1277 = vunpack.c.l.b16 %v1204
    %v1278 = vunpack.c.h.b16 %v1204
    %v1279 = vunpack.c.l.b16 %v1205
    %v1280 = vunpack.c.h.b16 %v1205
    %v1281 = vunpack.c.l.b16 %v1206
    %v1282 = vunpack.c.h.b16 %v1206
    %v1283 = vunpack.c.l.b16 %v1207
    %v1284 = vunpack.c.h.b16 %v1207
    %v1285 = vunpack.c.l.b16 %v1208
    %v1286 = vunpack.c.h.b16 %v1208
    %v1287 = vunpack.c.l.b16 %v1209
    %v1288 = vunpack.c.h.b16 %v1209
    %v1289 = vunpack.c.l.b16 %v1210
    %v1290 = vunpack.c.h.b16 %v1210
    %v1291 = vunpack.c.l.b16 %v1211
    %v1292 = vunpack.c.h.b16 %v1211
    %v1293 = vunpack.c.l.b16 %v1212
    %v1294 = vunpack.c.h.b16 %v1212
    %v1295 = vunpack.c.l.b16 %v1213
    %v1296 = vunpack.c.h.b16 %v1213
    %v1297 = vunpack.c.l.b16 %v1214
    %v1298 = vunpack.c.h.b16 %v1214
    %v1299 = vunpack.c.l.b16 %v1215
    %v1300 = vunpack.c.h.b16 %v1215
    %v1301 = vunpack.c.l.b16 %v1216
    %v1302 = vunpack.c.h.b16 %v1216
    %v1303 = vunpack.c.l.b16 %v1217
    %v1304 = vunpack.c.h.b16 %v1217
    %v1305 = vunpack.c.l.b16 %v1218
    %v1306 = vunpack.c.h.b16 %v1218
    %v1307 = vunpack.c.l.b16 %v1219
    %v1308 = vunpack.c.h.b16 %v1219
    %v1309 = vunpack.c.l.b16 %v1220
    %v1310 = vunpack.c.h.b16 %v1220
    %v1311 = vunpack.c.l.b16 %v1221
    %v1312 = vunpack.c.h.b16 %v1221
    %v1313 = vunpack.c.l.b16 %v1222
    %v1314 = vunpack.c.h.b16 %v1222
    %v1315 = vunpack.c.l.b16 %v1223
    %v1316 = vunpack.c.h.b16 %v1223
    %v1317 = vunpack.c.l.b16 %v1224
    %v1318 = vunpack.c.h.b16 %v1224
    %v1319 = vunpack.c.l.b16 %v1225
    %v1320 = vunpack.c.h.b16 %v1225
    %v1321 = vunpack.c.l.b16 %v1226
    %v1322 = vunpack.c.h.b16 %v1226
    %v1323 = vpack.c.b16 %v1263, %v1259
    %v1324 = vpack.c.b16 %v1264, %v1260
    %v1325 = vpack.c.b16 %v1265, %v1261
    %v1326 = vpack.c.b16 %v1266, %v1262
    %v1327 = vpack.c.b16 %v1271, %v1267
    %v1328 = vpack.c.b16 %v1272, %v1268
    %v1329 = vpack.c.b16 %v1273, %v1269
    %v1330 = vpack.c.b16 %v1274, %v1270
    %v1331 = vpack.c.b16 %v1279, %v1275
    %v1332 = vpack.c.b16 %v1280, %v1276
    %v1333 = vpack.c.b16 %v1281, %v1277
    %v1334 = vpack.c.b16 %v1282, %v1278
    %v1335 = vpack.c.b16 %v1287, %v1283
    %v1336 = vpack.c.b16 %v1288, %v1284
    %v1337 = vpack.c.b16 %v1289, %v1285
    %v1338 = vpack.c.b16 %v1290, %v1286
    %v1339 = vpack.c.b16 %v1295, %v1291
    %v1340 = vpack.c.b16 %v1296, %v1292
    %v1341 = vpack.c.b16 %v1297, %v1293
    %v1342 = vpack.c.b16 %v1298, %v1294
    %v1343 = vpack.c.b16 %v1303, %v1299
    %v1344 = vpack.c.b16 %v1304, %v1300
    %v1345 = vpack.c.b16 %v1305, %v1301
    %v1346 = vpack.c.b16 %v1306, %v1302
    %v1347 = vpack.c.b16 %v1311, %v1307
    %v1348 = vpack.c.b16 %v1312, %v1308
    %v1349 = vpack.c.b16 %v1313, %v1309
    %v1350 = vpack.c.b16 %v1314, %v1310
    %v1351 = vpack.c.b16 %v1319, %v1315
    %v1352 = vpack.c.b16 %v1320, %v1316
    %v1353 = vpack.c.b16 %v1321, %v1317
    %v1354 = vpack.c.b16 %v1322, %v1318
    %1387 = vmatprep.subr.bf16.mxu0 %v1324
    %1388 = vmatpush1.bf16.msra.mxu0 %v1323
    %1389 = vmatprep.subr.bf16.mxu0 %v1328
    %1390 = vmatpush1.bf16.msra.mxu0 %v1327
    %1391 = vmatprep.subr.bf16.mxu0 %v1332
    %1392 = vmatpush1.bf16.msra.mxu0 %v1331
    %1393 = vmatprep.subr.bf16.mxu0 %v1336
    %1394 = vmatpush1.bf16.msra.mxu0 %v1335
    %1395 = vmatprep.subr.bf16.mxu0 %v1340
    %1396 = vmatpush1.bf16.msra.mxu0 %v1339
    %1397 = vmatprep.subr.bf16.mxu0 %v1344
    %1398 = vmatpush1.bf16.msra.mxu0 %v1343
    %1399 = vmatprep.subr.bf16.mxu0 %v1348
    %1400 = vmatpush1.bf16.msra.mxu0 %v1347
    %1401 = vmatprep.subr.bf16.mxu0 %v1352
    %1402 = vmatpush1.bf16.msra.mxu0 %v1351
    %1403 = vmatprep.subr.bf16.mxu0 0
    %1404 = vmatpush1.bf16.msra.mxu0 0
    %1405 = vmatprep.subr.bf16.mxu0 0
    %1406 = vmatpush1.bf16.msra.mxu0 0
    %1407 = vmatprep.subr.bf16.mxu0 0
    %1408 = vmatpush1.bf16.msra.mxu0 0
    %1409 = vmatprep.subr.bf16.mxu0 0
    %1410 = vmatpush1.bf16.msra.mxu0 0
    %1411 = vmatprep.subr.bf16.mxu0 0
    %1412 = vmatpush1.bf16.msra.mxu0 0
    %1413 = vmatprep.subr.bf16.mxu0 0
    %1414 = vmatpush1.bf16.msra.mxu0 0
    %1415 = vmatprep.subr.bf16.mxu0 0
    %1416 = vmatpush1.bf16.msra.mxu0 0
    %1417 = vmatprep.subr.bf16.mxu0 0
    %1418 = vmatpush1.bf16.msra.mxu0 0
    %1419 = vmatprep.mubr.bf16.mxu0 0
    %1420 = vmatmul.mubr.bf16.gmra.mrb[0].mxu0 0
    %v1421 = vpop.f32.mrb[0].mxu0
    %v1422 = vadd.f32 0.0, %v1421
    %v1423 = vpop.f32.mrb[0].mxu0
    %v1424 = vadd.f32 0.0, %v1423
    %v1425 = vpop.f32.mrb[0].mxu0
    %v1426 = vpop.f32.mrb[0].mxu0
    %1427 = vdwg.mxu0
    %1428 = vmatprep.subr.bf16.mxu0 %v1326
    %1429 = vmatpush1.bf16.msra.mxu0 %v1325
    %1430 = vmatprep.subr.bf16.mxu0 %v1330
    %1431 = vmatpush1.bf16.msra.mxu0 %v1329
    %1432 = vmatprep.subr.bf16.mxu0 %v1334
    %1433 = vmatpush1.bf16.msra.mxu0 %v1333
    %1434 = vmatprep.subr.bf16.mxu0 %v1338
    %1435 = vmatpush1.bf16.msra.mxu0 %v1337
    %1436 = vmatprep.subr.bf16.mxu0 %v1342
    %1437 = vmatpush1.bf16.msra.mxu0 %v1341
    %1438 = vmatprep.subr.bf16.mxu0 %v1346
    %1439 = vmatpush1.bf16.msra.mxu0 %v1345
    %1440 = vmatprep.subr.bf16.mxu0 %v1350
    %1441 = vmatpush1.bf16.msra.mxu0 %v1349
    %1442 = vmatprep.subr.bf16.mxu0 %v1354
    %1443 = vmatpush1.bf16.msra.mxu0 %v1353
    %1444 = vmatprep.subr.bf16.mxu0 0
    %1445 = vmatpush1.bf16.msra.mxu0 0
    %1446 = vmatprep.subr.bf16.mxu0 0
    %1447 = vmatpush1.bf16.msra.mxu0 0
    %1448 = vmatprep.subr.bf16.mxu0 0
    %1449 = vmatpush1.bf16.msra.mxu0 0
    %1450 = vmatprep.subr.bf16.mxu0 0
    %1451 = vmatpush1.bf16.msra.mxu0 0
    %1452 = vmatprep.subr.bf16.mxu0 0
    %1453 = vmatpush1.bf16.msra.mxu0 0
    %1454 = vmatprep.subr.bf16.mxu0 0
    %1455 = vmatpush1.bf16.msra.mxu0 0
    %1456 = vmatprep.subr.bf16.mxu0 0
    %1457 = vmatpush1.bf16.msra.mxu0 0
    %1458 = vmatprep.subr.bf16.mxu0 0
    %1459 = vmatpush1.bf16.msra.mxu0 0
    %1460 = vmatprep.mubr.bf16.mxu0 0
    %1461 = vmatmul.mubr.bf16.gmra.mrb[0].mxu0 0
    %v1462 = vpop.f32.mrb[0].mxu0
    %v1463 = vadd.f32 0.0, %v1462
    %v1464 = vpop.f32.mrb[0].mxu0
    %v1465 = vadd.f32 0.0, %v1464
    %v1466 = vpop.f32.mrb[0].mxu0
    %v1467 = vpop.f32.mrb[0].mxu0
    %1468 = vdwg.mxu0
    %v1469 = vadd.f32 %v1191, %v1422
    %v1470 = vadd.f32 %v1192, %v1424
    %v1471 = vadd.f32 %v1193, %v1463
    %v1472 = vadd.f32 %v1194, %v1465
    %v1473 = vxor.u32 %v1469, 2147483648
    %v1474 = vxor.u32 %v1470, 2147483648
    %v1475 = vmul.f32 %v1473, 1.442695
    %v1476 = vpow.pop %v1475
    %v1477 = vmul.f32 %v1474, 1.442695
    %v1478 = vpow.pop %v1477
    %v1479 = vadd.f32 %v1476, 1.0
    %v1480 = vadd.f32 %v1478, 1.0
    %v1481 = vrcp.pop %v1479
    %v1482 = vmul.f32 1.0, %v1481
    %v1483 = vrcp.pop %v1480
    %v1484 = vmul.f32 1.0, %v1483
    %v1485 = vtanh.pop %v1471
    %v1486 = vxor.u32 %v1472, 2147483648
    %v1487 = vmul.f32 %v1486, 1.442695
    %v1488 = vpow.pop %v1487
    %v1489 = vadd.f32 %v1488, 1.0
    %v1490 = vrcp.pop %v1489
    %v1491 = vmul.f32 1.0, %v1490
    %v1492 = vmul.f32 %v1484, 0.0
    %v1493 = vmul.f32 %v1482, %v1485
    %v1494 = vadd.f32 %v1492, %v1493
    %v1495 = vtanh.pop %v1494
    %v1496 = vmul.f32 %v1491, %v1495
    %1497 = vst [vmem:[%s7 + $0x78] sm:$0xff] %v1496
    %v1498 = vld [vmem:[#allocation2 + $0x20] sm:$0xff]
    %v1499 = vld [vmem:[#allocation2 + $0x28] sm:$0xff]
    %v1500 = vld [vmem:[#allocation2 + $0x30] sm:$0xff]
    %v1501 = vld [vmem:[#allocation2 + $0x38] sm:$0xff]
    %v1502 = vpack.c.bf16 %v1189, %v1189
    %v1503 = vld [vmem:[#allocation4] sm:$0xff]
    %v1504 = vld [vmem:[#allocation4 + $0x8] sm:$0xff]
    %v1505 = vld [vmem:[#allocation4 + $0x10] sm:$0xff]
    %v1506 = vld [vmem:[#allocation4 + $0x18] sm:$0xff]
    %v1507 = vld [vmem:[#allocation4 + $0x20] sm:$0xff]
    %v1508 = vld [vmem:[#allocation4 + $0x28] sm:$0xff]
    %v1509 = vld [vmem:[#allocation4 + $0x30] sm:$0xff]
    %v1510 = vld [vmem:[#allocation4 + $0x38] sm:$0xff]
    %v1511 = vld [vmem:[#allocation4 + $0x40] sm:$0xff]
    %v1512 = vld [vmem:[#allocation4 + $0x48] sm:$0xff]
    %v1513 = vld [vmem:[#allocation4 + $0x50] sm:$0xff]
    %v1514 = vld [vmem:[#allocation4 + $0x58] sm:$0xff]
    %v1515 = vld [vmem:[#allocation4 + $0x60] sm:$0xff]
    %v1516 = vld [vmem:[#allocation4 + $0x68] sm:$0xff]
    %v1517 = vld [vmem:[#allocation4 + $0x70] sm:$0xff]
    %v1518 = vld [vmem:[#allocation4 + $0x78] sm:$0xff]
    %v1519 = vld [vmem:[#allocation4 + $0x80] sm:$0xff]
    %v1520 = vld [vmem:[#allocation4 + $0x88] sm:$0xff]
    %v1521 = vld [vmem:[#allocation4 + $0x90] sm:$0xff]
    %v1522 = vld [vmem:[#allocation4 + $0x98] sm:$0xff]
    %v1523 = vld [vmem:[#allocation4 + $0xa0] sm:$0xff]
    %v1524 = vld [vmem:[#allocation4 + $0xa8] sm:$0xff]
    %v1525 = vld [vmem:[#allocation4 + $0xb0] sm:$0xff]
    %v1526 = vld [vmem:[#allocation4 + $0xb8] sm:$0xff]
    %v1527 = vld [vmem:[#allocation4 + $0xc0] sm:$0xff]
    %v1528 = vld [vmem:[#allocation4 + $0xc8] sm:$0xff]
    %v1529 = vld [vmem:[#allocation4 + $0xd0] sm:$0xff]
    %v1530 = vld [vmem:[#allocation4 + $0xd8] sm:$0xff]
    %v1531 = vld [vmem:[#allocation4 + $0xe0] sm:$0xff]
    %v1532 = vld [vmem:[#allocation4 + $0xe8] sm:$0xff]
    %v1533 = vld [vmem:[#allocation4 + $0xf0] sm:$0xff]
    %v1534 = vld [vmem:[#allocation4 + $0xf8] sm:$0xff]
    %v1567 = vunpack.c.l.b16 %v1503
    %v1568 = vunpack.c.h.b16 %v1503
    %v1569 = vunpack.c.l.b16 %v1504
    %v1570 = vunpack.c.h.b16 %v1504
    %v1571 = vunpack.c.l.b16 %v1505
    %v1572 = vunpack.c.h.b16 %v1505
    %v1573 = vunpack.c.l.b16 %v1506
    %v1574 = vunpack.c.h.b16 %v1506
    %v1575 = vunpack.c.l.b16 %v1507
    %v1576 = vunpack.c.h.b16 %v1507
    %v1577 = vunpack.c.l.b16 %v1508
    %v1578 = vunpack.c.h.b16 %v1508
    %v1579 = vunpack.c.l.b16 %v1509
    %v1580 = vunpack.c.h.b16 %v1509
    %v1581 = vunpack.c.l.b16 %v1510
    %v1582 = vunpack.c.h.b16 %v1510
    %v1583 = vunpack.c.l.b16 %v1511
    %v1584 = vunpack.c.h.b16 %v1511
    %v1585 = vunpack.c.l.b16 %v1512
    %v1586 = vunpack.c.h.b16 %v1512
    %v1587 = vunpack.c.l.b16 %v1513
    %v1588 = vunpack.c.h.b16 %v1513
    %v1589 = vunpack.c.l.b16 %v1514
    %v1590 = vunpack.c.h.b16 %v1514
    %v1591 = vunpack.c.l.b16 %v1515
    %v1592 = vunpack.c.h.b16 %v1515
    %v1593 = vunpack.c.l.b16 %v1516
    %v1594 = vunpack.c.h.b16 %v1516
    %v1595 = vunpack.c.l.b16 %v1517
    %v1596 = vunpack.c.h.b16 %v1517
    %v1597 = vunpack.c.l.b16 %v1518
    %v1598 = vunpack.c.h.b16 %v1518
    %v1599 = vunpack.c.l.b16 %v1519
    %v1600 = vunpack.c.h.b16 %v1519
    %v1601 = vunpack.c.l.b16 %v1520
    %v1602 = vunpack.c.h.b16 %v1520
    %v1603 = vunpack.c.l.b16 %v1521
    %v1604 = vunpack.c.h.b16 %v1521
    %v1605 = vunpack.c.l.b16 %v1522
    %v1606 = vunpack.c.h.b16 %v1522
    %v1607 = vunpack.c.l.b16 %v1523
    %v1608 = vunpack.c.h.b16 %v1523
    %v1609 = vunpack.c.l.b16 %v1524
    %v1610 = vunpack.c.h.b16 %v1524
    %v1611 = vunpack.c.l.b16 %v1525
    %v1612 = vunpack.c.h.b16 %v1525
    %v1613 = vunpack.c.l.b16 %v1526
    %v1614 = vunpack.c.h.b16 %v1526
    %v1615 = vunpack.c.l.b16 %v1527
    %v1616 = vunpack.c.h.b16 %v1527
    %v1617 = vunpack.c.l.b16 %v1528
    %v1618 = vunpack.c.h.b16 %v1528
    %v1619 = vunpack.c.l.b16 %v1529
    %v1620 = vunpack.c.h.b16 %v1529
    %v1621 = vunpack.c.l.b16 %v1530
    %v1622 = vunpack.c.h.b16 %v1530
    %v1623 = vunpack.c.l.b16 %v1531
    %v1624 = vunpack.c.h.b16 %v1531
    %v1625 = vunpack.c.l.b16 %v1532
    %v1626 = vunpack.c.h.b16 %v1532
    %v1627 = vunpack.c.l.b16 %v1533
    %v1628 = vunpack.c.h.b16 %v1533
    %v1629 = vunpack.c.l.b16 %v1534
    %v1630 = vunpack.c.h.b16 %v1534
    %v1631 = vpack.c.b16 %v1571, %v1567
    %v1632 = vpack.c.b16 %v1572, %v1568
    %v1633 = vpack.c.b16 %v1573, %v1569
    %v1634 = vpack.c.b16 %v1574, %v1570
    %v1635 = vpack.c.b16 %v1579, %v1575
    %v1636 = vpack.c.b16 %v1580, %v1576
    %v1637 = vpack.c.b16 %v1581, %v1577
    %v1638 = vpack.c.b16 %v1582, %v1578
    %v1639 = vpack.c.b16 %v1587, %v1583
    %v1640 = vpack.c.b16 %v1588, %v1584
    %v1641 = vpack.c.b16 %v1589, %v1585
    %v1642 = vpack.c.b16 %v1590, %v1586
    %v1643 = vpack.c.b16 %v1595, %v1591
    %v1644 = vpack.c.b16 %v1596, %v1592
    %v1645 = vpack.c.b16 %v1597, %v1593
    %v1646 = vpack.c.b16 %v1598, %v1594
    %v1647 = vpack.c.b16 %v1603, %v1599
    %v1648 = vpack.c.b16 %v1604, %v1600
    %v1649 = vpack.c.b16 %v1605, %v1601
    %v1650 = vpack.c.b16 %v1606, %v1602
    %v1651 = vpack.c.b16 %v1611, %v1607
    %v1652 = vpack.c.b16 %v1612, %v1608
    %v1653 = vpack.c.b16 %v1613, %v1609
    %v1654 = vpack.c.b16 %v1614, %v1610
    %v1655 = vpack.c.b16 %v1619, %v1615
    %v1656 = vpack.c.b16 %v1620, %v1616
    %v1657 = vpack.c.b16 %v1621, %v1617
    %v1658 = vpack.c.b16 %v1622, %v1618
    %v1659 = vpack.c.b16 %v1627, %v1623
    %v1660 = vpack.c.b16 %v1628, %v1624
    %v1661 = vpack.c.b16 %v1629, %v1625
    %v1662 = vpack.c.b16 %v1630, %v1626
    %1695 = vmatprep.subr.bf16.mxu0 %v1632
    %1696 = vmatpush1.bf16.msra.mxu0 %v1631
    %1697 = vmatprep.subr.bf16.mxu0 %v1636
    %1698 = vmatpush1.bf16.msra.mxu0 %v1635
    %1699 = vmatprep.subr.bf16.mxu0 %v1640
    %1700 = vmatpush1.bf16.msra.mxu0 %v1639
    %1701 = vmatprep.subr.bf16.mxu0 %v1644
    %1702 = vmatpush1.bf16.msra.mxu0 %v1643
    %1703 = vmatprep.subr.bf16.mxu0 %v1648
    %1704 = vmatpush1.bf16.msra.mxu0 %v1647
    %1705 = vmatprep.subr.bf16.mxu0 %v1652
    %1706 = vmatpush1.bf16.msra.mxu0 %v1651
    %1707 = vmatprep.subr.bf16.mxu0 %v1656
    %1708 = vmatpush1.bf16.msra.mxu0 %v1655
    %1709 = vmatprep.subr.bf16.mxu0 %v1660
    %1710 = vmatpush1.bf16.msra.mxu0 %v1659
    %1711 = vmatprep.subr.bf16.mxu0 0
    %1712 = vmatpush1.bf16.msra.mxu0 0
    %1713 = vmatprep.subr.bf16.mxu0 0
    %1714 = vmatpush1.bf16.msra.mxu0 0
    %1715 = vmatprep.subr.bf16.mxu0 0
    %1716 = vmatpush1.bf16.msra.mxu0 0
    %1717 = vmatprep.subr.bf16.mxu0 0
    %1718 = vmatpush1.bf16.msra.mxu0 0
    %1719 = vmatprep.subr.bf16.mxu0 0
    %1720 = vmatpush1.bf16.msra.mxu0 0
    %1721 = vmatprep.subr.bf16.mxu0 0
    %1722 = vmatpush1.bf16.msra.mxu0 0
    %1723 = vmatprep.subr.bf16.mxu0 0
    %1724 = vmatpush1.bf16.msra.mxu0 0
    %1725 = vmatprep.subr.bf16.mxu0 0
    %1726 = vmatpush1.bf16.msra.mxu0 0
    %1727 = vmatprep.mubr.bf16.mxu0 0
    %1728 = vmatmul.mubr.bf16.gmra.mrb[0].mxu0 %v1502
    %v1729 = vpop.f32.mrb[0].mxu0
    %v1730 = vadd.f32 0.0, %v1729
    %v1731 = vpop.f32.mrb[0].mxu0
    %v1732 = vadd.f32 0.0, %v1731
    %v1733 = vpop.f32.mrb[0].mxu0
    %v1734 = vpop.f32.mrb[0].mxu0
    %1735 = vdwg.mxu0
    %1736 = vmatprep.subr.bf16.mxu0 %v1634
    %1737 = vmatpush1.bf16.msra.mxu0 %v1633
    %1738 = vmatprep.subr.bf16.mxu0 %v1638
    %1739 = vmatpush1.bf16.msra.mxu0 %v1637
    %1740 = vmatprep.subr.bf16.mxu0 %v1642
    %1741 = vmatpush1.bf16.msra.mxu0 %v1641
    %1742 = vmatprep.subr.bf16.mxu0 %v1646
    %1743 = vmatpush1.bf16.msra.mxu0 %v1645
    %1744 = vmatprep.subr.bf16.mxu0 %v1650
    %1745 = vmatpush1.bf16.msra.mxu0 %v1649
    %1746 = vmatprep.subr.bf16.mxu0 %v1654
    %1747 = vmatpush1.bf16.msra.mxu0 %v1653
    %1748 = vmatprep.subr.bf16.mxu0 %v1658
    %1749 = vmatpush1.bf16.msra.mxu0 %v1657
    %1750 = vmatprep.subr.bf16.mxu0 %v1662
    %1751 = vmatpush1.bf16.msra.mxu0 %v1661
    %1752 = vmatprep.subr.bf16.mxu0 0
    %1753 = vmatpush1.bf16.msra.mxu0 0
    %1754 = vmatprep.subr.bf16.mxu0 0
    %1755 = vmatpush1.bf16.msra.mxu0 0
    %1756 = vmatprep.subr.bf16.mxu0 0
    %1757 = vmatpush1.bf16.msra.mxu0 0
    %1758 = vmatprep.subr.bf16.mxu0 0
    %1759 = vmatpush1.bf16.msra.mxu0 0
    %1760 = vmatprep.subr.bf16.mxu0 0
    %1761 = vmatpush1.bf16.msra.mxu0 0
    %1762 = vmatprep.subr.bf16.mxu0 0
    %1763 = vmatpush1.bf16.msra.mxu0 0
    %1764 = vmatprep.subr.bf16.mxu0 0
    %1765 = vmatpush1.bf16.msra.mxu0 0
    %1766 = vmatprep.subr.bf16.mxu0 0
    %1767 = vmatpush1.bf16.msra.mxu0 0
    %1768 = vmatprep.mubr.bf16.mxu0 0
    %1769 = vmatmul.mubr.bf16.gmra.mrb[0].mxu0 %v1502
    %v1770 = vpop.f32.mrb[0].mxu0
    %v1771 = vadd.f32 0.0, %v1770
    %v1772 = vpop.f32.mrb[0].mxu0
    %v1773 = vadd.f32 0.0, %v1772
    %v1774 = vpop.f32.mrb[0].mxu0
    %v1775 = vpop.f32.mrb[0].mxu0
    %1776 = vdwg.mxu0
    %v1777 = vadd.f32 %v1498, %v1730
    %v1778 = vadd.f32 %v1499, %v1732
    %v1779 = vadd.f32 %v1500, %v1771
    %v1780 = vadd.f32 %v1501, %v1773
    %v1781 = vxor.u32 %v1777, 2147483648
    %v1782 = vxor.u32 %v1778, 2147483648
    %v1783 = vmul.f32 %v1781, 1.442695
    %v1784 = vpow.pop %v1783
    %v1785 = vmul.f32 %v1782, 1.442695
    %v1786 = vpow.pop %v1785
    %v1787 = vadd.f32 %v1784, 1.0
    %v1788 = vadd.f32 %v1786, 1.0
    %v1789 = vrcp.pop %v1787
    %v1790 = vmul.f32 1.0, %v1789
    %v1791 = vrcp.pop %v1788
    %v1792 = vmul.f32 1.0, %v1791
    %v1793 = vtanh.pop %v1779
    %v1794 = vxor.u32 %v1780, 2147483648
    %v1795 = vmul.f32 %v1794, 1.442695
    %v1796 = vpow.pop %v1795
    %v1797 = vadd.f32 %v1796, 1.0
    %v1798 = vrcp.pop %v1797
    %v1799 = vmul.f32 1.0, %v1798
    %v1800 = vmul.f32 %v1792, %v1187
    %v1801 = vmul.f32 %v1790, %v1793
    %v1802 = vadd.f32 %v1800, %v1801
    %v1803 = vtanh.pop %v1802
    %v1804 = vmul.f32 %v1799, %v1803
    %1805 = vst [vmem:[%s7 + $0x10] sm:$0xff] %v1804
    %v1806 = vld [vmem:[#allocation3 + $0xc0] sm:$0xff]
    %v1807 = vld [vmem:[#allocation3 + $0xc8] sm:$0xff]
    %v1808 = vld [vmem:[#allocation3 + $0xd0] sm:$0xff]
    %v1809 = vld [vmem:[#allocation3 + $0xd8] sm:$0xff]
    %v1810 = vpack.c.bf16 %v1496, %v1496
    %v1811 = vld [vmem:[#allocation8] sm:$0xff]
    %v1812 = vld [vmem:[#allocation8 + $0x8] sm:$0xff]
    %v1813 = vld [vmem:[#allocation8 + $0x10] sm:$0xff]
    %v1814 = vld [vmem:[#allocation8 + $0x18] sm:$0xff]
    %v1815 = vld [vmem:[#allocation8 + $0x20] sm:$0xff]
    %v1816 = vld [vmem:[#allocation8 + $0x28] sm:$0xff]
    %v1817 = vld [vmem:[#allocation8 + $0x30] sm:$0xff]
    %v1818 = vld [vmem:[#allocation8 + $0x38] sm:$0xff]
    %v1819 = vld [vmem:[#allocation8 + $0x40] sm:$0xff]
    %v1820 = vld [vmem:[#allocation8 + $0x48] sm:$0xff]
    %v1821 = vld [vmem:[#allocation8 + $0x50] sm:$0xff]
    %v1822 = vld [vmem:[#allocation8 + $0x58] sm:$0xff]
    %v1823 = vld [vmem:[#allocation8 + $0x60] sm:$0xff]
    %v1824 = vld [vmem:[#allocation8 + $0x68] sm:$0xff]
    %v1825 = vld [vmem:[#allocation8 + $0x70] sm:$0xff]
    %v1826 = vld [vmem:[#allocation8 + $0x78] sm:$0xff]
    %v1827 = vld [vmem:[#allocation8 + $0x80] sm:$0xff]
    %v1828 = vld [vmem:[#allocation8 + $0x88] sm:$0xff]
    %v1829 = vld [vmem:[#allocation8 + $0x90] sm:$0xff]
    %v1830 = vld [vmem:[#allocation8 + $0x98] sm:$0xff]
    %v1831 = vld [vmem:[#allocation8 + $0xa0] sm:$0xff]
    %v1832 = vld [vmem:[#allocation8 + $0xa8] sm:$0xff]
    %v1833 = vld [vmem:[#allocation8 + $0xb0] sm:$0xff]
    %v1834 = vld [vmem:[#allocation8 + $0xb8] sm:$0xff]
    %v1835 = vld [vmem:[#allocation8 + $0xc0] sm:$0xff]
    %v1836 = vld [vmem:[#allocation8 + $0xc8] sm:$0xff]
    %v1837 = vld [vmem:[#allocation8 + $0xd0] sm:$0xff]
    %v1838 = vld [vmem:[#allocation8 + $0xd8] sm:$0xff]
    %v1839 = vld [vmem:[#allocation8 + $0xe0] sm:$0xff]
    %v1840 = vld [vmem:[#allocation8 + $0xe8] sm:$0xff]
    %v1841 = vld [vmem:[#allocation8 + $0xf0] sm:$0xff]
    %v1842 = vld [vmem:[#allocation8 + $0xf8] sm:$0xff]
    %v1875 = vunpack.c.l.b16 %v1811
    %v1876 = vunpack.c.h.b16 %v1811
    %v1877 = vunpack.c.l.b16 %v1812
    %v1878 = vunpack.c.h.b16 %v1812
    %v1879 = vunpack.c.l.b16 %v1813
    %v1880 = vunpack.c.h.b16 %v1813
    %v1881 = vunpack.c.l.b16 %v1814
    %v1882 = vunpack.c.h.b16 %v1814
    %v1883 = vunpack.c.l.b16 %v1815
    %v1884 = vunpack.c.h.b16 %v1815
    %v1885 = vunpack.c.l.b16 %v1816
    %v1886 = vunpack.c.h.b16 %v1816
    %v1887 = vunpack.c.l.b16 %v1817
    %v1888 = vunpack.c.h.b16 %v1817
    %v1889 = vunpack.c.l.b16 %v1818
    %v1890 = vunpack.c.h.b16 %v1818
    %v1891 = vunpack.c.l.b16 %v1819
    %v1892 = vunpack.c.h.b16 %v1819
    %v1893 = vunpack.c.l.b16 %v1820
    %v1894 = vunpack.c.h.b16 %v1820
    %v1895 = vunpack.c.l.b16 %v1821
    %v1896 = vunpack.c.h.b16 %v1821
    %v1897 = vunpack.c.l.b16 %v1822
    %v1898 = vunpack.c.h.b16 %v1822
    %v1899 = vunpack.c.l.b16 %v1823
    %v1900 = vunpack.c.h.b16 %v1823
    %v1901 = vunpack.c.l.b16 %v1824
    %v1902 = vunpack.c.h.b16 %v1824
    %v1903 = vunpack.c.l.b16 %v1825
    %v1904 = vunpack.c.h.b16 %v1825
    %v1905 = vunpack.c.l.b16 %v1826
    %v1906 = vunpack.c.h.b16 %v1826
    %v1907 = vunpack.c.l.b16 %v1827
    %v1908 = vunpack.c.h.b16 %v1827
    %v1909 = vunpack.c.l.b16 %v1828
    %v1910 = vunpack.c.h.b16 %v1828
    %v1911 = vunpack.c.l.b16 %v1829
    %v1912 = vunpack.c.h.b16 %v1829
    %v1913 = vunpack.c.l.b16 %v1830
    %v1914 = vunpack.c.h.b16 %v1830
    %v1915 = vunpack.c.l.b16 %v1831
    %v1916 = vunpack.c.h.b16 %v1831
    %v1917 = vunpack.c.l.b16 %v1832
    %v1918 = vunpack.c.h.b16 %v1832
    %v1919 = vunpack.c.l.b16 %v1833
    %v1920 = vunpack.c.h.b16 %v1833
    %v1921 = vunpack.c.l.b16 %v1834
    %v1922 = vunpack.c.h.b16 %v1834
    %v1923 = vunpack.c.l.b16 %v1835
    %v1924 = vunpack.c.h.b16 %v1835
    %v1925 = vunpack.c.l.b16 %v1836
    %v1926 = vunpack.c.h.b16 %v1836
    %v1927 = vunpack.c.l.b16 %v1837
    %v1928 = vunpack.c.h.b16 %v1837
    %v1929 = vunpack.c.l.b16 %v1838
    %v1930 = vunpack.c.h.b16 %v1838
    %v1931 = vunpack.c.l.b16 %v1839
    %v1932 = vunpack.c.h.b16 %v1839
    %v1933 = vunpack.c.l.b16 %v1840
    %v1934 = vunpack.c.h.b16 %v1840
    %v1935 = vunpack.c.l.b16 %v1841
    %v1936 = vunpack.c.h.b16 %v1841
    %v1937 = vunpack.c.l.b16 %v1842
    %v1938 = vunpack.c.h.b16 %v1842
    %v1939 = vpack.c.b16 %v1879, %v1875
    %v1940 = vpack.c.b16 %v1880, %v1876
    %v1941 = vpack.c.b16 %v1881, %v1877
    %v1942 = vpack.c.b16 %v1882, %v1878
    %v1943 = vpack.c.b16 %v1887, %v1883
    %v1944 = vpack.c.b16 %v1888, %v1884
    %v1945 = vpack.c.b16 %v1889, %v1885
    %v1946 = vpack.c.b16 %v1890, %v1886
    %v1947 = vpack.c.b16 %v1895, %v1891
    %v1948 = vpack.c.b16 %v1896, %v1892
    %v1949 = vpack.c.b16 %v1897, %v1893
    %v1950 = vpack.c.b16 %v1898, %v1894
    %v1951 = vpack.c.b16 %v1903, %v1899
    %v1952 = vpack.c.b16 %v1904, %v1900
    %v1953 = vpack.c.b16 %v1905, %v1901
    %v1954 = vpack.c.b16 %v1906, %v1902
    %v1955 = vpack.c.b16 %v1911, %v1907
    %v1956 = vpack.c.b16 %v1912, %v1908
    %v1957 = vpack.c.b16 %v1913, %v1909
    %v1958 = vpack.c.b16 %v1914, %v1910
    %v1959 = vpack.c.b16 %v1919, %v1915
    %v1960 = vpack.c.b16 %v1920, %v1916
    %v1961 = vpack.c.b16 %v1921, %v1917
    %v1962 = vpack.c.b16 %v1922, %v1918
    %v1963 = vpack.c.b16 %v1927, %v1923
    %v1964 = vpack.c.b16 %v1928, %v1924
    %v1965 = vpack.c.b16 %v1929, %v1925
    %v1966 = vpack.c.b16 %v1930, %v1926
    %v1967 = vpack.c.b16 %v1935, %v1931
    %v1968 = vpack.c.b16 %v1936, %v1932
    %v1969 = vpack.c.b16 %v1937, %v1933
    %v1970 = vpack.c.b16 %v1938, %v1934
    %2003 = vmatprep.subr.bf16.mxu0 %v1940
    %2004 = vmatpush1.bf16.msra.mxu0 %v1939
    %2005 = vmatprep.subr.bf16.mxu0 %v1944
    %2006 = vmatpush1.bf16.msra.mxu0 %v1943
    %2007 = vmatprep.subr.bf16.mxu0 %v1948
    %2008 = vmatpush1.bf16.msra.mxu0 %v1947
    %2009 = vmatprep.subr.bf16.mxu0 %v1952
    %2010 = vmatpush1.bf16.msra.mxu0 %v1951
    %2011 = vmatprep.subr.bf16.mxu0 %v1956
    %2012 = vmatpush1.bf16.msra.mxu0 %v1955
    %2013 = vmatprep.subr.bf16.mxu0 %v1960
    %2014 = vmatpush1.bf16.msra.mxu0 %v1959
    %2015 = vmatprep.subr.bf16.mxu0 %v1964
    %2016 = vmatpush1.bf16.msra.mxu0 %v1963
    %2017 = vmatprep.subr.bf16.mxu0 %v1968
    %2018 = vmatpush1.bf16.msra.mxu0 %v1967
    %2019 = vmatprep.subr.bf16.mxu0 0
    %2020 = vmatpush1.bf16.msra.mxu0 0
    %2021 = vmatprep.subr.bf16.mxu0 0
    %2022 = vmatpush1.bf16.msra.mxu0 0
    %2023 = vmatprep.subr.bf16.mxu0 0
    %2024 = vmatpush1.bf16.msra.mxu0 0
    %2025 = vmatprep.subr.bf16.mxu0 0
    %2026 = vmatpush1.bf16.msra.mxu0 0
    %2027 = vmatprep.subr.bf16.mxu0 0
    %2028 = vmatpush1.bf16.msra.mxu0 0
    %2029 = vmatprep.subr.bf16.mxu0 0
    %2030 = vmatpush1.bf16.msra.mxu0 0
    %2031 = vmatprep.subr.bf16.mxu0 0
    %2032 = vmatpush1.bf16.msra.mxu0 0
    %2033 = vmatprep.subr.bf16.mxu0 0
    %2034 = vmatpush1.bf16.msra.mxu0 0
    %2035 = vmatprep.mubr.bf16.mxu0 0
    %2036 = vmatmul.mubr.bf16.gmra.mrb[0].mxu0 %v1810
    %v2037 = vpop.f32.mrb[0].mxu0
    %v2038 = vadd.f32 0.0, %v2037
    %v2039 = vpop.f32.mrb[0].mxu0
    %v2040 = vadd.f32 0.0, %v2039
    %v2041 = vpop.f32.mrb[0].mxu0
    %v2042 = vpop.f32.mrb[0].mxu0
    %2043 = vdwg.mxu0
    %2044 = vmatprep.subr.bf16.mxu0 %v1942
    %2045 = vmatpush1.bf16.msra.mxu0 %v1941
    %2046 = vmatprep.subr.bf16.mxu0 %v1946
    %2047 = vmatpush1.bf16.msra.mxu0 %v1945
    %2048 = vmatprep.subr.bf16.mxu0 %v1950
    %2049 = vmatpush1.bf16.msra.mxu0 %v1949
    %2050 = vmatprep.subr.bf16.mxu0 %v1954
    %2051 = vmatpush1.bf16.msra.mxu0 %v1953
    %2052 = vmatprep.subr.bf16.mxu0 %v1958
    %2053 = vmatpush1.bf16.msra.mxu0 %v1957
    %2054 = vmatprep.subr.bf16.mxu0 %v1962
    %2055 = vmatpush1.bf16.msra.mxu0 %v1961
    %2056 = vmatprep.subr.bf16.mxu0 %v1966
    %2057 = vmatpush1.bf16.msra.mxu0 %v1965
    %2058 = vmatprep.subr.bf16.mxu0 %v1970
    %2059 = vmatpush1.bf16.msra.mxu0 %v1969
    %2060 = vmatprep.subr.bf16.mxu0 0
    %2061 = vmatpush1.bf16.msra.mxu0 0
    %2062 = vmatprep.subr.bf16.mxu0 0
    %2063 = vmatpush1.bf16.msra.mxu0 0
    %2064 = vmatprep.subr.bf16.mxu0 0
    %2065 = vmatpush1.bf16.msra.mxu0 0
    %2066 = vmatprep.subr.bf16.mxu0 0
    %2067 = vmatpush1.bf16.msra.mxu0 0
    %2068 = vmatprep.subr.bf16.mxu0 0
    %2069 = vmatpush1.bf16.msra.mxu0 0
    %2070 = vmatprep.subr.bf16.mxu0 0
    %2071 = vmatpush1.bf16.msra.mxu0 0
    %2072 = vmatprep.subr.bf16.mxu0 0
    %2073 = vmatpush1.bf16.msra.mxu0 0
    %2074 = vmatprep.subr.bf16.mxu0 0
    %2075 = vmatpush1.bf16.msra.mxu0 0
    %2076 = vmatprep.mubr.bf16.mxu0 0
    %2077 = vmatmul.mubr.bf16.gmra.mrb[0].mxu0 %v1810
    %v2078 = vpop.f32.mrb[0].mxu0
    %v2079 = vadd.f32 0.0, %v2078
    %v2080 = vpop.f32.mrb[0].mxu0
    %v2081 = vadd.f32 0.0, %v2080
    %v2082 = vpop.f32.mrb[0].mxu0
    %v2083 = vpop.f32.mrb[0].mxu0
    %2084 = vdwg.mxu0
    %v2085 = vadd.f32 %v1806, %v2038
    %v2086 = vadd.f32 %v1807, %v2040
    %v2087 = vadd.f32 %v1808, %v2079
    %v2088 = vadd.f32 %v1809, %v2081
    %v2089 = vxor.u32 %v2085, 2147483648
    %v2090 = vxor.u32 %v2086, 2147483648
    %v2091 = vmul.f32 %v2089, 1.442695
    %v2092 = vpow.pop %v2091
    %v2093 = vmul.f32 %v2090, 1.442695
    %v2094 = vpow.pop %v2093
    %v2095 = vadd.f32 %v2092, 1.0
    %v2096 = vadd.f32 %v2094, 1.0
    %v2097 = vrcp.pop %v2095
    %v2098 = vmul.f32 1.0, %v2097
    %v2099 = vrcp.pop %v2096
    %v2100 = vmul.f32 1.0, %v2099
    %v2101 = vtanh.pop %v2087
    %v2102 = vxor.u32 %v2088, 2147483648
    %v2103 = vmul.f32 %v2102, 1.442695
    %v2104 = vpow.pop %v2103
    %v2105 = vadd.f32 %v2104, 1.0
    %v2106 = vrcp.pop %v2105
    %v2107 = vmul.f32 1.0, %v2106
    %v2108 = vmul.f32 %v2100, %v1494
    %v2109 = vmul.f32 %v2098, %v2101
    %v2110 = vadd.f32 %v2108, %v2109
    %v2111 = vtanh.pop %v2110
    %v2112 = vmul.f32 %v2107, %v2111
    %2113 = vst [vmem:[%s7 + $0x68] sm:$0xff] %v2112
    %v2114 = vld [vmem:[#allocation2 + $0x40] sm:$0xff]
    %v2115 = vld [vmem:[#allocation2 + $0x48] sm:$0xff]
    %v2116 = vld [vmem:[#allocation2 + $0x50] sm:$0xff]
    %v2117 = vld [vmem:[#allocation2 + $0x58] sm:$0xff]
    %v2118 = vpack.c.bf16 %v1804, %v1804
    %v2119 = vld [vmem:[#allocation4] sm:$0xff]
    %v2120 = vld [vmem:[#allocation4 + $0x8] sm:$0xff]
    %v2121 = vld [vmem:[#allocation4 + $0x10] sm:$0xff]
    %v2122 = vld [vmem:[#allocation4 + $0x18] sm:$0xff]
    %v2123 = vld [vmem:[#allocation4 + $0x20] sm:$0xff]
    %v2124 = vld [vmem:[#allocation4 + $0x28] sm:$0xff]
    %v2125 = vld [vmem:[#allocation4 + $0x30] sm:$0xff]
    %v2126 = vld [vmem:[#allocation4 + $0x38] sm:$0xff]
    %v2127 = vld [vmem:[#allocation4 + $0x40] sm:$0xff]
    %v2128 = vld [vmem:[#allocation4 + $0x48] sm:$0xff]
    %v2129 = vld [vmem:[#allocation4 + $0x50] sm:$0xff]
    %v2130 = vld [vmem:[#allocation4 + $0x58] sm:$0xff]
    %v2131 = vld [vmem:[#allocation4 + $0x60] sm:$0xff]
    %v2132 = vld [vmem:[#allocation4 + $0x68] sm:$0xff]
    %v2133 = vld [vmem:[#allocation4 + $0x70] sm:$0xff]
    %v2134 = vld [vmem:[#allocation4 + $0x78] sm:$0xff]
    %v2135 = vld [vmem:[#allocation4 + $0x80] sm:$0xff]
    %v2136 = vld [vmem:[#allocation4 + $0x88] sm:$0xff]
    %v2137 = vld [vmem:[#allocation4 + $0x90] sm:$0xff]
    %v2138 = vld [vmem:[#allocation4 + $0x98] sm:$0xff]
    %v2139 = vld [vmem:[#allocation4 + $0xa0] sm:$0xff]
    %v2140 = vld [vmem:[#allocation4 + $0xa8] sm:$0xff]
    %v2141 = vld [vmem:[#allocation4 + $0xb0] sm:$0xff]
    %v2142 = vld [vmem:[#allocation4 + $0xb8] sm:$0xff]
    %v2143 = vld [vmem:[#allocation4 + $0xc0] sm:$0xff]
    %v2144 = vld [vmem:[#allocation4 + $0xc8] sm:$0xff]
    %v2145 = vld [vmem:[#allocation4 + $0xd0] sm:$0xff]
    %v2146 = vld [vmem:[#allocation4 + $0xd8] sm:$0xff]
    %v2147 = vld [vmem:[#allocation4 + $0xe0] sm:$0xff]
    %v2148 = vld [vmem:[#allocation4 + $0xe8] sm:$0xff]
    %v2149 = vld [vmem:[#allocation4 + $0xf0] sm:$0xff]
    %v2150 = vld [vmem:[#allocation4 + $0xf8] sm:$0xff]
    %v2183 = vunpack.c.l.b16 %v2119
    %v2184 = vunpack.c.h.b16 %v2119
    %v2185 = vunpack.c.l.b16 %v2120
    %v2186 = vunpack.c.h.b16 %v2120
    %v2187 = vunpack.c.l.b16 %v2121
    %v2188 = vunpack.c.h.b16 %v2121
    %v2189 = vunpack.c.l.b16 %v2122
    %v2190 = vunpack.c.h.b16 %v2122
    %v2191 = vunpack.c.l.b16 %v2123
    %v2192 = vunpack.c.h.b16 %v2123
    %v2193 = vunpack.c.l.b16 %v2124
    %v2194 = vunpack.c.h.b16 %v2124
    %v2195 = vunpack.c.l.b16 %v2125
    %v2196 = vunpack.c.h.b16 %v2125
    %v2197 = vunpack.c.l.b16 %v2126
    %v2198 = vunpack.c.h.b16 %v2126
    %v2199 = vunpack.c.l.b16 %v2127
    %v2200 = vunpack.c.h.b16 %v2127
    %v2201 = vunpack.c.l.b16 %v2128
    %v2202 = vunpack.c.h.b16 %v2128
    %v2203 = vunpack.c.l.b16 %v2129
    %v2204 = vunpack.c.h.b16 %v2129
    %v2205 = vunpack.c.l.b16 %v2130
    %v2206 = vunpack.c.h.b16 %v2130
    %v2207 = vunpack.c.l.b16 %v2131
    %v2208 = vunpack.c.h.b16 %v2131
    %v2209 = vunpack.c.l.b16 %v2132
    %v2210 = vunpack.c.h.b16 %v2132
    %v2211 = vunpack.c.l.b16 %v2133
    %v2212 = vunpack.c.h.b16 %v2133
    %v2213 = vunpack.c.l.b16 %v2134
    %v2214 = vunpack.c.h.b16 %v2134
    %v2215 = vunpack.c.l.b16 %v2135
    %v2216 = vunpack.c.h.b16 %v2135
    %v2217 = vunpack.c.l.b16 %v2136
    %v2218 = vunpack.c.h.b16 %v2136
    %v2219 = vunpack.c.l.b16 %v2137
    %v2220 = vunpack.c.h.b16 %v2137
    %v2221 = vunpack.c.l.b16 %v2138
    %v2222 = vunpack.c.h.b16 %v2138
    %v2223 = vunpack.c.l.b16 %v2139
    %v2224 = vunpack.c.h.b16 %v2139
    %v2225 = vunpack.c.l.b16 %v2140
    %v2226 = vunpack.c.h.b16 %v2140
    %v2227 = vunpack.c.l.b16 %v2141
    %v2228 = vunpack.c.h.b16 %v2141
    %v2229 = vunpack.c.l.b16 %v2142
    %v2230 = vunpack.c.h.b16 %v2142
    %v2231 = vunpack.c.l.b16 %v2143
    %v2232 = vunpack.c.h.b16 %v2143
    %v2233 = vunpack.c.l.b16 %v2144
    %v2234 = vunpack.c.h.b16 %v2144
    %v2235 = vunpack.c.l.b16 %v2145
    %v2236 = vunpack.c.h.b16 %v2145
    %v2237 = vunpack.c.l.b16 %v2146
    %v2238 = vunpack.c.h.b16 %v2146
    %v2239 = vunpack.c.l.b16 %v2147
    %v2240 = vunpack.c.h.b16 %v2147
    %v2241 = vunpack.c.l.b16 %v2148
    %v2242 = vunpack.c.h.b16 %v2148
    %v2243 = vunpack.c.l.b16 %v2149
    %v2244 = vunpack.c.h.b16 %v2149
    %v2245 = vunpack.c.l.b16 %v2150
    %v2246 = vunpack.c.h.b16 %v2150
    %v2247 = vpack.c.b16 %v2187, %v2183
    %v2248 = vpack.c.b16 %v2188, %v2184
    %v2249 = vpack.c.b16 %v2189, %v2185
    %v2250 = vpack.c.b16 %v2190, %v2186
    %v2251 = vpack.c.b16 %v2195, %v2191
    %v2252 = vpack.c.b16 %v2196, %v2192
    %v2253 = vpack.c.b16 %v2197, %v2193
    %v2254 = vpack.c.b16 %v2198, %v2194
    %v2255 = vpack.c.b16 %v2203, %v2199
    %v2256 = vpack.c.b16 %v2204, %v2200
    %v2257 = vpack.c.b16 %v2205, %v2201
    %v2258 = vpack.c.b16 %v2206, %v2202
    %v2259 = vpack.c.b16 %v2211, %v2207
    %v2260 = vpack.c.b16 %v2212, %v2208
    %v2261 = vpack.c.b16 %v2213, %v2209
    %v2262 = vpack.c.b16 %v2214, %v2210
    %v2263 = vpack.c.b16 %v2219, %v2215
    %v2264 = vpack.c.b16 %v2220, %v2216
    %v2265 = vpack.c.b16 %v2221, %v2217
    %v2266 = vpack.c.b16 %v2222, %v2218
    %v2267 = vpack.c.b16 %v2227, %v2223
    %v2268 = vpack.c.b16 %v2228, %v2224
    %v2269 = vpack.c.b16 %v2229, %v2225
    %v2270 = vpack.c.b16 %v2230, %v2226
    %v2271 = vpack.c.b16 %v2235, %v2231
    %v2272 = vpack.c.b16 %v2236, %v2232
    %v2273 = vpack.c.b16 %v2237, %v2233
    %v2274 = vpack.c.b16 %v2238, %v2234
    %v2275 = vpack.c.b16 %v2243, %v2239
    %v2276 = vpack.c.b16 %v2244, %v2240
    %v2277 = vpack.c.b16 %v2245, %v2241
    %v2278 = vpack.c.b16 %v2246, %v2242
    %2311 = vmatprep.subr.bf16.mxu0 %v2248
    %2312 = vmatpush1.bf16.msra.mxu0 %v2247
    %2313 = vmatprep.subr.bf16.mxu0 %v2252
    %2314 = vmatpush1.bf16.msra.mxu0 %v2251
    %2315 = vmatprep.subr.bf16.mxu0 %v2256
    %2316 = vmatpush1.bf16.msra.mxu0 %v2255
    %2317 = vmatprep.subr.bf16.mxu0 %v2260
    %2318 = vmatpush1.bf16.msra.mxu0 %v2259
    %2319 = vmatprep.subr.bf16.mxu0 %v2264
    %2320 = vmatpush1.bf16.msra.mxu0 %v2263
    %2321 = vmatprep.subr.bf16.mxu0 %v2268
    %2322 = vmatpush1.bf16.msra.mxu0 %v2267
    %2323 = vmatprep.subr.bf16.mxu0 %v2272
    %2324 = vmatpush1.bf16.msra.mxu0 %v2271
    %2325 = vmatprep.subr.bf16.mxu0 %v2276
    %2326 = vmatpush1.bf16.msra.mxu0 %v2275
    %2327 = vmatprep.subr.bf16.mxu0 0
    %2328 = vmatpush1.bf16.msra.mxu0 0
    %2329 = vmatprep.subr.bf16.mxu0 0
    %2330 = vmatpush1.bf16.msra.mxu0 0
    %2331 = vmatprep.subr.bf16.mxu0 0
    %2332 = vmatpush1.bf16.msra.mxu0 0
    %2333 = vmatprep.subr.bf16.mxu0 0
    %2334 = vmatpush1.bf16.msra.mxu0 0
    %2335 = vmatprep.subr.bf16.mxu0 0
    %2336 = vmatpush1.bf16.msra.mxu0 0
    %2337 = vmatprep.subr.bf16.mxu0 0
    %2338 = vmatpush1.bf16.msra.mxu0 0
    %2339 = vmatprep.subr.bf16.mxu0 0
    %2340 = vmatpush1.bf16.msra.mxu0 0
    %2341 = vmatprep.subr.bf16.mxu0 0
    %2342 = vmatpush1.bf16.msra.mxu0 0
    %2343 = vmatprep.mubr.bf16.mxu0 0
    %2344 = vmatmul.mubr.bf16.gmra.mrb[0].mxu0 %v2118
    %v2345 = vpop.f32.mrb[0].mxu0
    %v2346 = vadd.f32 0.0, %v2345
    %v2347 = vpop.f32.mrb[0].mxu0
    %v2348 = vadd.f32 0.0, %v2347
    %v2349 = vpop.f32.mrb[0].mxu0
    %v2350 = vpop.f32.mrb[0].mxu0
    %2351 = vdwg.mxu0
    %2352 = vmatprep.subr.bf16.mxu0 %v2250
    %2353 = vmatpush1.bf16.msra.mxu0 %v2249
    %2354 = vmatprep.subr.bf16.mxu0 %v2254
    %2355 = vmatpush1.bf16.msra.mxu0 %v2253
    %2356 = vmatprep.subr.bf16.mxu0 %v2258
    %2357 = vmatpush1.bf16.msra.mxu0 %v2257
    %2358 = vmatprep.subr.bf16.mxu0 %v2262
    %2359 = vmatpush1.bf16.msra.mxu0 %v2261
    %2360 = vmatprep.subr.bf16.mxu0 %v2266
    %2361 = vmatpush1.bf16.msra.mxu0 %v2265
    %2362 = vmatprep.subr.bf16.mxu0 %v2270
    %2363 = vmatpush1.bf16.msra.mxu0 %v2269
    %2364 = vmatprep.subr.bf16.mxu0 %v2274
    %2365 = vmatpush1.bf16.msra.mxu0 %v2273
    %2366 = vmatprep.subr.bf16.mxu0 %v2278
    %2367 = vmatpush1.bf16.msra.mxu0 %v2277
    %2368 = vmatprep.subr.bf16.mxu0 0
    %2369 = vmatpush1.bf16.msra.mxu0 0
    %2370 = vmatprep.subr.bf16.mxu0 0
    %2371 = vmatpush1.bf16.msra.mxu0 0
    %2372 = vmatprep.subr.bf16.mxu0 0
    %2373 = vmatpush1.bf16.msra.mxu0 0
    %2374 = vmatprep.subr.bf16.mxu0 0
    %2375 = vmatpush1.bf16.msra.mxu0 0
    %2376 = vmatprep.subr.bf16.mxu0 0
    %2377 = vmatpush1.bf16.msra.mxu0 0
    %2378 = vmatprep.subr.bf16.mxu0 0
    %2379 = vmatpush1.bf16.msra.mxu0 0
    %2380 = vmatprep.subr.bf16.mxu0 0
    %2381 = vmatpush1.bf16.msra.mxu0 0
    %2382 = vmatprep.subr.bf16.mxu0 0
    %2383 = vmatpush1.bf16.msra.mxu0 0
    %2384 = vmatprep.mubr.bf16.mxu0 0
    %2385 = vmatmul.mubr.bf16.gmra.mrb[0].mxu0 %v2118
    %v2386 = vpop.f32.mrb[0].mxu0
    %v2387 = vadd.f32 0.0, %v2386
    %v2388 = vpop.f32.mrb[0].mxu0
    %v2389 = vadd.f32 0.0, %v2388
    %v2390 = vpop.f32.mrb[0].mxu0
    %v2391 = vpop.f32.mrb[0].mxu0
    %2392 = vdwg.mxu0
    %v2393 = vadd.f32 %v2114, %v2346
    %v2394 = vadd.f32 %v2115, %v2348
    %v2395 = vadd.f32 %v2116, %v2387
    %v2396 = vadd.f32 %v2117, %v2389
    %v2397 = vxor.u32 %v2393, 2147483648
    %v2398 = vxor.u32 %v2394, 2147483648
    %v2399 = vmul.f32 %v2397, 1.442695
    %v2400 = vpow.pop %v2399
    %v2401 = vmul.f32 %v2398, 1.442695
    %v2402 = vpow.pop %v2401
    %v2403 = vadd.f32 %v2400, 1.0
    %v2404 = vadd.f32 %v2402, 1.0
    %v2405 = vrcp.pop %v2403
    %v2406 = vmul.f32 1.0, %v2405
    %v2407 = vrcp.pop %v2404
    %v2408 = vmul.f32 1.0, %v2407
    %v2409 = vtanh.pop %v2395
    %v2410 = vxor.u32 %v2396, 2147483648
    %v2411 = vmul.f32 %v2410, 1.442695
    %v2412 = vpow.pop %v2411
    %v2413 = vadd.f32 %v2412, 1.0
    %v2414 = vrcp.pop %v2413
    %v2415 = vmul.f32 1.0, %v2414
    %v2416 = vmul.f32 %v2408, %v1802
    %v2417 = vmul.f32 %v2406, %v2409
    %v2418 = vadd.f32 %v2416, %v2417
    %v2419 = vtanh.pop %v2418
    %v2420 = vmul.f32 %v2415, %v2419
    %2421 = vst [vmem:[%s7 + $0x20] sm:$0xff] %v2420
    %v2422 = vld [vmem:[#allocation3 + $0xa0] sm:$0xff]
    %v2423 = vld [vmem:[#allocation3 + $0xa8] sm:$0xff]
    %v2424 = vld [vmem:[#allocation3 + $0xb0] sm:$0xff]
    %v2425 = vld [vmem:[#allocation3 + $0xb8] sm:$0xff]
    %v2426 = vpack.c.bf16 %v2112, %v2112
    %v2427 = vld [vmem:[#allocation8] sm:$0xff]
    %v2428 = vld [vmem:[#allocation8 + $0x8] sm:$0xff]
    %v2429 = vld [vmem:[#allocation8 + $0x10] sm:$0xff]
    %v2430 = vld [vmem:[#allocation8 + $0x18] sm:$0xff]
    %v2431 = vld [vmem:[#allocation8 + $0x20] sm:$0xff]
    %v2432 = vld [vmem:[#allocation8 + $0x28] sm:$0xff]
    %v2433 = vld [vmem:[#allocation8 + $0x30] sm:$0xff]
    %v2434 = vld [vmem:[#allocation8 + $0x38] sm:$0xff]
    %v2435 = vld [vmem:[#allocation8 + $0x40] sm:$0xff]
    %v2436 = vld [vmem:[#allocation8 + $0x48] sm:$0xff]
    %v2437 = vld [vmem:[#allocation8 + $0x50] sm:$0xff]
    %v2438 = vld [vmem:[#allocation8 + $0x58] sm:$0xff]
    %v2439 = vld [vmem:[#allocation8 + $0x60] sm:$0xff]
    %v2440 = vld [vmem:[#allocation8 + $0x68] sm:$0xff]
    %v2441 = vld [vmem:[#allocation8 + $0x70] sm:$0xff]
    %v2442 = vld [vmem:[#allocation8 + $0x78] sm:$0xff]
    %v2443 = vld [vmem:[#allocation8 + $0x80] sm:$0xff]
    %v2444 = vld [vmem:[#allocation8 + $0x88] sm:$0xff]
    %v2445 = vld [vmem:[#allocation8 + $0x90] sm:$0xff]
    %v2446 = vld [vmem:[#allocation8 + $0x98] sm:$0xff]
    %v2447 = vld [vmem:[#allocation8 + $0xa0] sm:$0xff]
    %v2448 = vld [vmem:[#allocation8 + $0xa8] sm:$0xff]
    %v2449 = vld [vmem:[#allocation8 + $0xb0] sm:$0xff]
    %v2450 = vld [vmem:[#allocation8 + $0xb8] sm:$0xff]
    %v2451 = vld [vmem:[#allocation8 + $0xc0] sm:$0xff]
    %v2452 = vld [vmem:[#allocation8 + $0xc8] sm:$0xff]
    %v2453 = vld [vmem:[#allocation8 + $0xd0] sm:$0xff]
    %v2454 = vld [vmem:[#allocation8 + $0xd8] sm:$0xff]
    %v2455 = vld [vmem:[#allocation8 + $0xe0] sm:$0xff]
    %v2456 = vld [vmem:[#allocation8 + $0xe8] sm:$0xff]
    %v2457 = vld [vmem:[#allocation8 + $0xf0] sm:$0xff]
    %v2458 = vld [vmem:[#allocation8 + $0xf8] sm:$0xff]
    %v2491 = vunpack.c.l.b16 %v2427
    %v2492 = vunpack.c.h.b16 %v2427
    %v2493 = vunpack.c.l.b16 %v2428
    %v2494 = vunpack.c.h.b16 %v2428
    %v2495 = vunpack.c.l.b16 %v2429
    %v2496 = vunpack.c.h.b16 %v2429
    %v2497 = vunpack.c.l.b16 %v2430
    %v2498 = vunpack.c.h.b16 %v2430
    %v2499 = vunpack.c.l.b16 %v2431
    %v2500 = vunpack.c.h.b16 %v2431
    %v2501 = vunpack.c.l.b16 %v2432
    %v2502 = vunpack.c.h.b16 %v2432
    %v2503 = vunpack.c.l.b16 %v2433
    %v2504 = vunpack.c.h.b16 %v2433
    %v2505 = vunpack.c.l.b16 %v2434
    %v2506 = vunpack.c.h.b16 %v2434
    %v2507 = vunpack.c.l.b16 %v2435
    %v2508 = vunpack.c.h.b16 %v2435
    %v2509 = vunpack.c.l.b16 %v2436
    %v2510 = vunpack.c.h.b16 %v2436
    %v2511 = vunpack.c.l.b16 %v2437
    %v2512 = vunpack.c.h.b16 %v2437
    %v2513 = vunpack.c.l.b16 %v2438
    %v2514 = vunpack.c.h.b16 %v2438
    %v2515 = vunpack.c.l.b16 %v2439
    %v2516 = vunpack.c.h.b16 %v2439
    %v2517 = vunpack.c.l.b16 %v2440
    %v2518 = vunpack.c.h.b16 %v2440
    %v2519 = vunpack.c.l.b16 %v2441
    %v2520 = vunpack.c.h.b16 %v2441
    %v2521 = vunpack.c.l.b16 %v2442
    %v2522 = vunpack.c.h.b16 %v2442
    %v2523 = vunpack.c.l.b16 %v2443
    %v2524 = vunpack.c.h.b16 %v2443
    %v2525 = vunpack.c.l.b16 %v2444
    %v2526 = vunpack.c.h.b16 %v2444
    %v2527 = vunpack.c.l.b16 %v2445
    %v2528 = vunpack.c.h.b16 %v2445
    %v2529 = vunpack.c.l.b16 %v2446
    %v2530 = vunpack.c.h.b16 %v2446
    %v2531 = vunpack.c.l.b16 %v2447
    %v2532 = vunpack.c.h.b16 %v2447
    %v2533 = vunpack.c.l.b16 %v2448
    %v2534 = vunpack.c.h.b16 %v2448
    %v2535 = vunpack.c.l.b16 %v2449
    %v2536 = vunpack.c.h.b16 %v2449
    %v2537 = vunpack.c.l.b16 %v2450
    %v2538 = vunpack.c.h.b16 %v2450
    %v2539 = vunpack.c.l.b16 %v2451
    %v2540 = vunpack.c.h.b16 %v2451
    %v2541 = vunpack.c.l.b16 %v2452
    %v2542 = vunpack.c.h.b16 %v2452
    %v2543 = vunpack.c.l.b16 %v2453
    %v2544 = vunpack.c.h.b16 %v2453
    %v2545 = vunpack.c.l.b16 %v2454
    %v2546 = vunpack.c.h.b16 %v2454
    %v2547 = vunpack.c.l.b16 %v2455
    %v2548 = vunpack.c.h.b16 %v2455
    %v2549 = vunpack.c.l.b16 %v2456
    %v2550 = vunpack.c.h.b16 %v2456
    %v2551 = vunpack.c.l.b16 %v2457
    %v2552 = vunpack.c.h.b16 %v2457
    %v2553 = vunpack.c.l.b16 %v2458
    %v2554 = vunpack.c.h.b16 %v2458
    %v2555 = vpack.c.b16 %v2495, %v2491
    %v2556 = vpack.c.b16 %v2496, %v2492
    %v2557 = vpack.c.b16 %v2497, %v2493
    %v2558 = vpack.c.b16 %v2498, %v2494
    %v2559 = vpack.c.b16 %v2503, %v2499
    %v2560 = vpack.c.b16 %v2504, %v2500
    %v2561 = vpack.c.b16 %v2505, %v2501
    %v2562 = vpack.c.b16 %v2506, %v2502
    %v2563 = vpack.c.b16 %v2511, %v2507
    %v2564 = vpack.c.b16 %v2512, %v2508
    %v2565 = vpack.c.b16 %v2513, %v2509
    %v2566 = vpack.c.b16 %v2514, %v2510
    %v2567 = vpack.c.b16 %v2519, %v2515
    %v2568 = vpack.c.b16 %v2520, %v2516
    %v2569 = vpack.c.b16 %v2521, %v2517
    %v2570 = vpack.c.b16 %v2522, %v2518
    %v2571 = vpack.c.b16 %v2527, %v2523
    %v2572 = vpack.c.b16 %v2528, %v2524
    %v2573 = vpack.c.b16 %v2529, %v2525
    %v2574 = vpack.c.b16 %v2530, %v2526
    %v2575 = vpack.c.b16 %v2535, %v2531
    %v2576 = vpack.c.b16 %v2536, %v2532
    %v2577 = vpack.c.b16 %v2537, %v2533
    %v2578 = vpack.c.b16 %v2538, %v2534
    %v2579 = vpack.c.b16 %v2543, %v2539
    %v2580 = vpack.c.b16 %v2544, %v2540
    %v2581 = vpack.c.b16 %v2545, %v2541
    %v2582 = vpack.c.b16 %v2546, %v2542
    %v2583 = vpack.c.b16 %v2551, %v2547
    %v2584 = vpack.c.b16 %v2552, %v2548
    %v2585 = vpack.c.b16 %v2553, %v2549
    %v2586 = vpack.c.b16 %v2554, %v2550
    %2619 = vmatprep.subr.bf16.mxu0 %v2556
    %2620 = vmatpush1.bf16.msra.mxu0 %v2555
    %2621 = vmatprep.subr.bf16.mxu0 %v2560
    %2622 = vmatpush1.bf16.msra.mxu0 %v2559
    %2623 = vmatprep.subr.bf16.mxu0 %v2564
    %2624 = vmatpush1.bf16.msra.mxu0 %v2563
    %2625 = vmatprep.subr.bf16.mxu0 %v2568
    %2626 = vmatpush1.bf16.msra.mxu0 %v2567
    %2627 = vmatprep.subr.bf16.mxu0 %v2572
    %2628 = vmatpush1.bf16.msra.mxu0 %v2571
    %2629 = vmatprep.subr.bf16.mxu0 %v2576
    %2630 = vmatpush1.bf16.msra.mxu0 %v2575
    %2631 = vmatprep.subr.bf16.mxu0 %v2580
    %2632 = vmatpush1.bf16.msra.mxu0 %v2579
    %2633 = vmatprep.subr.bf16.mxu0 %v2584
    %2634 = vmatpush1.bf16.msra.mxu0 %v2583
    %2635 = vmatprep.subr.bf16.mxu0 0
    %2636 = vmatpush1.bf16.msra.mxu0 0
    %2637 = vmatprep.subr.bf16.mxu0 0
    %2638 = vmatpush1.bf16.msra.mxu0 0
    %2639 = vmatprep.subr.bf16.mxu0 0
    %2640 = vmatpush1.bf16.msra.mxu0 0
    %2641 = vmatprep.subr.bf16.mxu0 0
    %2642 = vmatpush1.bf16.msra.mxu0 0
    %2643 = vmatprep.subr.bf16.mxu0 0
    %2644 = vmatpush1.bf16.msra.mxu0 0
    %2645 = vmatprep.subr.bf16.mxu0 0
    %2646 = vmatpush1.bf16.msra.mxu0 0
    %2647 = vmatprep.subr.bf16.mxu0 0
    %2648 = vmatpush1.bf16.msra.mxu0 0
    %2649 = vmatprep.subr.bf16.mxu0 0
    %2650 = vmatpush1.bf16.msra.mxu0 0
    %2651 = vmatprep.mubr.bf16.mxu0 0
    %2652 = vmatmul.mubr.bf16.gmra.mrb[0].mxu0 %v2426
    %v2653 = vpop.f32.mrb[0].mxu0
    %v2654 = vadd.f32 0.0, %v2653
    %v2655 = vpop.f32.mrb[0].mxu0
    %v2656 = vadd.f32 0.0, %v2655
    %v2657 = vpop.f32.mrb[0].mxu0
    %v2658 = vpop.f32.mrb[0].mxu0
    %2659 = vdwg.mxu0
    %2660 = vmatprep.subr.bf16.mxu0 %v2558
    %2661 = vmatpush1.bf16.msra.mxu0 %v2557
    %2662 = vmatprep.subr.bf16.mxu0 %v2562
    %2663 = vmatpush1.bf16.msra.mxu0 %v2561
    %2664 = vmatprep.subr.bf16.mxu0 %v2566
    %2665 = vmatpush1.bf16.msra.mxu0 %v2565
    %2666 = vmatprep.subr.bf16.mxu0 %v2570
    %2667 = vmatpush1.bf16.msra.mxu0 %v2569
    %2668 = vmatprep.subr.bf16.mxu0 %v2574
    %2669 = vmatpush1.bf16.msra.mxu0 %v2573
    %2670 = vmatprep.subr.bf16.mxu0 %v2578
    %2671 = vmatpush1.bf16.msra.mxu0 %v2577
    %2672 = vmatprep.subr.bf16.mxu0 %v2582
    %2673 = vmatpush1.bf16.msra.mxu0 %v2581
    %2674 = vmatprep.subr.bf16.mxu0 %v2586
    %2675 = vmatpush1.bf16.msra.mxu0 %v2585
    %2676 = vmatprep.subr.bf16.mxu0 0
    %2677 = vmatpush1.bf16.msra.mxu0 0
    %2678 = vmatprep.subr.bf16.mxu0 0
    %2679 = vmatpush1.bf16.msra.mxu0 0
    %2680 = vmatprep.subr.bf16.mxu0 0
    %2681 = vmatpush1.bf16.msra.mxu0 0
    %2682 = vmatprep.subr.bf16.mxu0 0
    %2683 = vmatpush1.bf16.msra.mxu0 0
    %2684 = vmatprep.subr.bf16.mxu0 0
    %2685 = vmatpush1.bf16.msra.mxu0 0
    %2686 = vmatprep.subr.bf16.mxu0 0
    %2687 = vmatpush1.bf16.msra.mxu0 0
    %2688 = vmatprep.subr.bf16.mxu0 0
    %2689 = vmatpush1.bf16.msra.mxu0 0
    %2690 = vmatprep.subr.bf16.mxu0 0
    %2691 = vmatpush1.bf16.msra.mxu0 0
    %2692 = vmatprep.mubr.bf16.mxu0 0
    %2693 = vmatmul.mubr.bf16.gmra.mrb[0].mxu0 %v2426
    %v2694 = vpop.f32.mrb[0].mxu0
    %v2695 = vadd.f32 0.0, %v2694
    %v2696 = vpop.f32.mrb[0].mxu0
    %v2697 = vadd.f32 0.0, %v2696
    %v2698 = vpop.f32.mrb[0].mxu0
    %v2699 = vpop.f32.mrb[0].mxu0
    %2700 = vdwg.mxu0
    %v2701 = vadd.f32 %v2422, %v2654
    %v2702 = vadd.f32 %v2423, %v2656
    %v2703 = vadd.f32 %v2424, %v2695
    %v2704 = vadd.f32 %v2425, %v2697
    %v2705 = vxor.u32 %v2701, 2147483648
    %v2706 = vxor.u32 %v2702, 2147483648
    %v2707 = vmul.f32 %v2705, 1.442695
    %v2708 = vpow.pop %v2707
    %v2709 = vmul.f32 %v2706, 1.442695
    %v2710 = vpow.pop %v2709
    %v2711 = vadd.f32 %v2708, 1.0
    %v2712 = vadd.f32 %v2710, 1.0
    %v2713 = vrcp.pop %v2711
    %v2714 = vmul.f32 1.0, %v2713
    %v2715 = vrcp.pop %v2712
    %v2716 = vmul.f32 1.0, %v2715
    %v2717 = vtanh.pop %v2703
    %v2718 = vxor.u32 %v2704, 2147483648
    %v2719 = vmul.f32 %v2718, 1.442695
    %v2720 = vpow.pop %v2719
    %v2721 = vadd.f32 %v2720, 1.0
    %v2722 = vrcp.pop %v2721
    %v2723 = vmul.f32 1.0, %v2722
    %v2724 = vmul.f32 %v2716, %v2110
    %v2725 = vmul.f32 %v2714, %v2717
    %v2726 = vadd.f32 %v2724, %v2725
    %v2727 = vtanh.pop %v2726
    %v2728 = vmul.f32 %v2723, %v2727
    %2729 = vst [vmem:[%s7 + $0x58] sm:$0xff] %v2728
    %v2730 = vld [vmem:[#allocation2 + $0x60] sm:$0xff]
    %v2731 = vld [vmem:[#allocation2 + $0x68] sm:$0xff]
    %v2732 = vld [vmem:[#allocation2 + $0x70] sm:$0xff]
    %v2733 = vld [vmem:[#allocation2 + $0x78] sm:$0xff]
    %v2734 = vpack.c.bf16 %v2420, %v2420
    %v2735 = vld [vmem:[#allocation4] sm:$0xff]
    %v2736 = vld [vmem:[#allocation4 + $0x8] sm:$0xff]
    %v2737 = vld [vmem:[#allocation4 + $0x10] sm:$0xff]
    %v2738 = vld [vmem:[#allocation4 + $0x18] sm:$0xff]
    %v2739 = vld [vmem:[#allocation4 + $0x20] sm:$0xff]
    %v2740 = vld [vmem:[#allocation4 + $0x28] sm:$0xff]
    %v2741 = vld [vmem:[#allocation4 + $0x30] sm:$0xff]
    %v2742 = vld [vmem:[#allocation4 + $0x38] sm:$0xff]
    %v2743 = vld [vmem:[#allocation4 + $0x40] sm:$0xff]
    %v2744 = vld [vmem:[#allocation4 + $0x48] sm:$0xff]
    %v2745 = vld [vmem:[#allocation4 + $0x50] sm:$0xff]
    %v2746 = vld [vmem:[#allocation4 + $0x58] sm:$0xff]
    %v2747 = vld [vmem:[#allocation4 + $0x60] sm:$0xff]
    %v2748 = vld [vmem:[#allocation4 + $0x68] sm:$0xff]
    %v2749 = vld [vmem:[#allocation4 + $0x70] sm:$0xff]
    %v2750 = vld [vmem:[#allocation4 + $0x78] sm:$0xff]
    %v2751 = vld [vmem:[#allocation4 + $0x80] sm:$0xff]
    %v2752 = vld [vmem:[#allocation4 + $0x88] sm:$0xff]
    %v2753 = vld [vmem:[#allocation4 + $0x90] sm:$0xff]
    %v2754 = vld [vmem:[#allocation4 + $0x98] sm:$0xff]
    %v2755 = vld [vmem:[#allocation4 + $0xa0] sm:$0xff]
    %v2756 = vld [vmem:[#allocation4 + $0xa8] sm:$0xff]
    %v2757 = vld [vmem:[#allocation4 + $0xb0] sm:$0xff]
    %v2758 = vld [vmem:[#allocation4 + $0xb8] sm:$0xff]
    %v2759 = vld [vmem:[#allocation4 + $0xc0] sm:$0xff]
    %v2760 = vld [vmem:[#allocation4 + $0xc8] sm:$0xff]
    %v2761 = vld [vmem:[#allocation4 + $0xd0] sm:$0xff]
    %v2762 = vld [vmem:[#allocation4 + $0xd8] sm:$0xff]
    %v2763 = vld [vmem:[#allocation4 + $0xe0] sm:$0xff]
    %v2764 = vld [vmem:[#allocation4 + $0xe8] sm:$0xff]
    %v2765 = vld [vmem:[#allocation4 + $0xf0] sm:$0xff]
    %v2766 = vld [vmem:[#allocation4 + $0xf8] sm:$0xff]
    %v2799 = vunpack.c.l.b16 %v2735
    %v2800 = vunpack.c.h.b16 %v2735
    %v2801 = vunpack.c.l.b16 %v2736
    %v2802 = vunpack.c.h.b16 %v2736
    %v2803 = vunpack.c.l.b16 %v2737
    %v2804 = vunpack.c.h.b16 %v2737
    %v2805 = vunpack.c.l.b16 %v2738
    %v2806 = vunpack.c.h.b16 %v2738
    %v2807 = vunpack.c.l.b16 %v2739
    %v2808 = vunpack.c.h.b16 %v2739
    %v2809 = vunpack.c.l.b16 %v2740
    %v2810 = vunpack.c.h.b16 %v2740
    %v2811 = vunpack.c.l.b16 %v2741
    %v2812 = vunpack.c.h.b16 %v2741
    %v2813 = vunpack.c.l.b16 %v2742
    %v2814 = vunpack.c.h.b16 %v2742
    %v2815 = vunpack.c.l.b16 %v2743
    %v2816 = vunpack.c.h.b16 %v2743
    %v2817 = vunpack.c.l.b16 %v2744
    %v2818 = vunpack.c.h.b16 %v2744
    %v2819 = vunpack.c.l.b16 %v2745
    %v2820 = vunpack.c.h.b16 %v2745
    %v2821 = vunpack.c.l.b16 %v2746
    %v2822 = vunpack.c.h.b16 %v2746
    %v2823 = vunpack.c.l.b16 %v2747
    %v2824 = vunpack.c.h.b16 %v2747
    %v2825 = vunpack.c.l.b16 %v2748
    %v2826 = vunpack.c.h.b16 %v2748
    %v2827 = vunpack.c.l.b16 %v2749
    %v2828 = vunpack.c.h.b16 %v2749
    %v2829 = vunpack.c.l.b16 %v2750
    %v2830 = vunpack.c.h.b16 %v2750
    %v2831 = vunpack.c.l.b16 %v2751
    %v2832 = vunpack.c.h.b16 %v2751
    %v2833 = vunpack.c.l.b16 %v2752
    %v2834 = vunpack.c.h.b16 %v2752
    %v2835 = vunpack.c.l.b16 %v2753
    %v2836 = vunpack.c.h.b16 %v2753
    %v2837 = vunpack.c.l.b16 %v2754
    %v2838 = vunpack.c.h.b16 %v2754
    %v2839 = vunpack.c.l.b16 %v2755
    %v2840 = vunpack.c.h.b16 %v2755
    %v2841 = vunpack.c.l.b16 %v2756
    %v2842 = vunpack.c.h.b16 %v2756
    %v2843 = vunpack.c.l.b16 %v2757
    %v2844 = vunpack.c.h.b16 %v2757
    %v2845 = vunpack.c.l.b16 %v2758
    %v2846 = vunpack.c.h.b16 %v2758
    %v2847 = vunpack.c.l.b16 %v2759
    %v2848 = vunpack.c.h.b16 %v2759
    %v2849 = vunpack.c.l.b16 %v2760
    %v2850 = vunpack.c.h.b16 %v2760
    %v2851 = vunpack.c.l.b16 %v2761
    %v2852 = vunpack.c.h.b16 %v2761
    %v2853 = vunpack.c.l.b16 %v2762
    %v2854 = vunpack.c.h.b16 %v2762
    %v2855 = vunpack.c.l.b16 %v2763
    %v2856 = vunpack.c.h.b16 %v2763
    %v2857 = vunpack.c.l.b16 %v2764
    %v2858 = vunpack.c.h.b16 %v2764
    %v2859 = vunpack.c.l.b16 %v2765
    %v2860 = vunpack.c.h.b16 %v2765
    %v2861 = vunpack.c.l.b16 %v2766
    %v2862 = vunpack.c.h.b16 %v2766
    %v2863 = vpack.c.b16 %v2803, %v2799
    %v2864 = vpack.c.b16 %v2804, %v2800
    %v2865 = vpack.c.b16 %v2805, %v2801
    %v2866 = vpack.c.b16 %v2806, %v2802
    %v2867 = vpack.c.b16 %v2811, %v2807
    %v2868 = vpack.c.b16 %v2812, %v2808
    %v2869 = vpack.c.b16 %v2813, %v2809
    %v2870 = vpack.c.b16 %v2814, %v2810
    %v2871 = vpack.c.b16 %v2819, %v2815
    %v2872 = vpack.c.b16 %v2820, %v2816
    %v2873 = vpack.c.b16 %v2821, %v2817
    %v2874 = vpack.c.b16 %v2822, %v2818
    %v2875 = vpack.c.b16 %v2827, %v2823
    %v2876 = vpack.c.b16 %v2828, %v2824
    %v2877 = vpack.c.b16 %v2829, %v2825
    %v2878 = vpack.c.b16 %v2830, %v2826
    %v2879 = vpack.c.b16 %v2835, %v2831
    %v2880 = vpack.c.b16 %v2836, %v2832
    %v2881 = vpack.c.b16 %v2837, %v2833
    %v2882 = vpack.c.b16 %v2838, %v2834
    %v2883 = vpack.c.b16 %v2843, %v2839
    %v2884 = vpack.c.b16 %v2844, %v2840
    %v2885 = vpack.c.b16 %v2845, %v2841
    %v2886 = vpack.c.b16 %v2846, %v2842
    %v2887 = vpack.c.b16 %v2851, %v2847
    %v2888 = vpack.c.b16 %v2852, %v2848
    %v2889 = vpack.c.b16 %v2853, %v2849
    %v2890 = vpack.c.b16 %v2854, %v2850
    %v2891 = vpack.c.b16 %v2859, %v2855
    %v2892 = vpack.c.b16 %v2860, %v2856
    %v2893 = vpack.c.b16 %v2861, %v2857
    %v2894 = vpack.c.b16 %v2862, %v2858
    %2927 = vmatprep.subr.bf16.mxu0 %v2864
    %2928 = vmatpush1.bf16.msra.mxu0 %v2863
    %2929 = vmatprep.subr.bf16.mxu0 %v2868
    %2930 = vmatpush1.bf16.msra.mxu0 %v2867
    %2931 = vmatprep.subr.bf16.mxu0 %v2872
    %2932 = vmatpush1.bf16.msra.mxu0 %v2871
    %2933 = vmatprep.subr.bf16.mxu0 %v2876
    %2934 = vmatpush1.bf16.msra.mxu0 %v2875
    %2935 = vmatprep.subr.bf16.mxu0 %v2880
    %2936 = vmatpush1.bf16.msra.mxu0 %v2879
    %2937 = vmatprep.subr.bf16.mxu0 %v2884
    %2938 = vmatpush1.bf16.msra.mxu0 %v2883
    %2939 = vmatprep.subr.bf16.mxu0 %v2888
    %2940 = vmatpush1.bf16.msra.mxu0 %v2887
    %2941 = vmatprep.subr.bf16.mxu0 %v2892
    %2942 = vmatpush1.bf16.msra.mxu0 %v2891
    %2943 = vmatprep.subr.bf16.mxu0 0
    %2944 = vmatpush1.bf16.msra.mxu0 0
    %2945 = vmatprep.subr.bf16.mxu0 0
    %2946 = vmatpush1.bf16.msra.mxu0 0
    %2947 = vmatprep.subr.bf16.mxu0 0
    %2948 = vmatpush1.bf16.msra.mxu0 0
    %2949 = vmatprep.subr.bf16.mxu0 0
    %2950 = vmatpush1.bf16.msra.mxu0 0
    %2951 = vmatprep.subr.bf16.mxu0 0
    %2952 = vmatpush1.bf16.msra.mxu0 0
    %2953 = vmatprep.subr.bf16.mxu0 0
    %2954 = vmatpush1.bf16.msra.mxu0 0
    %2955 = vmatprep.subr.bf16.mxu0 0
    %2956 = vmatpush1.bf16.msra.mxu0 0
    %2957 = vmatprep.subr.bf16.mxu0 0
    %2958 = vmatpush1.bf16.msra.mxu0 0
    %2959 = vmatprep.mubr.bf16.mxu0 0
    %2960 = vmatmul.mubr.bf16.gmra.mrb[0].mxu0 %v2734
    %v2961 = vpop.f32.mrb[0].mxu0
    %v2962 = vadd.f32 0.0, %v2961
    %v2963 = vpop.f32.mrb[0].mxu0
    %v2964 = vadd.f32 0.0, %v2963
    %v2965 = vpop.f32.mrb[0].mxu0
    %v2966 = vpop.f32.mrb[0].mxu0
    %2967 = vdwg.mxu0
    %2968 = vmatprep.subr.bf16.mxu0 %v2866
    %2969 = vmatpush1.bf16.msra.mxu0 %v2865
    %2970 = vmatprep.subr.bf16.mxu0 %v2870
    %2971 = vmatpush1.bf16.msra.mxu0 %v2869
    %2972 = vmatprep.subr.bf16.mxu0 %v2874
    %2973 = vmatpush1.bf16.msra.mxu0 %v2873
    %2974 = vmatprep.subr.bf16.mxu0 %v2878
    %2975 = vmatpush1.bf16.msra.mxu0 %v2877
    %2976 = vmatprep.subr.bf16.mxu0 %v2882
    %2977 = vmatpush1.bf16.msra.mxu0 %v2881
    %2978 = vmatprep.subr.bf16.mxu0 %v2886
    %2979 = vmatpush1.bf16.msra.mxu0 %v2885
    %2980 = vmatprep.subr.bf16.mxu0 %v2890
    %2981 = vmatpush1.bf16.msra.mxu0 %v2889
    %2982 = vmatprep.subr.bf16.mxu0 %v2894
    %2983 = vmatpush1.bf16.msra.mxu0 %v2893
    %2984 = vmatprep.subr.bf16.mxu0 0
    %2985 = vmatpush1.bf16.msra.mxu0 0
    %2986 = vmatprep.subr.bf16.mxu0 0
    %2987 = vmatpush1.bf16.msra.mxu0 0
    %2988 = vmatprep.subr.bf16.mxu0 0
    %2989 = vmatpush1.bf16.msra.mxu0 0
    %2990 = vmatprep.subr.bf16.mxu0 0
    %2991 = vmatpush1.bf16.msra.mxu0 0
    %2992 = vmatprep.subr.bf16.mxu0 0
    %2993 = vmatpush1.bf16.msra.mxu0 0
    %2994 = vmatprep.subr.bf16.mxu0 0
    %2995 = vmatpush1.bf16.msra.mxu0 0
    %2996 = vmatprep.subr.bf16.mxu0 0
    %2997 = vmatpush1.bf16.msra.mxu0 0
    %2998 = vmatprep.subr.bf16.mxu0 0
    %2999 = vmatpush1.bf16.msra.mxu0 0
    %3000 = vmatprep.mubr.bf16.mxu0 0
    %3001 = vmatmul.mubr.bf16.gmra.mrb[0].mxu0 %v2734
    %v3002 = vpop.f32.mrb[0].mxu0
    %v3003 = vadd.f32 0.0, %v3002
    %v3004 = vpop.f32.mrb[0].mxu0
    %v3005 = vadd.f32 0.0, %v3004
    %v3006 = vpop.f32.mrb[0].mxu0
    %v3007 = vpop.f32.mrb[0].mxu0
    %3008 = vdwg.mxu0
    %v3009 = vadd.f32 %v2730, %v2962
    %v3010 = vadd.f32 %v2731, %v2964
    %v3011 = vadd.f32 %v2732, %v3003
    %v3012 = vadd.f32 %v2733, %v3005
    %v3013 = vxor.u32 %v3009, 2147483648
    %v3014 = vxor.u32 %v3010, 2147483648
    %v3015 = vmul.f32 %v3013, 1.442695
    %v3016 = vpow.pop %v3015
    %v3017 = vmul.f32 %v3014, 1.442695
    %v3018 = vpow.pop %v3017
    %v3019 = vadd.f32 %v3016, 1.0
    %v3020 = vadd.f32 %v3018, 1.0
    %v3021 = vrcp.pop %v3019
    %v3022 = vmul.f32 1.0, %v3021
    %v3023 = vrcp.pop %v3020
    %v3024 = vmul.f32 1.0, %v3023
    %v3025 = vtanh.pop %v3011
    %v3026 = vxor.u32 %v3012, 2147483648
    %v3027 = vmul.f32 %v3026, 1.442695
    %v3028 = vpow.pop %v3027
    %v3029 = vadd.f32 %v3028, 1.0
    %v3030 = vrcp.pop %v3029
    %v3031 = vmul.f32 1.0, %v3030
    %v3032 = vmul.f32 %v3024, %v2418
    %v3033 = vmul.f32 %v3022, %v3025
    %v3034 = vadd.f32 %v3032, %v3033
    %v3035 = vtanh.pop %v3034
    %v3036 = vmul.f32 %v3031, %v3035
    %3037 = vst [vmem:[%s7 + $0x30] sm:$0xff] %v3036
    %v3038 = vld [vmem:[#allocation3 + $0x80] sm:$0xff]
    %v3039 = vld [vmem:[#allocation3 + $0x88] sm:$0xff]
    %v3040 = vld [vmem:[#allocation3 + $0x90] sm:$0xff]
    %v3041 = vld [vmem:[#allocation3 + $0x98] sm:$0xff]
    %v3042 = vpack.c.bf16 %v2728, %v2728
    %v3043 = vld [vmem:[#allocation8] sm:$0xff]
    %v3044 = vld [vmem:[#allocation8 + $0x8] sm:$0xff]
    %v3045 = vld [vmem:[#allocation8 + $0x10] sm:$0xff]
    %v3046 = vld [vmem:[#allocation8 + $0x18] sm:$0xff]
    %v3047 = vld [vmem:[#allocation8 + $0x20] sm:$0xff]
    %v3048 = vld [vmem:[#allocation8 + $0x28] sm:$0xff]
    %v3049 = vld [vmem:[#allocation8 + $0x30] sm:$0xff]
    %v3050 = vld [vmem:[#allocation8 + $0x38] sm:$0xff]
    %v3051 = vld [vmem:[#allocation8 + $0x40] sm:$0xff]
    %v3052 = vld [vmem:[#allocation8 + $0x48] sm:$0xff]
    %v3053 = vld [vmem:[#allocation8 + $0x50] sm:$0xff]
    %v3054 = vld [vmem:[#allocation8 + $0x58] sm:$0xff]
    %v3055 = vld [vmem:[#allocation8 + $0x60] sm:$0xff]
    %v3056 = vld [vmem:[#allocation8 + $0x68] sm:$0xff]
    %v3057 = vld [vmem:[#allocation8 + $0x70] sm:$0xff]
    %v3058 = vld [vmem:[#allocation8 + $0x78] sm:$0xff]
    %v3059 = vld [vmem:[#allocation8 + $0x80] sm:$0xff]
    %v3060 = vld [vmem:[#allocation8 + $0x88] sm:$0xff]
    %v3061 = vld [vmem:[#allocation8 + $0x90] sm:$0xff]
    %v3062 = vld [vmem:[#allocation8 + $0x98] sm:$0xff]
    %v3063 = vld [vmem:[#allocation8 + $0xa0] sm:$0xff]
    %v3064 = vld [vmem:[#allocation8 + $0xa8] sm:$0xff]
    %v3065 = vld [vmem:[#allocation8 + $0xb0] sm:$0xff]
    %v3066 = vld [vmem:[#allocation8 + $0xb8] sm:$0xff]
    %v3067 = vld [vmem:[#allocation8 + $0xc0] sm:$0xff]
    %v3068 = vld [vmem:[#allocation8 + $0xc8] sm:$0xff]
    %v3069 = vld [vmem:[#allocation8 + $0xd0] sm:$0xff]
    %v3070 = vld [vmem:[#allocation8 + $0xd8] sm:$0xff]
    %v3071 = vld [vmem:[#allocation8 + $0xe0] sm:$0xff]
    %v3072 = vld [vmem:[#allocation8 + $0xe8] sm:$0xff]
    %v3073 = vld [vmem:[#allocation8 + $0xf0] sm:$0xff]
    %v3074 = vld [vmem:[#allocation8 + $0xf8] sm:$0xff]
    %v3107 = vunpack.c.l.b16 %v3043
    %v3108 = vunpack.c.h.b16 %v3043
    %v3109 = vunpack.c.l.b16 %v3044
    %v3110 = vunpack.c.h.b16 %v3044
    %v3111 = vunpack.c.l.b16 %v3045
    %v3112 = vunpack.c.h.b16 %v3045
    %v3113 = vunpack.c.l.b16 %v3046
    %v3114 = vunpack.c.h.b16 %v3046
    %v3115 = vunpack.c.l.b16 %v3047
    %v3116 = vunpack.c.h.b16 %v3047
    %v3117 = vunpack.c.l.b16 %v3048
    %v3118 = vunpack.c.h.b16 %v3048
    %v3119 = vunpack.c.l.b16 %v3049
    %v3120 = vunpack.c.h.b16 %v3049
    %v3121 = vunpack.c.l.b16 %v3050
    %v3122 = vunpack.c.h.b16 %v3050
    %v3123 = vunpack.c.l.b16 %v3051
    %v3124 = vunpack.c.h.b16 %v3051
    %v3125 = vunpack.c.l.b16 %v3052
    %v3126 = vunpack.c.h.b16 %v3052
    %v3127 = vunpack.c.l.b16 %v3053
    %v3128 = vunpack.c.h.b16 %v3053
    %v3129 = vunpack.c.l.b16 %v3054
    %v3130 = vunpack.c.h.b16 %v3054
    %v3131 = vunpack.c.l.b16 %v3055
    %v3132 = vunpack.c.h.b16 %v3055
    %v3133 = vunpack.c.l.b16 %v3056
    %v3134 = vunpack.c.h.b16 %v3056
    %v3135 = vunpack.c.l.b16 %v3057
    %v3136 = vunpack.c.h.b16 %v3057
    %v3137 = vunpack.c.l.b16 %v3058
    %v3138 = vunpack.c.h.b16 %v3058
    %v3139 = vunpack.c.l.b16 %v3059
    %v3140 = vunpack.c.h.b16 %v3059
    %v3141 = vunpack.c.l.b16 %v3060
    %v3142 = vunpack.c.h.b16 %v3060
    %v3143 = vunpack.c.l.b16 %v3061
    %v3144 = vunpack.c.h.b16 %v3061
    %v3145 = vunpack.c.l.b16 %v3062
    %v3146 = vunpack.c.h.b16 %v3062
    %v3147 = vunpack.c.l.b16 %v3063
    %v3148 = vunpack.c.h.b16 %v3063
    %v3149 = vunpack.c.l.b16 %v3064
    %v3150 = vunpack.c.h.b16 %v3064
    %v3151 = vunpack.c.l.b16 %v3065
    %v3152 = vunpack.c.h.b16 %v3065
    %v3153 = vunpack.c.l.b16 %v3066
    %v3154 = vunpack.c.h.b16 %v3066
    %v3155 = vunpack.c.l.b16 %v3067
    %v3156 = vunpack.c.h.b16 %v3067
    %v3157 = vunpack.c.l.b16 %v3068
    %v3158 = vunpack.c.h.b16 %v3068
    %v3159 = vunpack.c.l.b16 %v3069
    %v3160 = vunpack.c.h.b16 %v3069
    %v3161 = vunpack.c.l.b16 %v3070
    %v3162 = vunpack.c.h.b16 %v3070
    %v3163 = vunpack.c.l.b16 %v3071
    %v3164 = vunpack.c.h.b16 %v3071
    %v3165 = vunpack.c.l.b16 %v3072
    %v3166 = vunpack.c.h.b16 %v3072
    %v3167 = vunpack.c.l.b16 %v3073
    %v3168 = vunpack.c.h.b16 %v3073
    %v3169 = vunpack.c.l.b16 %v3074
    %v3170 = vunpack.c.h.b16 %v3074
    %v3171 = vpack.c.b16 %v3111, %v3107
    %v3172 = vpack.c.b16 %v3112, %v3108
    %v3173 = vpack.c.b16 %v3113, %v3109
    %v3174 = vpack.c.b16 %v3114, %v3110
    %v3175 = vpack.c.b16 %v3119, %v3115
    %v3176 = vpack.c.b16 %v3120, %v3116
    %v3177 = vpack.c.b16 %v3121, %v3117
    %v3178 = vpack.c.b16 %v3122, %v3118
    %v3179 = vpack.c.b16 %v3127, %v3123
    %v3180 = vpack.c.b16 %v3128, %v3124
    %v3181 = vpack.c.b16 %v3129, %v3125
    %v3182 = vpack.c.b16 %v3130, %v3126
    %v3183 = vpack.c.b16 %v3135, %v3131
    %v3184 = vpack.c.b16 %v3136, %v3132
    %v3185 = vpack.c.b16 %v3137, %v3133
    %v3186 = vpack.c.b16 %v3138, %v3134
    %v3187 = vpack.c.b16 %v3143, %v3139
    %v3188 = vpack.c.b16 %v3144, %v3140
    %v3189 = vpack.c.b16 %v3145, %v3141
    %v3190 = vpack.c.b16 %v3146, %v3142
    %v3191 = vpack.c.b16 %v3151, %v3147
    %v3192 = vpack.c.b16 %v3152, %v3148
    %v3193 = vpack.c.b16 %v3153, %v3149
    %v3194 = vpack.c.b16 %v3154, %v3150
    %v3195 = vpack.c.b16 %v3159, %v3155
    %v3196 = vpack.c.b16 %v3160, %v3156
    %v3197 = vpack.c.b16 %v3161, %v3157
    %v3198 = vpack.c.b16 %v3162, %v3158
    %v3199 = vpack.c.b16 %v3167, %v3163
    %v3200 = vpack.c.b16 %v3168, %v3164
    %v3201 = vpack.c.b16 %v3169, %v3165
    %v3202 = vpack.c.b16 %v3170, %v3166
    %3235 = vmatprep.subr.bf16.mxu0 %v3172
    %3236 = vmatpush1.bf16.msra.mxu0 %v3171
    %3237 = vmatprep.subr.bf16.mxu0 %v3176
    %3238 = vmatpush1.bf16.msra.mxu0 %v3175
    %3239 = vmatprep.subr.bf16.mxu0 %v3180
    %3240 = vmatpush1.bf16.msra.mxu0 %v3179
    %3241 = vmatprep.subr.bf16.mxu0 %v3184
    %3242 = vmatpush1.bf16.msra.mxu0 %v3183
    %3243 = vmatprep.subr.bf16.mxu0 %v3188
    %3244 = vmatpush1.bf16.msra.mxu0 %v3187
    %3245 = vmatprep.subr.bf16.mxu0 %v3192
    %3246 = vmatpush1.bf16.msra.mxu0 %v3191
    %3247 = vmatprep.subr.bf16.mxu0 %v3196
    %3248 = vmatpush1.bf16.msra.mxu0 %v3195
    %3249 = vmatprep.subr.bf16.mxu0 %v3200
    %3250 = vmatpush1.bf16.msra.mxu0 %v3199
    %3251 = vmatprep.subr.bf16.mxu0 0
    %3252 = vmatpush1.bf16.msra.mxu0 0
    %3253 = vmatprep.subr.bf16.mxu0 0
    %3254 = vmatpush1.bf16.msra.mxu0 0
    %3255 = vmatprep.subr.bf16.mxu0 0
    %3256 = vmatpush1.bf16.msra.mxu0 0
    %3257 = vmatprep.subr.bf16.mxu0 0
    %3258 = vmatpush1.bf16.msra.mxu0 0
    %3259 = vmatprep.subr.bf16.mxu0 0
    %3260 = vmatpush1.bf16.msra.mxu0 0
    %3261 = vmatprep.subr.bf16.mxu0 0
    %3262 = vmatpush1.bf16.msra.mxu0 0
    %3263 = vmatprep.subr.bf16.mxu0 0
    %3264 = vmatpush1.bf16.msra.mxu0 0
    %3265 = vmatprep.subr.bf16.mxu0 0
    %3266 = vmatpush1.bf16.msra.mxu0 0
    %3267 = vmatprep.mubr.bf16.mxu0 0
    %3268 = vmatmul.mubr.bf16.gmra.mrb[0].mxu0 %v3042
    %v3269 = vpop.f32.mrb[0].mxu0
    %v3270 = vadd.f32 0.0, %v3269
    %v3271 = vpop.f32.mrb[0].mxu0
    %v3272 = vadd.f32 0.0, %v3271
    %v3273 = vpop.f32.mrb[0].mxu0
    %v3274 = vpop.f32.mrb[0].mxu0
    %3275 = vdwg.mxu0
    %3276 = vmatprep.subr.bf16.mxu0 %v3174
    %3277 = vmatpush1.bf16.msra.mxu0 %v3173
    %3278 = vmatprep.subr.bf16.mxu0 %v3178
    %3279 = vmatpush1.bf16.msra.mxu0 %v3177
    %3280 = vmatprep.subr.bf16.mxu0 %v3182
    %3281 = vmatpush1.bf16.msra.mxu0 %v3181
    %3282 = vmatprep.subr.bf16.mxu0 %v3186
    %3283 = vmatpush1.bf16.msra.mxu0 %v3185
    %3284 = vmatprep.subr.bf16.mxu0 %v3190
    %3285 = vmatpush1.bf16.msra.mxu0 %v3189
    %3286 = vmatprep.subr.bf16.mxu0 %v3194
    %3287 = vmatpush1.bf16.msra.mxu0 %v3193
    %3288 = vmatprep.subr.bf16.mxu0 %v3198
    %3289 = vmatpush1.bf16.msra.mxu0 %v3197
    %3290 = vmatprep.subr.bf16.mxu0 %v3202
    %3291 = vmatpush1.bf16.msra.mxu0 %v3201
    %3292 = vmatprep.subr.bf16.mxu0 0
    %3293 = vmatpush1.bf16.msra.mxu0 0
    %3294 = vmatprep.subr.bf16.mxu0 0
    %3295 = vmatpush1.bf16.msra.mxu0 0
    %3296 = vmatprep.subr.bf16.mxu0 0
    %3297 = vmatpush1.bf16.msra.mxu0 0
    %3298 = vmatprep.subr.bf16.mxu0 0
    %3299 = vmatpush1.bf16.msra.mxu0 0
    %3300 = vmatprep.subr.bf16.mxu0 0
    %3301 = vmatpush1.bf16.msra.mxu0 0
    %3302 = vmatprep.subr.bf16.mxu0 0
    %3303 = vmatpush1.bf16.msra.mxu0 0
    %3304 = vmatprep.subr.bf16.mxu0 0
    %3305 = vmatpush1.bf16.msra.mxu0 0
    %3306 = vmatprep.subr.bf16.mxu0 0
    %3307 = vmatpush1.bf16.msra.mxu0 0
    %3308 = vmatprep.mubr.bf16.mxu0 0
    %3309 = vmatmul.mubr.bf16.gmra.mrb[0].mxu0 %v3042
    %v3310 = vpop.f32.mrb[0].mxu0
    %v3311 = vadd.f32 0.0, %v3310
    %v3312 = vpop.f32.mrb[0].mxu0
    %v3313 = vadd.f32 0.0, %v3312
    %v3314 = vpop.f32.mrb[0].mxu0
    %v3315 = vpop.f32.mrb[0].mxu0
    %3316 = vdwg.mxu0
    %v3317 = vadd.f32 %v3038, %v3270
    %v3318 = vadd.f32 %v3039, %v3272
    %v3319 = vadd.f32 %v3040, %v3311
    %v3320 = vadd.f32 %v3041, %v3313
    %v3321 = vxor.u32 %v3317, 2147483648
    %v3322 = vxor.u32 %v3318, 2147483648
    %v3323 = vmul.f32 %v3321, 1.442695
    %v3324 = vpow.pop %v3323
    %v3325 = vmul.f32 %v3322, 1.442695
    %v3326 = vpow.pop %v3325
    %v3327 = vadd.f32 %v3324, 1.0
    %v3328 = vadd.f32 %v3326, 1.0
    %v3329 = vrcp.pop %v3327
    %v3330 = vmul.f32 1.0, %v3329
    %v3331 = vrcp.pop %v3328
    %v3332 = vmul.f32 1.0, %v3331
    %v3333 = vtanh.pop %v3319
    %v3334 = vxor.u32 %v3320, 2147483648
    %v3335 = vmul.f32 %v3334, 1.442695
    %v3336 = vpow.pop %v3335
    %v3337 = vadd.f32 %v3336, 1.0
    %v3338 = vrcp.pop %v3337
    %v3339 = vmul.f32 1.0, %v3338
    %v3340 = vmul.f32 %v3332, %v2726
    %v3341 = vmul.f32 %v3330, %v3333
    %v3342 = vadd.f32 %v3340, %v3341
    %v3343 = vtanh.pop %v3342
    %v3344 = vmul.f32 %v3339, %v3343
    %3345 = vst [vmem:[%s7 + $0x48] sm:$0xff] %v3344
    %v3346 = vld [vmem:[#allocation2 + $0x80] sm:$0xff]
    %v3347 = vld [vmem:[#allocation2 + $0x88] sm:$0xff]
    %v3348 = vld [vmem:[#allocation2 + $0x90] sm:$0xff]
    %v3349 = vld [vmem:[#allocation2 + $0x98] sm:$0xff]
    %v3350 = vpack.c.bf16 %v3036, %v3036
    %v3351 = vld [vmem:[#allocation4] sm:$0xff]
    %v3352 = vld [vmem:[#allocation4 + $0x8] sm:$0xff]
    %v3353 = vld [vmem:[#allocation4 + $0x10] sm:$0xff]
    %v3354 = vld [vmem:[#allocation4 + $0x18] sm:$0xff]
    %v3355 = vld [vmem:[#allocation4 + $0x20] sm:$0xff]
    %v3356 = vld [vmem:[#allocation4 + $0x28] sm:$0xff]
    %v3357 = vld [vmem:[#allocation4 + $0x30] sm:$0xff]
    %v3358 = vld [vmem:[#allocation4 + $0x38] sm:$0xff]
    %v3359 = vld [vmem:[#allocation4 + $0x40] sm:$0xff]
    %v3360 = vld [vmem:[#allocation4 + $0x48] sm:$0xff]
    %v3361 = vld [vmem:[#allocation4 + $0x50] sm:$0xff]
    %v3362 = vld [vmem:[#allocation4 + $0x58] sm:$0xff]
    %v3363 = vld [vmem:[#allocation4 + $0x60] sm:$0xff]
    %v3364 = vld [vmem:[#allocation4 + $0x68] sm:$0xff]
    %v3365 = vld [vmem:[#allocation4 + $0x70] sm:$0xff]
    %v3366 = vld [vmem:[#allocation4 + $0x78] sm:$0xff]
    %v3367 = vld [vmem:[#allocation4 + $0x80] sm:$0xff]
    %v3368 = vld [vmem:[#allocation4 + $0x88] sm:$0xff]
    %v3369 = vld [vmem:[#allocation4 + $0x90] sm:$0xff]
    %v3370 = vld [vmem:[#allocation4 + $0x98] sm:$0xff]
    %v3371 = vld [vmem:[#allocation4 + $0xa0] sm:$0xff]
    %v3372 = vld [vmem:[#allocation4 + $0xa8] sm:$0xff]
    %v3373 = vld [vmem:[#allocation4 + $0xb0] sm:$0xff]
    %v3374 = vld [vmem:[#allocation4 + $0xb8] sm:$0xff]
    %v3375 = vld [vmem:[#allocation4 + $0xc0] sm:$0xff]
    %v3376 = vld [vmem:[#allocation4 + $0xc8] sm:$0xff]
    %v3377 = vld [vmem:[#allocation4 + $0xd0] sm:$0xff]
    %v3378 = vld [vmem:[#allocation4 + $0xd8] sm:$0xff]
    %v3379 = vld [vmem:[#allocation4 + $0xe0] sm:$0xff]
    %v3380 = vld [vmem:[#allocation4 + $0xe8] sm:$0xff]
    %v3381 = vld [vmem:[#allocation4 + $0xf0] sm:$0xff]
    %v3382 = vld [vmem:[#allocation4 + $0xf8] sm:$0xff]
    %v3415 = vunpack.c.l.b16 %v3351
    %v3416 = vunpack.c.h.b16 %v3351
    %v3417 = vunpack.c.l.b16 %v3352
    %v3418 = vunpack.c.h.b16 %v3352
    %v3419 = vunpack.c.l.b16 %v3353
    %v3420 = vunpack.c.h.b16 %v3353
    %v3421 = vunpack.c.l.b16 %v3354
    %v3422 = vunpack.c.h.b16 %v3354
    %v3423 = vunpack.c.l.b16 %v3355
    %v3424 = vunpack.c.h.b16 %v3355
    %v3425 = vunpack.c.l.b16 %v3356
    %v3426 = vunpack.c.h.b16 %v3356
    %v3427 = vunpack.c.l.b16 %v3357
    %v3428 = vunpack.c.h.b16 %v3357
    %v3429 = vunpack.c.l.b16 %v3358
    %v3430 = vunpack.c.h.b16 %v3358
    %v3431 = vunpack.c.l.b16 %v3359
    %v3432 = vunpack.c.h.b16 %v3359
    %v3433 = vunpack.c.l.b16 %v3360
    %v3434 = vunpack.c.h.b16 %v3360
    %v3435 = vunpack.c.l.b16 %v3361
    %v3436 = vunpack.c.h.b16 %v3361
    %v3437 = vunpack.c.l.b16 %v3362
    %v3438 = vunpack.c.h.b16 %v3362
    %v3439 = vunpack.c.l.b16 %v3363
    %v3440 = vunpack.c.h.b16 %v3363
    %v3441 = vunpack.c.l.b16 %v3364
    %v3442 = vunpack.c.h.b16 %v3364
    %v3443 = vunpack.c.l.b16 %v3365
    %v3444 = vunpack.c.h.b16 %v3365
    %v3445 = vunpack.c.l.b16 %v3366
    %v3446 = vunpack.c.h.b16 %v3366
    %v3447 = vunpack.c.l.b16 %v3367
    %v3448 = vunpack.c.h.b16 %v3367
    %v3449 = vunpack.c.l.b16 %v3368
    %v3450 = vunpack.c.h.b16 %v3368
    %v3451 = vunpack.c.l.b16 %v3369
    %v3452 = vunpack.c.h.b16 %v3369
    %v3453 = vunpack.c.l.b16 %v3370
    %v3454 = vunpack.c.h.b16 %v3370
    %v3455 = vunpack.c.l.b16 %v3371
    %v3456 = vunpack.c.h.b16 %v3371
    %v3457 = vunpack.c.l.b16 %v3372
    %v3458 = vunpack.c.h.b16 %v3372
    %v3459 = vunpack.c.l.b16 %v3373
    %v3460 = vunpack.c.h.b16 %v3373
    %v3461 = vunpack.c.l.b16 %v3374
    %v3462 = vunpack.c.h.b16 %v3374
    %v3463 = vunpack.c.l.b16 %v3375
    %v3464 = vunpack.c.h.b16 %v3375
    %v3465 = vunpack.c.l.b16 %v3376
    %v3466 = vunpack.c.h.b16 %v3376
    %v3467 = vunpack.c.l.b16 %v3377
    %v3468 = vunpack.c.h.b16 %v3377
    %v3469 = vunpack.c.l.b16 %v3378
    %v3470 = vunpack.c.h.b16 %v3378
    %v3471 = vunpack.c.l.b16 %v3379
    %v3472 = vunpack.c.h.b16 %v3379
    %v3473 = vunpack.c.l.b16 %v3380
    %v3474 = vunpack.c.h.b16 %v3380
    %v3475 = vunpack.c.l.b16 %v3381
    %v3476 = vunpack.c.h.b16 %v3381
    %v3477 = vunpack.c.l.b16 %v3382
    %v3478 = vunpack.c.h.b16 %v3382
    %v3479 = vpack.c.b16 %v3419, %v3415
    %v3480 = vpack.c.b16 %v3420, %v3416
    %v3481 = vpack.c.b16 %v3421, %v3417
    %v3482 = vpack.c.b16 %v3422, %v3418
    %v3483 = vpack.c.b16 %v3427, %v3423
    %v3484 = vpack.c.b16 %v3428, %v3424
    %v3485 = vpack.c.b16 %v3429, %v3425
    %v3486 = vpack.c.b16 %v3430, %v3426
    %v3487 = vpack.c.b16 %v3435, %v3431
    %v3488 = vpack.c.b16 %v3436, %v3432
    %v3489 = vpack.c.b16 %v3437, %v3433
    %v3490 = vpack.c.b16 %v3438, %v3434
    %v3491 = vpack.c.b16 %v3443, %v3439
    %v3492 = vpack.c.b16 %v3444, %v3440
    %v3493 = vpack.c.b16 %v3445, %v3441
    %v3494 = vpack.c.b16 %v3446, %v3442
    %v3495 = vpack.c.b16 %v3451, %v3447
    %v3496 = vpack.c.b16 %v3452, %v3448
    %v3497 = vpack.c.b16 %v3453, %v3449
    %v3498 = vpack.c.b16 %v3454, %v3450
    %v3499 = vpack.c.b16 %v3459, %v3455
    %v3500 = vpack.c.b16 %v3460, %v3456
    %v3501 = vpack.c.b16 %v3461, %v3457
    %v3502 = vpack.c.b16 %v3462, %v3458
    %v3503 = vpack.c.b16 %v3467, %v3463
    %v3504 = vpack.c.b16 %v3468, %v3464
    %v3505 = vpack.c.b16 %v3469, %v3465
    %v3506 = vpack.c.b16 %v3470, %v3466
    %v3507 = vpack.c.b16 %v3475, %v3471
    %v3508 = vpack.c.b16 %v3476, %v3472
    %v3509 = vpack.c.b16 %v3477, %v3473
    %v3510 = vpack.c.b16 %v3478, %v3474
    %3543 = vmatprep.subr.bf16.mxu0 %v3480
    %3544 = vmatpush1.bf16.msra.mxu0 %v3479
    %3545 = vmatprep.subr.bf16.mxu0 %v3484
    %3546 = vmatpush1.bf16.msra.mxu0 %v3483
    %3547 = vmatprep.subr.bf16.mxu0 %v3488
    %3548 = vmatpush1.bf16.msra.mxu0 %v3487
    %3549 = vmatprep.subr.bf16.mxu0 %v3492
    %3550 = vmatpush1.bf16.msra.mxu0 %v3491
    %3551 = vmatprep.subr.bf16.mxu0 %v3496
    %3552 = vmatpush1.bf16.msra.mxu0 %v3495
    %3553 = vmatprep.subr.bf16.mxu0 %v3500
    %3554 = vmatpush1.bf16.msra.mxu0 %v3499
    %3555 = vmatprep.subr.bf16.mxu0 %v3504
    %3556 = vmatpush1.bf16.msra.mxu0 %v3503
    %3557 = vmatprep.subr.bf16.mxu0 %v3508
    %3558 = vmatpush1.bf16.msra.mxu0 %v3507
    %3559 = vmatprep.subr.bf16.mxu0 0
    %3560 = vmatpush1.bf16.msra.mxu0 0
    %3561 = vmatprep.subr.bf16.mxu0 0
    %3562 = vmatpush1.bf16.msra.mxu0 0
    %3563 = vmatprep.subr.bf16.mxu0 0
    %3564 = vmatpush1.bf16.msra.mxu0 0
    %3565 = vmatprep.subr.bf16.mxu0 0
    %3566 = vmatpush1.bf16.msra.mxu0 0
    %3567 = vmatprep.subr.bf16.mxu0 0
    %3568 = vmatpush1.bf16.msra.mxu0 0
    %3569 = vmatprep.subr.bf16.mxu0 0
    %3570 = vmatpush1.bf16.msra.mxu0 0
    %3571 = vmatprep.subr.bf16.mxu0 0
    %3572 = vmatpush1.bf16.msra.mxu0 0
    %3573 = vmatprep.subr.bf16.mxu0 0
    %3574 = vmatpush1.bf16.msra.mxu0 0
    %3575 = vmatprep.mubr.bf16.mxu0 0
    %3576 = vmatmul.mubr.bf16.gmra.mrb[0].mxu0 %v3350
    %v3577 = vpop.f32.mrb[0].mxu0
    %v3578 = vadd.f32 0.0, %v3577
    %v3579 = vpop.f32.mrb[0].mxu0
    %v3580 = vadd.f32 0.0, %v3579
    %v3581 = vpop.f32.mrb[0].mxu0
    %v3582 = vpop.f32.mrb[0].mxu0
    %3583 = vdwg.mxu0
    %3584 = vmatprep.subr.bf16.mxu0 %v3482
    %3585 = vmatpush1.bf16.msra.mxu0 %v3481
    %3586 = vmatprep.subr.bf16.mxu0 %v3486
    %3587 = vmatpush1.bf16.msra.mxu0 %v3485
    %3588 = vmatprep.subr.bf16.mxu0 %v3490
    %3589 = vmatpush1.bf16.msra.mxu0 %v3489
    %3590 = vmatprep.subr.bf16.mxu0 %v3494
    %3591 = vmatpush1.bf16.msra.mxu0 %v3493
    %3592 = vmatprep.subr.bf16.mxu0 %v3498
    %3593 = vmatpush1.bf16.msra.mxu0 %v3497
    %3594 = vmatprep.subr.bf16.mxu0 %v3502
    %3595 = vmatpush1.bf16.msra.mxu0 %v3501
    %3596 = vmatprep.subr.bf16.mxu0 %v3506
    %3597 = vmatpush1.bf16.msra.mxu0 %v3505
    %3598 = vmatprep.subr.bf16.mxu0 %v3510
    %3599 = vmatpush1.bf16.msra.mxu0 %v3509
    %3600 = vmatprep.subr.bf16.mxu0 0
    %3601 = vmatpush1.bf16.msra.mxu0 0
    %3602 = vmatprep.subr.bf16.mxu0 0
    %3603 = vmatpush1.bf16.msra.mxu0 0
    %3604 = vmatprep.subr.bf16.mxu0 0
    %3605 = vmatpush1.bf16.msra.mxu0 0
    %3606 = vmatprep.subr.bf16.mxu0 0
    %3607 = vmatpush1.bf16.msra.mxu0 0
    %3608 = vmatprep.subr.bf16.mxu0 0
    %3609 = vmatpush1.bf16.msra.mxu0 0
    %3610 = vmatprep.subr.bf16.mxu0 0
    %3611 = vmatpush1.bf16.msra.mxu0 0
    %3612 = vmatprep.subr.bf16.mxu0 0
    %3613 = vmatpush1.bf16.msra.mxu0 0
    %3614 = vmatprep.subr.bf16.mxu0 0
    %3615 = vmatpush1.bf16.msra.mxu0 0
    %3616 = vmatprep.mubr.bf16.mxu0 0
    %3617 = vmatmul.mubr.bf16.gmra.mrb[0].mxu0 %v3350
    %v3618 = vpop.f32.mrb[0].mxu0
    %v3619 = vadd.f32 0.0, %v3618
    %v3620 = vpop.f32.mrb[0].mxu0
    %v3621 = vadd.f32 0.0, %v3620
    %v3622 = vpop.f32.mrb[0].mxu0
    %v3623 = vpop.f32.mrb[0].mxu0
    %3624 = vdwg.mxu0
    %v3625 = vadd.f32 %v3346, %v3578
    %v3626 = vadd.f32 %v3347, %v3580
    %v3627 = vadd.f32 %v3348, %v3619
    %v3628 = vadd.f32 %v3349, %v3621
    %v3629 = vxor.u32 %v3625, 2147483648
    %v3630 = vxor.u32 %v3626, 2147483648
    %v3631 = vmul.f32 %v3629, 1.442695
    %v3632 = vpow.pop %v3631
    %v3633 = vmul.f32 %v3630, 1.442695
    %v3634 = vpow.pop %v3633
    %v3635 = vadd.f32 %v3632, 1.0
    %v3636 = vadd.f32 %v3634, 1.0
    %v3637 = vrcp.pop %v3635
    %v3638 = vmul.f32 1.0, %v3637
    %v3639 = vrcp.pop %v3636
    %v3640 = vmul.f32 1.0, %v3639
    %v3641 = vtanh.pop %v3627
    %v3642 = vxor.u32 %v3628, 2147483648
    %v3643 = vmul.f32 %v3642, 1.442695
    %v3644 = vpow.pop %v3643
    %v3645 = vadd.f32 %v3644, 1.0
    %v3646 = vrcp.pop %v3645
    %v3647 = vmul.f32 1.0, %v3646
    %v3648 = vmul.f32 %v3640, %v3034
    %v3649 = vmul.f32 %v3638, %v3641
    %v3650 = vadd.f32 %v3648, %v3649
    %v3651 = vtanh.pop %v3650
    %v3652 = vmul.f32 %v3647, %v3651
    %3653 = vst [vmem:[%s7 + $0x40] sm:$0xff] %v3652
    %v3654 = vld [vmem:[#allocation3 + $0x60] sm:$0xff]
    %v3655 = vld [vmem:[#allocation3 + $0x68] sm:$0xff]
    %v3656 = vld [vmem:[#allocation3 + $0x70] sm:$0xff]
    %v3657 = vld [vmem:[#allocation3 + $0x78] sm:$0xff]
    %v3658 = vpack.c.bf16 %v3344, %v3344
    %v3659 = vld [vmem:[#allocation8] sm:$0xff]
    %v3660 = vld [vmem:[#allocation8 + $0x8] sm:$0xff]
    %v3661 = vld [vmem:[#allocation8 + $0x10] sm:$0xff]
    %v3662 = vld [vmem:[#allocation8 + $0x18] sm:$0xff]
    %v3663 = vld [vmem:[#allocation8 + $0x20] sm:$0xff]
    %v3664 = vld [vmem:[#allocation8 + $0x28] sm:$0xff]
    %v3665 = vld [vmem:[#allocation8 + $0x30] sm:$0xff]
    %v3666 = vld [vmem:[#allocation8 + $0x38] sm:$0xff]
    %v3667 = vld [vmem:[#allocation8 + $0x40] sm:$0xff]
    %v3668 = vld [vmem:[#allocation8 + $0x48] sm:$0xff]
    %v3669 = vld [vmem:[#allocation8 + $0x50] sm:$0xff]
    %v3670 = vld [vmem:[#allocation8 + $0x58] sm:$0xff]
    %v3671 = vld [vmem:[#allocation8 + $0x60] sm:$0xff]
    %v3672 = vld [vmem:[#allocation8 + $0x68] sm:$0xff]
    %v3673 = vld [vmem:[#allocation8 + $0x70] sm:$0xff]
    %v3674 = vld [vmem:[#allocation8 + $0x78] sm:$0xff]
    %v3675 = vld [vmem:[#allocation8 + $0x80] sm:$0xff]
    %v3676 = vld [vmem:[#allocation8 + $0x88] sm:$0xff]
    %v3677 = vld [vmem:[#allocation8 + $0x90] sm:$0xff]
    %v3678 = vld [vmem:[#allocation8 + $0x98] sm:$0xff]
    %v3679 = vld [vmem:[#allocation8 + $0xa0] sm:$0xff]
    %v3680 = vld [vmem:[#allocation8 + $0xa8] sm:$0xff]
    %v3681 = vld [vmem:[#allocation8 + $0xb0] sm:$0xff]
    %v3682 = vld [vmem:[#allocation8 + $0xb8] sm:$0xff]
    %v3683 = vld [vmem:[#allocation8 + $0xc0] sm:$0xff]
    %v3684 = vld [vmem:[#allocation8 + $0xc8] sm:$0xff]
    %v3685 = vld [vmem:[#allocation8 + $0xd0] sm:$0xff]
    %v3686 = vld [vmem:[#allocation8 + $0xd8] sm:$0xff]
    %v3687 = vld [vmem:[#allocation8 + $0xe0] sm:$0xff]
    %v3688 = vld [vmem:[#allocation8 + $0xe8] sm:$0xff]
    %v3689 = vld [vmem:[#allocation8 + $0xf0] sm:$0xff]
    %v3690 = vld [vmem:[#allocation8 + $0xf8] sm:$0xff]
    %v3723 = vunpack.c.l.b16 %v3659
    %v3724 = vunpack.c.h.b16 %v3659
    %v3725 = vunpack.c.l.b16 %v3660
    %v3726 = vunpack.c.h.b16 %v3660
    %v3727 = vunpack.c.l.b16 %v3661
    %v3728 = vunpack.c.h.b16 %v3661
    %v3729 = vunpack.c.l.b16 %v3662
    %v3730 = vunpack.c.h.b16 %v3662
    %v3731 = vunpack.c.l.b16 %v3663
    %v3732 = vunpack.c.h.b16 %v3663
    %v3733 = vunpack.c.l.b16 %v3664
    %v3734 = vunpack.c.h.b16 %v3664
    %v3735 = vunpack.c.l.b16 %v3665
    %v3736 = vunpack.c.h.b16 %v3665
    %v3737 = vunpack.c.l.b16 %v3666
    %v3738 = vunpack.c.h.b16 %v3666
    %v3739 = vunpack.c.l.b16 %v3667
    %v3740 = vunpack.c.h.b16 %v3667
    %v3741 = vunpack.c.l.b16 %v3668
    %v3742 = vunpack.c.h.b16 %v3668
    %v3743 = vunpack.c.l.b16 %v3669
    %v3744 = vunpack.c.h.b16 %v3669
    %v3745 = vunpack.c.l.b16 %v3670
    %v3746 = vunpack.c.h.b16 %v3670
    %v3747 = vunpack.c.l.b16 %v3671
    %v3748 = vunpack.c.h.b16 %v3671
    %v3749 = vunpack.c.l.b16 %v3672
    %v3750 = vunpack.c.h.b16 %v3672
    %v3751 = vunpack.c.l.b16 %v3673
    %v3752 = vunpack.c.h.b16 %v3673
    %v3753 = vunpack.c.l.b16 %v3674
    %v3754 = vunpack.c.h.b16 %v3674
    %v3755 = vunpack.c.l.b16 %v3675
    %v3756 = vunpack.c.h.b16 %v3675
    %v3757 = vunpack.c.l.b16 %v3676
    %v3758 = vunpack.c.h.b16 %v3676
    %v3759 = vunpack.c.l.b16 %v3677
    %v3760 = vunpack.c.h.b16 %v3677
    %v3761 = vunpack.c.l.b16 %v3678
    %v3762 = vunpack.c.h.b16 %v3678
    %v3763 = vunpack.c.l.b16 %v3679
    %v3764 = vunpack.c.h.b16 %v3679
    %v3765 = vunpack.c.l.b16 %v3680
    %v3766 = vunpack.c.h.b16 %v3680
    %v3767 = vunpack.c.l.b16 %v3681
    %v3768 = vunpack.c.h.b16 %v3681
    %v3769 = vunpack.c.l.b16 %v3682
    %v3770 = vunpack.c.h.b16 %v3682
    %v3771 = vunpack.c.l.b16 %v3683
    %v3772 = vunpack.c.h.b16 %v3683
    %v3773 = vunpack.c.l.b16 %v3684
    %v3774 = vunpack.c.h.b16 %v3684
    %v3775 = vunpack.c.l.b16 %v3685
    %v3776 = vunpack.c.h.b16 %v3685
    %v3777 = vunpack.c.l.b16 %v3686
    %v3778 = vunpack.c.h.b16 %v3686
    %v3779 = vunpack.c.l.b16 %v3687
    %v3780 = vunpack.c.h.b16 %v3687
    %v3781 = vunpack.c.l.b16 %v3688
    %v3782 = vunpack.c.h.b16 %v3688
    %v3783 = vunpack.c.l.b16 %v3689
    %v3784 = vunpack.c.h.b16 %v3689
    %v3785 = vunpack.c.l.b16 %v3690
    %v3786 = vunpack.c.h.b16 %v3690
    %v3787 = vpack.c.b16 %v3727, %v3723
    %v3788 = vpack.c.b16 %v3728, %v3724
    %v3789 = vpack.c.b16 %v3729, %v3725
    %v3790 = vpack.c.b16 %v3730, %v3726
    %v3791 = vpack.c.b16 %v3735, %v3731
    %v3792 = vpack.c.b16 %v3736, %v3732
    %v3793 = vpack.c.b16 %v3737, %v3733
    %v3794 = vpack.c.b16 %v3738, %v3734
    %v3795 = vpack.c.b16 %v3743, %v3739
    %v3796 = vpack.c.b16 %v3744, %v3740
    %v3797 = vpack.c.b16 %v3745, %v3741
    %v3798 = vpack.c.b16 %v3746, %v3742
    %v3799 = vpack.c.b16 %v3751, %v3747
    %v3800 = vpack.c.b16 %v3752, %v3748
    %v3801 = vpack.c.b16 %v3753, %v3749
    %v3802 = vpack.c.b16 %v3754, %v3750
    %v3803 = vpack.c.b16 %v3759, %v3755
    %v3804 = vpack.c.b16 %v3760, %v3756
    %v3805 = vpack.c.b16 %v3761, %v3757
    %v3806 = vpack.c.b16 %v3762, %v3758
    %v3807 = vpack.c.b16 %v3767, %v3763
    %v3808 = vpack.c.b16 %v3768, %v3764
    %v3809 = vpack.c.b16 %v3769, %v3765
    %v3810 = vpack.c.b16 %v3770, %v3766
    %v3811 = vpack.c.b16 %v3775, %v3771
    %v3812 = vpack.c.b16 %v3776, %v3772
    %v3813 = vpack.c.b16 %v3777, %v3773
    %v3814 = vpack.c.b16 %v3778, %v3774
    %v3815 = vpack.c.b16 %v3783, %v3779
    %v3816 = vpack.c.b16 %v3784, %v3780
    %v3817 = vpack.c.b16 %v3785, %v3781
    %v3818 = vpack.c.b16 %v3786, %v3782
    %3851 = vmatprep.subr.bf16.mxu0 %v3788
    %3852 = vmatpush1.bf16.msra.mxu0 %v3787
    %3853 = vmatprep.subr.bf16.mxu0 %v3792
    %3854 = vmatpush1.bf16.msra.mxu0 %v3791
    %3855 = vmatprep.subr.bf16.mxu0 %v3796
    %3856 = vmatpush1.bf16.msra.mxu0 %v3795
    %3857 = vmatprep.subr.bf16.mxu0 %v3800
    %3858 = vmatpush1.bf16.msra.mxu0 %v3799
    %3859 = vmatprep.subr.bf16.mxu0 %v3804
    %3860 = vmatpush1.bf16.msra.mxu0 %v3803
    %3861 = vmatprep.subr.bf16.mxu0 %v3808
    %3862 = vmatpush1.bf16.msra.mxu0 %v3807
    %3863 = vmatprep.subr.bf16.mxu0 %v3812
    %3864 = vmatpush1.bf16.msra.mxu0 %v3811
    %3865 = vmatprep.subr.bf16.mxu0 %v3816
    %3866 = vmatpush1.bf16.msra.mxu0 %v3815
    %3867 = vmatprep.subr.bf16.mxu0 0
    %3868 = vmatpush1.bf16.msra.mxu0 0
    %3869 = vmatprep.subr.bf16.mxu0 0
    %3870 = vmatpush1.bf16.msra.mxu0 0
    %3871 = vmatprep.subr.bf16.mxu0 0
    %3872 = vmatpush1.bf16.msra.mxu0 0
    %3873 = vmatprep.subr.bf16.mxu0 0
    %3874 = vmatpush1.bf16.msra.mxu0 0
    %3875 = vmatprep.subr.bf16.mxu0 0
    %3876 = vmatpush1.bf16.msra.mxu0 0
    %3877 = vmatprep.subr.bf16.mxu0 0
    %3878 = vmatpush1.bf16.msra.mxu0 0
    %3879 = vmatprep.subr.bf16.mxu0 0
    %3880 = vmatpush1.bf16.msra.mxu0 0
    %3881 = vmatprep.subr.bf16.mxu0 0
    %3882 = vmatpush1.bf16.msra.mxu0 0
    %3883 = vmatprep.mubr.bf16.mxu0 0
    %3884 = vmatmul.mubr.bf16.gmra.mrb[0].mxu0 %v3658
    %v3885 = vpop.f32.mrb[0].mxu0
    %v3886 = vadd.f32 0.0, %v3885
    %v3887 = vpop.f32.mrb[0].mxu0
    %v3888 = vadd.f32 0.0, %v3887
    %v3889 = vpop.f32.mrb[0].mxu0
    %v3890 = vpop.f32.mrb[0].mxu0
    %3891 = vdwg.mxu0
    %3892 = vmatprep.subr.bf16.mxu0 %v3790
    %3893 = vmatpush1.bf16.msra.mxu0 %v3789
    %3894 = vmatprep.subr.bf16.mxu0 %v3794
    %3895 = vmatpush1.bf16.msra.mxu0 %v3793
    %3896 = vmatprep.subr.bf16.mxu0 %v3798
    %3897 = vmatpush1.bf16.msra.mxu0 %v3797
    %3898 = vmatprep.subr.bf16.mxu0 %v3802
    %3899 = vmatpush1.bf16.msra.mxu0 %v3801
    %3900 = vmatprep.subr.bf16.mxu0 %v3806
    %3901 = vmatpush1.bf16.msra.mxu0 %v3805
    %3902 = vmatprep.subr.bf16.mxu0 %v3810
    %3903 = vmatpush1.bf16.msra.mxu0 %v3809
    %3904 = vmatprep.subr.bf16.mxu0 %v3814
    %3905 = vmatpush1.bf16.msra.mxu0 %v3813
    %3906 = vmatprep.subr.bf16.mxu0 %v3818
    %3907 = vmatpush1.bf16.msra.mxu0 %v3817
    %3908 = vmatprep.subr.bf16.mxu0 0
    %3909 = vmatpush1.bf16.msra.mxu0 0
    %3910 = vmatprep.subr.bf16.mxu0 0
    %3911 = vmatpush1.bf16.msra.mxu0 0
    %3912 = vmatprep.subr.bf16.mxu0 0
    %3913 = vmatpush1.bf16.msra.mxu0 0
    %3914 = vmatprep.subr.bf16.mxu0 0
    %3915 = vmatpush1.bf16.msra.mxu0 0
    %3916 = vmatprep.subr.bf16.mxu0 0
    %3917 = vmatpush1.bf16.msra.mxu0 0
    %3918 = vmatprep.subr.bf16.mxu0 0
    %3919 = vmatpush1.bf16.msra.mxu0 0
    %3920 = vmatprep.subr.bf16.mxu0 0
    %3921 = vmatpush1.bf16.msra.mxu0 0
    %3922 = vmatprep.subr.bf16.mxu0 0
    %3923 = vmatpush1.bf16.msra.mxu0 0
    %3924 = vmatprep.mubr.bf16.mxu0 0
    %3925 = vmatmul.mubr.bf16.gmra.mrb[0].mxu0 %v3658
    %v3926 = vpop.f32.mrb[0].mxu0
    %v3927 = vadd.f32 0.0, %v3926
    %v3928 = vpop.f32.mrb[0].mxu0
    %v3929 = vadd.f32 0.0, %v3928
    %v3930 = vpop.f32.mrb[0].mxu0
    %v3931 = vpop.f32.mrb[0].mxu0
    %3932 = vdwg.mxu0
    %v3933 = vadd.f32 %v3654, %v3886
    %v3934 = vadd.f32 %v3655, %v3888
    %v3935 = vadd.f32 %v3656, %v3927
    %v3936 = vadd.f32 %v3657, %v3929
    %v3937 = vxor.u32 %v3933, 2147483648
    %v3938 = vxor.u32 %v3934, 2147483648
    %v3939 = vmul.f32 %v3937, 1.442695
    %v3940 = vpow.pop %v3939
    %v3941 = vmul.f32 %v3938, 1.442695
    %v3942 = vpow.pop %v3941
    %v3943 = vadd.f32 %v3940, 1.0
    %v3944 = vadd.f32 %v3942, 1.0
    %v3945 = vrcp.pop %v3943
    %v3946 = vmul.f32 1.0, %v3945
    %v3947 = vrcp.pop %v3944
    %v3948 = vmul.f32 1.0, %v3947
    %v3949 = vtanh.pop %v3935
    %v3950 = vxor.u32 %v3936, 2147483648
    %v3951 = vmul.f32 %v3950, 1.442695
    %v3952 = vpow.pop %v3951
    %v3953 = vadd.f32 %v3952, 1.0
    %v3954 = vrcp.pop %v3953
    %v3955 = vmul.f32 1.0, %v3954
    %v3956 = vmul.f32 %v3948, %v3342
    %v3957 = vmul.f32 %v3946, %v3949
    %v3958 = vadd.f32 %v3956, %v3957
    %v3959 = vtanh.pop %v3958
    %v3960 = vmul.f32 %v3955, %v3959
    %3961 = vst [vmem:[%s7 + $0x38] sm:$0xff] %v3960
    %v3962 = vld [vmem:[#allocation2 + $0xa0] sm:$0xff]
    %v3963 = vld [vmem:[#allocation2 + $0xa8] sm:$0xff]
    %v3964 = vld [vmem:[#allocation2 + $0xb0] sm:$0xff]
    %v3965 = vld [vmem:[#allocation2 + $0xb8] sm:$0xff]
    %v3966 = vpack.c.bf16 %v3652, %v3652
    %v3967 = vld [vmem:[#allocation4] sm:$0xff]
    %v3968 = vld [vmem:[#allocation4 + $0x8] sm:$0xff]
    %v3969 = vld [vmem:[#allocation4 + $0x10] sm:$0xff]
    %v3970 = vld [vmem:[#allocation4 + $0x18] sm:$0xff]
    %v3971 = vld [vmem:[#allocation4 + $0x20] sm:$0xff]
    %v3972 = vld [vmem:[#allocation4 + $0x28] sm:$0xff]
    %v3973 = vld [vmem:[#allocation4 + $0x30] sm:$0xff]
    %v3974 = vld [vmem:[#allocation4 + $0x38] sm:$0xff]
    %v3975 = vld [vmem:[#allocation4 + $0x40] sm:$0xff]
    %v3976 = vld [vmem:[#allocation4 + $0x48] sm:$0xff]
    %v3977 = vld [vmem:[#allocation4 + $0x50] sm:$0xff]
    %v3978 = vld [vmem:[#allocation4 + $0x58] sm:$0xff]
    %v3979 = vld [vmem:[#allocation4 + $0x60] sm:$0xff]
    %v3980 = vld [vmem:[#allocation4 + $0x68] sm:$0xff]
    %v3981 = vld [vmem:[#allocation4 + $0x70] sm:$0xff]
    %v3982 = vld [vmem:[#allocation4 + $0x78] sm:$0xff]
    %v3983 = vld [vmem:[#allocation4 + $0x80] sm:$0xff]
    %v3984 = vld [vmem:[#allocation4 + $0x88] sm:$0xff]
    %v3985 = vld [vmem:[#allocation4 + $0x90] sm:$0xff]
    %v3986 = vld [vmem:[#allocation4 + $0x98] sm:$0xff]
    %v3987 = vld [vmem:[#allocation4 + $0xa0] sm:$0xff]
    %v3988 = vld [vmem:[#allocation4 + $0xa8] sm:$0xff]
    %v3989 = vld [vmem:[#allocation4 + $0xb0] sm:$0xff]
    %v3990 = vld [vmem:[#allocation4 + $0xb8] sm:$0xff]
    %v3991 = vld [vmem:[#allocation4 + $0xc0] sm:$0xff]
    %v3992 = vld [vmem:[#allocation4 + $0xc8] sm:$0xff]
    %v3993 = vld [vmem:[#allocation4 + $0xd0] sm:$0xff]
    %v3994 = vld [vmem:[#allocation4 + $0xd8] sm:$0xff]
    %v3995 = vld [vmem:[#allocation4 + $0xe0] sm:$0xff]
    %v3996 = vld [vmem:[#allocation4 + $0xe8] sm:$0xff]
    %v3997 = vld [vmem:[#allocation4 + $0xf0] sm:$0xff]
    %v3998 = vld [vmem:[#allocation4 + $0xf8] sm:$0xff]
    %v4031 = vunpack.c.l.b16 %v3967
    %v4032 = vunpack.c.h.b16 %v3967
    %v4033 = vunpack.c.l.b16 %v3968
    %v4034 = vunpack.c.h.b16 %v3968
    %v4035 = vunpack.c.l.b16 %v3969
    %v4036 = vunpack.c.h.b16 %v3969
    %v4037 = vunpack.c.l.b16 %v3970
    %v4038 = vunpack.c.h.b16 %v3970
    %v4039 = vunpack.c.l.b16 %v3971
    %v4040 = vunpack.c.h.b16 %v3971
    %v4041 = vunpack.c.l.b16 %v3972
    %v4042 = vunpack.c.h.b16 %v3972
    %v4043 = vunpack.c.l.b16 %v3973
    %v4044 = vunpack.c.h.b16 %v3973
    %v4045 = vunpack.c.l.b16 %v3974
    %v4046 = vunpack.c.h.b16 %v3974
    %v4047 = vunpack.c.l.b16 %v3975
    %v4048 = vunpack.c.h.b16 %v3975
    %v4049 = vunpack.c.l.b16 %v3976
    %v4050 = vunpack.c.h.b16 %v3976
    %v4051 = vunpack.c.l.b16 %v3977
    %v4052 = vunpack.c.h.b16 %v3977
    %v4053 = vunpack.c.l.b16 %v3978
    %v4054 = vunpack.c.h.b16 %v3978
    %v4055 = vunpack.c.l.b16 %v3979
    %v4056 = vunpack.c.h.b16 %v3979
    %v4057 = vunpack.c.l.b16 %v3980
    %v4058 = vunpack.c.h.b16 %v3980
    %v4059 = vunpack.c.l.b16 %v3981
    %v4060 = vunpack.c.h.b16 %v3981
    %v4061 = vunpack.c.l.b16 %v3982
    %v4062 = vunpack.c.h.b16 %v3982
    %v4063 = vunpack.c.l.b16 %v3983
    %v4064 = vunpack.c.h.b16 %v3983
    %v4065 = vunpack.c.l.b16 %v3984
    %v4066 = vunpack.c.h.b16 %v3984
    %v4067 = vunpack.c.l.b16 %v3985
    %v4068 = vunpack.c.h.b16 %v3985
    %v4069 = vunpack.c.l.b16 %v3986
    %v4070 = vunpack.c.h.b16 %v3986
    %v4071 = vunpack.c.l.b16 %v3987
    %v4072 = vunpack.c.h.b16 %v3987
    %v4073 = vunpack.c.l.b16 %v3988
    %v4074 = vunpack.c.h.b16 %v3988
    %v4075 = vunpack.c.l.b16 %v3989
    %v4076 = vunpack.c.h.b16 %v3989
    %v4077 = vunpack.c.l.b16 %v3990
    %v4078 = vunpack.c.h.b16 %v3990
    %v4079 = vunpack.c.l.b16 %v3991
    %v4080 = vunpack.c.h.b16 %v3991
    %v4081 = vunpack.c.l.b16 %v3992
    %v4082 = vunpack.c.h.b16 %v3992
    %v4083 = vunpack.c.l.b16 %v3993
    %v4084 = vunpack.c.h.b16 %v3993
    %v4085 = vunpack.c.l.b16 %v3994
    %v4086 = vunpack.c.h.b16 %v3994
    %v4087 = vunpack.c.l.b16 %v3995
    %v4088 = vunpack.c.h.b16 %v3995
    %v4089 = vunpack.c.l.b16 %v3996
    %v4090 = vunpack.c.h.b16 %v3996
    %v4091 = vunpack.c.l.b16 %v3997
    %v4092 = vunpack.c.h.b16 %v3997
    %v4093 = vunpack.c.l.b16 %v3998
    %v4094 = vunpack.c.h.b16 %v3998
    %v4095 = vpack.c.b16 %v4035, %v4031
    %v4096 = vpack.c.b16 %v4036, %v4032
    %v4097 = vpack.c.b16 %v4037, %v4033
    %v4098 = vpack.c.b16 %v4038, %v4034
    %v4099 = vpack.c.b16 %v4043, %v4039
    %v4100 = vpack.c.b16 %v4044, %v4040
    %v4101 = vpack.c.b16 %v4045, %v4041
    %v4102 = vpack.c.b16 %v4046, %v4042
    %v4103 = vpack.c.b16 %v4051, %v4047
    %v4104 = vpack.c.b16 %v4052, %v4048
    %v4105 = vpack.c.b16 %v4053, %v4049
    %v4106 = vpack.c.b16 %v4054, %v4050
    %v4107 = vpack.c.b16 %v4059, %v4055
    %v4108 = vpack.c.b16 %v4060, %v4056
    %v4109 = vpack.c.b16 %v4061, %v4057
    %v4110 = vpack.c.b16 %v4062, %v4058
    %v4111 = vpack.c.b16 %v4067, %v4063
    %v4112 = vpack.c.b16 %v4068, %v4064
    %v4113 = vpack.c.b16 %v4069, %v4065
    %v4114 = vpack.c.b16 %v4070, %v4066
    %v4115 = vpack.c.b16 %v4075, %v4071
    %v4116 = vpack.c.b16 %v4076, %v4072
    %v4117 = vpack.c.b16 %v4077, %v4073
    %v4118 = vpack.c.b16 %v4078, %v4074
    %v4119 = vpack.c.b16 %v4083, %v4079
    %v4120 = vpack.c.b16 %v4084, %v4080
    %v4121 = vpack.c.b16 %v4085, %v4081
    %v4122 = vpack.c.b16 %v4086, %v4082
    %v4123 = vpack.c.b16 %v4091, %v4087
    %v4124 = vpack.c.b16 %v4092, %v4088
    %v4125 = vpack.c.b16 %v4093, %v4089
    %v4126 = vpack.c.b16 %v4094, %v4090
    %4159 = vmatprep.subr.bf16.mxu0 %v4096
    %4160 = vmatpush1.bf16.msra.mxu0 %v4095
    %4161 = vmatprep.subr.bf16.mxu0 %v4100
    %4162 = vmatpush1.bf16.msra.mxu0 %v4099
    %4163 = vmatprep.subr.bf16.mxu0 %v4104
    %4164 = vmatpush1.bf16.msra.mxu0 %v4103
    %4165 = vmatprep.subr.bf16.mxu0 %v4108
    %4166 = vmatpush1.bf16.msra.mxu0 %v4107
    %4167 = vmatprep.subr.bf16.mxu0 %v4112
    %4168 = vmatpush1.bf16.msra.mxu0 %v4111
    %4169 = vmatprep.subr.bf16.mxu0 %v4116
    %4170 = vmatpush1.bf16.msra.mxu0 %v4115
    %4171 = vmatprep.subr.bf16.mxu0 %v4120
    %4172 = vmatpush1.bf16.msra.mxu0 %v4119
    %4173 = vmatprep.subr.bf16.mxu0 %v4124
    %4174 = vmatpush1.bf16.msra.mxu0 %v4123
    %4175 = vmatprep.subr.bf16.mxu0 0
    %4176 = vmatpush1.bf16.msra.mxu0 0
    %4177 = vmatprep.subr.bf16.mxu0 0
    %4178 = vmatpush1.bf16.msra.mxu0 0
    %4179 = vmatprep.subr.bf16.mxu0 0
    %4180 = vmatpush1.bf16.msra.mxu0 0
    %4181 = vmatprep.subr.bf16.mxu0 0
    %4182 = vmatpush1.bf16.msra.mxu0 0
    %4183 = vmatprep.subr.bf16.mxu0 0
    %4184 = vmatpush1.bf16.msra.mxu0 0
    %4185 = vmatprep.subr.bf16.mxu0 0
    %4186 = vmatpush1.bf16.msra.mxu0 0
    %4187 = vmatprep.subr.bf16.mxu0 0
    %4188 = vmatpush1.bf16.msra.mxu0 0
    %4189 = vmatprep.subr.bf16.mxu0 0
    %4190 = vmatpush1.bf16.msra.mxu0 0
    %4191 = vmatprep.mubr.bf16.mxu0 0
    %4192 = vmatmul.mubr.bf16.gmra.mrb[0].mxu0 %v3966
    %v4193 = vpop.f32.mrb[0].mxu0
    %v4194 = vadd.f32 0.0, %v4193
    %v4195 = vpop.f32.mrb[0].mxu0
    %v4196 = vadd.f32 0.0, %v4195
    %v4197 = vpop.f32.mrb[0].mxu0
    %v4198 = vpop.f32.mrb[0].mxu0
    %4199 = vdwg.mxu0
    %4200 = vmatprep.subr.bf16.mxu0 %v4098
    %4201 = vmatpush1.bf16.msra.mxu0 %v4097
    %4202 = vmatprep.subr.bf16.mxu0 %v4102
    %4203 = vmatpush1.bf16.msra.mxu0 %v4101
    %4204 = vmatprep.subr.bf16.mxu0 %v4106
    %4205 = vmatpush1.bf16.msra.mxu0 %v4105
    %4206 = vmatprep.subr.bf16.mxu0 %v4110
    %4207 = vmatpush1.bf16.msra.mxu0 %v4109
    %4208 = vmatprep.subr.bf16.mxu0 %v4114
    %4209 = vmatpush1.bf16.msra.mxu0 %v4113
    %4210 = vmatprep.subr.bf16.mxu0 %v4118
    %4211 = vmatpush1.bf16.msra.mxu0 %v4117
    %4212 = vmatprep.subr.bf16.mxu0 %v4122
    %4213 = vmatpush1.bf16.msra.mxu0 %v4121
    %4214 = vmatprep.subr.bf16.mxu0 %v4126
    %4215 = vmatpush1.bf16.msra.mxu0 %v4125
    %4216 = vmatprep.subr.bf16.mxu0 0
    %4217 = vmatpush1.bf16.msra.mxu0 0
    %4218 = vmatprep.subr.bf16.mxu0 0
    %4219 = vmatpush1.bf16.msra.mxu0 0
    %4220 = vmatprep.subr.bf16.mxu0 0
    %4221 = vmatpush1.bf16.msra.mxu0 0
    %4222 = vmatprep.subr.bf16.mxu0 0
    %4223 = vmatpush1.bf16.msra.mxu0 0
    %4224 = vmatprep.subr.bf16.mxu0 0
    %4225 = vmatpush1.bf16.msra.mxu0 0
    %4226 = vmatprep.subr.bf16.mxu0 0
    %4227 = vmatpush1.bf16.msra.mxu0 0
    %4228 = vmatprep.subr.bf16.mxu0 0
    %4229 = vmatpush1.bf16.msra.mxu0 0
    %4230 = vmatprep.subr.bf16.mxu0 0
    %4231 = vmatpush1.bf16.msra.mxu0 0
    %4232 = vmatprep.mubr.bf16.mxu0 0
    %4233 = vmatmul.mubr.bf16.gmra.mrb[0].mxu0 %v3966
    %v4234 = vpop.f32.mrb[0].mxu0
    %v4235 = vadd.f32 0.0, %v4234
    %v4236 = vpop.f32.mrb[0].mxu0
    %v4237 = vadd.f32 0.0, %v4236
    %v4238 = vpop.f32.mrb[0].mxu0
    %v4239 = vpop.f32.mrb[0].mxu0
    %4240 = vdwg.mxu0
    %v4241 = vadd.f32 %v3962, %v4194
    %v4242 = vadd.f32 %v3963, %v4196
    %v4243 = vadd.f32 %v3964, %v4235
    %v4244 = vadd.f32 %v3965, %v4237
    %v4245 = vxor.u32 %v4241, 2147483648
    %v4246 = vxor.u32 %v4242, 2147483648
    %v4247 = vmul.f32 %v4245, 1.442695
    %v4248 = vpow.pop %v4247
    %v4249 = vmul.f32 %v4246, 1.442695
    %v4250 = vpow.pop %v4249
    %v4251 = vadd.f32 %v4248, 1.0
    %v4252 = vadd.f32 %v4250, 1.0
    %v4253 = vrcp.pop %v4251
    %v4254 = vmul.f32 1.0, %v4253
    %v4255 = vrcp.pop %v4252
    %v4256 = vmul.f32 1.0, %v4255
    %v4257 = vtanh.pop %v4243
    %v4258 = vxor.u32 %v4244, 2147483648
    %v4259 = vmul.f32 %v4258, 1.442695
    %v4260 = vpow.pop %v4259
    %v4261 = vadd.f32 %v4260, 1.0
    %v4262 = vrcp.pop %v4261
    %v4263 = vmul.f32 1.0, %v4262
    %v4264 = vmul.f32 %v4256, %v3650
    %v4265 = vmul.f32 %v4254, %v4257
    %v4266 = vadd.f32 %v4264, %v4265
    %v4267 = vtanh.pop %v4266
    %v4268 = vmul.f32 %v4263, %v4267
    %4269 = vst [vmem:[%s7 + $0x50] sm:$0xff] %v4268
    %v4270 = vld [vmem:[#allocation3 + $0x40] sm:$0xff]
    %v4271 = vld [vmem:[#allocation3 + $0x48] sm:$0xff]
    %v4272 = vld [vmem:[#allocation3 + $0x50] sm:$0xff]
    %v4273 = vld [vmem:[#allocation3 + $0x58] sm:$0xff]
    %v4274 = vpack.c.bf16 %v3960, %v3960
    %v4275 = vld [vmem:[#allocation8] sm:$0xff]
    %v4276 = vld [vmem:[#allocation8 + $0x8] sm:$0xff]
    %v4277 = vld [vmem:[#allocation8 + $0x10] sm:$0xff]
    %v4278 = vld [vmem:[#allocation8 + $0x18] sm:$0xff]
    %v4279 = vld [vmem:[#allocation8 + $0x20] sm:$0xff]
    %v4280 = vld [vmem:[#allocation8 + $0x28] sm:$0xff]
    %v4281 = vld [vmem:[#allocation8 + $0x30] sm:$0xff]
    %v4282 = vld [vmem:[#allocation8 + $0x38] sm:$0xff]
    %v4283 = vld [vmem:[#allocation8 + $0x40] sm:$0xff]
    %v4284 = vld [vmem:[#allocation8 + $0x48] sm:$0xff]
    %v4285 = vld [vmem:[#allocation8 + $0x50] sm:$0xff]
    %v4286 = vld [vmem:[#allocation8 + $0x58] sm:$0xff]
    %v4287 = vld [vmem:[#allocation8 + $0x60] sm:$0xff]
    %v4288 = vld [vmem:[#allocation8 + $0x68] sm:$0xff]
    %v4289 = vld [vmem:[#allocation8 + $0x70] sm:$0xff]
    %v4290 = vld [vmem:[#allocation8 + $0x78] sm:$0xff]
    %v4291 = vld [vmem:[#allocation8 + $0x80] sm:$0xff]
    %v4292 = vld [vmem:[#allocation8 + $0x88] sm:$0xff]
    %v4293 = vld [vmem:[#allocation8 + $0x90] sm:$0xff]
    %v4294 = vld [vmem:[#allocation8 + $0x98] sm:$0xff]
    %v4295 = vld [vmem:[#allocation8 + $0xa0] sm:$0xff]
    %v4296 = vld [vmem:[#allocation8 + $0xa8] sm:$0xff]
    %v4297 = vld [vmem:[#allocation8 + $0xb0] sm:$0xff]
    %v4298 = vld [vmem:[#allocation8 + $0xb8] sm:$0xff]
    %v4299 = vld [vmem:[#allocation8 + $0xc0] sm:$0xff]
    %v4300 = vld [vmem:[#allocation8 + $0xc8] sm:$0xff]
    %v4301 = vld [vmem:[#allocation8 + $0xd0] sm:$0xff]
    %v4302 = vld [vmem:[#allocation8 + $0xd8] sm:$0xff]
    %v4303 = vld [vmem:[#allocation8 + $0xe0] sm:$0xff]
    %v4304 = vld [vmem:[#allocation8 + $0xe8] sm:$0xff]
    %v4305 = vld [vmem:[#allocation8 + $0xf0] sm:$0xff]
    %v4306 = vld [vmem:[#allocation8 + $0xf8] sm:$0xff]
    %v4339 = vunpack.c.l.b16 %v4275
    %v4340 = vunpack.c.h.b16 %v4275
    %v4341 = vunpack.c.l.b16 %v4276
    %v4342 = vunpack.c.h.b16 %v4276
    %v4343 = vunpack.c.l.b16 %v4277
    %v4344 = vunpack.c.h.b16 %v4277
    %v4345 = vunpack.c.l.b16 %v4278
    %v4346 = vunpack.c.h.b16 %v4278
    %v4347 = vunpack.c.l.b16 %v4279
    %v4348 = vunpack.c.h.b16 %v4279
    %v4349 = vunpack.c.l.b16 %v4280
    %v4350 = vunpack.c.h.b16 %v4280
    %v4351 = vunpack.c.l.b16 %v4281
    %v4352 = vunpack.c.h.b16 %v4281
    %v4353 = vunpack.c.l.b16 %v4282
    %v4354 = vunpack.c.h.b16 %v4282
    %v4355 = vunpack.c.l.b16 %v4283
    %v4356 = vunpack.c.h.b16 %v4283
    %v4357 = vunpack.c.l.b16 %v4284
    %v4358 = vunpack.c.h.b16 %v4284
    %v4359 = vunpack.c.l.b16 %v4285
    %v4360 = vunpack.c.h.b16 %v4285
    %v4361 = vunpack.c.l.b16 %v4286
    %v4362 = vunpack.c.h.b16 %v4286
    %v4363 = vunpack.c.l.b16 %v4287
    %v4364 = vunpack.c.h.b16 %v4287
    %v4365 = vunpack.c.l.b16 %v4288
    %v4366 = vunpack.c.h.b16 %v4288
    %v4367 = vunpack.c.l.b16 %v4289
    %v4368 = vunpack.c.h.b16 %v4289
    %v4369 = vunpack.c.l.b16 %v4290
    %v4370 = vunpack.c.h.b16 %v4290
    %v4371 = vunpack.c.l.b16 %v4291
    %v4372 = vunpack.c.h.b16 %v4291
    %v4373 = vunpack.c.l.b16 %v4292
    %v4374 = vunpack.c.h.b16 %v4292
    %v4375 = vunpack.c.l.b16 %v4293
    %v4376 = vunpack.c.h.b16 %v4293
    %v4377 = vunpack.c.l.b16 %v4294
    %v4378 = vunpack.c.h.b16 %v4294
    %v4379 = vunpack.c.l.b16 %v4295
    %v4380 = vunpack.c.h.b16 %v4295
    %v4381 = vunpack.c.l.b16 %v4296
    %v4382 = vunpack.c.h.b16 %v4296
    %v4383 = vunpack.c.l.b16 %v4297
    %v4384 = vunpack.c.h.b16 %v4297
    %v4385 = vunpack.c.l.b16 %v4298
    %v4386 = vunpack.c.h.b16 %v4298
    %v4387 = vunpack.c.l.b16 %v4299
    %v4388 = vunpack.c.h.b16 %v4299
    %v4389 = vunpack.c.l.b16 %v4300
    %v4390 = vunpack.c.h.b16 %v4300
    %v4391 = vunpack.c.l.b16 %v4301
    %v4392 = vunpack.c.h.b16 %v4301
    %v4393 = vunpack.c.l.b16 %v4302
    %v4394 = vunpack.c.h.b16 %v4302
    %v4395 = vunpack.c.l.b16 %v4303
    %v4396 = vunpack.c.h.b16 %v4303
    %v4397 = vunpack.c.l.b16 %v4304
    %v4398 = vunpack.c.h.b16 %v4304
    %v4399 = vunpack.c.l.b16 %v4305
    %v4400 = vunpack.c.h.b16 %v4305
    %v4401 = vunpack.c.l.b16 %v4306
    %v4402 = vunpack.c.h.b16 %v4306
    %v4403 = vpack.c.b16 %v4343, %v4339
    %v4404 = vpack.c.b16 %v4344, %v4340
    %v4405 = vpack.c.b16 %v4345, %v4341
    %v4406 = vpack.c.b16 %v4346, %v4342
    %v4407 = vpack.c.b16 %v4351, %v4347
    %v4408 = vpack.c.b16 %v4352, %v4348
    %v4409 = vpack.c.b16 %v4353, %v4349
    %v4410 = vpack.c.b16 %v4354, %v4350
    %v4411 = vpack.c.b16 %v4359, %v4355
    %v4412 = vpack.c.b16 %v4360, %v4356
    %v4413 = vpack.c.b16 %v4361, %v4357
    %v4414 = vpack.c.b16 %v4362, %v4358
    %v4415 = vpack.c.b16 %v4367, %v4363
    %v4416 = vpack.c.b16 %v4368, %v4364
    %v4417 = vpack.c.b16 %v4369, %v4365
    %v4418 = vpack.c.b16 %v4370, %v4366
    %v4419 = vpack.c.b16 %v4375, %v4371
    %v4420 = vpack.c.b16 %v4376, %v4372
    %v4421 = vpack.c.b16 %v4377, %v4373
    %v4422 = vpack.c.b16 %v4378, %v4374
    %v4423 = vpack.c.b16 %v4383, %v4379
    %v4424 = vpack.c.b16 %v4384, %v4380
    %v4425 = vpack.c.b16 %v4385, %v4381
    %v4426 = vpack.c.b16 %v4386, %v4382
    %v4427 = vpack.c.b16 %v4391, %v4387
    %v4428 = vpack.c.b16 %v4392, %v4388
    %v4429 = vpack.c.b16 %v4393, %v4389
    %v4430 = vpack.c.b16 %v4394, %v4390
    %v4431 = vpack.c.b16 %v4399, %v4395
    %v4432 = vpack.c.b16 %v4400, %v4396
    %v4433 = vpack.c.b16 %v4401, %v4397
    %v4434 = vpack.c.b16 %v4402, %v4398
    %4467 = vmatprep.subr.bf16.mxu0 %v4404
    %4468 = vmatpush1.bf16.msra.mxu0 %v4403
    %4469 = vmatprep.subr.bf16.mxu0 %v4408
    %4470 = vmatpush1.bf16.msra.mxu0 %v4407
    %4471 = vmatprep.subr.bf16.mxu0 %v4412
    %4472 = vmatpush1.bf16.msra.mxu0 %v4411
    %4473 = vmatprep.subr.bf16.mxu0 %v4416
    %4474 = vmatpush1.bf16.msra.mxu0 %v4415
    %4475 = vmatprep.subr.bf16.mxu0 %v4420
    %4476 = vmatpush1.bf16.msra.mxu0 %v4419
    %4477 = vmatprep.subr.bf16.mxu0 %v4424
    %4478 = vmatpush1.bf16.msra.mxu0 %v4423
    %4479 = vmatprep.subr.bf16.mxu0 %v4428
    %4480 = vmatpush1.bf16.msra.mxu0 %v4427
    %4481 = vmatprep.subr.bf16.mxu0 %v4432
    %4482 = vmatpush1.bf16.msra.mxu0 %v4431
    %4483 = vmatprep.subr.bf16.mxu0 0
    %4484 = vmatpush1.bf16.msra.mxu0 0
    %4485 = vmatprep.subr.bf16.mxu0 0
    %4486 = vmatpush1.bf16.msra.mxu0 0
    %4487 = vmatprep.subr.bf16.mxu0 0
    %4488 = vmatpush1.bf16.msra.mxu0 0
    %4489 = vmatprep.subr.bf16.mxu0 0
    %4490 = vmatpush1.bf16.msra.mxu0 0
    %4491 = vmatprep.subr.bf16.mxu0 0
    %4492 = vmatpush1.bf16.msra.mxu0 0
    %4493 = vmatprep.subr.bf16.mxu0 0
    %4494 = vmatpush1.bf16.msra.mxu0 0
    %4495 = vmatprep.subr.bf16.mxu0 0
    %4496 = vmatpush1.bf16.msra.mxu0 0
    %4497 = vmatprep.subr.bf16.mxu0 0
    %4498 = vmatpush1.bf16.msra.mxu0 0
    %4499 = vmatprep.mubr.bf16.mxu0 0
    %4500 = vmatmul.mubr.bf16.gmra.mrb[0].mxu0 %v4274
    %v4501 = vpop.f32.mrb[0].mxu0
    %v4502 = vadd.f32 0.0, %v4501
    %v4503 = vpop.f32.mrb[0].mxu0
    %v4504 = vadd.f32 0.0, %v4503
    %v4505 = vpop.f32.mrb[0].mxu0
    %v4506 = vpop.f32.mrb[0].mxu0
    %4507 = vdwg.mxu0
    %4508 = vmatprep.subr.bf16.mxu0 %v4406
    %4509 = vmatpush1.bf16.msra.mxu0 %v4405
    %4510 = vmatprep.subr.bf16.mxu0 %v4410
    %4511 = vmatpush1.bf16.msra.mxu0 %v4409
    %4512 = vmatprep.subr.bf16.mxu0 %v4414
    %4513 = vmatpush1.bf16.msra.mxu0 %v4413
    %4514 = vmatprep.subr.bf16.mxu0 %v4418
    %4515 = vmatpush1.bf16.msra.mxu0 %v4417
    %4516 = vmatprep.subr.bf16.mxu0 %v4422
    %4517 = vmatpush1.bf16.msra.mxu0 %v4421
    %4518 = vmatprep.subr.bf16.mxu0 %v4426
    %4519 = vmatpush1.bf16.msra.mxu0 %v4425
    %4520 = vmatprep.subr.bf16.mxu0 %v4430
    %4521 = vmatpush1.bf16.msra.mxu0 %v4429
    %4522 = vmatprep.subr.bf16.mxu0 %v4434
    %4523 = vmatpush1.bf16.msra.mxu0 %v4433
    %4524 = vmatprep.subr.bf16.mxu0 0
    %4525 = vmatpush1.bf16.msra.mxu0 0
    %4526 = vmatprep.subr.bf16.mxu0 0
    %4527 = vmatpush1.bf16.msra.mxu0 0
    %4528 = vmatprep.subr.bf16.mxu0 0
    %4529 = vmatpush1.bf16.msra.mxu0 0
    %4530 = vmatprep.subr.bf16.mxu0 0
    %4531 = vmatpush1.bf16.msra.mxu0 0
    %4532 = vmatprep.subr.bf16.mxu0 0
    %4533 = vmatpush1.bf16.msra.mxu0 0
    %4534 = vmatprep.subr.bf16.mxu0 0
    %4535 = vmatpush1.bf16.msra.mxu0 0
    %4536 = vmatprep.subr.bf16.mxu0 0
    %4537 = vmatpush1.bf16.msra.mxu0 0
    %4538 = vmatprep.subr.bf16.mxu0 0
    %4539 = vmatpush1.bf16.msra.mxu0 0
    %4540 = vmatprep.mubr.bf16.mxu0 0
    %4541 = vmatmul.mubr.bf16.gmra.mrb[0].mxu0 %v4274
    %v4542 = vpop.f32.mrb[0].mxu0
    %v4543 = vadd.f32 0.0, %v4542
    %v4544 = vpop.f32.mrb[0].mxu0
    %v4545 = vadd.f32 0.0, %v4544
    %v4546 = vpop.f32.mrb[0].mxu0
    %v4547 = vpop.f32.mrb[0].mxu0
    %4548 = vdwg.mxu0
    %v4549 = vadd.f32 %v4270, %v4502
    %v4550 = vadd.f32 %v4271, %v4504
    %v4551 = vadd.f32 %v4272, %v4543
    %v4552 = vadd.f32 %v4273, %v4545
    %v4553 = vxor.u32 %v4549, 2147483648
    %v4554 = vxor.u32 %v4550, 2147483648
    %v4555 = vmul.f32 %v4553, 1.442695
    %v4556 = vpow.pop %v4555
    %v4557 = vmul.f32 %v4554, 1.442695
    %v4558 = vpow.pop %v4557
    %v4559 = vadd.f32 %v4556, 1.0
    %v4560 = vadd.f32 %v4558, 1.0
    %v4561 = vrcp.pop %v4559
    %v4562 = vmul.f32 1.0, %v4561
    %v4563 = vrcp.pop %v4560
    %v4564 = vmul.f32 1.0, %v4563
    %v4565 = vtanh.pop %v4551
    %v4566 = vxor.u32 %v4552, 2147483648
    %v4567 = vmul.f32 %v4566, 1.442695
    %v4568 = vpow.pop %v4567
    %v4569 = vadd.f32 %v4568, 1.0
    %v4570 = vrcp.pop %v4569
    %v4571 = vmul.f32 1.0, %v4570
    %v4572 = vmul.f32 %v4564, %v3958
    %v4573 = vmul.f32 %v4562, %v4565
    %v4574 = vadd.f32 %v4572, %v4573
    %v4575 = vtanh.pop %v4574
    %v4576 = vmul.f32 %v4571, %v4575
    %4577 = vst [vmem:[%s7 + $0x28] sm:$0xff] %v4576
    %v4578 = vld [vmem:[#allocation2 + $0xc0] sm:$0xff]
    %v4579 = vld [vmem:[#allocation2 + $0xc8] sm:$0xff]
    %v4580 = vld [vmem:[#allocation2 + $0xd0] sm:$0xff]
    %v4581 = vld [vmem:[#allocation2 + $0xd8] sm:$0xff]
    %v4582 = vpack.c.bf16 %v4268, %v4268
    %v4583 = vld [vmem:[#allocation4] sm:$0xff]
    %v4584 = vld [vmem:[#allocation4 + $0x8] sm:$0xff]
    %v4585 = vld [vmem:[#allocation4 + $0x10] sm:$0xff]
    %v4586 = vld [vmem:[#allocation4 + $0x18] sm:$0xff]
    %v4587 = vld [vmem:[#allocation4 + $0x20] sm:$0xff]
    %v4588 = vld [vmem:[#allocation4 + $0x28] sm:$0xff]
    %v4589 = vld [vmem:[#allocation4 + $0x30] sm:$0xff]
    %v4590 = vld [vmem:[#allocation4 + $0x38] sm:$0xff]
    %v4591 = vld [vmem:[#allocation4 + $0x40] sm:$0xff]
    %v4592 = vld [vmem:[#allocation4 + $0x48] sm:$0xff]
    %v4593 = vld [vmem:[#allocation4 + $0x50] sm:$0xff]
    %v4594 = vld [vmem:[#allocation4 + $0x58] sm:$0xff]
    %v4595 = vld [vmem:[#allocation4 + $0x60] sm:$0xff]
    %v4596 = vld [vmem:[#allocation4 + $0x68] sm:$0xff]
    %v4597 = vld [vmem:[#allocation4 + $0x70] sm:$0xff]
    %v4598 = vld [vmem:[#allocation4 + $0x78] sm:$0xff]
    %v4599 = vld [vmem:[#allocation4 + $0x80] sm:$0xff]
    %v4600 = vld [vmem:[#allocation4 + $0x88] sm:$0xff]
    %v4601 = vld [vmem:[#allocation4 + $0x90] sm:$0xff]
    %v4602 = vld [vmem:[#allocation4 + $0x98] sm:$0xff]
    %v4603 = vld [vmem:[#allocation4 + $0xa0] sm:$0xff]
    %v4604 = vld [vmem:[#allocation4 + $0xa8] sm:$0xff]
    %v4605 = vld [vmem:[#allocation4 + $0xb0] sm:$0xff]
    %v4606 = vld [vmem:[#allocation4 + $0xb8] sm:$0xff]
    %v4607 = vld [vmem:[#allocation4 + $0xc0] sm:$0xff]
    %v4608 = vld [vmem:[#allocation4 + $0xc8] sm:$0xff]
    %v4609 = vld [vmem:[#allocation4 + $0xd0] sm:$0xff]
    %v4610 = vld [vmem:[#allocation4 + $0xd8] sm:$0xff]
    %v4611 = vld [vmem:[#allocation4 + $0xe0] sm:$0xff]
    %v4612 = vld [vmem:[#allocation4 + $0xe8] sm:$0xff]
    %v4613 = vld [vmem:[#allocation4 + $0xf0] sm:$0xff]
    %v4614 = vld [vmem:[#allocation4 + $0xf8] sm:$0xff]
    %v4647 = vunpack.c.l.b16 %v4583
    %v4648 = vunpack.c.h.b16 %v4583
    %v4649 = vunpack.c.l.b16 %v4584
    %v4650 = vunpack.c.h.b16 %v4584
    %v4651 = vunpack.c.l.b16 %v4585
    %v4652 = vunpack.c.h.b16 %v4585
    %v4653 = vunpack.c.l.b16 %v4586
    %v4654 = vunpack.c.h.b16 %v4586
    %v4655 = vunpack.c.l.b16 %v4587
    %v4656 = vunpack.c.h.b16 %v4587
    %v4657 = vunpack.c.l.b16 %v4588
    %v4658 = vunpack.c.h.b16 %v4588
    %v4659 = vunpack.c.l.b16 %v4589
    %v4660 = vunpack.c.h.b16 %v4589
    %v4661 = vunpack.c.l.b16 %v4590
    %v4662 = vunpack.c.h.b16 %v4590
    %v4663 = vunpack.c.l.b16 %v4591
    %v4664 = vunpack.c.h.b16 %v4591
    %v4665 = vunpack.c.l.b16 %v4592
    %v4666 = vunpack.c.h.b16 %v4592
    %v4667 = vunpack.c.l.b16 %v4593
    %v4668 = vunpack.c.h.b16 %v4593
    %v4669 = vunpack.c.l.b16 %v4594
    %v4670 = vunpack.c.h.b16 %v4594
    %v4671 = vunpack.c.l.b16 %v4595
    %v4672 = vunpack.c.h.b16 %v4595
    %v4673 = vunpack.c.l.b16 %v4596
    %v4674 = vunpack.c.h.b16 %v4596
    %v4675 = vunpack.c.l.b16 %v4597
    %v4676 = vunpack.c.h.b16 %v4597
    %v4677 = vunpack.c.l.b16 %v4598
    %v4678 = vunpack.c.h.b16 %v4598
    %v4679 = vunpack.c.l.b16 %v4599
    %v4680 = vunpack.c.h.b16 %v4599
    %v4681 = vunpack.c.l.b16 %v4600
    %v4682 = vunpack.c.h.b16 %v4600
    %v4683 = vunpack.c.l.b16 %v4601
    %v4684 = vunpack.c.h.b16 %v4601
    %v4685 = vunpack.c.l.b16 %v4602
    %v4686 = vunpack.c.h.b16 %v4602
    %v4687 = vunpack.c.l.b16 %v4603
    %v4688 = vunpack.c.h.b16 %v4603
    %v4689 = vunpack.c.l.b16 %v4604
    %v4690 = vunpack.c.h.b16 %v4604
    %v4691 = vunpack.c.l.b16 %v4605
    %v4692 = vunpack.c.h.b16 %v4605
    %v4693 = vunpack.c.l.b16 %v4606
    %v4694 = vunpack.c.h.b16 %v4606
    %v4695 = vunpack.c.l.b16 %v4607
    %v4696 = vunpack.c.h.b16 %v4607
    %v4697 = vunpack.c.l.b16 %v4608
    %v4698 = vunpack.c.h.b16 %v4608
    %v4699 = vunpack.c.l.b16 %v4609
    %v4700 = vunpack.c.h.b16 %v4609
    %v4701 = vunpack.c.l.b16 %v4610
    %v4702 = vunpack.c.h.b16 %v4610
    %v4703 = vunpack.c.l.b16 %v4611
    %v4704 = vunpack.c.h.b16 %v4611
    %v4705 = vunpack.c.l.b16 %v4612
    %v4706 = vunpack.c.h.b16 %v4612
    %v4707 = vunpack.c.l.b16 %v4613
    %v4708 = vunpack.c.h.b16 %v4613
    %v4709 = vunpack.c.l.b16 %v4614
    %v4710 = vunpack.c.h.b16 %v4614
    %v4711 = vpack.c.b16 %v4651, %v4647
    %v4712 = vpack.c.b16 %v4652, %v4648
    %v4713 = vpack.c.b16 %v4653, %v4649
    %v4714 = vpack.c.b16 %v4654, %v4650
    %v4715 = vpack.c.b16 %v4659, %v4655
    %v4716 = vpack.c.b16 %v4660, %v4656
    %v4717 = vpack.c.b16 %v4661, %v4657
    %v4718 = vpack.c.b16 %v4662, %v4658
    %v4719 = vpack.c.b16 %v4667, %v4663
    %v4720 = vpack.c.b16 %v4668, %v4664
    %v4721 = vpack.c.b16 %v4669, %v4665
    %v4722 = vpack.c.b16 %v4670, %v4666
    %v4723 = vpack.c.b16 %v4675, %v4671
    %v4724 = vpack.c.b16 %v4676, %v4672
    %v4725 = vpack.c.b16 %v4677, %v4673
    %v4726 = vpack.c.b16 %v4678, %v4674
    %v4727 = vpack.c.b16 %v4683, %v4679
    %v4728 = vpack.c.b16 %v4684, %v4680
    %v4729 = vpack.c.b16 %v4685, %v4681
    %v4730 = vpack.c.b16 %v4686, %v4682
    %v4731 = vpack.c.b16 %v4691, %v4687
    %v4732 = vpack.c.b16 %v4692, %v4688
    %v4733 = vpack.c.b16 %v4693, %v4689
    %v4734 = vpack.c.b16 %v4694, %v4690
    %v4735 = vpack.c.b16 %v4699, %v4695
    %v4736 = vpack.c.b16 %v4700, %v4696
    %v4737 = vpack.c.b16 %v4701, %v4697
    %v4738 = vpack.c.b16 %v4702, %v4698
    %v4739 = vpack.c.b16 %v4707, %v4703
    %v4740 = vpack.c.b16 %v4708, %v4704
    %v4741 = vpack.c.b16 %v4709, %v4705
    %v4742 = vpack.c.b16 %v4710, %v4706
    %4775 = vmatprep.subr.bf16.mxu0 %v4712
    %4776 = vmatpush1.bf16.msra.mxu0 %v4711
    %4777 = vmatprep.subr.bf16.mxu0 %v4716
    %4778 = vmatpush1.bf16.msra.mxu0 %v4715
    %4779 = vmatprep.subr.bf16.mxu0 %v4720
    %4780 = vmatpush1.bf16.msra.mxu0 %v4719
    %4781 = vmatprep.subr.bf16.mxu0 %v4724
    %4782 = vmatpush1.bf16.msra.mxu0 %v4723
    %4783 = vmatprep.subr.bf16.mxu0 %v4728
    %4784 = vmatpush1.bf16.msra.mxu0 %v4727
    %4785 = vmatprep.subr.bf16.mxu0 %v4732
    %4786 = vmatpush1.bf16.msra.mxu0 %v4731
    %4787 = vmatprep.subr.bf16.mxu0 %v4736
    %4788 = vmatpush1.bf16.msra.mxu0 %v4735
    %4789 = vmatprep.subr.bf16.mxu0 %v4740
    %4790 = vmatpush1.bf16.msra.mxu0 %v4739
    %4791 = vmatprep.subr.bf16.mxu0 0
    %4792 = vmatpush1.bf16.msra.mxu0 0
    %4793 = vmatprep.subr.bf16.mxu0 0
    %4794 = vmatpush1.bf16.msra.mxu0 0
    %4795 = vmatprep.subr.bf16.mxu0 0
    %4796 = vmatpush1.bf16.msra.mxu0 0
    %4797 = vmatprep.subr.bf16.mxu0 0
    %4798 = vmatpush1.bf16.msra.mxu0 0
    %4799 = vmatprep.subr.bf16.mxu0 0
    %4800 = vmatpush1.bf16.msra.mxu0 0
    %4801 = vmatprep.subr.bf16.mxu0 0
    %4802 = vmatpush1.bf16.msra.mxu0 0
    %4803 = vmatprep.subr.bf16.mxu0 0
    %4804 = vmatpush1.bf16.msra.mxu0 0
    %4805 = vmatprep.subr.bf16.mxu0 0
    %4806 = vmatpush1.bf16.msra.mxu0 0
    %4807 = vmatprep.mubr.bf16.mxu0 0
    %4808 = vmatmul.mubr.bf16.gmra.mrb[0].mxu0 %v4582
    %v4809 = vpop.f32.mrb[0].mxu0
    %v4810 = vadd.f32 0.0, %v4809
    %v4811 = vpop.f32.mrb[0].mxu0
    %v4812 = vadd.f32 0.0, %v4811
    %v4813 = vpop.f32.mrb[0].mxu0
    %v4814 = vpop.f32.mrb[0].mxu0
    %4815 = vdwg.mxu0
    %4816 = vmatprep.subr.bf16.mxu0 %v4714
    %4817 = vmatpush1.bf16.msra.mxu0 %v4713
    %4818 = vmatprep.subr.bf16.mxu0 %v4718
    %4819 = vmatpush1.bf16.msra.mxu0 %v4717
    %4820 = vmatprep.subr.bf16.mxu0 %v4722
    %4821 = vmatpush1.bf16.msra.mxu0 %v4721
    %4822 = vmatprep.subr.bf16.mxu0 %v4726
    %4823 = vmatpush1.bf16.msra.mxu0 %v4725
    %4824 = vmatprep.subr.bf16.mxu0 %v4730
    %4825 = vmatpush1.bf16.msra.mxu0 %v4729
    %4826 = vmatprep.subr.bf16.mxu0 %v4734
    %4827 = vmatpush1.bf16.msra.mxu0 %v4733
    %4828 = vmatprep.subr.bf16.mxu0 %v4738
    %4829 = vmatpush1.bf16.msra.mxu0 %v4737
    %4830 = vmatprep.subr.bf16.mxu0 %v4742
    %4831 = vmatpush1.bf16.msra.mxu0 %v4741
    %4832 = vmatprep.subr.bf16.mxu0 0
    %4833 = vmatpush1.bf16.msra.mxu0 0
    %4834 = vmatprep.subr.bf16.mxu0 0
    %4835 = vmatpush1.bf16.msra.mxu0 0
    %4836 = vmatprep.subr.bf16.mxu0 0
    %4837 = vmatpush1.bf16.msra.mxu0 0
    %4838 = vmatprep.subr.bf16.mxu0 0
    %4839 = vmatpush1.bf16.msra.mxu0 0
    %4840 = vmatprep.subr.bf16.mxu0 0
    %4841 = vmatpush1.bf16.msra.mxu0 0
    %4842 = vmatprep.subr.bf16.mxu0 0
    %4843 = vmatpush1.bf16.msra.mxu0 0
    %4844 = vmatprep.subr.bf16.mxu0 0
    %4845 = vmatpush1.bf16.msra.mxu0 0
    %4846 = vmatprep.subr.bf16.mxu0 0
    %4847 = vmatpush1.bf16.msra.mxu0 0
    %4848 = vmatprep.mubr.bf16.mxu0 0
    %4849 = vmatmul.mubr.bf16.gmra.mrb[0].mxu0 %v4582
    %v4850 = vpop.f32.mrb[0].mxu0
    %v4851 = vadd.f32 0.0, %v4850
    %v4852 = vpop.f32.mrb[0].mxu0
    %v4853 = vadd.f32 0.0, %v4852
    %v4854 = vpop.f32.mrb[0].mxu0
    %v4855 = vpop.f32.mrb[0].mxu0
    %4856 = vdwg.mxu0
    %v4857 = vadd.f32 %v4578, %v4810
    %v4858 = vadd.f32 %v4579, %v4812
    %v4859 = vadd.f32 %v4580, %v4851
    %v4860 = vadd.f32 %v4581, %v4853
    %v4861 = vxor.u32 %v4857, 2147483648
    %v4862 = vxor.u32 %v4858, 2147483648
    %v4863 = vmul.f32 %v4861, 1.442695
    %v4864 = vpow.pop %v4863
    %v4865 = vmul.f32 %v4862, 1.442695
    %v4866 = vpow.pop %v4865
    %v4867 = vadd.f32 %v4864, 1.0
    %v4868 = vadd.f32 %v4866, 1.0
    %v4869 = vrcp.pop %v4867
    %v4870 = vmul.f32 1.0, %v4869
    %v4871 = vrcp.pop %v4868
    %v4872 = vmul.f32 1.0, %v4871
    %v4873 = vtanh.pop %v4859
    %v4874 = vxor.u32 %v4860, 2147483648
    %v4875 = vmul.f32 %v4874, 1.442695
    %v4876 = vpow.pop %v4875
    %v4877 = vadd.f32 %v4876, 1.0
    %v4878 = vrcp.pop %v4877
    %v4879 = vmul.f32 1.0, %v4878
    %v4880 = vmul.f32 %v4872, %v4266
    %v4881 = vmul.f32 %v4870, %v4873
    %v4882 = vadd.f32 %v4880, %v4881
    %v4883 = vtanh.pop %v4882
    %v4884 = vmul.f32 %v4879, %v4883
    %4885 = vst [vmem:[%s7 + $0x60] sm:$0xff] %v4884
    %v4886 = vld [vmem:[#allocation3 + $0x20] sm:$0xff]
    %v4887 = vld [vmem:[#allocation3 + $0x28] sm:$0xff]
    %v4888 = vld [vmem:[#allocation3 + $0x30] sm:$0xff]
    %v4889 = vld [vmem:[#allocation3 + $0x38] sm:$0xff]
    %v4890 = vpack.c.bf16 %v4576, %v4576
    %v4891 = vld [vmem:[#allocation8] sm:$0xff]
    %v4892 = vld [vmem:[#allocation8 + $0x8] sm:$0xff]
    %v4893 = vld [vmem:[#allocation8 + $0x10] sm:$0xff]
    %v4894 = vld [vmem:[#allocation8 + $0x18] sm:$0xff]
    %v4895 = vld [vmem:[#allocation8 + $0x20] sm:$0xff]
    %v4896 = vld [vmem:[#allocation8 + $0x28] sm:$0xff]
    %v4897 = vld [vmem:[#allocation8 + $0x30] sm:$0xff]
    %v4898 = vld [vmem:[#allocation8 + $0x38] sm:$0xff]
    %v4899 = vld [vmem:[#allocation8 + $0x40] sm:$0xff]
    %v4900 = vld [vmem:[#allocation8 + $0x48] sm:$0xff]
    %v4901 = vld [vmem:[#allocation8 + $0x50] sm:$0xff]
    %v4902 = vld [vmem:[#allocation8 + $0x58] sm:$0xff]
    %v4903 = vld [vmem:[#allocation8 + $0x60] sm:$0xff]
    %v4904 = vld [vmem:[#allocation8 + $0x68] sm:$0xff]
    %v4905 = vld [vmem:[#allocation8 + $0x70] sm:$0xff]
    %v4906 = vld [vmem:[#allocation8 + $0x78] sm:$0xff]
    %v4907 = vld [vmem:[#allocation8 + $0x80] sm:$0xff]
    %v4908 = vld [vmem:[#allocation8 + $0x88] sm:$0xff]
    %v4909 = vld [vmem:[#allocation8 + $0x90] sm:$0xff]
    %v4910 = vld [vmem:[#allocation8 + $0x98] sm:$0xff]
    %v4911 = vld [vmem:[#allocation8 + $0xa0] sm:$0xff]
    %v4912 = vld [vmem:[#allocation8 + $0xa8] sm:$0xff]
    %v4913 = vld [vmem:[#allocation8 + $0xb0] sm:$0xff]
    %v4914 = vld [vmem:[#allocation8 + $0xb8] sm:$0xff]
    %v4915 = vld [vmem:[#allocation8 + $0xc0] sm:$0xff]
    %v4916 = vld [vmem:[#allocation8 + $0xc8] sm:$0xff]
    %v4917 = vld [vmem:[#allocation8 + $0xd0] sm:$0xff]
    %v4918 = vld [vmem:[#allocation8 + $0xd8] sm:$0xff]
    %v4919 = vld [vmem:[#allocation8 + $0xe0] sm:$0xff]
    %v4920 = vld [vmem:[#allocation8 + $0xe8] sm:$0xff]
    %v4921 = vld [vmem:[#allocation8 + $0xf0] sm:$0xff]
    %v4922 = vld [vmem:[#allocation8 + $0xf8] sm:$0xff]
    %v4955 = vunpack.c.l.b16 %v4891
    %v4956 = vunpack.c.h.b16 %v4891
    %v4957 = vunpack.c.l.b16 %v4892
    %v4958 = vunpack.c.h.b16 %v4892
    %v4959 = vunpack.c.l.b16 %v4893
    %v4960 = vunpack.c.h.b16 %v4893
    %v4961 = vunpack.c.l.b16 %v4894
    %v4962 = vunpack.c.h.b16 %v4894
    %v4963 = vunpack.c.l.b16 %v4895
    %v4964 = vunpack.c.h.b16 %v4895
    %v4965 = vunpack.c.l.b16 %v4896
    %v4966 = vunpack.c.h.b16 %v4896
    %v4967 = vunpack.c.l.b16 %v4897
    %v4968 = vunpack.c.h.b16 %v4897
    %v4969 = vunpack.c.l.b16 %v4898
    %v4970 = vunpack.c.h.b16 %v4898
    %v4971 = vunpack.c.l.b16 %v4899
    %v4972 = vunpack.c.h.b16 %v4899
    %v4973 = vunpack.c.l.b16 %v4900
    %v4974 = vunpack.c.h.b16 %v4900
    %v4975 = vunpack.c.l.b16 %v4901
    %v4976 = vunpack.c.h.b16 %v4901
    %v4977 = vunpack.c.l.b16 %v4902
    %v4978 = vunpack.c.h.b16 %v4902
    %v4979 = vunpack.c.l.b16 %v4903
    %v4980 = vunpack.c.h.b16 %v4903
    %v4981 = vunpack.c.l.b16 %v4904
    %v4982 = vunpack.c.h.b16 %v4904
    %v4983 = vunpack.c.l.b16 %v4905
    %v4984 = vunpack.c.h.b16 %v4905
    %v4985 = vunpack.c.l.b16 %v4906
    %v4986 = vunpack.c.h.b16 %v4906
    %v4987 = vunpack.c.l.b16 %v4907
    %v4988 = vunpack.c.h.b16 %v4907
    %v4989 = vunpack.c.l.b16 %v4908
    %v4990 = vunpack.c.h.b16 %v4908
    %v4991 = vunpack.c.l.b16 %v4909
    %v4992 = vunpack.c.h.b16 %v4909
    %v4993 = vunpack.c.l.b16 %v4910
    %v4994 = vunpack.c.h.b16 %v4910
    %v4995 = vunpack.c.l.b16 %v4911
    %v4996 = vunpack.c.h.b16 %v4911
    %v4997 = vunpack.c.l.b16 %v4912
    %v4998 = vunpack.c.h.b16 %v4912
    %v4999 = vunpack.c.l.b16 %v4913
    %v5000 = vunpack.c.h.b16 %v4913
    %v5001 = vunpack.c.l.b16 %v4914
    %v5002 = vunpack.c.h.b16 %v4914
    %v5003 = vunpack.c.l.b16 %v4915
    %v5004 = vunpack.c.h.b16 %v4915
    %v5005 = vunpack.c.l.b16 %v4916
    %v5006 = vunpack.c.h.b16 %v4916
    %v5007 = vunpack.c.l.b16 %v4917
    %v5008 = vunpack.c.h.b16 %v4917
    %v5009 = vunpack.c.l.b16 %v4918
    %v5010 = vunpack.c.h.b16 %v4918
    %v5011 = vunpack.c.l.b16 %v4919
    %v5012 = vunpack.c.h.b16 %v4919
    %v5013 = vunpack.c.l.b16 %v4920
    %v5014 = vunpack.c.h.b16 %v4920
    %v5015 = vunpack.c.l.b16 %v4921
    %v5016 = vunpack.c.h.b16 %v4921
    %v5017 = vunpack.c.l.b16 %v4922
    %v5018 = vunpack.c.h.b16 %v4922
    %v5019 = vpack.c.b16 %v4959, %v4955
    %v5020 = vpack.c.b16 %v4960, %v4956
    %v5021 = vpack.c.b16 %v4961, %v4957
    %v5022 = vpack.c.b16 %v4962, %v4958
    %v5023 = vpack.c.b16 %v4967, %v4963
    %v5024 = vpack.c.b16 %v4968, %v4964
    %v5025 = vpack.c.b16 %v4969, %v4965
    %v5026 = vpack.c.b16 %v4970, %v4966
    %v5027 = vpack.c.b16 %v4975, %v4971
    %v5028 = vpack.c.b16 %v4976, %v4972
    %v5029 = vpack.c.b16 %v4977, %v4973
    %v5030 = vpack.c.b16 %v4978, %v4974
    %v5031 = vpack.c.b16 %v4983, %v4979
    %v5032 = vpack.c.b16 %v4984, %v4980
    %v5033 = vpack.c.b16 %v4985, %v4981
    %v5034 = vpack.c.b16 %v4986, %v4982
    %v5035 = vpack.c.b16 %v4991, %v4987
    %v5036 = vpack.c.b16 %v4992, %v4988
    %v5037 = vpack.c.b16 %v4993, %v4989
    %v5038 = vpack.c.b16 %v4994, %v4990
    %v5039 = vpack.c.b16 %v4999, %v4995
    %v5040 = vpack.c.b16 %v5000, %v4996
    %v5041 = vpack.c.b16 %v5001, %v4997
    %v5042 = vpack.c.b16 %v5002, %v4998
    %v5043 = vpack.c.b16 %v5007, %v5003
    %v5044 = vpack.c.b16 %v5008, %v5004
    %v5045 = vpack.c.b16 %v5009, %v5005
    %v5046 = vpack.c.b16 %v5010, %v5006
    %v5047 = vpack.c.b16 %v5015, %v5011
    %v5048 = vpack.c.b16 %v5016, %v5012
    %v5049 = vpack.c.b16 %v5017, %v5013
    %v5050 = vpack.c.b16 %v5018, %v5014
    %5083 = vmatprep.subr.bf16.mxu0 %v5020
    %5084 = vmatpush1.bf16.msra.mxu0 %v5019
    %5085 = vmatprep.subr.bf16.mxu0 %v5024
    %5086 = vmatpush1.bf16.msra.mxu0 %v5023
    %5087 = vmatprep.subr.bf16.mxu0 %v5028
    %5088 = vmatpush1.bf16.msra.mxu0 %v5027
    %5089 = vmatprep.subr.bf16.mxu0 %v5032
    %5090 = vmatpush1.bf16.msra.mxu0 %v5031
    %5091 = vmatprep.subr.bf16.mxu0 %v5036
    %5092 = vmatpush1.bf16.msra.mxu0 %v5035
    %5093 = vmatprep.subr.bf16.mxu0 %v5040
    %5094 = vmatpush1.bf16.msra.mxu0 %v5039
    %5095 = vmatprep.subr.bf16.mxu0 %v5044
    %5096 = vmatpush1.bf16.msra.mxu0 %v5043
    %5097 = vmatprep.subr.bf16.mxu0 %v5048
    %5098 = vmatpush1.bf16.msra.mxu0 %v5047
    %5099 = vmatprep.subr.bf16.mxu0 0
    %5100 = vmatpush1.bf16.msra.mxu0 0
    %5101 = vmatprep.subr.bf16.mxu0 0
    %5102 = vmatpush1.bf16.msra.mxu0 0
    %5103 = vmatprep.subr.bf16.mxu0 0
    %5104 = vmatpush1.bf16.msra.mxu0 0
    %5105 = vmatprep.subr.bf16.mxu0 0
    %5106 = vmatpush1.bf16.msra.mxu0 0
    %5107 = vmatprep.subr.bf16.mxu0 0
    %5108 = vmatpush1.bf16.msra.mxu0 0
    %5109 = vmatprep.subr.bf16.mxu0 0
    %5110 = vmatpush1.bf16.msra.mxu0 0
    %5111 = vmatprep.subr.bf16.mxu0 0
    %5112 = vmatpush1.bf16.msra.mxu0 0
    %5113 = vmatprep.subr.bf16.mxu0 0
    %5114 = vmatpush1.bf16.msra.mxu0 0
    %5115 = vmatprep.mubr.bf16.mxu0 0
    %5116 = vmatmul.mubr.bf16.gmra.mrb[0].mxu0 %v4890
    %v5117 = vpop.f32.mrb[0].mxu0
    %v5118 = vadd.f32 0.0, %v5117
    %v5119 = vpop.f32.mrb[0].mxu0
    %v5120 = vadd.f32 0.0, %v5119
    %v5121 = vpop.f32.mrb[0].mxu0
    %v5122 = vpop.f32.mrb[0].mxu0
    %5123 = vdwg.mxu0
    %5124 = vmatprep.subr.bf16.mxu0 %v5022
    %5125 = vmatpush1.bf16.msra.mxu0 %v5021
    %5126 = vmatprep.subr.bf16.mxu0 %v5026
    %5127 = vmatpush1.bf16.msra.mxu0 %v5025
    %5128 = vmatprep.subr.bf16.mxu0 %v5030
    %5129 = vmatpush1.bf16.msra.mxu0 %v5029
    %5130 = vmatprep.subr.bf16.mxu0 %v5034
    %5131 = vmatpush1.bf16.msra.mxu0 %v5033
    %5132 = vmatprep.subr.bf16.mxu0 %v5038
    %5133 = vmatpush1.bf16.msra.mxu0 %v5037
    %5134 = vmatprep.subr.bf16.mxu0 %v5042
    %5135 = vmatpush1.bf16.msra.mxu0 %v5041
    %5136 = vmatprep.subr.bf16.mxu0 %v5046
    %5137 = vmatpush1.bf16.msra.mxu0 %v5045
    %5138 = vmatprep.subr.bf16.mxu0 %v5050
    %5139 = vmatpush1.bf16.msra.mxu0 %v5049
    %5140 = vmatprep.subr.bf16.mxu0 0
    %5141 = vmatpush1.bf16.msra.mxu0 0
    %5142 = vmatprep.subr.bf16.mxu0 0
    %5143 = vmatpush1.bf16.msra.mxu0 0
    %5144 = vmatprep.subr.bf16.mxu0 0
    %5145 = vmatpush1.bf16.msra.mxu0 0
    %5146 = vmatprep.subr.bf16.mxu0 0
    %5147 = vmatpush1.bf16.msra.mxu0 0
    %5148 = vmatprep.subr.bf16.mxu0 0
    %5149 = vmatpush1.bf16.msra.mxu0 0
    %5150 = vmatprep.subr.bf16.mxu0 0
    %5151 = vmatpush1.bf16.msra.mxu0 0
    %5152 = vmatprep.subr.bf16.mxu0 0
    %5153 = vmatpush1.bf16.msra.mxu0 0
    %5154 = vmatprep.subr.bf16.mxu0 0
    %5155 = vmatpush1.bf16.msra.mxu0 0
    %5156 = vmatprep.mubr.bf16.mxu0 0
    %5157 = vmatmul.mubr.bf16.gmra.mrb[0].mxu0 %v4890
    %v5158 = vpop.f32.mrb[0].mxu0
    %v5159 = vadd.f32 0.0, %v5158
    %v5160 = vpop.f32.mrb[0].mxu0
    %v5161 = vadd.f32 0.0, %v5160
    %v5162 = vpop.f32.mrb[0].mxu0
    %v5163 = vpop.f32.mrb[0].mxu0
    %5164 = vdwg.mxu0
    %v5165 = vadd.f32 %v4886, %v5118
    %v5166 = vadd.f32 %v4887, %v5120
    %v5167 = vadd.f32 %v4888, %v5159
    %v5168 = vadd.f32 %v4889, %v5161
    %v5169 = vxor.u32 %v5165, 2147483648
    %v5170 = vxor.u32 %v5166, 2147483648
    %v5171 = vmul.f32 %v5169, 1.442695
    %v5172 = vpow.pop %v5171
    %v5173 = vmul.f32 %v5170, 1.442695
    %v5174 = vpow.pop %v5173
    %v5175 = vadd.f32 %v5172, 1.0
    %v5176 = vadd.f32 %v5174, 1.0
    %v5177 = vrcp.pop %v5175
    %v5178 = vmul.f32 1.0, %v5177
    %v5179 = vrcp.pop %v5176
    %v5180 = vmul.f32 1.0, %v5179
    %v5181 = vtanh.pop %v5167
    %v5182 = vxor.u32 %v5168, 2147483648
    %v5183 = vmul.f32 %v5182, 1.442695
    %v5184 = vpow.pop %v5183
    %v5185 = vadd.f32 %v5184, 1.0
    %v5186 = vrcp.pop %v5185
    %v5187 = vmul.f32 1.0, %v5186
    %v5188 = vmul.f32 %v5180, %v4574
    %v5189 = vmul.f32 %v5178, %v5181
    %v5190 = vadd.f32 %v5188, %v5189
    %v5191 = vtanh.pop %v5190
    %v5192 = vmul.f32 %v5187, %v5191
    %5193 = vst [vmem:[%s7 + $0x18] sm:$0xff] %v5192
    %v5194 = vld [vmem:[#allocation2 + $0xe0] sm:$0xff]
    %v5195 = vld [vmem:[#allocation2 + $0xe8] sm:$0xff]
    %v5196 = vld [vmem:[#allocation2 + $0xf0] sm:$0xff]
    %v5197 = vld [vmem:[#allocation2 + $0xf8] sm:$0xff]
    %v5198 = vpack.c.bf16 %v4884, %v4884
    %v5199 = vld [vmem:[#allocation4] sm:$0xff]
    %v5200 = vld [vmem:[#allocation4 + $0x8] sm:$0xff]
    %v5201 = vld [vmem:[#allocation4 + $0x10] sm:$0xff]
    %v5202 = vld [vmem:[#allocation4 + $0x18] sm:$0xff]
    %v5203 = vld [vmem:[#allocation4 + $0x20] sm:$0xff]
    %v5204 = vld [vmem:[#allocation4 + $0x28] sm:$0xff]
    %v5205 = vld [vmem:[#allocation4 + $0x30] sm:$0xff]
    %v5206 = vld [vmem:[#allocation4 + $0x38] sm:$0xff]
    %v5207 = vld [vmem:[#allocation4 + $0x40] sm:$0xff]
    %v5208 = vld [vmem:[#allocation4 + $0x48] sm:$0xff]
    %v5209 = vld [vmem:[#allocation4 + $0x50] sm:$0xff]
    %v5210 = vld [vmem:[#allocation4 + $0x58] sm:$0xff]
    %v5211 = vld [vmem:[#allocation4 + $0x60] sm:$0xff]
    %v5212 = vld [vmem:[#allocation4 + $0x68] sm:$0xff]
    %v5213 = vld [vmem:[#allocation4 + $0x70] sm:$0xff]
    %v5214 = vld [vmem:[#allocation4 + $0x78] sm:$0xff]
    %v5215 = vld [vmem:[#allocation4 + $0x80] sm:$0xff]
    %v5216 = vld [vmem:[#allocation4 + $0x88] sm:$0xff]
    %v5217 = vld [vmem:[#allocation4 + $0x90] sm:$0xff]
    %v5218 = vld [vmem:[#allocation4 + $0x98] sm:$0xff]
    %v5219 = vld [vmem:[#allocation4 + $0xa0] sm:$0xff]
    %v5220 = vld [vmem:[#allocation4 + $0xa8] sm:$0xff]
    %v5221 = vld [vmem:[#allocation4 + $0xb0] sm:$0xff]
    %v5222 = vld [vmem:[#allocation4 + $0xb8] sm:$0xff]
    %v5223 = vld [vmem:[#allocation4 + $0xc0] sm:$0xff]
    %v5224 = vld [vmem:[#allocation4 + $0xc8] sm:$0xff]
    %v5225 = vld [vmem:[#allocation4 + $0xd0] sm:$0xff]
    %v5226 = vld [vmem:[#allocation4 + $0xd8] sm:$0xff]
    %v5227 = vld [vmem:[#allocation4 + $0xe0] sm:$0xff]
    %v5228 = vld [vmem:[#allocation4 + $0xe8] sm:$0xff]
    %v5229 = vld [vmem:[#allocation4 + $0xf0] sm:$0xff]
    %v5230 = vld [vmem:[#allocation4 + $0xf8] sm:$0xff]
    %v5263 = vunpack.c.l.b16 %v5199
    %v5264 = vunpack.c.h.b16 %v5199
    %v5265 = vunpack.c.l.b16 %v5200
    %v5266 = vunpack.c.h.b16 %v5200
    %v5267 = vunpack.c.l.b16 %v5201
    %v5268 = vunpack.c.h.b16 %v5201
    %v5269 = vunpack.c.l.b16 %v5202
    %v5270 = vunpack.c.h.b16 %v5202
    %v5271 = vunpack.c.l.b16 %v5203
    %v5272 = vunpack.c.h.b16 %v5203
    %v5273 = vunpack.c.l.b16 %v5204
    %v5274 = vunpack.c.h.b16 %v5204
    %v5275 = vunpack.c.l.b16 %v5205
    %v5276 = vunpack.c.h.b16 %v5205
    %v5277 = vunpack.c.l.b16 %v5206
    %v5278 = vunpack.c.h.b16 %v5206
    %v5279 = vunpack.c.l.b16 %v5207
    %v5280 = vunpack.c.h.b16 %v5207
    %v5281 = vunpack.c.l.b16 %v5208
    %v5282 = vunpack.c.h.b16 %v5208
    %v5283 = vunpack.c.l.b16 %v5209
    %v5284 = vunpack.c.h.b16 %v5209
    %v5285 = vunpack.c.l.b16 %v5210
    %v5286 = vunpack.c.h.b16 %v5210
    %v5287 = vunpack.c.l.b16 %v5211
    %v5288 = vunpack.c.h.b16 %v5211
    %v5289 = vunpack.c.l.b16 %v5212
    %v5290 = vunpack.c.h.b16 %v5212
    %v5291 = vunpack.c.l.b16 %v5213
    %v5292 = vunpack.c.h.b16 %v5213
    %v5293 = vunpack.c.l.b16 %v5214
    %v5294 = vunpack.c.h.b16 %v5214
    %v5295 = vunpack.c.l.b16 %v5215
    %v5296 = vunpack.c.h.b16 %v5215
    %v5297 = vunpack.c.l.b16 %v5216
    %v5298 = vunpack.c.h.b16 %v5216
    %v5299 = vunpack.c.l.b16 %v5217
    %v5300 = vunpack.c.h.b16 %v5217
    %v5301 = vunpack.c.l.b16 %v5218
    %v5302 = vunpack.c.h.b16 %v5218
    %v5303 = vunpack.c.l.b16 %v5219
    %v5304 = vunpack.c.h.b16 %v5219
    %v5305 = vunpack.c.l.b16 %v5220
    %v5306 = vunpack.c.h.b16 %v5220
    %v5307 = vunpack.c.l.b16 %v5221
    %v5308 = vunpack.c.h.b16 %v5221
    %v5309 = vunpack.c.l.b16 %v5222
    %v5310 = vunpack.c.h.b16 %v5222
    %v5311 = vunpack.c.l.b16 %v5223
    %v5312 = vunpack.c.h.b16 %v5223
    %v5313 = vunpack.c.l.b16 %v5224
    %v5314 = vunpack.c.h.b16 %v5224
    %v5315 = vunpack.c.l.b16 %v5225
    %v5316 = vunpack.c.h.b16 %v5225
    %v5317 = vunpack.c.l.b16 %v5226
    %v5318 = vunpack.c.h.b16 %v5226
    %v5319 = vunpack.c.l.b16 %v5227
    %v5320 = vunpack.c.h.b16 %v5227
    %v5321 = vunpack.c.l.b16 %v5228
    %v5322 = vunpack.c.h.b16 %v5228
    %v5323 = vunpack.c.l.b16 %v5229
    %v5324 = vunpack.c.h.b16 %v5229
    %v5325 = vunpack.c.l.b16 %v5230
    %v5326 = vunpack.c.h.b16 %v5230
    %v5327 = vpack.c.b16 %v5267, %v5263
    %v5328 = vpack.c.b16 %v5268, %v5264
    %v5329 = vpack.c.b16 %v5269, %v5265
    %v5330 = vpack.c.b16 %v5270, %v5266
    %v5331 = vpack.c.b16 %v5275, %v5271
    %v5332 = vpack.c.b16 %v5276, %v5272
    %v5333 = vpack.c.b16 %v5277, %v5273
    %v5334 = vpack.c.b16 %v5278, %v5274
    %v5335 = vpack.c.b16 %v5283, %v5279
    %v5336 = vpack.c.b16 %v5284, %v5280
    %v5337 = vpack.c.b16 %v5285, %v5281
    %v5338 = vpack.c.b16 %v5286, %v5282
    %v5339 = vpack.c.b16 %v5291, %v5287
    %v5340 = vpack.c.b16 %v5292, %v5288
    %v5341 = vpack.c.b16 %v5293, %v5289
    %v5342 = vpack.c.b16 %v5294, %v5290
    %v5343 = vpack.c.b16 %v5299, %v5295
    %v5344 = vpack.c.b16 %v5300, %v5296
    %v5345 = vpack.c.b16 %v5301, %v5297
    %v5346 = vpack.c.b16 %v5302, %v5298
    %v5347 = vpack.c.b16 %v5307, %v5303
    %v5348 = vpack.c.b16 %v5308, %v5304
    %v5349 = vpack.c.b16 %v5309, %v5305
    %v5350 = vpack.c.b16 %v5310, %v5306
    %v5351 = vpack.c.b16 %v5315, %v5311
    %v5352 = vpack.c.b16 %v5316, %v5312
    %v5353 = vpack.c.b16 %v5317, %v5313
    %v5354 = vpack.c.b16 %v5318, %v5314
    %v5355 = vpack.c.b16 %v5323, %v5319
    %v5356 = vpack.c.b16 %v5324, %v5320
    %v5357 = vpack.c.b16 %v5325, %v5321
    %v5358 = vpack.c.b16 %v5326, %v5322
    %5391 = vmatprep.subr.bf16.mxu0 %v5328
    %5392 = vmatpush1.bf16.msra.mxu0 %v5327
    %5393 = vmatprep.subr.bf16.mxu0 %v5332
    %5394 = vmatpush1.bf16.msra.mxu0 %v5331
    %5395 = vmatprep.subr.bf16.mxu0 %v5336
    %5396 = vmatpush1.bf16.msra.mxu0 %v5335
    %5397 = vmatprep.subr.bf16.mxu0 %v5340
    %5398 = vmatpush1.bf16.msra.mxu0 %v5339
    %5399 = vmatprep.subr.bf16.mxu0 %v5344
    %5400 = vmatpush1.bf16.msra.mxu0 %v5343
    %5401 = vmatprep.subr.bf16.mxu0 %v5348
    %5402 = vmatpush1.bf16.msra.mxu0 %v5347
    %5403 = vmatprep.subr.bf16.mxu0 %v5352
    %5404 = vmatpush1.bf16.msra.mxu0 %v5351
    %5405 = vmatprep.subr.bf16.mxu0 %v5356
    %5406 = vmatpush1.bf16.msra.mxu0 %v5355
    %5407 = vmatprep.subr.bf16.mxu0 0
    %5408 = vmatpush1.bf16.msra.mxu0 0
    %5409 = vmatprep.subr.bf16.mxu0 0
    %5410 = vmatpush1.bf16.msra.mxu0 0
    %5411 = vmatprep.subr.bf16.mxu0 0
    %5412 = vmatpush1.bf16.msra.mxu0 0
    %5413 = vmatprep.subr.bf16.mxu0 0
    %5414 = vmatpush1.bf16.msra.mxu0 0
    %5415 = vmatprep.subr.bf16.mxu0 0
    %5416 = vmatpush1.bf16.msra.mxu0 0
    %5417 = vmatprep.subr.bf16.mxu0 0
    %5418 = vmatpush1.bf16.msra.mxu0 0
    %5419 = vmatprep.subr.bf16.mxu0 0
    %5420 = vmatpush1.bf16.msra.mxu0 0
    %5421 = vmatprep.subr.bf16.mxu0 0
    %5422 = vmatpush1.bf16.msra.mxu0 0
    %5423 = vmatprep.mubr.bf16.mxu0 0
    %5424 = vmatmul.mubr.bf16.gmra.mrb[0].mxu0 %v5198
    %v5425 = vpop.f32.mrb[0].mxu0
    %v5426 = vadd.f32 0.0, %v5425
    %v5427 = vpop.f32.mrb[0].mxu0
    %v5428 = vadd.f32 0.0, %v5427
    %v5429 = vpop.f32.mrb[0].mxu0
    %v5430 = vpop.f32.mrb[0].mxu0
    %5431 = vdwg.mxu0
    %5432 = vmatprep.subr.bf16.mxu0 %v5330
    %5433 = vmatpush1.bf16.msra.mxu0 %v5329
    %5434 = vmatprep.subr.bf16.mxu0 %v5334
    %5435 = vmatpush1.bf16.msra.mxu0 %v5333
    %5436 = vmatprep.subr.bf16.mxu0 %v5338
    %5437 = vmatpush1.bf16.msra.mxu0 %v5337
    %5438 = vmatprep.subr.bf16.mxu0 %v5342
    %5439 = vmatpush1.bf16.msra.mxu0 %v5341
    %5440 = vmatprep.subr.bf16.mxu0 %v5346
    %5441 = vmatpush1.bf16.msra.mxu0 %v5345
    %5442 = vmatprep.subr.bf16.mxu0 %v5350
    %5443 = vmatpush1.bf16.msra.mxu0 %v5349
    %5444 = vmatprep.subr.bf16.mxu0 %v5354
    %5445 = vmatpush1.bf16.msra.mxu0 %v5353
    %5446 = vmatprep.subr.bf16.mxu0 %v5358
    %5447 = vmatpush1.bf16.msra.mxu0 %v5357
    %5448 = vmatprep.subr.bf16.mxu0 0
    %5449 = vmatpush1.bf16.msra.mxu0 0
    %5450 = vmatprep.subr.bf16.mxu0 0
    %5451 = vmatpush1.bf16.msra.mxu0 0
    %5452 = vmatprep.subr.bf16.mxu0 0
    %5453 = vmatpush1.bf16.msra.mxu0 0
    %5454 = vmatprep.subr.bf16.mxu0 0
    %5455 = vmatpush1.bf16.msra.mxu0 0
    %5456 = vmatprep.subr.bf16.mxu0 0
    %5457 = vmatpush1.bf16.msra.mxu0 0
    %5458 = vmatprep.subr.bf16.mxu0 0
    %5459 = vmatpush1.bf16.msra.mxu0 0
    %5460 = vmatprep.subr.bf16.mxu0 0
    %5461 = vmatpush1.bf16.msra.mxu0 0
    %5462 = vmatprep.subr.bf16.mxu0 0
    %5463 = vmatpush1.bf16.msra.mxu0 0
    %5464 = vmatprep.mubr.bf16.mxu0 0
    %5465 = vmatmul.mubr.bf16.gmra.mrb[0].mxu0 %v5198
    %v5466 = vpop.f32.mrb[0].mxu0
    %v5467 = vadd.f32 0.0, %v5466
    %v5468 = vpop.f32.mrb[0].mxu0
    %v5469 = vadd.f32 0.0, %v5468
    %v5470 = vpop.f32.mrb[0].mxu0
    %v5471 = vpop.f32.mrb[0].mxu0
    %5472 = vdwg.mxu0
    %v5473 = vadd.f32 %v5194, %v5426
    %v5474 = vadd.f32 %v5195, %v5428
    %v5475 = vadd.f32 %v5196, %v5467
    %v5476 = vadd.f32 %v5197, %v5469
    %v5477 = vxor.u32 %v5473, 2147483648
    %v5478 = vxor.u32 %v5474, 2147483648
    %v5479 = vmul.f32 %v5477, 1.442695
    %v5480 = vpow.pop %v5479
    %v5481 = vmul.f32 %v5478, 1.442695
    %v5482 = vpow.pop %v5481
    %v5483 = vadd.f32 %v5480, 1.0
    %v5484 = vadd.f32 %v5482, 1.0
    %v5485 = vrcp.pop %v5483
    %v5486 = vmul.f32 1.0, %v5485
    %v5487 = vrcp.pop %v5484
    %v5488 = vmul.f32 1.0, %v5487
    %v5489 = vtanh.pop %v5475
    %v5490 = vxor.u32 %v5476, 2147483648
    %v5491 = vmul.f32 %v5490, 1.442695
    %v5492 = vpow.pop %v5491
    %v5493 = vadd.f32 %v5492, 1.0
    %v5494 = vrcp.pop %v5493
    %v5495 = vmul.f32 1.0, %v5494
    %v5496 = vmul.f32 %v5488, %v4882
    %v5497 = vmul.f32 %v5486, %v5489
    %v5498 = vadd.f32 %v5496, %v5497
    %v5499 = vtanh.pop %v5498
    %v5500 = vmul.f32 %v5495, %v5499
    %5501 = vst [vmem:[%s7 + $0x70] sm:$0xff] %v5500
    %v5502 = vld [vmem:[#allocation3] sm:$0xff]
    %v5503 = vld [vmem:[#allocation3 + $0x8] sm:$0xff]
    %v5504 = vld [vmem:[#allocation3 + $0x10] sm:$0xff]
    %v5505 = vld [vmem:[#allocation3 + $0x18] sm:$0xff]
    %v5506 = vpack.c.bf16 %v5192, %v5192
    %v5507 = vld [vmem:[#allocation8] sm:$0xff]
    %v5508 = vld [vmem:[#allocation8 + $0x8] sm:$0xff]
    %v5509 = vld [vmem:[#allocation8 + $0x10] sm:$0xff]
    %v5510 = vld [vmem:[#allocation8 + $0x18] sm:$0xff]
    %v5511 = vld [vmem:[#allocation8 + $0x20] sm:$0xff]
    %v5512 = vld [vmem:[#allocation8 + $0x28] sm:$0xff]
    %v5513 = vld [vmem:[#allocation8 + $0x30] sm:$0xff]
    %v5514 = vld [vmem:[#allocation8 + $0x38] sm:$0xff]
    %v5515 = vld [vmem:[#allocation8 + $0x40] sm:$0xff]
    %v5516 = vld [vmem:[#allocation8 + $0x48] sm:$0xff]
    %v5517 = vld [vmem:[#allocation8 + $0x50] sm:$0xff]
    %v5518 = vld [vmem:[#allocation8 + $0x58] sm:$0xff]
    %v5519 = vld [vmem:[#allocation8 + $0x60] sm:$0xff]
    %v5520 = vld [vmem:[#allocation8 + $0x68] sm:$0xff]
    %v5521 = vld [vmem:[#allocation8 + $0x70] sm:$0xff]
    %v5522 = vld [vmem:[#allocation8 + $0x78] sm:$0xff]
    %v5523 = vld [vmem:[#allocation8 + $0x80] sm:$0xff]
    %v5524 = vld [vmem:[#allocation8 + $0x88] sm:$0xff]
    %v5525 = vld [vmem:[#allocation8 + $0x90] sm:$0xff]
    %v5526 = vld [vmem:[#allocation8 + $0x98] sm:$0xff]
    %v5527 = vld [vmem:[#allocation8 + $0xa0] sm:$0xff]
    %v5528 = vld [vmem:[#allocation8 + $0xa8] sm:$0xff]
    %v5529 = vld [vmem:[#allocation8 + $0xb0] sm:$0xff]
    %v5530 = vld [vmem:[#allocation8 + $0xb8] sm:$0xff]
    %v5531 = vld [vmem:[#allocation8 + $0xc0] sm:$0xff]
    %v5532 = vld [vmem:[#allocation8 + $0xc8] sm:$0xff]
    %v5533 = vld [vmem:[#allocation8 + $0xd0] sm:$0xff]
    %v5534 = vld [vmem:[#allocation8 + $0xd8] sm:$0xff]
    %v5535 = vld [vmem:[#allocation8 + $0xe0] sm:$0xff]
    %v5536 = vld [vmem:[#allocation8 + $0xe8] sm:$0xff]
    %v5537 = vld [vmem:[#allocation8 + $0xf0] sm:$0xff]
    %v5538 = vld [vmem:[#allocation8 + $0xf8] sm:$0xff]
    %v5571 = vunpack.c.l.b16 %v5507
    %v5572 = vunpack.c.h.b16 %v5507
    %v5573 = vunpack.c.l.b16 %v5508
    %v5574 = vunpack.c.h.b16 %v5508
    %v5575 = vunpack.c.l.b16 %v5509
    %v5576 = vunpack.c.h.b16 %v5509
    %v5577 = vunpack.c.l.b16 %v5510
    %v5578 = vunpack.c.h.b16 %v5510
    %v5579 = vunpack.c.l.b16 %v5511
    %v5580 = vunpack.c.h.b16 %v5511
    %v5581 = vunpack.c.l.b16 %v5512
    %v5582 = vunpack.c.h.b16 %v5512
    %v5583 = vunpack.c.l.b16 %v5513
    %v5584 = vunpack.c.h.b16 %v5513
    %v5585 = vunpack.c.l.b16 %v5514
    %v5586 = vunpack.c.h.b16 %v5514
    %v5587 = vunpack.c.l.b16 %v5515
    %v5588 = vunpack.c.h.b16 %v5515
    %v5589 = vunpack.c.l.b16 %v5516
    %v5590 = vunpack.c.h.b16 %v5516
    %v5591 = vunpack.c.l.b16 %v5517
    %v5592 = vunpack.c.h.b16 %v5517
    %v5593 = vunpack.c.l.b16 %v5518
    %v5594 = vunpack.c.h.b16 %v5518
    %v5595 = vunpack.c.l.b16 %v5519
    %v5596 = vunpack.c.h.b16 %v5519
    %v5597 = vunpack.c.l.b16 %v5520
    %v5598 = vunpack.c.h.b16 %v5520
    %v5599 = vunpack.c.l.b16 %v5521
    %v5600 = vunpack.c.h.b16 %v5521
    %v5601 = vunpack.c.l.b16 %v5522
    %v5602 = vunpack.c.h.b16 %v5522
    %v5603 = vunpack.c.l.b16 %v5523
    %v5604 = vunpack.c.h.b16 %v5523
    %v5605 = vunpack.c.l.b16 %v5524
    %v5606 = vunpack.c.h.b16 %v5524
    %v5607 = vunpack.c.l.b16 %v5525
    %v5608 = vunpack.c.h.b16 %v5525
    %v5609 = vunpack.c.l.b16 %v5526
    %v5610 = vunpack.c.h.b16 %v5526
    %v5611 = vunpack.c.l.b16 %v5527
    %v5612 = vunpack.c.h.b16 %v5527
    %v5613 = vunpack.c.l.b16 %v5528
    %v5614 = vunpack.c.h.b16 %v5528
    %v5615 = vunpack.c.l.b16 %v5529
    %v5616 = vunpack.c.h.b16 %v5529
    %v5617 = vunpack.c.l.b16 %v5530
    %v5618 = vunpack.c.h.b16 %v5530
    %v5619 = vunpack.c.l.b16 %v5531
    %v5620 = vunpack.c.h.b16 %v5531
    %v5621 = vunpack.c.l.b16 %v5532
    %v5622 = vunpack.c.h.b16 %v5532
    %v5623 = vunpack.c.l.b16 %v5533
    %v5624 = vunpack.c.h.b16 %v5533
    %v5625 = vunpack.c.l.b16 %v5534
    %v5626 = vunpack.c.h.b16 %v5534
    %v5627 = vunpack.c.l.b16 %v5535
    %v5628 = vunpack.c.h.b16 %v5535
    %v5629 = vunpack.c.l.b16 %v5536
    %v5630 = vunpack.c.h.b16 %v5536
    %v5631 = vunpack.c.l.b16 %v5537
    %v5632 = vunpack.c.h.b16 %v5537
    %v5633 = vunpack.c.l.b16 %v5538
    %v5634 = vunpack.c.h.b16 %v5538
    %v5635 = vpack.c.b16 %v5575, %v5571
    %v5636 = vpack.c.b16 %v5576, %v5572
    %v5637 = vpack.c.b16 %v5577, %v5573
    %v5638 = vpack.c.b16 %v5578, %v5574
    %v5639 = vpack.c.b16 %v5583, %v5579
    %v5640 = vpack.c.b16 %v5584, %v5580
    %v5641 = vpack.c.b16 %v5585, %v5581
    %v5642 = vpack.c.b16 %v5586, %v5582
    %v5643 = vpack.c.b16 %v5591, %v5587
    %v5644 = vpack.c.b16 %v5592, %v5588
    %v5645 = vpack.c.b16 %v5593, %v5589
    %v5646 = vpack.c.b16 %v5594, %v5590
    %v5647 = vpack.c.b16 %v5599, %v5595
    %v5648 = vpack.c.b16 %v5600, %v5596
    %v5649 = vpack.c.b16 %v5601, %v5597
    %v5650 = vpack.c.b16 %v5602, %v5598
    %v5651 = vpack.c.b16 %v5607, %v5603
    %v5652 = vpack.c.b16 %v5608, %v5604
    %v5653 = vpack.c.b16 %v5609, %v5605
    %v5654 = vpack.c.b16 %v5610, %v5606
    %v5655 = vpack.c.b16 %v5615, %v5611
    %v5656 = vpack.c.b16 %v5616, %v5612
    %v5657 = vpack.c.b16 %v5617, %v5613
    %v5658 = vpack.c.b16 %v5618, %v5614
    %v5659 = vpack.c.b16 %v5623, %v5619
    %v5660 = vpack.c.b16 %v5624, %v5620
    %v5661 = vpack.c.b16 %v5625, %v5621
    %v5662 = vpack.c.b16 %v5626, %v5622
    %v5663 = vpack.c.b16 %v5631, %v5627
    %v5664 = vpack.c.b16 %v5632, %v5628
    %v5665 = vpack.c.b16 %v5633, %v5629
    %v5666 = vpack.c.b16 %v5634, %v5630
    %5699 = vmatprep.subr.bf16.mxu0 %v5636
    %5700 = vmatpush1.bf16.msra.mxu0 %v5635
    %5701 = vmatprep.subr.bf16.mxu0 %v5640
    %5702 = vmatpush1.bf16.msra.mxu0 %v5639
    %5703 = vmatprep.subr.bf16.mxu0 %v5644
    %5704 = vmatpush1.bf16.msra.mxu0 %v5643
    %5705 = vmatprep.subr.bf16.mxu0 %v5648
    %5706 = vmatpush1.bf16.msra.mxu0 %v5647
    %5707 = vmatprep.subr.bf16.mxu0 %v5652
    %5708 = vmatpush1.bf16.msra.mxu0 %v5651
    %5709 = vmatprep.subr.bf16.mxu0 %v5656
    %5710 = vmatpush1.bf16.msra.mxu0 %v5655
    %5711 = vmatprep.subr.bf16.mxu0 %v5660
    %5712 = vmatpush1.bf16.msra.mxu0 %v5659
    %5713 = vmatprep.subr.bf16.mxu0 %v5664
    %5714 = vmatpush1.bf16.msra.mxu0 %v5663
    %5715 = vmatprep.subr.bf16.mxu0 0
    %5716 = vmatpush1.bf16.msra.mxu0 0
    %5717 = vmatprep.subr.bf16.mxu0 0
    %5718 = vmatpush1.bf16.msra.mxu0 0
    %5719 = vmatprep.subr.bf16.mxu0 0
    %5720 = vmatpush1.bf16.msra.mxu0 0
    %5721 = vmatprep.subr.bf16.mxu0 0
    %5722 = vmatpush1.bf16.msra.mxu0 0
    %5723 = vmatprep.subr.bf16.mxu0 0
    %5724 = vmatpush1.bf16.msra.mxu0 0
    %5725 = vmatprep.subr.bf16.mxu0 0
    %5726 = vmatpush1.bf16.msra.mxu0 0
    %5727 = vmatprep.subr.bf16.mxu0 0
    %5728 = vmatpush1.bf16.msra.mxu0 0
    %5729 = vmatprep.subr.bf16.mxu0 0
    %5730 = vmatpush1.bf16.msra.mxu0 0
    %5731 = vmatprep.mubr.bf16.mxu0 0
    %5732 = vmatmul.mubr.bf16.gmra.mrb[0].mxu0 %v5506
    %v5733 = vpop.f32.mrb[0].mxu0
    %v5734 = vadd.f32 0.0, %v5733
    %v5735 = vpop.f32.mrb[0].mxu0
    %v5736 = vadd.f32 0.0, %v5735
    %v5737 = vpop.f32.mrb[0].mxu0
    %v5738 = vpop.f32.mrb[0].mxu0
    %5739 = vdwg.mxu0
    %5740 = vmatprep.subr.bf16.mxu0 %v5638
    %5741 = vmatpush1.bf16.msra.mxu0 %v5637
    %5742 = vmatprep.subr.bf16.mxu0 %v5642
    %5743 = vmatpush1.bf16.msra.mxu0 %v5641
    %5744 = vmatprep.subr.bf16.mxu0 %v5646
    %5745 = vmatpush1.bf16.msra.mxu0 %v5645
    %5746 = vmatprep.subr.bf16.mxu0 %v5650
    %5747 = vmatpush1.bf16.msra.mxu0 %v5649
    %5748 = vmatprep.subr.bf16.mxu0 %v5654
    %5749 = vmatpush1.bf16.msra.mxu0 %v5653
    %5750 = vmatprep.subr.bf16.mxu0 %v5658
    %5751 = vmatpush1.bf16.msra.mxu0 %v5657
    %5752 = vmatprep.subr.bf16.mxu0 %v5662
    %5753 = vmatpush1.bf16.msra.mxu0 %v5661
    %5754 = vmatprep.subr.bf16.mxu0 %v5666
    %5755 = vmatpush1.bf16.msra.mxu0 %v5665
    %5756 = vmatprep.subr.bf16.mxu0 0
    %5757 = vmatpush1.bf16.msra.mxu0 0
    %5758 = vmatprep.subr.bf16.mxu0 0
    %5759 = vmatpush1.bf16.msra.mxu0 0
    %5760 = vmatprep.subr.bf16.mxu0 0
    %5761 = vmatpush1.bf16.msra.mxu0 0
    %5762 = vmatprep.subr.bf16.mxu0 0
    %5763 = vmatpush1.bf16.msra.mxu0 0
    %5764 = vmatprep.subr.bf16.mxu0 0
    %5765 = vmatpush1.bf16.msra.mxu0 0
    %5766 = vmatprep.subr.bf16.mxu0 0
    %5767 = vmatpush1.bf16.msra.mxu0 0
    %5768 = vmatprep.subr.bf16.mxu0 0
    %5769 = vmatpush1.bf16.msra.mxu0 0
    %5770 = vmatprep.subr.bf16.mxu0 0
    %5771 = vmatpush1.bf16.msra.mxu0 0
    %5772 = vmatprep.mubr.bf16.mxu0 0
    %5773 = vmatmul.mubr.bf16.gmra.mrb[0].mxu0 %v5506
    %v5774 = vpop.f32.mrb[0].mxu0
    %v5775 = vadd.f32 0.0, %v5774
    %v5776 = vpop.f32.mrb[0].mxu0
    %v5777 = vadd.f32 0.0, %v5776
    %v5778 = vpop.f32.mrb[0].mxu0
    %v5779 = vpop.f32.mrb[0].mxu0
    %5780 = vdwg.mxu0
    %v5781 = vadd.f32 %v5502, %v5734
    %v5782 = vadd.f32 %v5503, %v5736
    %v5783 = vadd.f32 %v5504, %v5775
    %v5784 = vadd.f32 %v5505, %v5777
    %v5785 = vxor.u32 %v5781, 2147483648
    %v5786 = vxor.u32 %v5782, 2147483648
    %v5787 = vmul.f32 %v5785, 1.442695
    %v5788 = vpow.pop %v5787
    %v5789 = vmul.f32 %v5786, 1.442695
    %v5790 = vpow.pop %v5789
    %v5791 = vadd.f32 %v5788, 1.0
    %v5792 = vadd.f32 %v5790, 1.0
    %v5793 = vrcp.pop %v5791
    %v5794 = vmul.f32 1.0, %v5793
    %v5795 = vrcp.pop %v5792
    %v5796 = vmul.f32 1.0, %v5795
    %v5797 = vtanh.pop %v5783
    %v5798 = vxor.u32 %v5784, 2147483648
    %v5799 = vmul.f32 %v5798, 1.442695
    %v5800 = vpow.pop %v5799
    %v5801 = vadd.f32 %v5800, 1.0
    %v5802 = vrcp.pop %v5801
    %v5803 = vmul.f32 1.0, %v5802
    %v5804 = vmul.f32 %v5796, %v5190
    %v5805 = vmul.f32 %v5794, %v5797
    %v5806 = vadd.f32 %v5804, %v5805
    %v5807 = vtanh.pop %v5806
    %v5808 = vmul.f32 %v5803, %v5807
    %5809 = vst [vmem:[%s7 + $0x8] sm:$0xff] %v5808
    // Predicated region
    $region42: #{lstm_model_forward.2} parent=1 // pred_check
      _
    $region43: #{lstm_model_forward.2} parent=1 // pred_check_branch
      %5811 = sbr.rel (0) target = $region45
    $region44: #{lstm_model_forward.2} parent=1 // pred_region
      _
    $region45: #{lstm_model_forward.2} parent=1 // pred_fallthru
      _
    // Predicated region
    $region46: #{lstm_model_forward.2} parent=1 // pred_check
      _
    $region47: #{lstm_model_forward.2} parent=1 // pred_check_branch
      %5813 = sbr.rel (0) target = $region49
    $region48: #{lstm_model_forward.2} parent=1 // pred_region
      _
    $region49: #{lstm_model_forward.2} parent=1 // pred_fallthru
      _
    %5814 = vsyncpa [#allocation5], 1
    %5815 = vsyncpa [#allocation7], 1

</llo_original>
